<compile_context>
chip_gen: v6e
topology: v6e:2x2x1
jax: 0.10.0
libtpu: 0.0.40
codegen_flags: <defaults>
</compile_context>

<pallas_src>
import math
from functools import partial

import jax
import jax.numpy as jnp
from jax.experimental import pallas as pl
from jax.experimental.pallas import tpu as pltpu


# Off-centre tap order (ky, kx), centre (1, 1) excluded — shared by kernel
# and wrapper so the block-diagonal weight stacking matches.
_OFF_TAPS = tuple((dy, dx) for dy in range(3) for dx in range(3)
                  if (dy, dx) != (1, 1))


# -----------------------------------------------------------------------------
# Pallas kernel: fused multi-dilation 3x3 "same" convolutions, concat on Cout
# -----------------------------------------------------------------------------
def _dcpp_kernel(*refs, TH, ph, pw_l, dilations, full, part):
    """One (batch-group, row-tile) step of the fused DCPP output.

    refs (in order):
      x_ref    : (NB, H, W, Cin)        unpadded activations (input dtype)
      wc_ref   : (Cin, Cout)            centre taps of all branches, concat
      b_ref    : (1, Cout)              concatenated biases (f32)
      w_blk_ref: (8, nF*Cin, Cout)      block-diag off-centre taps [if full]
      w_part_ref:(nP, 9, Cin, Cout)     zero-padded taps of partial branches
      o_ref    : (NB, TH, W, Cout)      output tile
      pad_ref  : (NB, Hp, Wp, Cin)      VMEM scratch, zero-padded bf16 slab
    """
    x_ref, wc_ref, b_ref = refs[0], refs[1], refs[2]
    k = 3
    w_blk_ref = None
    w_part_ref = None
    if full:
        w_blk_ref = refs[k]
        k += 1
    if part:
        w_part_ref = refs[k]
        k += 1
    o_ref, pad_ref = refs[k], refs[k + 1]

    NB, H, W, Cin = x_ref.shape
    M = NB * TH * W
    t = pl.program_id(1)
    row0 = pl.multiple_of(t * TH, TH)

    # --- build the zero-padded compute-dtype slab once per batch group.
    #     (t axis is "arbitrary" => sequential per group, so t == 0 runs
    #     before any row tile of that group is computed.)
    @pl.when(t == 0)
    def _():
        if pad_ref.shape[1] > H or pad_ref.shape[2] > W:
            pad_ref[...] = jnp.zeros_like(pad_ref)
        # interior store is sublane-aligned: pw_l is a multiple of 8
        pad_ref[:, ph:ph + H, pw_l:pw_l + W, :] = (
            x_ref[...].astype(pad_ref.dtype))

    def patch(dy, dx, d):
        # rows: dynamic offset along a major axis (cheap); cols: static
        # sublane-offset window folded into the load.
        rs = row0 + ph + (dy - 1) * d
        cs = pw_l + (dx - 1) * d
        return pad_ref[:, pl.ds(rs, TH), cs:cs + W, :].reshape(M, Cin)

    # --- centre tap: identical window for every dilation -> ONE lane-dense
    #     (M, Cin) x (Cin, G*oc) matmul covering all branches. -------------
    acc = jnp.dot(patch(1, 1, 0), wc_ref[...],
                  preferred_element_type=jnp.float32)          # (M, Cout) f32

    # --- off-centre taps of fully-active branches: per tap, ONE
    #     (M, nF*Cin) x (nF*Cin, Cout) block-diagonal matmul (N = Cout). ----
    if full:
        for ti, (dy, dx) in enumerate(_OFF_TAPS):
            ps = [patch(dy, dx, dilations[g]) for g in full]
            lhs = ps[0] if len(ps) == 1 else jnp.concatenate(ps, axis=-1)
            acc = acc + jnp.dot(lhs, w_blk_ref[ti],
                                preferred_element_type=jnp.float32)

    # --- branches active along only one axis (non-square maps): wide matmul
    #     against weights zero-padded to the full Cout column range. --------
    if part:
        for p, g in enumerate(part):
            d = dilations[g]
            dys = (0, 1, 2) if d < H else (1,)
            dxs = (0, 1, 2) if d < W else (1,)
            for dy in dys:
                for dx in dxs:
                    if (dy, dx) == (1, 1):
                        continue
                    acc = acc + jnp.dot(patch(dy, dx, d),
                                        w_part_ref[p, dy * 3 + dx],
                                        preferred_element_type=jnp.float32)

    out = (acc + b_ref[...]).reshape(o_ref.shape)               # f32 bias add
    o_ref[...] = out.astype(o_ref.dtype)


# -----------------------------------------------------------------------------
# Wrapper
# -----------------------------------------------------------------------------
def _vmem_limit_bytes():
    # Leave headroom below physical VMEM (64 MiB on v7x, 128 MiB on v5e/v6e).
    try:
        cap = int(pltpu.get_tpu_info().vmem_capacity_bytes)
    except Exception:
        cap = 64 * 1024 * 1024          # conservative v7x floor
    return (cap * 3) // 4


def dcpp(x_nhwc, weights, biases, d_rates, *,
         compute_dtype=jnp.bfloat16, out_dtype=jnp.float32,
         tile_h=None, batch_group=None):
    """DCPP forward.

    x_nhwc : (N, H, W, Cin) f32
    weights: list of G arrays (9, Cin, out_ch)   (tap = ky*3+kx, PyTorch
             cross-correlation order, i.e. torch weight[co, ci, ky, kx]
             transposed to (ky*3+kx, ci, co))
    biases : list of G arrays (out_ch,)
    d_rates: tuple of G dilation rates (padding == dilation => "same")
    returns (N, H, W, G*out_ch), branch g in channels [g*oc, (g+1)*oc).
    """
    N, H, W, Cin = x_nhwc.shape
    G = len(d_rates)
    oc = weights[0].shape[-1]
    Cout = G * oc
    assert all(w.shape == (9, Cin, oc) for w in weights)
    assert all(b.shape == (oc,) for b in biases)
    assert W % 8 == 0, "W must be a multiple of 8 (sublane packing)"
    dil = tuple(int(d) for d in d_rates)

    # Partition branches by which off-centre taps can see real (non-pad) data.
    full = [g for g, d in enumerate(dil) if d < H and d < W]   # all 8 taps
    part = [g for g, d in enumerate(dil) if (d < H) != (d < W)]  # one axis only
    # branches with d >= H and d >= W contribute only centre tap + bias.

    # Halo only as large as the largest *contributing* dilation per axis.
    ph = max([d for d in dil if d < H], default=0)
    pw = max([d for d in dil if d < W], default=0)
    pw_l = ((pw + 7) // 8) * 8          # left pad rounded up: aligned interior
    Hp = H + 2 * ph
    Wp = pw_l + W + ((pw + 7) // 8) * 8  # right pad rounded up (layout only)

    # Batch grouping: fold images into the matmul M dim only when one image's
    # spatial extent under-fills MXU rows, but keep >= 2 parallel groups when
    # N >= 2 so both v7x TensorCores get work.
    if batch_group is None:
        nb0 = max(1, 128 // (H * W)) if (H * W) < 128 else 1
        NB = max(d for d in range(1, N + 1) if N % d == 0 and d <= nb0)
        if N // NB < 2 and N > 1:
            NB = max(d for d in range(1, N) if N % d == 0 and N // d >= 2)
    else:
        NB = int(batch_group)
    assert N % NB == 0
    NS = N // NB

    # Row tile: bounded accumulator, target >= ~128 matmul rows when possible.
    if tile_h is None:
        tile_h = H
        for cand in (8, 16, 32):
            if H % cand == 0 and cand < tile_h and NB * cand * W >= 128:
                tile_h = cand
                break
    TH = int(tile_h)
    assert H % TH == 0
    T = H // TH
    M = NB * TH * W

    cdt = compute_dtype
    # Centre taps of all branches concatenated -> (Cin, Cout).
    wc = jnp.concatenate([w[4] for w in weights], axis=-1).astype(cdt)
    b_all = jnp.concatenate([b.reshape(-1) for b in biases]
                            ).reshape(1, Cout).astype(jnp.float32)

    inputs = [x_nhwc, wc, b_all]
    in_specs = [
        pl.BlockSpec((NB, H, W, Cin), lambda s, t: (s, 0, 0, 0)),
        pl.BlockSpec((Cin, Cout), lambda s, t: (0, 0)),
        pl.BlockSpec((1, Cout), lambda s, t: (0, 0)),
    ]

    nF, nP = len(full), len(part)
    if nF:
        # Block-diagonal off-centre weights: tap ti, K-block a (branch full[a])
        # at output columns of that branch.
        w_blk = jnp.zeros((8, nF * Cin, Cout), cdt)
        for a, g in enumerate(full):
            for ti, (dy, dx) in enumerate(_OFF_TAPS):
                w_blk = w_blk.at[ti, a * Cin:(a + 1) * Cin,
                                 g * oc:(g + 1) * oc].set(
                    weights[g][dy * 3 + dx].astype(cdt))
        inputs.append(w_blk)
        in_specs.append(pl.BlockSpec((8, nF * Cin, Cout),
                                     lambda s, t: (0, 0, 0)))
    if nP:
        w_part = jnp.zeros((nP, 9, Cin, Cout), cdt)
        for p, g in enumerate(part):
            w_part = w_part.at[p, :, :, g * oc:(g + 1) * oc].set(
                weights[g].astype(cdt))
        inputs.append(w_part)
        in_specs.append(pl.BlockSpec((nP, 9, Cin, Cout),
                                     lambda s, t: (0, 0, 0, 0)))

    out_spec = pl.BlockSpec((NB, TH, W, Cout), lambda s, t: (s, t, 0, 0))
    scratch_shapes = [pltpu.VMEM((NB, Hp, Wp, Cin), cdt)]

    # ---- explicit VMEM budget check (v7x has only 64 MiB physical) ---------
    def nbytes(shape, dt):
        return math.prod(shape) * jnp.dtype(dt).itemsize

    vmem_limit = _vmem_limit_bytes()
    est = 2 * (nbytes((NB, H, W, Cin), x_nhwc.dtype)          # x, 2-buffered
               + nbytes((NB, TH, W, Cout), out_dtype)          # out
               + nbytes((Cin, Cout), cdt)                      # wc
               + nbytes((1, Cout), jnp.float32))               # bias
    if nF:
        est += 2 * nbytes((8, nF * Cin, Cout), cdt)
    if nP:
        est += 2 * nbytes((nP, 9, Cin, Cout), cdt)
    est += nbytes((NB, Hp, Wp, Cin), cdt)                      # pad scratch
    # temporaries: concat LHS, f32 accumulator, a few live patches
    est += M * max(1, nF) * Cin * jnp.dtype(cdt).itemsize
    est += M * Cout * 4 + 4 * M * Cin * jnp.dtype(cdt).itemsize
    if est > vmem_limit:
        # TODO(synk): halo-tiled fallback (memory_space=pl.ANY + manual DMA of
        # TH+2*ph row windows) for maps too large for whole-image residency.
        raise ValueError(
            f"DCPP VMEM estimate {est} B exceeds budget {vmem_limit} B; "
            f"reduce tile_h / batch_group.")

    kernel = partial(_dcpp_kernel, TH=TH, ph=ph, pw_l=pw_l,
                     dilations=dil, full=tuple(full), part=tuple(part))
    return pl.pallas_call(
        kernel,
        out_shape=jax.ShapeDtypeStruct((N, H, W, Cout), out_dtype),
        grid=(NS, T),
        in_specs=in_specs,
        out_specs=out_spec,
        scratch_shapes=scratch_shapes,
        compiler_params=pltpu.CompilerParams(
            # batch groups shard across TensorCores; row tiles stay sequential
            # so the pad scratch / x block are reused (not re-fetched) per t.
            dimension_semantics=("parallel", "arbitrary"),
            vmem_limit_bytes=vmem_limit),
    )(*inputs)


def dcpp_nchw(x_nchw, weights, biases, d_rates, **kw):
    """PyTorch-convention entry point: NCHW in, NCHW out."""
    y = dcpp(jnp.transpose(x_nchw, (0, 2, 3, 1)), weights, biases, d_rates, **kw)
    return jnp.transpose(y, (0, 3, 1, 2))


# -----------------------------------------------------------------------------
# Pure-JAX reference (lax conv, f32, highest precision)
# -----------------------------------------------------------------------------
def dcpp_reference_nchw(x_nchw, weights, biases, d_rates):
    x = jnp.transpose(x_nchw, (0, 2, 3, 1))
    outs = []
    for w, b, d in zip(weights, biases, d_rates):
        k = w.reshape(3, 3, w.shape[1], w.shape[2])          # HWIO
        o = jax.lax.conv_general_dilated(
            x, k, window_strides=(1, 1),
            padding=((d, d), (d, d)), rhs_dilation=(d, d),
            dimension_numbers=("NHWC", "HWIO", "NHWC"),
            precision=jax.lax.Precision.HIGHEST)
        outs.append(o + b.reshape(1, 1, 1, -1))
    return jnp.transpose(jnp.concatenate(outs, axis=-1), (0, 3, 1, 2))


# -----------------------------------------------------------------------------
# Deterministic synthetic parameters (module shapes)
# -----------------------------------------------------------------------------
def init_dcpp_params(key, in_ch, out_ch, n_branches):
    std = math.sqrt(2.0 / (9.0 * in_ch))
    ws, bs = [], []
    for _ in range(n_branches):
        key, kw, kb = jax.random.split(key, 3)
        ws.append(jax.random.normal(kw, (9, in_ch, out_ch), jnp.float32) * std)
        bs.append(jax.random.normal(kb, (out_ch,), jnp.float32) * 0.1)
    return ws, bs


# -----------------------------------------------------------------------------
if __name__ == "__main__":
    key = jax.random.PRNGKey(0)
    kp, kx1, kx2, kx3 = jax.random.split(key, 4)

    d_rates = (1, 5, 9, 13)
    in_ch, out_ch = 128, 32
    ws, bs = init_dcpp_params(kp, in_ch, out_ch, len(d_rates))

    def check(x_nchw, name):
        run = jax.jit(lambda x, w, b: dcpp_nchw(x, w, b, d_rates))
        y = jax.block_until_ready(run(x_nchw, ws, bs))
        ref = dcpp_reference_nchw(x_nchw, ws, bs, d_rates)
        N, _, H, W = x_nchw.shape
        assert y.shape == (N, len(d_rates) * out_ch, H, W), (name, y.shape)
        assert bool(jnp.all(jnp.isfinite(y))), name
        err = float(jnp.max(jnp.abs(y - ref)) / (jnp.max(jnp.abs(ref)) + 1e-6))
        assert err < 3e-2, (name, err)   # bf16-operand / f32-accum tolerance

    # Config 1: 16x16 map -> all 4 branches fully active, grid (N=2, H/8=2),
    # off-centre work as 8 block-diagonal (128, 512)x(512, 128) matmuls.
    x1 = jax.random.normal(kx1, (2, in_ch, 16, 16), jnp.float32)
    check(x1, "full_16x16")

    # Config 2: 8x8 map (real DCPP size) -> d=9,13 fully skipped at trace
    # time, halo shrinks to 5, and two parallel batch groups keep both v7x
    # TensorCores busy.
    x2 = jax.random.normal(kx2, (2, in_ch, 8, 8), jnp.float32)
    check(x2, "skip_8x8")

    # Config 3: non-square 8x16 map -> d=9,13 are active along W only,
    # exercising the partial-branch path.
    x3 = jax.random.normal(kx3, (2, in_ch, 8, 16), jnp.float32)
    check(x3, "partial_8x16")

    print("KERNEL_OK")
</pallas_src>

<mosaic_0001>
module attributes {stable_mosaic.version = 11 : i64} {
  func.func @_dcpp_kernel(%arg0: i32, %arg1: i32, %arg2: memref<1x16x16x128xf32, #tpu.memory_space<vmem>>, %arg3: memref<128x128xbf16, #tpu.memory_space<vmem>>, %arg4: memref<1x128xf32, #tpu.memory_space<vmem>>, %arg5: memref<8x512x128xbf16, #tpu.memory_space<vmem>>, %arg6: memref<1x8x16x128xf32, #tpu.memory_space<vmem>>, %arg7: memref<1x42x48x128xbf16, #tpu.memory_space<vmem>>) attributes {dimension_semantics = [#tpu.dimension_semantics<parallel>, #tpu.dimension_semantics<arbitrary>], iteration_bounds = array<i64: 2, 2>, scalar_prefetch = 0 : i64, scratch_operands = 1 : i64, tpu.core_type = #tpu.core_type<tc>, window_params = [{transform_indices = @transform_0, window_bounds = array<i64: 1, 16, 16, 128>}, {pipeline_mode = #tpu.pipeline_mode<synchronous>, transform_indices = @transform_1, window_bounds = array<i64: 128, 128>}, {pipeline_mode = #tpu.pipeline_mode<synchronous>, transform_indices = @transform_2, window_bounds = array<i64: 1, 128>}, {pipeline_mode = #tpu.pipeline_mode<synchronous>, transform_indices = @transform_3, window_bounds = array<i64: 8, 512, 128>}, {transform_indices = @transform_4, window_bounds = array<i64: 1, 8, 16, 128>}]} {
    %c8_i32 = arith.constant 8 : i32
    %0 = arith.muli %arg1, %c8_i32 : i32
    %1 = tpu.assume_multiple %0, 8 : i32
    %c0_i32 = arith.constant 0 : i32
    %2 = arith.cmpi eq, %arg1, %c0_i32 : i32
    %3 = arith.extui %2 : i1 to i32
    %c0_i32_0 = arith.constant 0 : i32
    %4 = arith.cmpi ne, %3, %c0_i32_0 : i32
    scf.if %4 {
      %cst_183 = arith.constant 0.000000e+00 : bf16
      %217 = vector.broadcast %cst_183 : bf16 to vector<1x42x48x128xbf16>
      %c0_184 = arith.constant 0 : index
      %c0_185 = arith.constant 0 : index
      %c0_186 = arith.constant 0 : index
      %c0_187 = arith.constant 0 : index
      %218 = vector.load %arg7[%c0_184, %c0_185, %c0_186, %c0_187] : memref<1x42x48x128xbf16, #tpu.memory_space<vmem>>, vector<1x42x48x128xbf16>
      tpu.vector_store %arg7[%c0_184, %c0_185, %c0_186, %c0_187], %217 {strides = array<i32>} : memref<1x42x48x128xbf16, #tpu.memory_space<vmem>>, vector<1x42x48x128xbf16>,
      %c0_188 = arith.constant 0 : index
      %c0_189 = arith.constant 0 : index
      %c0_190 = arith.constant 0 : index
      %c0_191 = arith.constant 0 : index
      %219 = vector.load %arg2[%c0_188, %c0_189, %c0_190, %c0_191] : memref<1x16x16x128xf32, #tpu.memory_space<vmem>>, vector<1x16x16x128xf32>
      %220 = arith.truncf %219 : vector<1x16x16x128xf32> to vector<1x16x16x128xbf16>
      %c0_192 = arith.constant 0 : index
      %c13 = arith.constant 13 : index
      %c16_193 = arith.constant 16 : index
      %c0_194 = arith.constant 0 : index
      %221 = vector.load %arg7[%c0_192, %c13, %c16_193, %c0_194] : memref<1x42x48x128xbf16, #tpu.memory_space<vmem>>, vector<1x16x16x128xbf16>
      tpu.vector_store %arg7[%c0_192, %c13, %c16_193, %c0_194], %220 {strides = array<i32>} : memref<1x42x48x128xbf16, #tpu.memory_space<vmem>>, vector<1x16x16x128xbf16>,
    } else {
    }
    %c13_i32 = arith.constant 13 : i32
    %5 = arith.addi %1, %c13_i32 : i32
    %c0_i32_1 = arith.constant 0 : i32
    %6 = arith.addi %5, %c0_i32_1 : i32
    %c0 = arith.constant 0 : index
    %7 = arith.index_cast %6 : i32 to index
    %c16 = arith.constant 16 : index
    %c0_2 = arith.constant 0 : index
    %8 = vector.load %arg7[%c0, %7, %c16, %c0_2] : memref<1x42x48x128xbf16, #tpu.memory_space<vmem>>, vector<1x8x16x128xbf16>
    %9 = vector.shape_cast %8 : vector<1x8x16x128xbf16> to vector<128x128xbf16>
    %c0_3 = arith.constant 0 : index
    %c0_4 = arith.constant 0 : index
    %10 = vector.load %arg3[%c0_3, %c0_4] : memref<128x128xbf16, #tpu.memory_space<vmem>>, vector<128x128xbf16>
    %cst = arith.constant dense<0.000000e+00> : vector<128x128xf32>
    %11 = tpu.matmul %9, %10, %cst {dimension_numbers = #tpu.dot_dimension_numbers<[1], [0], [0], [1], [0, 0, 1, 1], [], []>} : vector<128x128xbf16>, vector<128x128xbf16>, vector<128x128xf32> -> vector<128x128xf32>
    %c13_i32_5 = arith.constant 13 : i32
    %12 = arith.addi %1, %c13_i32_5 : i32
    %c-1_i32 = arith.constant -1 : i32
    %13 = arith.addi %12, %c-1_i32 : i32
    %c0_6 = arith.constant 0 : index
    %14 = arith.index_cast %13 : i32 to index
    %c15 = arith.constant 15 : index
    %c0_7 = arith.constant 0 : index
    %15 = vector.load %arg7[%c0_6, %14, %c15, %c0_7] : memref<1x42x48x128xbf16, #tpu.memory_space<vmem>>, vector<1x8x16x128xbf16>
    %16 = vector.shape_cast %15 : vector<1x8x16x128xbf16> to vector<128x128xbf16>
    %c13_i32_8 = arith.constant 13 : i32
    %17 = arith.addi %1, %c13_i32_8 : i32
    %c-5_i32 = arith.constant -5 : i32
    %18 = arith.addi %17, %c-5_i32 : i32
    %c0_9 = arith.constant 0 : index
    %19 = arith.index_cast %18 : i32 to index
    %c11 = arith.constant 11 : index
    %c0_10 = arith.constant 0 : index
    %20 = vector.load %arg7[%c0_9, %19, %c11, %c0_10] : memref<1x42x48x128xbf16, #tpu.memory_space<vmem>>, vector<1x8x16x128xbf16>
    %21 = vector.shape_cast %20 : vector<1x8x16x128xbf16> to vector<128x128xbf16>
    %c13_i32_11 = arith.constant 13 : i32
    %22 = arith.addi %1, %c13_i32_11 : i32
    %c-9_i32 = arith.constant -9 : i32
    %23 = arith.addi %22, %c-9_i32 : i32
    %c0_12 = arith.constant 0 : index
    %24 = arith.index_cast %23 : i32 to index
    %c7 = arith.constant 7 : index
    %c0_13 = arith.constant 0 : index
    %25 = vector.load %arg7[%c0_12, %24, %c7, %c0_13] : memref<1x42x48x128xbf16, #tpu.memory_space<vmem>>, vector<1x8x16x128xbf16>
    %26 = vector.shape_cast %25 : vector<1x8x16x128xbf16> to vector<128x128xbf16>
    %c13_i32_14 = arith.constant 13 : i32
    %27 = arith.addi %1, %c13_i32_14 : i32
    %c-13_i32 = arith.constant -13 : i32
    %28 = arith.addi %27, %c-13_i32 : i32
    %c0_15 = arith.constant 0 : index
    %29 = arith.index_cast %28 : i32 to index
    %c3 = arith.constant 3 : index
    %c0_16 = arith.constant 0 : index
    %30 = vector.load %arg7[%c0_15, %29, %c3, %c0_16] : memref<1x42x48x128xbf16, #tpu.memory_space<vmem>>, vector<1x8x16x128xbf16>
    %31 = vector.shape_cast %30 : vector<1x8x16x128xbf16> to vector<128x128xbf16>
    %32 = tpu.concatenate %16, %21, %26, %31 in 1 : vector<128x128xbf16>, vector<128x128xbf16>, vector<128x128xbf16>, vector<128x128xbf16> -> vector<128x512xbf16>
    %c0_17 = arith.constant 0 : index
    %c0_18 = arith.constant 0 : index
    %c0_19 = arith.constant 0 : index
    %33 = vector.load %arg5[%c0_17, %c0_18, %c0_19] : memref<8x512x128xbf16, #tpu.memory_space<vmem>>, vector<1x512x128xbf16>
    %34 = vector.shape_cast %33 : vector<1x512x128xbf16> to vector<512x128xbf16>
    %cst_20 = arith.constant dense<0.000000e+00> : vector<128x128xf32>
    %35 = tpu.matmul %32, %34, %cst_20 {dimension_numbers = #tpu.dot_dimension_numbers<[1], [0], [0], [1], [0, 0, 1, 1], [], []>} : vector<128x512xbf16>, vector<512x128xbf16>, vector<128x128xf32> -> vector<128x128xf32>
    %36 = arith.addf %11, %35 : vector<128x128xf32>
    %c13_i32_21 = arith.constant 13 : i32
    %37 = arith.addi %1, %c13_i32_21 : i32
    %c-1_i32_22 = arith.constant -1 : i32
    %38 = arith.addi %37, %c-1_i32_22 : i32
    %c0_23 = arith.constant 0 : index
    %39 = arith.index_cast %38 : i32 to index
    %c16_24 = arith.constant 16 : index
    %c0_25 = arith.constant 0 : index
    %40 = vector.load %arg7[%c0_23, %39, %c16_24, %c0_25] : memref<1x42x48x128xbf16, #tpu.memory_space<vmem>>, vector<1x8x16x128xbf16>
    %41 = vector.shape_cast %40 : vector<1x8x16x128xbf16> to vector<128x128xbf16>
    %c13_i32_26 = arith.constant 13 : i32
    %42 = arith.addi %1, %c13_i32_26 : i32
    %c-5_i32_27 = arith.constant -5 : i32
    %43 = arith.addi %42, %c-5_i32_27 : i32
    %c0_28 = arith.constant 0 : index
    %44 = arith.index_cast %43 : i32 to index
    %c16_29 = arith.constant 16 : index
    %c0_30 = arith.constant 0 : index
    %45 = vector.load %arg7[%c0_28, %44, %c16_29, %c0_30] : memref<1x42x48x128xbf16, #tpu.memory_space<vmem>>, vector<1x8x16x128xbf16>
    %46 = vector.shape_cast %45 : vector<1x8x16x128xbf16> to vector<128x128xbf16>
    %c13_i32_31 = arith.constant 13 : i32
    %47 = arith.addi %1, %c13_i32_31 : i32
    %c-9_i32_32 = arith.constant -9 : i32
    %48 = arith.addi %47, %c-9_i32_32 : i32
    %c0_33 = arith.constant 0 : index
    %49 = arith.index_cast %48 : i32 to index
    %c16_34 = arith.constant 16 : index
    %c0_35 = arith.constant 0 : index
    %50 = vector.load %arg7[%c0_33, %49, %c16_34, %c0_35] : memref<1x42x48x128xbf16, #tpu.memory_space<vmem>>, vector<1x8x16x128xbf16>
    %51 = vector.shape_cast %50 : vector<1x8x16x128xbf16> to vector<128x128xbf16>
    %c13_i32_36 = arith.constant 13 : i32
    %52 = arith.addi %1, %c13_i32_36 : i32
    %c-13_i32_37 = arith.constant -13 : i32
    %53 = arith.addi %52, %c-13_i32_37 : i32
    %c0_38 = arith.constant 0 : index
    %54 = arith.index_cast %53 : i32 to index
    %c16_39 = arith.constant 16 : index
    %c0_40 = arith.constant 0 : index
    %55 = vector.load %arg7[%c0_38, %54, %c16_39, %c0_40] : memref<1x42x48x128xbf16, #tpu.memory_space<vmem>>, vector<1x8x16x128xbf16>
    %56 = vector.shape_cast %55 : vector<1x8x16x128xbf16> to vector<128x128xbf16>
    %57 = tpu.concatenate %41, %46, %51, %56 in 1 : vector<128x128xbf16>, vector<128x128xbf16>, vector<128x128xbf16>, vector<128x128xbf16> -> vector<128x512xbf16>
    %c1 = arith.constant 1 : index
    %c0_41 = arith.constant 0 : index
    %c0_42 = arith.constant 0 : index
    %58 = vector.load %arg5[%c1, %c0_41, %c0_42] : memref<8x512x128xbf16, #tpu.memory_space<vmem>>, vector<1x512x128xbf16>
    %59 = vector.shape_cast %58 : vector<1x512x128xbf16> to vector<512x128xbf16>
    %cst_43 = arith.constant dense<0.000000e+00> : vector<128x128xf32>
    %60 = tpu.matmul %57, %59, %cst_43 {dimension_numbers = #tpu.dot_dimension_numbers<[1], [0], [0], [1], [0, 0, 1, 1], [], []>} : vector<128x512xbf16>, vector<512x128xbf16>, vector<128x128xf32> -> vector<128x128xf32>
    %61 = arith.addf %36, %60 : vector<128x128xf32>
    %c13_i32_44 = arith.constant 13 : i32
    %62 = arith.addi %1, %c13_i32_44 : i32
    %c-1_i32_45 = arith.constant -1 : i32
    %63 = arith.addi %62, %c-1_i32_45 : i32
    %c0_46 = arith.constant 0 : index
    %64 = arith.index_cast %63 : i32 to index
    %c17 = arith.constant 17 : index
    %c0_47 = arith.constant 0 : index
    %65 = vector.load %arg7[%c0_46, %64, %c17, %c0_47] : memref<1x42x48x128xbf16, #tpu.memory_space<vmem>>, vector<1x8x16x128xbf16>
    %66 = vector.shape_cast %65 : vector<1x8x16x128xbf16> to vector<128x128xbf16>
    %c13_i32_48 = arith.constant 13 : i32
    %67 = arith.addi %1, %c13_i32_48 : i32
    %c-5_i32_49 = arith.constant -5 : i32
    %68 = arith.addi %67, %c-5_i32_49 : i32
    %c0_50 = arith.constant 0 : index
    %69 = arith.index_cast %68 : i32 to index
    %c21 = arith.constant 21 : index
    %c0_51 = arith.constant 0 : index
    %70 = vector.load %arg7[%c0_50, %69, %c21, %c0_51] : memref<1x42x48x128xbf16, #tpu.memory_space<vmem>>, vector<1x8x16x128xbf16>
    %71 = vector.shape_cast %70 : vector<1x8x16x128xbf16> to vector<128x128xbf16>
    %c13_i32_52 = arith.constant 13 : i32
    %72 = arith.addi %1, %c13_i32_52 : i32
    %c-9_i32_53 = arith.constant -9 : i32
    %73 = arith.addi %72, %c-9_i32_53 : i32
    %c0_54 = arith.constant 0 : index
    %74 = arith.index_cast %73 : i32 to index
    %c25 = arith.constant 25 : index
    %c0_55 = arith.constant 0 : index
    %75 = vector.load %arg7[%c0_54, %74, %c25, %c0_55] : memref<1x42x48x128xbf16, #tpu.memory_space<vmem>>, vector<1x8x16x128xbf16>
    %76 = vector.shape_cast %75 : vector<1x8x16x128xbf16> to vector<128x128xbf16>
    %c13_i32_56 = arith.constant 13 : i32
    %77 = arith.addi %1, %c13_i32_56 : i32
    %c-13_i32_57 = arith.constant -13 : i32
    %78 = arith.addi %77, %c-13_i32_57 : i32
    %c0_58 = arith.constant 0 : index
    %79 = arith.index_cast %78 : i32 to index
    %c29 = arith.constant 29 : index
    %c0_59 = arith.constant 0 : index
    %80 = vector.load %arg7[%c0_58, %79, %c29, %c0_59] : memref<1x42x48x128xbf16, #tpu.memory_space<vmem>>, vector<1x8x16x128xbf16>
    %81 = vector.shape_cast %80 : vector<1x8x16x128xbf16> to vector<128x128xbf16>
    %82 = tpu.concatenate %66, %71, %76, %81 in 1 : vector<128x128xbf16>, vector<128x128xbf16>, vector<128x128xbf16>, vector<128x128xbf16> -> vector<128x512xbf16>
    %c2 = arith.constant 2 : index
    %c0_60 = arith.constant 0 : index
    %c0_61 = arith.constant 0 : index
    %83 = vector.load %arg5[%c2, %c0_60, %c0_61] : memref<8x512x128xbf16, #tpu.memory_space<vmem>>, vector<1x512x128xbf16>
    %84 = vector.shape_cast %83 : vector<1x512x128xbf16> to vector<512x128xbf16>
    %cst_62 = arith.constant dense<0.000000e+00> : vector<128x128xf32>
    %85 = tpu.matmul %82, %84, %cst_62 {dimension_numbers = #tpu.dot_dimension_numbers<[1], [0], [0], [1], [0, 0, 1, 1], [], []>} : vector<128x512xbf16>, vector<512x128xbf16>, vector<128x128xf32> -> vector<128x128xf32>
    %86 = arith.addf %61, %85 : vector<128x128xf32>
    %c13_i32_63 = arith.constant 13 : i32
    %87 = arith.addi %1, %c13_i32_63 : i32
    %c0_i32_64 = arith.constant 0 : i32
    %88 = arith.addi %87, %c0_i32_64 : i32
    %c0_65 = arith.constant 0 : index
    %89 = arith.index_cast %88 : i32 to index
    %c15_66 = arith.constant 15 : index
    %c0_67 = arith.constant 0 : index
    %90 = vector.load %arg7[%c0_65, %89, %c15_66, %c0_67] : memref<1x42x48x128xbf16, #tpu.memory_space<vmem>>, vector<1x8x16x128xbf16>
    %91 = vector.shape_cast %90 : vector<1x8x16x128xbf16> to vector<128x128xbf16>
    %c13_i32_68 = arith.constant 13 : i32
    %92 = arith.addi %1, %c13_i32_68 : i32
    %c0_i32_69 = arith.constant 0 : i32
    %93 = arith.addi %92, %c0_i32_69 : i32
    %c0_70 = arith.constant 0 : index
    %94 = arith.index_cast %93 : i32 to index
    %c11_71 = arith.constant 11 : index
    %c0_72 = arith.constant 0 : index
    %95 = vector.load %arg7[%c0_70, %94, %c11_71, %c0_72] : memref<1x42x48x128xbf16, #tpu.memory_space<vmem>>, vector<1x8x16x128xbf16>
    %96 = vector.shape_cast %95 : vector<1x8x16x128xbf16> to vector<128x128xbf16>
    %c13_i32_73 = arith.constant 13 : i32
    %97 = arith.addi %1, %c13_i32_73 : i32
    %c0_i32_74 = arith.constant 0 : i32
    %98 = arith.addi %97, %c0_i32_74 : i32
    %c0_75 = arith.constant 0 : index
    %99 = arith.index_cast %98 : i32 to index
    %c7_76 = arith.constant 7 : index
    %c0_77 = arith.constant 0 : index
    %100 = vector.load %arg7[%c0_75, %99, %c7_76, %c0_77] : memref<1x42x48x128xbf16, #tpu.memory_space<vmem>>, vector<1x8x16x128xbf16>
    %101 = vector.shape_cast %100 : vector<1x8x16x128xbf16> to vector<128x128xbf16>
    %c13_i32_78 = arith.constant 13 : i32
    %102 = arith.addi %1, %c13_i32_78 : i32
    %c0_i32_79 = arith.constant 0 : i32
    %103 = arith.addi %102, %c0_i32_79 : i32
    %c0_80 = arith.constant 0 : index
    %104 = arith.index_cast %103 : i32 to index
    %c3_81 = arith.constant 3 : index
    %c0_82 = arith.constant 0 : index
    %105 = vector.load %arg7[%c0_80, %104, %c3_81, %c0_82] : memref<1x42x48x128xbf16, #tpu.memory_space<vmem>>, vector<1x8x16x128xbf16>
    %106 = vector.shape_cast %105 : vector<1x8x16x128xbf16> to vector<128x128xbf16>
    %107 = tpu.concatenate %91, %96, %101, %106 in 1 : vector<128x128xbf16>, vector<128x128xbf16>, vector<128x128xbf16>, vector<128x128xbf16> -> vector<128x512xbf16>
    %c3_83 = arith.constant 3 : index
    %c0_84 = arith.constant 0 : index
    %c0_85 = arith.constant 0 : index
    %108 = vector.load %arg5[%c3_83, %c0_84, %c0_85] : memref<8x512x128xbf16, #tpu.memory_space<vmem>>, vector<1x512x128xbf16>
    %109 = vector.shape_cast %108 : vector<1x512x128xbf16> to vector<512x128xbf16>
    %cst_86 = arith.constant dense<0.000000e+00> : vector<128x128xf32>
    %110 = tpu.matmul %107, %109, %cst_86 {dimension_numbers = #tpu.dot_dimension_numbers<[1], [0], [0], [1], [0, 0, 1, 1], [], []>} : vector<128x512xbf16>, vector<512x128xbf16>, vector<128x128xf32> -> vector<128x128xf32>
    %111 = arith.addf %86, %110 : vector<128x128xf32>
    %c13_i32_87 = arith.constant 13 : i32
    %112 = arith.addi %1, %c13_i32_87 : i32
    %c0_i32_88 = arith.constant 0 : i32
    %113 = arith.addi %112, %c0_i32_88 : i32
    %c0_89 = arith.constant 0 : index
    %114 = arith.index_cast %113 : i32 to index
    %c17_90 = arith.constant 17 : index
    %c0_91 = arith.constant 0 : index
    %115 = vector.load %arg7[%c0_89, %114, %c17_90, %c0_91] : memref<1x42x48x128xbf16, #tpu.memory_space<vmem>>, vector<1x8x16x128xbf16>
    %116 = vector.shape_cast %115 : vector<1x8x16x128xbf16> to vector<128x128xbf16>
    %c13_i32_92 = arith.constant 13 : i32
    %117 = arith.addi %1, %c13_i32_92 : i32
    %c0_i32_93 = arith.constant 0 : i32
    %118 = arith.addi %117, %c0_i32_93 : i32
    %c0_94 = arith.constant 0 : index
    %119 = arith.index_cast %118 : i32 to index
    %c21_95 = arith.constant 21 : index
    %c0_96 = arith.constant 0 : index
    %120 = vector.load %arg7[%c0_94, %119, %c21_95, %c0_96] : memref<1x42x48x128xbf16, #tpu.memory_space<vmem>>, vector<1x8x16x128xbf16>
    %121 = vector.shape_cast %120 : vector<1x8x16x128xbf16> to vector<128x128xbf16>
    %c13_i32_97 = arith.constant 13 : i32
    %122 = arith.addi %1, %c13_i32_97 : i32
    %c0_i32_98 = arith.constant 0 : i32
    %123 = arith.addi %122, %c0_i32_98 : i32
    %c0_99 = arith.constant 0 : index
    %124 = arith.index_cast %123 : i32 to index
    %c25_100 = arith.constant 25 : index
    %c0_101 = arith.constant 0 : index
    %125 = vector.load %arg7[%c0_99, %124, %c25_100, %c0_101] : memref<1x42x48x128xbf16, #tpu.memory_space<vmem>>, vector<1x8x16x128xbf16>
    %126 = vector.shape_cast %125 : vector<1x8x16x128xbf16> to vector<128x128xbf16>
    %c13_i32_102 = arith.constant 13 : i32
    %127 = arith.addi %1, %c13_i32_102 : i32
    %c0_i32_103 = arith.constant 0 : i32
    %128 = arith.addi %127, %c0_i32_103 : i32
    %c0_104 = arith.constant 0 : index
    %129 = arith.index_cast %128 : i32 to index
    %c29_105 = arith.constant 29 : index
    %c0_106 = arith.constant 0 : index
    %130 = vector.load %arg7[%c0_104, %129, %c29_105, %c0_106] : memref<1x42x48x128xbf16, #tpu.memory_space<vmem>>, vector<1x8x16x128xbf16>
    %131 = vector.shape_cast %130 : vector<1x8x16x128xbf16> to vector<128x128xbf16>
    %132 = tpu.concatenate %116, %121, %126, %131 in 1 : vector<128x128xbf16>, vector<128x128xbf16>, vector<128x128xbf16>, vector<128x128xbf16> -> vector<128x512xbf16>
    %c4 = arith.constant 4 : index
    %c0_107 = arith.constant 0 : index
    %c0_108 = arith.constant 0 : index
    %133 = vector.load %arg5[%c4, %c0_107, %c0_108] : memref<8x512x128xbf16, #tpu.memory_space<vmem>>, vector<1x512x128xbf16>
    %134 = vector.shape_cast %133 : vector<1x512x128xbf16> to vector<512x128xbf16>
    %cst_109 = arith.constant dense<0.000000e+00> : vector<128x128xf32>
    %135 = tpu.matmul %132, %134, %cst_109 {dimension_numbers = #tpu.dot_dimension_numbers<[1], [0], [0], [1], [0, 0, 1, 1], [], []>} : vector<128x512xbf16>, vector<512x128xbf16>, vector<128x128xf32> -> vector<128x128xf32>
    %136 = arith.addf %111, %135 : vector<128x128xf32>
    %c13_i32_110 = arith.constant 13 : i32
    %137 = arith.addi %1, %c13_i32_110 : i32
    %c1_i32 = arith.constant 1 : i32
    %138 = arith.addi %137, %c1_i32 : i32
    %c0_111 = arith.constant 0 : index
    %139 = arith.index_cast %138 : i32 to index
    %c15_112 = arith.constant 15 : index
    %c0_113 = arith.constant 0 : index
    %140 = vector.load %arg7[%c0_111, %139, %c15_112, %c0_113] : memref<1x42x48x128xbf16, #tpu.memory_space<vmem>>, vector<1x8x16x128xbf16>
    %141 = vector.shape_cast %140 : vector<1x8x16x128xbf16> to vector<128x128xbf16>
    %c13_i32_114 = arith.constant 13 : i32
    %142 = arith.addi %1, %c13_i32_114 : i32
    %c5_i32 = arith.constant 5 : i32
    %143 = arith.addi %142, %c5_i32 : i32
    %c0_115 = arith.constant 0 : index
    %144 = arith.index_cast %143 : i32 to index
    %c11_116 = arith.constant 11 : index
    %c0_117 = arith.constant 0 : index
    %145 = vector.load %arg7[%c0_115, %144, %c11_116, %c0_117] : memref<1x42x48x128xbf16, #tpu.memory_space<vmem>>, vector<1x8x16x128xbf16>
    %146 = vector.shape_cast %145 : vector<1x8x16x128xbf16> to vector<128x128xbf16>
    %c13_i32_118 = arith.constant 13 : i32
    %147 = arith.addi %1, %c13_i32_118 : i32
    %c9_i32 = arith.constant 9 : i32
    %148 = arith.addi %147, %c9_i32 : i32
    %c0_119 = arith.constant 0 : index
    %149 = arith.index_cast %148 : i32 to index
    %c7_120 = arith.constant 7 : index
    %c0_121 = arith.constant 0 : index
    %150 = vector.load %arg7[%c0_119, %149, %c7_120, %c0_121] : memref<1x42x48x128xbf16, #tpu.memory_space<vmem>>, vector<1x8x16x128xbf16>
    %151 = vector.shape_cast %150 : vector<1x8x16x128xbf16> to vector<128x128xbf16>
    %c13_i32_122 = arith.constant 13 : i32
    %152 = arith.addi %1, %c13_i32_122 : i32
    %c13_i32_123 = arith.constant 13 : i32
    %153 = arith.addi %152, %c13_i32_123 : i32
    %c0_124 = arith.constant 0 : index
    %154 = arith.index_cast %153 : i32 to index
    %c3_125 = arith.constant 3 : index
    %c0_126 = arith.constant 0 : index
    %155 = vector.load %arg7[%c0_124, %154, %c3_125, %c0_126] : memref<1x42x48x128xbf16, #tpu.memory_space<vmem>>, vector<1x8x16x128xbf16>
    %156 = vector.shape_cast %155 : vector<1x8x16x128xbf16> to vector<128x128xbf16>
    %157 = tpu.concatenate %141, %146, %151, %156 in 1 : vector<128x128xbf16>, vector<128x128xbf16>, vector<128x128xbf16>, vector<128x128xbf16> -> vector<128x512xbf16>
    %c5 = arith.constant 5 : index
    %c0_127 = arith.constant 0 : index
    %c0_128 = arith.constant 0 : index
    %158 = vector.load %arg5[%c5, %c0_127, %c0_128] : memref<8x512x128xbf16, #tpu.memory_space<vmem>>, vector<1x512x128xbf16>
    %159 = vector.shape_cast %158 : vector<1x512x128xbf16> to vector<512x128xbf16>
    %cst_129 = arith.constant dense<0.000000e+00> : vector<128x128xf32>
    %160 = tpu.matmul %157, %159, %cst_129 {dimension_numbers = #tpu.dot_dimension_numbers<[1], [0], [0], [1], [0, 0, 1, 1], [], []>} : vector<128x512xbf16>, vector<512x128xbf16>, vector<128x128xf32> -> vector<128x128xf32>
    %161 = arith.addf %136, %160 : vector<128x128xf32>
    %c13_i32_130 = arith.constant 13 : i32
    %162 = arith.addi %1, %c13_i32_130 : i32
    %c1_i32_131 = arith.constant 1 : i32
    %163 = arith.addi %162, %c1_i32_131 : i32
    %c0_132 = arith.constant 0 : index
    %164 = arith.index_cast %163 : i32 to index
    %c16_133 = arith.constant 16 : index
    %c0_134 = arith.constant 0 : index
    %165 = vector.load %arg7[%c0_132, %164, %c16_133, %c0_134] : memref<1x42x48x128xbf16, #tpu.memory_space<vmem>>, vector<1x8x16x128xbf16>
    %166 = vector.shape_cast %165 : vector<1x8x16x128xbf16> to vector<128x128xbf16>
    %c13_i32_135 = arith.constant 13 : i32
    %167 = arith.addi %1, %c13_i32_135 : i32
    %c5_i32_136 = arith.constant 5 : i32
    %168 = arith.addi %167, %c5_i32_136 : i32
    %c0_137 = arith.constant 0 : index
    %169 = arith.index_cast %168 : i32 to index
    %c16_138 = arith.constant 16 : index
    %c0_139 = arith.constant 0 : index
    %170 = vector.load %arg7[%c0_137, %169, %c16_138, %c0_139] : memref<1x42x48x128xbf16, #tpu.memory_space<vmem>>, vector<1x8x16x128xbf16>
    %171 = vector.shape_cast %170 : vector<1x8x16x128xbf16> to vector<128x128xbf16>
    %c13_i32_140 = arith.constant 13 : i32
    %172 = arith.addi %1, %c13_i32_140 : i32
    %c9_i32_141 = arith.constant 9 : i32
    %173 = arith.addi %172, %c9_i32_141 : i32
    %c0_142 = arith.constant 0 : index
    %174 = arith.index_cast %173 : i32 to index
    %c16_143 = arith.constant 16 : index
    %c0_144 = arith.constant 0 : index
    %175 = vector.load %arg7[%c0_142, %174, %c16_143, %c0_144] : memref<1x42x48x128xbf16, #tpu.memory_space<vmem>>, vector<1x8x16x128xbf16>
    %176 = vector.shape_cast %175 : vector<1x8x16x128xbf16> to vector<128x128xbf16>
    %c13_i32_145 = arith.constant 13 : i32
    %177 = arith.addi %1, %c13_i32_145 : i32
    %c13_i32_146 = arith.constant 13 : i32
    %178 = arith.addi %177, %c13_i32_146 : i32
    %c0_147 = arith.constant 0 : index
    %179 = arith.index_cast %178 : i32 to index
    %c16_148 = arith.constant 16 : index
    %c0_149 = arith.constant 0 : index
    %180 = vector.load %arg7[%c0_147, %179, %c16_148, %c0_149] : memref<1x42x48x128xbf16, #tpu.memory_space<vmem>>, vector<1x8x16x128xbf16>
    %181 = vector.shape_cast %180 : vector<1x8x16x128xbf16> to vector<128x128xbf16>
    %182 = tpu.concatenate %166, %171, %176, %181 in 1 : vector<128x128xbf16>, vector<128x128xbf16>, vector<128x128xbf16>, vector<128x128xbf16> -> vector<128x512xbf16>
    %c6 = arith.constant 6 : index
    %c0_150 = arith.constant 0 : index
    %c0_151 = arith.constant 0 : index
    %183 = vector.load %arg5[%c6, %c0_150, %c0_151] : memref<8x512x128xbf16, #tpu.memory_space<vmem>>, vector<1x512x128xbf16>
    %184 = vector.shape_cast %183 : vector<1x512x128xbf16> to vector<512x128xbf16>
    %cst_152 = arith.constant dense<0.000000e+00> : vector<128x128xf32>
    %185 = tpu.matmul %182, %184, %cst_152 {dimension_numbers = #tpu.dot_dimension_numbers<[1], [0], [0], [1], [0, 0, 1, 1], [], []>} : vector<128x512xbf16>, vector<512x128xbf16>, vector<128x128xf32> -> vector<128x128xf32>
    %186 = arith.addf %161, %185 : vector<128x128xf32>
    %c13_i32_153 = arith.constant 13 : i32
    %187 = arith.addi %1, %c13_i32_153 : i32
    %c1_i32_154 = arith.constant 1 : i32
    %188 = arith.addi %187, %c1_i32_154 : i32
    %c0_155 = arith.constant 0 : index
    %189 = arith.index_cast %188 : i32 to index
    %c17_156 = arith.constant 17 : index
    %c0_157 = arith.constant 0 : index
    %190 = vector.load %arg7[%c0_155, %189, %c17_156, %c0_157] : memref<1x42x48x128xbf16, #tpu.memory_space<vmem>>, vector<1x8x16x128xbf16>
    %191 = vector.shape_cast %190 : vector<1x8x16x128xbf16> to vector<128x128xbf16>
    %c13_i32_158 = arith.constant 13 : i32
    %192 = arith.addi %1, %c13_i32_158 : i32
    %c5_i32_159 = arith.constant 5 : i32
    %193 = arith.addi %192, %c5_i32_159 : i32
    %c0_160 = arith.constant 0 : index
    %194 = arith.index_cast %193 : i32 to index
    %c21_161 = arith.constant 21 : index
    %c0_162 = arith.constant 0 : index
    %195 = vector.load %arg7[%c0_160, %194, %c21_161, %c0_162] : memref<1x42x48x128xbf16, #tpu.memory_space<vmem>>, vector<1x8x16x128xbf16>
    %196 = vector.shape_cast %195 : vector<1x8x16x128xbf16> to vector<128x128xbf16>
    %c13_i32_163 = arith.constant 13 : i32
    %197 = arith.addi %1, %c13_i32_163 : i32
    %c9_i32_164 = arith.constant 9 : i32
    %198 = arith.addi %197, %c9_i32_164 : i32
    %c0_165 = arith.constant 0 : index
    %199 = arith.index_cast %198 : i32 to index
    %c25_166 = arith.constant 25 : index
    %c0_167 = arith.constant 0 : index
    %200 = vector.load %arg7[%c0_165, %199, %c25_166, %c0_167] : memref<1x42x48x128xbf16, #tpu.memory_space<vmem>>, vector<1x8x16x128xbf16>
    %201 = vector.shape_cast %200 : vector<1x8x16x128xbf16> to vector<128x128xbf16>
    %c13_i32_168 = arith.constant 13 : i32
    %202 = arith.addi %1, %c13_i32_168 : i32
    %c13_i32_169 = arith.constant 13 : i32
    %203 = arith.addi %202, %c13_i32_169 : i32
    %c0_170 = arith.constant 0 : index
    %204 = arith.index_cast %203 : i32 to index
    %c29_171 = arith.constant 29 : index
    %c0_172 = arith.constant 0 : index
    %205 = vector.load %arg7[%c0_170, %204, %c29_171, %c0_172] : memref<1x42x48x128xbf16, #tpu.memory_space<vmem>>, vector<1x8x16x128xbf16>
    %206 = vector.shape_cast %205 : vector<1x8x16x128xbf16> to vector<128x128xbf16>
    %207 = tpu.concatenate %191, %196, %201, %206 in 1 : vector<128x128xbf16>, vector<128x128xbf16>, vector<128x128xbf16>, vector<128x128xbf16> -> vector<128x512xbf16>
    %c7_173 = arith.constant 7 : index
    %c0_174 = arith.constant 0 : index
    %c0_175 = arith.constant 0 : index
    %208 = vector.load %arg5[%c7_173, %c0_174, %c0_175] : memref<8x512x128xbf16, #tpu.memory_space<vmem>>, vector<1x512x128xbf16>
    %209 = vector.shape_cast %208 : vector<1x512x128xbf16> to vector<512x128xbf16>
    %cst_176 = arith.constant dense<0.000000e+00> : vector<128x128xf32>
    %210 = tpu.matmul %207, %209, %cst_176 {dimension_numbers = #tpu.dot_dimension_numbers<[1], [0], [0], [1], [0, 0, 1, 1], [], []>} : vector<128x512xbf16>, vector<512x128xbf16>, vector<128x128xf32> -> vector<128x128xf32>
    %211 = arith.addf %186, %210 : vector<128x128xf32>
    %c0_177 = arith.constant 0 : index
    %c0_178 = arith.constant 0 : index
    %212 = vector.load %arg4[%c0_177, %c0_178] : memref<1x128xf32, #tpu.memory_space<vmem>>, vector<1x128xf32>
    %213 = vector.broadcast %212 : vector<1x128xf32> to vector<128x128xf32>
    %214 = arith.addf %211, %213 : vector<128x128xf32>
    %215 = vector.shape_cast %214 : vector<128x128xf32> to vector<1x8x16x128xf32>
    %c0_179 = arith.constant 0 : index
    %c0_180 = arith.constant 0 : index
    %c0_181 = arith.constant 0 : index
    %c0_182 = arith.constant 0 : index
    %216 = vector.load %arg6[%c0_179, %c0_180, %c0_181, %c0_182] : memref<1x8x16x128xf32, #tpu.memory_space<vmem>>, vector<1x8x16x128xf32>
    tpu.vector_store %arg6[%c0_179, %c0_180, %c0_181, %c0_182], %215 {strides = array<i32>} : memref<1x8x16x128xf32, #tpu.memory_space<vmem>>, vector<1x8x16x128xf32>,
    return
  }
  func.func @transform_0(%arg0: i32, %arg1: i32) -> (i32, i32, i32, i32) {
    %c0_i32 = arith.constant 0 : i32
    %c0_i32_0 = arith.constant 0 : i32
    %c0_i32_1 = arith.constant 0 : i32
    %c0_i32_2 = arith.constant 0 : i32
    return %arg0, %c0_i32, %c0_i32_0, %c0_i32_1 : i32, i32, i32, i32
  }
  func.func @transform_1(%arg0: i32, %arg1: i32) -> (i32, i32) {
    %c0_i32 = arith.constant 0 : i32
    %c0_i32_0 = arith.constant 0 : i32
    %c0_i32_1 = arith.constant 0 : i32
    return %c0_i32, %c0_i32_0 : i32, i32
  }
  func.func @transform_2(%arg0: i32, %arg1: i32) -> (i32, i32) {
    %c0_i32 = arith.constant 0 : i32
    %c0_i32_0 = arith.constant 0 : i32
    %c0_i32_1 = arith.constant 0 : i32
    return %c0_i32, %c0_i32_0 : i32, i32
  }
  func.func @transform_3(%arg0: i32, %arg1: i32) -> (i32, i32, i32) {
    %c0_i32 = arith.constant 0 : i32
    %c0_i32_0 = arith.constant 0 : i32
    %c0_i32_1 = arith.constant 0 : i32
    %c0_i32_2 = arith.constant 0 : i32
    return %c0_i32, %c0_i32_0, %c0_i32_1 : i32, i32, i32
  }
  func.func @transform_4(%arg0: i32, %arg1: i32) -> (i32, i32, i32, i32) {
    %c0_i32 = arith.constant 0 : i32
    %c0_i32_0 = arith.constant 0 : i32
    %c0_i32_1 = arith.constant 0 : i32
    return %arg0, %arg1, %c0_i32, %c0_i32_0 : i32, i32, i32, i32
  }
}

</mosaic_0001>

<llo_original>
// kernel: _lambda_.1
$region0: #{_lambda_.1}
  #allocation0 [shape = 'u32[]', space=smem, size = 0x4, offset = 0x4, fixed_abs, tag = 'smem constant byte address 0x4 - core index']
  #allocation1 [shape = 'u32[144,128]{1,0:T(1,128)}', space=vmem, size = 0x12000, scoped, tag = 'internal scratch']
  #allocation2 [shape = 'bf16[1,42,48,128]{3,2,1,0:T(8,128)(2,1)}', space=vmem, size = 0x7e000, scoped, tag = 'scratch operand']
  %s0 = inlined_call_operand.vmem [shape: f32[2,16,16,128], index: 0, kind: input, shape index: {}]
  %s1 = inlined_call_operand.vmem [shape: bf16[128,128], index: 1, kind: input, shape index: {}]
  %s2 = inlined_call_operand.vmem [shape: f32[1,128], index: 2, kind: input, shape index: {}]
  %s3 = inlined_call_operand.vmem [shape: bf16[8,512,128], index: 3, kind: input, shape index: {}]
  %s4 = inlined_call_operand.hbm [shape: f32[2,16,16,128], index: 4, kind: output, shape index: {}]
  %s5 = sld [smem:[#allocation0]]
  $region53: #{_lambda_.1} parent=0
    _
  %s7 = ssub.s32 1, %s5
  %s8 = scalar_select 0, %s7, %s5
  $region1: #{_lambda_.1} parent=0
    #allocation3 [shape = 'u8[131072]{0}', space=vmem, size = 0x20000, scoped, tag = 'output window, operand 0']
    #allocation4 [shape = 's32[2]{0}', space=sflag, size = 0x8, scoped, tag = 'scoped memory for _lambda_.1']
    %9 = vsyncpa [#allocation4], 0
    %s10 = scalar_lea.sflag [#allocation4], 1
    %11 = vsyncpa %s10, 0
    loop: start=0, step=1, limit=6
    $region2: #{_lambda_.1} parent=1 // loop_pre_header
      _
    $region3: #{_lambda_.1} parent=1 // loop_header
      %s13 = sphi 0, %s17
      %p14 = scmp.ge.s32.totalorder %s13, 6
      %s20 = sphi 0, %s32
      %s21 = sphi 0, %s28
      %s22 = sphi 0, %s20
      %s23 = sphi 0, %s21
      %s24 = sphi 0, %s22
      %s25 = sphi 0, %s23
      %s35 = sphi 0, %s37
      %s38 = sphi 0, %s35
      %s39 = sphi 0, %s38
      %s55 = sphi 0, %s39
      %s59 = sphi 0, %s59
      %s61 = sphi 0, %s59
      %s62 = sphi 0, %s61
      %s76 = sphi 0, %s62
      %s80 = sphi 0, %s80
      %s82 = sphi 0, %s80
      %s83 = sphi 0, %s82
      %s97 = sphi 0, %s83
      %s101 = sphi 0, %s101
      %s103 = sphi 0, %s101
      %s104 = sphi 0, %s103
      %s118 = sphi 0, %s104
      %s126 = sphi 0, %s128
      %s129 = sphi 0, %s126
      %s130 = sphi 0, %s129
      %s146 = sphi 0, %s130
    $region4: #{_lambda_.1} parent=1 // loop_header_branch
      %16 = sbr.rel (%p14) target = $region8
    $region5: #{_lambda_.1} parent=1 // loop_body
      %s18 = ssub.s32 %s13, 1
      %s19 = ssub.s32 %s13, 2
      %s26 = sadd.s32 1, %s21
      %p27 = scmp.ge.s32.totalorder %s26, 2
      %s28 = scalar_select %p27, 0, %s26
      %s29 = sadd.s32 1, %s20
      %s30 = scalar_select %p27, %s29, %s20
      %p31 = scmp.ge.s32.totalorder %s30, 2
      %s32 = scalar_select %p31, 0, %s30
      %s33 = ssub.s32 %s20, %s32
      %p34 = scmp.eq.s32.totalorder %s33, 0
      %s36 = sadd.s32 %s35, 1
      %s37 = scalar_select %p34, %s35, %s36
      %p40 = pneg %p34
      %p41 = scmp.eq.s32.totalorder %s13, 3
      %p42 = por %p40, %p41
      %p43 = scmp.ne.s32.totalorder %s35, %s38
      %p44 = scmp.eq.s32.totalorder %s13, 0
      %p45 = por %p43, %p44
      %p46 = scmp.ne.s32.totalorder %s35, %s38
      %p47 = scmp.eq.s32.totalorder %s18, 3
      %p48 = por %p46, %p47
      %p49 = scmp.ne.s32.totalorder %s38, %s39
      %p50 = scmp.eq.s32.totalorder %s18, 0
      %p51 = por %p49, %p50
      %p52 = scmp.ne.s32.totalorder %s38, %s39
      %p53 = scmp.eq.s32.totalorder %s19, 3
      %p54 = por %p52, %p53
      %p56 = scmp.ne.s32.totalorder %s39, %s55
      %p57 = scmp.eq.s32.totalorder %s19, 0
      %p58 = por %p56, %p57
      %s60 = sadd.s32 %s59, 1
      %p63 = scmp.eq.s32.totalorder %s13, 3
      %p64 = scmp.ne.s32.totalorder %s59, %s61
      %p65 = scmp.eq.s32.totalorder %s13, 0
      %p66 = por %p64, %p65
      %p67 = scmp.ne.s32.totalorder %s59, %s61
      %p68 = scmp.eq.s32.totalorder %s18, 3
      %p69 = por %p67, %p68
      %p70 = scmp.ne.s32.totalorder %s61, %s62
      %p71 = scmp.eq.s32.totalorder %s18, 0
      %p72 = por %p70, %p71
      %p73 = scmp.ne.s32.totalorder %s61, %s62
      %p74 = scmp.eq.s32.totalorder %s19, 3
      %p75 = por %p73, %p74
      %p77 = scmp.ne.s32.totalorder %s62, %s76
      %p78 = scmp.eq.s32.totalorder %s19, 0
      %p79 = por %p77, %p78
      %s81 = sadd.s32 %s80, 1
      %p84 = scmp.eq.s32.totalorder %s13, 3
      %p85 = scmp.ne.s32.totalorder %s80, %s82
      %p86 = scmp.eq.s32.totalorder %s13, 0
      %p87 = por %p85, %p86
      %p88 = scmp.ne.s32.totalorder %s80, %s82
      %p89 = scmp.eq.s32.totalorder %s18, 3
      %p90 = por %p88, %p89
      %p91 = scmp.ne.s32.totalorder %s82, %s83
      %p92 = scmp.eq.s32.totalorder %s18, 0
      %p93 = por %p91, %p92
      %p94 = scmp.ne.s32.totalorder %s82, %s83
      %p95 = scmp.eq.s32.totalorder %s19, 3
      %p96 = por %p94, %p95
      %p98 = scmp.ne.s32.totalorder %s83, %s97
      %p99 = scmp.eq.s32.totalorder %s19, 0
      %p100 = por %p98, %p99
      %s102 = sadd.s32 %s101, 1
      %p105 = scmp.eq.s32.totalorder %s13, 3
      %p106 = scmp.ne.s32.totalorder %s101, %s103
      %p107 = scmp.eq.s32.totalorder %s13, 0
      %p108 = por %p106, %p107
      %p109 = scmp.ne.s32.totalorder %s101, %s103
      %p110 = scmp.eq.s32.totalorder %s18, 3
      %p111 = por %p109, %p110
      %p112 = scmp.ne.s32.totalorder %s103, %s104
      %p113 = scmp.eq.s32.totalorder %s18, 0
      %p114 = por %p112, %p113
      %p115 = scmp.ne.s32.totalorder %s103, %s104
      %p116 = scmp.eq.s32.totalorder %s19, 3
      %p117 = por %p115, %p116
      %p119 = scmp.ne.s32.totalorder %s104, %s118
      %p120 = scmp.eq.s32.totalorder %s19, 0
      %p121 = por %p119, %p120
      %s122 = ssub.s32 %s20, %s32
      %s123 = ssub.s32 %s21, %s28
      %s124 = sor.u32 %s122, %s123
      %p125 = scmp.eq.s32.totalorder %s124, 0
      %s127 = sadd.s32 %s126, 1
      %s128 = scalar_select %p125, %s126, %s127
      %p131 = pneg %p125
      %p132 = scmp.eq.s32.totalorder %s13, 3
      %p133 = por %p131, %p132
      %p134 = scmp.ne.s32.totalorder %s126, %s129
      %p135 = scmp.eq.s32.totalorder %s13, 0
      %p136 = por %p134, %p135
      %p137 = scmp.ne.s32.totalorder %s126, %s129
      %p138 = scmp.eq.s32.totalorder %s18, 3
      %p139 = por %p137, %p138
      %p140 = scmp.ne.s32.totalorder %s129, %s130
      %p141 = scmp.eq.s32.totalorder %s18, 0
      %p142 = por %p140, %p141
      %p143 = scmp.ne.s32.totalorder %s129, %s130
      %p144 = scmp.eq.s32.totalorder %s19, 3
      %p145 = por %p143, %p144
      %p147 = scmp.ne.s32.totalorder %s130, %s146
      %p148 = scmp.eq.s32.totalorder %s19, 0
      %p149 = por %p147, %p148
      %p150 = scmp.le.s32.totalorder 1, %s13
      %p151 = scmp.lt.s32.totalorder %s13, 5
      %p152 = pnand %p150, %p151
      %p153 = pneg %p152
      // Predicated region
      $region9: #{_lambda_.1} parent=5 // pred_check
        _
      $region10: #{_lambda_.1} parent=5 // pred_check_branch
        %155 = sbr.rel (%p152) target = $region12
      $region11: #{_lambda_.1} parent=5 // pred_region
        %s156 = ssub.s32 %s13, 1
        // Predicated region
        $region13: #{_lambda_.1} parent=11 // pred_check
          %p157 = pneg %p72
        $region14: #{_lambda_.1} parent=11 // pred_check_branch
          %159 = sbr.rel (%p157) target = $region16
        $region15: #{_lambda_.1} parent=11 // pred_region
          _
        $region16: #{_lambda_.1} parent=11 // pred_fallthru
          _
        // Predicated region
        $region17: #{_lambda_.1} parent=11 // pred_check
          %p160 = pneg %p93
        $region18: #{_lambda_.1} parent=11 // pred_check_branch
          %162 = sbr.rel (%p160) target = $region20
        $region19: #{_lambda_.1} parent=11 // pred_region
          _
        $region20: #{_lambda_.1} parent=11 // pred_fallthru
          _
        // Predicated region
        $region21: #{_lambda_.1} parent=11 // pred_check
          %p163 = pneg %p114
        $region22: #{_lambda_.1} parent=11 // pred_check_branch
          %165 = sbr.rel (%p163) target = $region24
        $region23: #{_lambda_.1} parent=11 // pred_region
          _
        $region24: #{_lambda_.1} parent=11 // pred_fallthru
          _
      $region12: #{_lambda_.1} parent=5 // pred_fallthru
        _
      %p166 = scmp.lt.s32.totalorder %s13, 4
      // Predicated region
      $region25: #{_lambda_.1} parent=5 // pred_check
        %p167 = pneg %p166
      $region26: #{_lambda_.1} parent=5 // pred_check_branch
        %169 = sbr.rel (%p167) target = $region28
      $region27: #{_lambda_.1} parent=5 // pred_region
        // Predicated region
        $region29: #{_lambda_.1} parent=27 // pred_check
          %p170 = pneg %p45
        $region30: #{_lambda_.1} parent=27 // pred_check_branch
          %172 = sbr.rel (%p170) target = $region32
        $region31: #{_lambda_.1} parent=27 // pred_region
          %p173 = scmp.lt.s32.totalorder %s20, 1
          %s174 = scalar_select %p173, %s20, 1
          %s175 = smul.addr %s174, 32
          %s176 = smul.addr %s175, 8
          %s177 = scalar_lea.vmem %s0, %s176
        $region32: #{_lambda_.1} parent=27 // pred_fallthru
          _
      $region28: #{_lambda_.1} parent=5 // pred_fallthru
        _
      %p178 = scmp.le.s32.totalorder 1, %s13
      %p179 = scmp.lt.s32.totalorder %s13, 5
      %p180 = pnand %p178, %p179
      %p181 = pneg %p180
      // Predicated region
      $region33: #{_lambda_.1} parent=5 // pred_check
        _
      $region34: #{_lambda_.1} parent=5 // pred_check_branch
        %183 = sbr.rel (%p180) target = $region36
      $region35: #{_lambda_.1} parent=5 // pred_region
        %s184 = ssub.s32 %s13, 1
        %p185 = scmp.lt.s32.totalorder %s22, 1
        %s186 = scalar_select %p185, %s22, 1
        %s187 = smul.addr %s186, 32
        %s188 = smul.addr %s187, 8
        %s189 = scalar_lea.vmem %s0, %s188
        %p190 = pneg %p51
        %p191 = pneg %p48
        %p192 = pneg %p72
        %p193 = pneg %p69
        %p194 = pneg %p93
        %p195 = pneg %p90
        %p196 = pneg %p114
        %p197 = pneg %p111
        %p198 = pneg %p142
        %p199 = pneg %p139
        %s200 = sand.u32 %s129, 1
        %s201 = scalar_lea.sflag [#allocation4], %s200
        %s202 = sand.u32 %s129, 1
        %s203 = smul.addr %s202, 128
        %s204 = scalar_lea.vmem [#allocation3], %s203
        %p205 = scmp.lt.s32.totalorder %s22, 1
        %s206 = scalar_select %p205, %s22, 1
        %s207 = smul.addr %s206, 32
        %s208 = smul.addr %s207, 8
        %s209 = scalar_lea.vmem %s0, %s208
        %s210 = smul.u32 8, %s23
        %s212 = smul.u32 %s23, 8
        %p213 = scmp.eq.s32.totalorder %s23, 0
        // Predicated region
        $region37: #{_lambda_.1} parent=35 // pred_check
          %p214 = pneg %p213
        $region38: #{_lambda_.1} parent=35 // pred_check_branch
          %216 = sbr.rel (%p214) target = $region40
        $region39: #{_lambda_.1} parent=35 // pred_region
          %217 = vst [vmem:[#allocation2] sm:$0xf] 0
          %218 = vst [vmem:[#allocation2 + $0x4] sm:$0xf] 0
          %219 = vst [vmem:[#allocation2 + $0x8] sm:$0xf] 0
          %220 = vst [vmem:[#allocation2 + $0xc] sm:$0xf] 0
          %221 = vst [vmem:[#allocation2 + $0x10] sm:$0xf] 0
          %222 = vst [vmem:[#allocation2 + $0x14] sm:$0xf] 0
          %223 = vst [vmem:[#allocation2 + $0x18] sm:$0xf] 0
          %224 = vst [vmem:[#allocation2 + $0x1c] sm:$0xf] 0
          %225 = vst [vmem:[#allocation2 + $0x20] sm:$0xf] 0
          %226 = vst [vmem:[#allocation2 + $0x24] sm:$0xf] 0
          %227 = vst [vmem:[#allocation2 + $0x28] sm:$0xf] 0
          %228 = vst [vmem:[#allocation2 + $0x2c] sm:$0xf] 0
          %229 = vst [vmem:[#allocation2 + $0x30] sm:$0xf] 0
          %230 = vst [vmem:[#allocation2 + $0x34] sm:$0xf] 0
          %231 = vst [vmem:[#allocation2 + $0x38] sm:$0xf] 0
          %232 = vst [vmem:[#allocation2 + $0x3c] sm:$0xf] 0
          %233 = vst [vmem:[#allocation2 + $0x40] sm:$0xf] 0
          %234 = vst [vmem:[#allocation2 + $0x44] sm:$0xf] 0
          %235 = vst [vmem:[#allocation2 + $0x48] sm:$0xf] 0
          %236 = vst [vmem:[#allocation2 + $0x4c] sm:$0xf] 0
          %237 = vst [vmem:[#allocation2 + $0x50] sm:$0xf] 0
          %238 = vst [vmem:[#allocation2 + $0x54] sm:$0xf] 0
          %239 = vst [vmem:[#allocation2 + $0x58] sm:$0xf] 0
          %240 = vst [vmem:[#allocation2 + $0x5c] sm:$0xf] 0
          %241 = vst [vmem:[#allocation2 + $0x60] sm:$0xf] 0
          %242 = vst [vmem:[#allocation2 + $0x64] sm:$0xf] 0
          %243 = vst [vmem:[#allocation2 + $0x68] sm:$0xf] 0
          %244 = vst [vmem:[#allocation2 + $0x6c] sm:$0xf] 0
          %245 = vst [vmem:[#allocation2 + $0x70] sm:$0xf] 0
          %246 = vst [vmem:[#allocation2 + $0x74] sm:$0xf] 0
          %247 = vst [vmem:[#allocation2 + $0x78] sm:$0xf] 0
          %248 = vst [vmem:[#allocation2 + $0x7c] sm:$0xf] 0
          %249 = vst [vmem:[#allocation2 + $0x80] sm:$0xf] 0
          %250 = vst [vmem:[#allocation2 + $0x84] sm:$0xf] 0
          %251 = vst [vmem:[#allocation2 + $0x88] sm:$0xf] 0
          %252 = vst [vmem:[#allocation2 + $0x8c] sm:$0xf] 0
          %253 = vst [vmem:[#allocation2 + $0x90] sm:$0xf] 0
          %254 = vst [vmem:[#allocation2 + $0x94] sm:$0xf] 0
          %255 = vst [vmem:[#allocation2 + $0x98] sm:$0xf] 0
          %256 = vst [vmem:[#allocation2 + $0x9c] sm:$0xf] 0
          %257 = vst [vmem:[#allocation2 + $0xa0] sm:$0xf] 0
          %258 = vst [vmem:[#allocation2 + $0xa4] sm:$0xf] 0
          %259 = vst [vmem:[#allocation2 + $0xa8] sm:$0xf] 0
          %260 = vst [vmem:[#allocation2 + $0xac] sm:$0xf] 0
          %261 = vst [vmem:[#allocation2 + $0xb0] sm:$0xf] 0
          %262 = vst [vmem:[#allocation2 + $0xb4] sm:$0xf] 0
          %263 = vst [vmem:[#allocation2 + $0xb8] sm:$0xf] 0
          %264 = vst [vmem:[#allocation2 + $0xbc] sm:$0xf] 0
          %265 = vst [vmem:[#allocation2 + $0xc0] sm:$0xf] 0
          %266 = vst [vmem:[#allocation2 + $0xc4] sm:$0xf] 0
          %267 = vst [vmem:[#allocation2 + $0xc8] sm:$0xf] 0
          %268 = vst [vmem:[#allocation2 + $0xcc] sm:$0xf] 0
          %269 = vst [vmem:[#allocation2 + $0xd0] sm:$0xf] 0
          %270 = vst [vmem:[#allocation2 + $0xd4] sm:$0xf] 0
          %271 = vst [vmem:[#allocation2 + $0xd8] sm:$0xf] 0
          %272 = vst [vmem:[#allocation2 + $0xdc] sm:$0xf] 0
          %273 = vst [vmem:[#allocation2 + $0xe0] sm:$0xf] 0
          %274 = vst [vmem:[#allocation2 + $0xe4] sm:$0xf] 0
          %275 = vst [vmem:[#allocation2 + $0xe8] sm:$0xf] 0
          %276 = vst [vmem:[#allocation2 + $0xec] sm:$0xf] 0
          %277 = vst [vmem:[#allocation2 + $0xf0] sm:$0xf] 0
          %278 = vst [vmem:[#allocation2 + $0xf4] sm:$0xf] 0
          %279 = vst [vmem:[#allocation2 + $0xf8] sm:$0xf] 0
          %280 = vst [vmem:[#allocation2 + $0xfc] sm:$0xf] 0
          %281 = vst [vmem:[#allocation2 + $0x100] sm:$0xf] 0
          %282 = vst [vmem:[#allocation2 + $0x104] sm:$0xf] 0
          %283 = vst [vmem:[#allocation2 + $0x108] sm:$0xf] 0
          %284 = vst [vmem:[#allocation2 + $0x10c] sm:$0xf] 0
          %285 = vst [vmem:[#allocation2 + $0x110] sm:$0xf] 0
          %286 = vst [vmem:[#allocation2 + $0x114] sm:$0xf] 0
          %287 = vst [vmem:[#allocation2 + $0x118] sm:$0xf] 0
          %288 = vst [vmem:[#allocation2 + $0x11c] sm:$0xf] 0
          %289 = vst [vmem:[#allocation2 + $0x120] sm:$0xf] 0
          %290 = vst [vmem:[#allocation2 + $0x124] sm:$0xf] 0
          %291 = vst [vmem:[#allocation2 + $0x128] sm:$0xf] 0
          %292 = vst [vmem:[#allocation2 + $0x12c] sm:$0xf] 0
          %293 = vst [vmem:[#allocation2 + $0x130] sm:$0xf] 0
          %294 = vst [vmem:[#allocation2 + $0x134] sm:$0xf] 0
          %295 = vst [vmem:[#allocation2 + $0x138] sm:$0xf] 0
          %296 = vst [vmem:[#allocation2 + $0x13c] sm:$0xf] 0
          %297 = vst [vmem:[#allocation2 + $0x140] sm:$0xf] 0
          %298 = vst [vmem:[#allocation2 + $0x144] sm:$0xf] 0
          %299 = vst [vmem:[#allocation2 + $0x148] sm:$0xf] 0
          %300 = vst [vmem:[#allocation2 + $0x14c] sm:$0xf] 0
          %301 = vst [vmem:[#allocation2 + $0x150] sm:$0xf] 0
          %302 = vst [vmem:[#allocation2 + $0x154] sm:$0xf] 0
          %303 = vst [vmem:[#allocation2 + $0x158] sm:$0xf] 0
          %304 = vst [vmem:[#allocation2 + $0x15c] sm:$0xf] 0
          %305 = vst [vmem:[#allocation2 + $0x160] sm:$0xf] 0
          %306 = vst [vmem:[#allocation2 + $0x164] sm:$0xf] 0
          %307 = vst [vmem:[#allocation2 + $0x168] sm:$0xf] 0
          %308 = vst [vmem:[#allocation2 + $0x16c] sm:$0xf] 0
          %309 = vst [vmem:[#allocation2 + $0x170] sm:$0xf] 0
          %310 = vst [vmem:[#allocation2 + $0x174] sm:$0xf] 0
          %311 = vst [vmem:[#allocation2 + $0x178] sm:$0xf] 0
          %312 = vst [vmem:[#allocation2 + $0x17c] sm:$0xf] 0
          %313 = vst [vmem:[#allocation2 + $0x180] sm:$0xf] 0
          %314 = vst [vmem:[#allocation2 + $0x184] sm:$0xf] 0
          %315 = vst [vmem:[#allocation2 + $0x188] sm:$0xf] 0
          %316 = vst [vmem:[#allocation2 + $0x18c] sm:$0xf] 0
          %317 = vst [vmem:[#allocation2 + $0x190] sm:$0xf] 0
          %318 = vst [vmem:[#allocation2 + $0x194] sm:$0xf] 0
          %319 = vst [vmem:[#allocation2 + $0x198] sm:$0xf] 0
          %320 = vst [vmem:[#allocation2 + $0x19c] sm:$0xf] 0
          %321 = vst [vmem:[#allocation2 + $0x1a0] sm:$0xf] 0
          %322 = vst [vmem:[#allocation2 + $0x1a4] sm:$0xf] 0
          %323 = vst [vmem:[#allocation2 + $0x1a8] sm:$0xf] 0
          %324 = vst [vmem:[#allocation2 + $0x1ac] sm:$0xf] 0
          %325 = vst [vmem:[#allocation2 + $0x1b0] sm:$0xf] 0
          %326 = vst [vmem:[#allocation2 + $0x1b4] sm:$0xf] 0
          %327 = vst [vmem:[#allocation2 + $0x1b8] sm:$0xf] 0
          %328 = vst [vmem:[#allocation2 + $0x1bc] sm:$0xf] 0
          %329 = vst [vmem:[#allocation2 + $0x1c0] sm:$0xf] 0
          %330 = vst [vmem:[#allocation2 + $0x1c4] sm:$0xf] 0
          %331 = vst [vmem:[#allocation2 + $0x1c8] sm:$0xf] 0
          %332 = vst [vmem:[#allocation2 + $0x1cc] sm:$0xf] 0
          %333 = vst [vmem:[#allocation2 + $0x1d0] sm:$0xf] 0
          %334 = vst [vmem:[#allocation2 + $0x1d4] sm:$0xf] 0
          %335 = vst [vmem:[#allocation2 + $0x1d8] sm:$0xf] 0
          %336 = vst [vmem:[#allocation2 + $0x1dc] sm:$0xf] 0
          %337 = vst [vmem:[#allocation2 + $0x1e0] sm:$0xf] 0
          %338 = vst [vmem:[#allocation2 + $0x1e4] sm:$0xf] 0
          %339 = vst [vmem:[#allocation2 + $0x1e8] sm:$0xf] 0
          %340 = vst [vmem:[#allocation2 + $0x1ec] sm:$0xf] 0
          %341 = vst [vmem:[#allocation2 + $0x1f0] sm:$0xf] 0
          %342 = vst [vmem:[#allocation2 + $0x1f4] sm:$0xf] 0
          %343 = vst [vmem:[#allocation2 + $0x1f8] sm:$0xf] 0
          %344 = vst [vmem:[#allocation2 + $0x1fc] sm:$0xf] 0
          %345 = vst [vmem:[#allocation2 + $0x200] sm:$0xf] 0
          %346 = vst [vmem:[#allocation2 + $0x204] sm:$0xf] 0
          %347 = vst [vmem:[#allocation2 + $0x208] sm:$0xf] 0
          %348 = vst [vmem:[#allocation2 + $0x20c] sm:$0xf] 0
          %349 = vst [vmem:[#allocation2 + $0x210] sm:$0xf] 0
          %350 = vst [vmem:[#allocation2 + $0x214] sm:$0xf] 0
          %351 = vst [vmem:[#allocation2 + $0x218] sm:$0xf] 0
          %352 = vst [vmem:[#allocation2 + $0x21c] sm:$0xf] 0
          %353 = vst [vmem:[#allocation2 + $0x220] sm:$0xf] 0
          %354 = vst [vmem:[#allocation2 + $0x224] sm:$0xf] 0
          %355 = vst [vmem:[#allocation2 + $0x228] sm:$0xf] 0
          %356 = vst [vmem:[#allocation2 + $0x22c] sm:$0xf] 0
          %357 = vst [vmem:[#allocation2 + $0x230] sm:$0xf] 0
          %358 = vst [vmem:[#allocation2 + $0x234] sm:$0xf] 0
          %359 = vst [vmem:[#allocation2 + $0x238] sm:$0xf] 0
          %360 = vst [vmem:[#allocation2 + $0x23c] sm:$0xf] 0
          %361 = vst [vmem:[#allocation2 + $0x240] sm:$0xf] 0
          %362 = vst [vmem:[#allocation2 + $0x244] sm:$0xf] 0
          %363 = vst [vmem:[#allocation2 + $0x248] sm:$0xf] 0
          %364 = vst [vmem:[#allocation2 + $0x24c] sm:$0xf] 0
          %365 = vst [vmem:[#allocation2 + $0x250] sm:$0xf] 0
          %366 = vst [vmem:[#allocation2 + $0x254] sm:$0xf] 0
          %367 = vst [vmem:[#allocation2 + $0x258] sm:$0xf] 0
          %368 = vst [vmem:[#allocation2 + $0x25c] sm:$0xf] 0
          %369 = vst [vmem:[#allocation2 + $0x260] sm:$0xf] 0
          %370 = vst [vmem:[#allocation2 + $0x264] sm:$0xf] 0
          %371 = vst [vmem:[#allocation2 + $0x268] sm:$0xf] 0
          %372 = vst [vmem:[#allocation2 + $0x26c] sm:$0xf] 0
          %373 = vst [vmem:[#allocation2 + $0x270] sm:$0xf] 0
          %374 = vst [vmem:[#allocation2 + $0x274] sm:$0xf] 0
          %375 = vst [vmem:[#allocation2 + $0x278] sm:$0xf] 0
          %376 = vst [vmem:[#allocation2 + $0x27c] sm:$0xf] 0
          %377 = vst [vmem:[#allocation2 + $0x280] sm:$0xf] 0
          %378 = vst [vmem:[#allocation2 + $0x284] sm:$0xf] 0
          %379 = vst [vmem:[#allocation2 + $0x288] sm:$0xf] 0
          %380 = vst [vmem:[#allocation2 + $0x28c] sm:$0xf] 0
          %381 = vst [vmem:[#allocation2 + $0x290] sm:$0xf] 0
          %382 = vst [vmem:[#allocation2 + $0x294] sm:$0xf] 0
          %383 = vst [vmem:[#allocation2 + $0x298] sm:$0xf] 0
          %384 = vst [vmem:[#allocation2 + $0x29c] sm:$0xf] 0
          %385 = vst [vmem:[#allocation2 + $0x2a0] sm:$0xf] 0
          %386 = vst [vmem:[#allocation2 + $0x2a4] sm:$0xf] 0
          %387 = vst [vmem:[#allocation2 + $0x2a8] sm:$0xf] 0
          %388 = vst [vmem:[#allocation2 + $0x2ac] sm:$0xf] 0
          %389 = vst [vmem:[#allocation2 + $0x2b0] sm:$0xf] 0
          %390 = vst [vmem:[#allocation2 + $0x2b4] sm:$0xf] 0
          %391 = vst [vmem:[#allocation2 + $0x2b8] sm:$0xf] 0
          %392 = vst [vmem:[#allocation2 + $0x2bc] sm:$0xf] 0
          %393 = vst [vmem:[#allocation2 + $0x2c0] sm:$0xf] 0
          %394 = vst [vmem:[#allocation2 + $0x2c4] sm:$0xf] 0
          %395 = vst [vmem:[#allocation2 + $0x2c8] sm:$0xf] 0
          %396 = vst [vmem:[#allocation2 + $0x2cc] sm:$0xf] 0
          %397 = vst [vmem:[#allocation2 + $0x2d0] sm:$0xf] 0
          %398 = vst [vmem:[#allocation2 + $0x2d4] sm:$0xf] 0
          %399 = vst [vmem:[#allocation2 + $0x2d8] sm:$0xf] 0
          %400 = vst [vmem:[#allocation2 + $0x2dc] sm:$0xf] 0
          %401 = vst [vmem:[#allocation2 + $0x2e0] sm:$0xf] 0
          %402 = vst [vmem:[#allocation2 + $0x2e4] sm:$0xf] 0
          %403 = vst [vmem:[#allocation2 + $0x2e8] sm:$0xf] 0
          %404 = vst [vmem:[#allocation2 + $0x2ec] sm:$0xf] 0
          %405 = vst [vmem:[#allocation2 + $0x2f0] sm:$0xf] 0
          %406 = vst [vmem:[#allocation2 + $0x2f4] sm:$0xf] 0
          %407 = vst [vmem:[#allocation2 + $0x2f8] sm:$0xf] 0
          %408 = vst [vmem:[#allocation2 + $0x2fc] sm:$0xf] 0
          %409 = vst [vmem:[#allocation2 + $0x300] sm:$0xf] 0
          %410 = vst [vmem:[#allocation2 + $0x304] sm:$0xf] 0
          %411 = vst [vmem:[#allocation2 + $0x308] sm:$0xf] 0
          %412 = vst [vmem:[#allocation2 + $0x30c] sm:$0xf] 0
          %413 = vst [vmem:[#allocation2 + $0x310] sm:$0xf] 0
          %414 = vst [vmem:[#allocation2 + $0x314] sm:$0xf] 0
          %415 = vst [vmem:[#allocation2 + $0x318] sm:$0xf] 0
          %416 = vst [vmem:[#allocation2 + $0x31c] sm:$0xf] 0
          %417 = vst [vmem:[#allocation2 + $0x320] sm:$0xf] 0
          %418 = vst [vmem:[#allocation2 + $0x324] sm:$0xf] 0
          %419 = vst [vmem:[#allocation2 + $0x328] sm:$0xf] 0
          %420 = vst [vmem:[#allocation2 + $0x32c] sm:$0xf] 0
          %421 = vst [vmem:[#allocation2 + $0x330] sm:$0xf] 0
          %422 = vst [vmem:[#allocation2 + $0x334] sm:$0xf] 0
          %423 = vst [vmem:[#allocation2 + $0x338] sm:$0xf] 0
          %424 = vst [vmem:[#allocation2 + $0x33c] sm:$0xf] 0
          %425 = vst [vmem:[#allocation2 + $0x340] sm:$0xf] 0
          %426 = vst [vmem:[#allocation2 + $0x344] sm:$0xf] 0
          %427 = vst [vmem:[#allocation2 + $0x348] sm:$0xf] 0
          %428 = vst [vmem:[#allocation2 + $0x34c] sm:$0xf] 0
          %429 = vst [vmem:[#allocation2 + $0x350] sm:$0xf] 0
          %430 = vst [vmem:[#allocation2 + $0x354] sm:$0xf] 0
          %431 = vst [vmem:[#allocation2 + $0x358] sm:$0xf] 0
          %432 = vst [vmem:[#allocation2 + $0x35c] sm:$0xf] 0
          %433 = vst [vmem:[#allocation2 + $0x360] sm:$0xf] 0
          %434 = vst [vmem:[#allocation2 + $0x364] sm:$0xf] 0
          %435 = vst [vmem:[#allocation2 + $0x368] sm:$0xf] 0
          %436 = vst [vmem:[#allocation2 + $0x36c] sm:$0xf] 0
          %437 = vst [vmem:[#allocation2 + $0x370] sm:$0xf] 0
          %438 = vst [vmem:[#allocation2 + $0x374] sm:$0xf] 0
          %439 = vst [vmem:[#allocation2 + $0x378] sm:$0xf] 0
          %440 = vst [vmem:[#allocation2 + $0x37c] sm:$0xf] 0
          %441 = vst [vmem:[#allocation2 + $0x380] sm:$0xf] 0
          %442 = vst [vmem:[#allocation2 + $0x384] sm:$0xf] 0
          %443 = vst [vmem:[#allocation2 + $0x388] sm:$0xf] 0
          %444 = vst [vmem:[#allocation2 + $0x38c] sm:$0xf] 0
          %445 = vst [vmem:[#allocation2 + $0x390] sm:$0xf] 0
          %446 = vst [vmem:[#allocation2 + $0x394] sm:$0xf] 0
          %447 = vst [vmem:[#allocation2 + $0x398] sm:$0xf] 0
          %448 = vst [vmem:[#allocation2 + $0x39c] sm:$0xf] 0
          %449 = vst [vmem:[#allocation2 + $0x3a0] sm:$0xf] 0
          %450 = vst [vmem:[#allocation2 + $0x3a4] sm:$0xf] 0
          %451 = vst [vmem:[#allocation2 + $0x3a8] sm:$0xf] 0
          %452 = vst [vmem:[#allocation2 + $0x3ac] sm:$0xf] 0
          %453 = vst [vmem:[#allocation2 + $0x3b0] sm:$0xf] 0
          %454 = vst [vmem:[#allocation2 + $0x3b4] sm:$0xf] 0
          %455 = vst [vmem:[#allocation2 + $0x3b8] sm:$0xf] 0
          %456 = vst [vmem:[#allocation2 + $0x3bc] sm:$0xf] 0
          %457 = vst [vmem:[#allocation2 + $0x3c0] sm:$0xf] 0
          %458 = vst [vmem:[#allocation2 + $0x3c4] sm:$0xf] 0
          %459 = vst [vmem:[#allocation2 + $0x3c8] sm:$0xf] 0
          %460 = vst [vmem:[#allocation2 + $0x3cc] sm:$0xf] 0
          %461 = vst [vmem:[#allocation2 + $0x3d0] sm:$0xf] 0
          %462 = vst [vmem:[#allocation2 + $0x3d4] sm:$0xf] 0
          %463 = vst [vmem:[#allocation2 + $0x3d8] sm:$0xf] 0
          %464 = vst [vmem:[#allocation2 + $0x3dc] sm:$0xf] 0
          %465 = vst [vmem:[#allocation2 + $0x3e0] sm:$0xf] 0
          %466 = vst [vmem:[#allocation2 + $0x3e4] sm:$0xf] 0
          %467 = vst [vmem:[#allocation2 + $0x3e8] sm:$0xf] 0
          %468 = vst [vmem:[#allocation2 + $0x3ec] sm:$0xf] 0
          %v469 = vld [vmem:[%s209] sm:$0xff]
          %v470 = vld [vmem:[%s209 + $0x8] sm:$0xff]
          %v471 = vld [vmem:[%s209 + $0x10] sm:$0xff]
          %v472 = vld [vmem:[%s209 + $0x18] sm:$0xff]
          %v473 = vld [vmem:[%s209 + $0x20] sm:$0xff]
          %v474 = vld [vmem:[%s209 + $0x28] sm:$0xff]
          %v475 = vld [vmem:[%s209 + $0x30] sm:$0xff]
          %v476 = vld [vmem:[%s209 + $0x38] sm:$0xff]
          %v477 = vld [vmem:[%s209 + $0x40] sm:$0xff]
          %v478 = vld [vmem:[%s209 + $0x48] sm:$0xff]
          %v479 = vld [vmem:[%s209 + $0x50] sm:$0xff]
          %v480 = vld [vmem:[%s209 + $0x58] sm:$0xff]
          %v481 = vld [vmem:[%s209 + $0x60] sm:$0xff]
          %v482 = vld [vmem:[%s209 + $0x68] sm:$0xff]
          %v483 = vld [vmem:[%s209 + $0x70] sm:$0xff]
          %v484 = vld [vmem:[%s209 + $0x78] sm:$0xff]
          %v485 = vld [vmem:[%s209 + $0x80] sm:$0xff]
          %v486 = vld [vmem:[%s209 + $0x88] sm:$0xff]
          %v487 = vld [vmem:[%s209 + $0x90] sm:$0xff]
          %v488 = vld [vmem:[%s209 + $0x98] sm:$0xff]
          %v489 = vld [vmem:[%s209 + $0xa0] sm:$0xff]
          %v490 = vld [vmem:[%s209 + $0xa8] sm:$0xff]
          %v491 = vld [vmem:[%s209 + $0xb0] sm:$0xff]
          %v492 = vld [vmem:[%s209 + $0xb8] sm:$0xff]
          %v493 = vld [vmem:[%s209 + $0xc0] sm:$0xff]
          %v494 = vld [vmem:[%s209 + $0xc8] sm:$0xff]
          %v495 = vld [vmem:[%s209 + $0xd0] sm:$0xff]
          %v496 = vld [vmem:[%s209 + $0xd8] sm:$0xff]
          %v497 = vld [vmem:[%s209 + $0xe0] sm:$0xff]
          %v498 = vld [vmem:[%s209 + $0xe8] sm:$0xff]
          %v499 = vld [vmem:[%s209 + $0xf0] sm:$0xff]
          %v500 = vld [vmem:[%s209 + $0xf8] sm:$0xff]
          %v501 = vpack.c.bf16 %v470, %v469
          %v502 = vpack.c.bf16 %v472, %v471
          %v503 = vpack.c.bf16 %v474, %v473
          %v504 = vpack.c.bf16 %v476, %v475
          %v505 = vpack.c.bf16 %v478, %v477
          %v506 = vpack.c.bf16 %v480, %v479
          %v507 = vpack.c.bf16 %v482, %v481
          %v508 = vpack.c.bf16 %v484, %v483
          %v509 = vpack.c.bf16 %v486, %v485
          %v510 = vpack.c.bf16 %v488, %v487
          %v511 = vpack.c.bf16 %v490, %v489
          %v512 = vpack.c.bf16 %v492, %v491
          %v513 = vpack.c.bf16 %v494, %v493
          %v514 = vpack.c.bf16 %v496, %v495
          %v515 = vpack.c.bf16 %v498, %v497
          %v516 = vpack.c.bf16 %v500, %v499
          %v533 = vunpack.c.l.b16 %v501
          %v534 = vunpack.c.h.b16 %v501
          %v535 = vunpack.c.l.b16 %v502
          %v536 = vunpack.c.h.b16 %v502
          %v537 = vunpack.c.l.b16 %v503
          %v538 = vunpack.c.h.b16 %v503
          %v539 = vunpack.c.l.b16 %v504
          %v540 = vunpack.c.h.b16 %v504
          %v541 = vunpack.c.l.b16 %v505
          %v542 = vunpack.c.h.b16 %v505
          %v543 = vunpack.c.l.b16 %v506
          %v544 = vunpack.c.h.b16 %v506
          %v545 = vunpack.c.l.b16 %v507
          %v546 = vunpack.c.h.b16 %v507
          %v547 = vunpack.c.l.b16 %v508
          %v548 = vunpack.c.h.b16 %v508
          %v549 = vunpack.c.l.b16 %v509
          %v550 = vunpack.c.h.b16 %v509
          %v551 = vunpack.c.l.b16 %v510
          %v552 = vunpack.c.h.b16 %v510
          %v553 = vunpack.c.l.b16 %v511
          %v554 = vunpack.c.h.b16 %v511
          %v555 = vunpack.c.l.b16 %v512
          %v556 = vunpack.c.h.b16 %v512
          %v557 = vunpack.c.l.b16 %v513
          %v558 = vunpack.c.h.b16 %v513
          %v559 = vunpack.c.l.b16 %v514
          %v560 = vunpack.c.h.b16 %v514
          %v561 = vunpack.c.l.b16 %v515
          %v562 = vunpack.c.h.b16 %v515
          %v563 = vunpack.c.l.b16 %v516
          %v564 = vunpack.c.h.b16 %v516
          %v565 = vpack.c.b16 %v533, %v533
          %v566 = vpack.c.b16 %v534, %v534
          %v567 = vpack.c.b16 %v535, %v535
          %v568 = vpack.c.b16 %v536, %v536
          %v569 = vpack.c.b16 %v537, %v537
          %v570 = vpack.c.b16 %v538, %v538
          %v571 = vpack.c.b16 %v539, %v539
          %v572 = vpack.c.b16 %v540, %v540
          %v573 = vpack.c.b16 %v541, %v541
          %v574 = vpack.c.b16 %v542, %v542
          %v575 = vpack.c.b16 %v543, %v543
          %v576 = vpack.c.b16 %v544, %v544
          %v577 = vpack.c.b16 %v545, %v545
          %v578 = vpack.c.b16 %v546, %v546
          %v579 = vpack.c.b16 %v547, %v547
          %v580 = vpack.c.b16 %v548, %v548
          %v581 = vpack.c.b16 %v549, %v549
          %v582 = vpack.c.b16 %v550, %v550
          %v583 = vpack.c.b16 %v551, %v551
          %v584 = vpack.c.b16 %v552, %v552
          %v585 = vpack.c.b16 %v553, %v553
          %v586 = vpack.c.b16 %v554, %v554
          %v587 = vpack.c.b16 %v555, %v555
          %v588 = vpack.c.b16 %v556, %v556
          %v589 = vpack.c.b16 %v557, %v557
          %v590 = vpack.c.b16 %v558, %v558
          %v591 = vpack.c.b16 %v559, %v559
          %v592 = vpack.c.b16 %v560, %v560
          %v593 = vpack.c.b16 %v561, %v561
          %v594 = vpack.c.b16 %v562, %v562
          %v595 = vpack.c.b16 %v563, %v563
          %v596 = vpack.c.b16 %v564, %v564
          %s629 = scalar_lea.vmem [#allocation2], 312
          %630 = vst [vmem:[%s629 + $0x8] sm:$0xf] %v565
          %631 = vst [vmem:[%s629 + $0xc] sm:$0xf] %v566
          %632 = vst [vmem:[%s629 + $0x20] sm:$0xf] %v567
          %633 = vst [vmem:[%s629 + $0x24] sm:$0xf] %v568
          %634 = vst [vmem:[%s629 + $0x38] sm:$0xf] %v569
          %635 = vst [vmem:[%s629 + $0x3c] sm:$0xf] %v570
          %636 = vst [vmem:[%s629 + $0x50] sm:$0xf] %v571
          %637 = vst [vmem:[%s629 + $0x54] sm:$0xf] %v572
          %638 = vst [vmem:[%s629 + $0x68] sm:$0xf] %v573
          %639 = vst [vmem:[%s629 + $0x6c] sm:$0xf] %v574
          %640 = vst [vmem:[%s629 + $0x80] sm:$0xf] %v575
          %641 = vst [vmem:[%s629 + $0x84] sm:$0xf] %v576
          %642 = vst [vmem:[%s629 + $0x98] sm:$0xf] %v577
          %643 = vst [vmem:[%s629 + $0x9c] sm:$0xf] %v578
          %644 = vst [vmem:[%s629 + $0xb0] sm:$0xf] %v579
          %645 = vst [vmem:[%s629 + $0xb4] sm:$0xf] %v580
          %646 = vst [vmem:[%s629 + $0xc8] sm:$0xf] %v581
          %647 = vst [vmem:[%s629 + $0xcc] sm:$0xf] %v582
          %648 = vst [vmem:[%s629 + $0xe0] sm:$0xf] %v583
          %649 = vst [vmem:[%s629 + $0xe4] sm:$0xf] %v584
          %650 = vst [vmem:[%s629 + $0xf8] sm:$0xf] %v585
          %651 = vst [vmem:[%s629 + $0xfc] sm:$0xf] %v586
          %652 = vst [vmem:[%s629 + $0x110] sm:$0xf] %v587
          %653 = vst [vmem:[%s629 + $0x114] sm:$0xf] %v588
          %654 = vst [vmem:[%s629 + $0x128] sm:$0xf] %v589
          %655 = vst [vmem:[%s629 + $0x12c] sm:$0xf] %v590
          %656 = vst [vmem:[%s629 + $0x140] sm:$0xf] %v591
          %657 = vst [vmem:[%s629 + $0x144] sm:$0xf] %v592
          %658 = vst [vmem:[%s629 + $0x158] sm:$0xf] %v593
          %659 = vst [vmem:[%s629 + $0x15c] sm:$0xf] %v594
          %660 = vst [vmem:[%s629 + $0x170] sm:$0xf] %v595
          %661 = vst [vmem:[%s629 + $0x174] sm:$0xf] %v596
        $region40: #{_lambda_.1} parent=35 // pred_fallthru
          _
        %s662 = sadd.s32 %s212, 13
        %s663 = smul.u32 %s662, 6
        %s664 = smul.addr %s663, 4
        %s665 = scalar_lea.vmem [#allocation2], %s664
        %v666 = vld [vmem:[%s665 + $0x8] sm:$0xf]
        %v667 = vld [vmem:[%s665 + $0xc] sm:$0xf]
        %v668 = vld [vmem:[%s665 + $0x20] sm:$0xf]
        %v669 = vld [vmem:[%s665 + $0x24] sm:$0xf]
        %v670 = vld [vmem:[%s665 + $0x38] sm:$0xf]
        %v671 = vld [vmem:[%s665 + $0x3c] sm:$0xf]
        %v672 = vld [vmem:[%s665 + $0x50] sm:$0xf]
        %v673 = vld [vmem:[%s665 + $0x54] sm:$0xf]
        %v674 = vld [vmem:[%s665 + $0x68] sm:$0xf]
        %v675 = vld [vmem:[%s665 + $0x6c] sm:$0xf]
        %v676 = vld [vmem:[%s665 + $0x80] sm:$0xf]
        %v677 = vld [vmem:[%s665 + $0x84] sm:$0xf]
        %v678 = vld [vmem:[%s665 + $0x98] sm:$0xf]
        %v679 = vld [vmem:[%s665 + $0x9c] sm:$0xf]
        %v680 = vld [vmem:[%s665 + $0xb0] sm:$0xf]
        %v681 = vld [vmem:[%s665 + $0xb4] sm:$0xf]
        %v682 = vld [vmem:[%s1] sm:$0xf]
        %v683 = vld [vmem:[%s1 + $0x4] sm:$0xf]
        %v684 = vld [vmem:[%s1 + $0x8] sm:$0xf]
        %v685 = vld [vmem:[%s1 + $0xc] sm:$0xf]
        %v686 = vld [vmem:[%s1 + $0x10] sm:$0xf]
        %v687 = vld [vmem:[%s1 + $0x14] sm:$0xf]
        %v688 = vld [vmem:[%s1 + $0x18] sm:$0xf]
        %v689 = vld [vmem:[%s1 + $0x1c] sm:$0xf]
        %v690 = vld [vmem:[%s1 + $0x20] sm:$0xf]
        %v691 = vld [vmem:[%s1 + $0x24] sm:$0xf]
        %v692 = vld [vmem:[%s1 + $0x28] sm:$0xf]
        %v693 = vld [vmem:[%s1 + $0x2c] sm:$0xf]
        %v694 = vld [vmem:[%s1 + $0x30] sm:$0xf]
        %v695 = vld [vmem:[%s1 + $0x34] sm:$0xf]
        %v696 = vld [vmem:[%s1 + $0x38] sm:$0xf]
        %v697 = vld [vmem:[%s1 + $0x3c] sm:$0xf]
        %s698 = sadd.s32 %s212, 12
        %s699 = smul.u32 %s698, 6
        %s700 = smul.addr %s699, 4
        %s701 = scalar_lea.vmem [#allocation2], %s700
        %v702 = vld [vmem:[%s701 + $0x4] sm:$0x8]
        %v703 = vld [vmem:[%s701 + $0x8] sm:$0xf]
        %v704 = vld [vmem:[%s701 + $0xc] sm:$0xf]
        %v705 = vld [vmem:[%s701 + $0x1c] sm:$0x8]
        %v706 = vld [vmem:[%s701 + $0x20] sm:$0xf]
        %v707 = vld [vmem:[%s701 + $0x24] sm:$0xf]
        %v708 = vld [vmem:[%s701 + $0x34] sm:$0x8]
        %v709 = vld [vmem:[%s701 + $0x38] sm:$0xf]
        %v710 = vld [vmem:[%s701 + $0x3c] sm:$0xf]
        %v711 = vld [vmem:[%s701 + $0x4c] sm:$0x8]
        %v712 = vld [vmem:[%s701 + $0x50] sm:$0xf]
        %v713 = vld [vmem:[%s701 + $0x54] sm:$0xf]
        %v714 = vld [vmem:[%s701 + $0x64] sm:$0x8]
        %v715 = vld [vmem:[%s701 + $0x68] sm:$0xf]
        %v716 = vld [vmem:[%s701 + $0x6c] sm:$0xf]
        %v717 = vld [vmem:[%s701 + $0x7c] sm:$0x8]
        %v718 = vld [vmem:[%s701 + $0x80] sm:$0xf]
        %v719 = vld [vmem:[%s701 + $0x84] sm:$0xf]
        %v720 = vld [vmem:[%s701 + $0x94] sm:$0x8]
        %v721 = vld [vmem:[%s701 + $0x98] sm:$0xf]
        %v722 = vld [vmem:[%s701 + $0x9c] sm:$0xf]
        %v723 = vld [vmem:[%s701 + $0xac] sm:$0x8]
        %v724 = vld [vmem:[%s701 + $0xb0] sm:$0xf]
        %v725 = vld [vmem:[%s701 + $0xb4] sm:$0xf]
        %vm726 = vsmask.f32 256
        %vm727 = vsmask.f32 4368
        %vm728 = vmor %vm726, %vm727
        %v730 = vshrl.u32 %v702, 16
        %v732 = vrot.slane %v730, 7
        %v733 = vrot.slane %v732, 4
        %v735 = vshrl.u32 %v703, 16
        %v737 = vrot.slane %v735, 7
        %v738 = vshll.u32 %v703, 16
        %v740 = vor.u32 %v737, %v738
        %v741 = vsel %vm728, %v733, %v740
        %v742 = vrot.slane %v737, 4
        %v744 = vshrl.u32 %v704, 16
        %v746 = vrot.slane %v744, 7
        %v747 = vshll.u32 %v704, 16
        %v749 = vor.u32 %v746, %v747
        %v750 = vsel %vm728, %v742, %v749
        %v752 = vshrl.u32 %v705, 16
        %v754 = vrot.slane %v752, 7
        %v755 = vrot.slane %v754, 4
        %v757 = vshrl.u32 %v706, 16
        %v759 = vrot.slane %v757, 7
        %v760 = vshll.u32 %v706, 16
        %v762 = vor.u32 %v759, %v760
        %v763 = vsel %vm728, %v755, %v762
        %v764 = vrot.slane %v759, 4
        %v766 = vshrl.u32 %v707, 16
        %v768 = vrot.slane %v766, 7
        %v769 = vshll.u32 %v707, 16
        %v771 = vor.u32 %v768, %v769
        %v772 = vsel %vm728, %v764, %v771
        %v774 = vshrl.u32 %v708, 16
        %v776 = vrot.slane %v774, 7
        %v777 = vrot.slane %v776, 4
        %v779 = vshrl.u32 %v709, 16
        %v781 = vrot.slane %v779, 7
        %v782 = vshll.u32 %v709, 16
        %v784 = vor.u32 %v781, %v782
        %v785 = vsel %vm728, %v777, %v784
        %v786 = vrot.slane %v781, 4
        %v788 = vshrl.u32 %v710, 16
        %v790 = vrot.slane %v788, 7
        %v791 = vshll.u32 %v710, 16
        %v793 = vor.u32 %v790, %v791
        %v794 = vsel %vm728, %v786, %v793
        %v796 = vshrl.u32 %v711, 16
        %v798 = vrot.slane %v796, 7
        %v799 = vrot.slane %v798, 4
        %v801 = vshrl.u32 %v712, 16
        %v803 = vrot.slane %v801, 7
        %v804 = vshll.u32 %v712, 16
        %v806 = vor.u32 %v803, %v804
        %v807 = vsel %vm728, %v799, %v806
        %v808 = vrot.slane %v803, 4
        %v810 = vshrl.u32 %v713, 16
        %v812 = vrot.slane %v810, 7
        %v813 = vshll.u32 %v713, 16
        %v815 = vor.u32 %v812, %v813
        %v816 = vsel %vm728, %v808, %v815
        %v818 = vshrl.u32 %v714, 16
        %v820 = vrot.slane %v818, 7
        %v821 = vrot.slane %v820, 4
        %v823 = vshrl.u32 %v715, 16
        %v825 = vrot.slane %v823, 7
        %v826 = vshll.u32 %v715, 16
        %v828 = vor.u32 %v825, %v826
        %v829 = vsel %vm728, %v821, %v828
        %v830 = vrot.slane %v825, 4
        %v832 = vshrl.u32 %v716, 16
        %v834 = vrot.slane %v832, 7
        %v835 = vshll.u32 %v716, 16
        %v837 = vor.u32 %v834, %v835
        %v838 = vsel %vm728, %v830, %v837
        %v840 = vshrl.u32 %v717, 16
        %v842 = vrot.slane %v840, 7
        %v843 = vrot.slane %v842, 4
        %v845 = vshrl.u32 %v718, 16
        %v847 = vrot.slane %v845, 7
        %v848 = vshll.u32 %v718, 16
        %v850 = vor.u32 %v847, %v848
        %v851 = vsel %vm728, %v843, %v850
        %v852 = vrot.slane %v847, 4
        %v854 = vshrl.u32 %v719, 16
        %v856 = vrot.slane %v854, 7
        %v857 = vshll.u32 %v719, 16
        %v859 = vor.u32 %v856, %v857
        %v860 = vsel %vm728, %v852, %v859
        %v862 = vshrl.u32 %v720, 16
        %v864 = vrot.slane %v862, 7
        %v865 = vrot.slane %v864, 4
        %v867 = vshrl.u32 %v721, 16
        %v869 = vrot.slane %v867, 7
        %v870 = vshll.u32 %v721, 16
        %v872 = vor.u32 %v869, %v870
        %v873 = vsel %vm728, %v865, %v872
        %v874 = vrot.slane %v869, 4
        %v876 = vshrl.u32 %v722, 16
        %v878 = vrot.slane %v876, 7
        %v879 = vshll.u32 %v722, 16
        %v881 = vor.u32 %v878, %v879
        %v882 = vsel %vm728, %v874, %v881
        %v884 = vshrl.u32 %v723, 16
        %v886 = vrot.slane %v884, 7
        %v887 = vrot.slane %v886, 4
        %v889 = vshrl.u32 %v724, 16
        %v891 = vrot.slane %v889, 7
        %v892 = vshll.u32 %v724, 16
        %v894 = vor.u32 %v891, %v892
        %v895 = vsel %vm728, %v887, %v894
        %v896 = vrot.slane %v891, 4
        %v898 = vshrl.u32 %v725, 16
        %v900 = vrot.slane %v898, 7
        %v901 = vshll.u32 %v725, 16
        %v903 = vor.u32 %v900, %v901
        %v904 = vsel %vm728, %v896, %v903
        %s905 = sadd.s32 %s212, 8
        %s906 = smul.u32 %s905, 6
        %s907 = smul.addr %s906, 4
        %s908 = scalar_lea.vmem [#allocation2], %s907
        %v909 = vld [vmem:[%s908 + $0x4] sm:$0xe]
        %v910 = vld [vmem:[%s908 + $0x8] sm:$0xf]
        %v911 = vld [vmem:[%s908 + $0xc] sm:$0x3]
        %v912 = vld [vmem:[%s908 + $0x1c] sm:$0xe]
        %v913 = vld [vmem:[%s908 + $0x20] sm:$0xf]
        %v914 = vld [vmem:[%s908 + $0x24] sm:$0x3]
        %v915 = vld [vmem:[%s908 + $0x34] sm:$0xe]
        %v916 = vld [vmem:[%s908 + $0x38] sm:$0xf]
        %v917 = vld [vmem:[%s908 + $0x3c] sm:$0x3]
        %v918 = vld [vmem:[%s908 + $0x4c] sm:$0xe]
        %v919 = vld [vmem:[%s908 + $0x50] sm:$0xf]
        %v920 = vld [vmem:[%s908 + $0x54] sm:$0x3]
        %v921 = vld [vmem:[%s908 + $0x64] sm:$0xe]
        %v922 = vld [vmem:[%s908 + $0x68] sm:$0xf]
        %v923 = vld [vmem:[%s908 + $0x6c] sm:$0x3]
        %v924 = vld [vmem:[%s908 + $0x7c] sm:$0xe]
        %v925 = vld [vmem:[%s908 + $0x80] sm:$0xf]
        %v926 = vld [vmem:[%s908 + $0x84] sm:$0x3]
        %v927 = vld [vmem:[%s908 + $0x94] sm:$0xe]
        %v928 = vld [vmem:[%s908 + $0x98] sm:$0xf]
        %v929 = vld [vmem:[%s908 + $0x9c] sm:$0x3]
        %v930 = vld [vmem:[%s908 + $0xac] sm:$0xe]
        %v931 = vld [vmem:[%s908 + $0xb0] sm:$0xf]
        %v932 = vld [vmem:[%s908 + $0xb4] sm:$0x3]
        %vm933 = vsmask.f32 2304
        %vm934 = vsmask.f32 6416
        %vm935 = vmor %vm933, %vm934
        %v937 = vshrl.u32 %v909, 16
        %v939 = vrot.slane %v937, 5
        %v940 = vshll.u32 %v909, 16
        %v942 = vrot.slane %v940, 6
        %v943 = vor.u32 %v939, %v942
        %v944 = vrot.slane %v943, 4
        %v946 = vshrl.u32 %v910, 16
        %v948 = vrot.slane %v946, 5
        %v949 = vshll.u32 %v910, 16
        %v951 = vrot.slane %v949, 6
        %v952 = vor.u32 %v948, %v951
        %v953 = vsel %vm935, %v944, %v952
        %v954 = vrot.slane %v952, 4
        %v956 = vshrl.u32 %v911, 16
        %v958 = vrot.slane %v956, 5
        %v959 = vshll.u32 %v911, 16
        %v961 = vrot.slane %v959, 6
        %v962 = vor.u32 %v958, %v961
        %v963 = vsel %vm935, %v954, %v962
        %v965 = vshrl.u32 %v912, 16
        %v967 = vrot.slane %v965, 5
        %v968 = vshll.u32 %v912, 16
        %v970 = vrot.slane %v968, 6
        %v971 = vor.u32 %v967, %v970
        %v972 = vrot.slane %v971, 4
        %v974 = vshrl.u32 %v913, 16
        %v976 = vrot.slane %v974, 5
        %v977 = vshll.u32 %v913, 16
        %v979 = vrot.slane %v977, 6
        %v980 = vor.u32 %v976, %v979
        %v981 = vsel %vm935, %v972, %v980
        %v982 = vrot.slane %v980, 4
        %v984 = vshrl.u32 %v914, 16
        %v986 = vrot.slane %v984, 5
        %v987 = vshll.u32 %v914, 16
        %v989 = vrot.slane %v987, 6
        %v990 = vor.u32 %v986, %v989
        %v991 = vsel %vm935, %v982, %v990
        %v993 = vshrl.u32 %v915, 16
        %v995 = vrot.slane %v993, 5
        %v996 = vshll.u32 %v915, 16
        %v998 = vrot.slane %v996, 6
        %v999 = vor.u32 %v995, %v998
        %v1000 = vrot.slane %v999, 4
        %v1002 = vshrl.u32 %v916, 16
        %v1004 = vrot.slane %v1002, 5
        %v1005 = vshll.u32 %v916, 16
        %v1007 = vrot.slane %v1005, 6
        %v1008 = vor.u32 %v1004, %v1007
        %v1009 = vsel %vm935, %v1000, %v1008
        %v1010 = vrot.slane %v1008, 4
        %v1012 = vshrl.u32 %v917, 16
        %v1014 = vrot.slane %v1012, 5
        %v1015 = vshll.u32 %v917, 16
        %v1017 = vrot.slane %v1015, 6
        %v1018 = vor.u32 %v1014, %v1017
        %v1019 = vsel %vm935, %v1010, %v1018
        %v1021 = vshrl.u32 %v918, 16
        %v1023 = vrot.slane %v1021, 5
        %v1024 = vshll.u32 %v918, 16
        %v1026 = vrot.slane %v1024, 6
        %v1027 = vor.u32 %v1023, %v1026
        %v1028 = vrot.slane %v1027, 4
        %v1030 = vshrl.u32 %v919, 16
        %v1032 = vrot.slane %v1030, 5
        %v1033 = vshll.u32 %v919, 16
        %v1035 = vrot.slane %v1033, 6
        %v1036 = vor.u32 %v1032, %v1035
        %v1037 = vsel %vm935, %v1028, %v1036
        %v1038 = vrot.slane %v1036, 4
        %v1040 = vshrl.u32 %v920, 16
        %v1042 = vrot.slane %v1040, 5
        %v1043 = vshll.u32 %v920, 16
        %v1045 = vrot.slane %v1043, 6
        %v1046 = vor.u32 %v1042, %v1045
        %v1047 = vsel %vm935, %v1038, %v1046
        %v1049 = vshrl.u32 %v921, 16
        %v1051 = vrot.slane %v1049, 5
        %v1052 = vshll.u32 %v921, 16
        %v1054 = vrot.slane %v1052, 6
        %v1055 = vor.u32 %v1051, %v1054
        %v1056 = vrot.slane %v1055, 4
        %v1058 = vshrl.u32 %v922, 16
        %v1060 = vrot.slane %v1058, 5
        %v1061 = vshll.u32 %v922, 16
        %v1063 = vrot.slane %v1061, 6
        %v1064 = vor.u32 %v1060, %v1063
        %v1065 = vsel %vm935, %v1056, %v1064
        %v1066 = vrot.slane %v1064, 4
        %v1068 = vshrl.u32 %v923, 16
        %v1070 = vrot.slane %v1068, 5
        %v1071 = vshll.u32 %v923, 16
        %v1073 = vrot.slane %v1071, 6
        %v1074 = vor.u32 %v1070, %v1073
        %v1075 = vsel %vm935, %v1066, %v1074
        %v1077 = vshrl.u32 %v924, 16
        %v1079 = vrot.slane %v1077, 5
        %v1080 = vshll.u32 %v924, 16
        %v1082 = vrot.slane %v1080, 6
        %v1083 = vor.u32 %v1079, %v1082
        %v1084 = vrot.slane %v1083, 4
        %v1086 = vshrl.u32 %v925, 16
        %v1088 = vrot.slane %v1086, 5
        %v1089 = vshll.u32 %v925, 16
        %v1091 = vrot.slane %v1089, 6
        %v1092 = vor.u32 %v1088, %v1091
        %v1093 = vsel %vm935, %v1084, %v1092
        %v1094 = vrot.slane %v1092, 4
        %v1096 = vshrl.u32 %v926, 16
        %v1098 = vrot.slane %v1096, 5
        %v1099 = vshll.u32 %v926, 16
        %v1101 = vrot.slane %v1099, 6
        %v1102 = vor.u32 %v1098, %v1101
        %v1103 = vsel %vm935, %v1094, %v1102
        %v1105 = vshrl.u32 %v927, 16
        %v1107 = vrot.slane %v1105, 5
        %v1108 = vshll.u32 %v927, 16
        %v1110 = vrot.slane %v1108, 6
        %v1111 = vor.u32 %v1107, %v1110
        %v1112 = vrot.slane %v1111, 4
        %v1114 = vshrl.u32 %v928, 16
        %v1116 = vrot.slane %v1114, 5
        %v1117 = vshll.u32 %v928, 16
        %v1119 = vrot.slane %v1117, 6
        %v1120 = vor.u32 %v1116, %v1119
        %v1121 = vsel %vm935, %v1112, %v1120
        %v1122 = vrot.slane %v1120, 4
        %v1124 = vshrl.u32 %v929, 16
        %v1126 = vrot.slane %v1124, 5
        %v1127 = vshll.u32 %v929, 16
        %v1129 = vrot.slane %v1127, 6
        %v1130 = vor.u32 %v1126, %v1129
        %v1131 = vsel %vm935, %v1122, %v1130
        %v1133 = vshrl.u32 %v930, 16
        %v1135 = vrot.slane %v1133, 5
        %v1136 = vshll.u32 %v930, 16
        %v1138 = vrot.slane %v1136, 6
        %v1139 = vor.u32 %v1135, %v1138
        %v1140 = vrot.slane %v1139, 4
        %v1142 = vshrl.u32 %v931, 16
        %v1144 = vrot.slane %v1142, 5
        %v1145 = vshll.u32 %v931, 16
        %v1147 = vrot.slane %v1145, 6
        %v1148 = vor.u32 %v1144, %v1147
        %v1149 = vsel %vm935, %v1140, %v1148
        %v1150 = vrot.slane %v1148, 4
        %v1152 = vshrl.u32 %v932, 16
        %v1154 = vrot.slane %v1152, 5
        %v1155 = vshll.u32 %v932, 16
        %v1157 = vrot.slane %v1155, 6
        %v1158 = vor.u32 %v1154, %v1157
        %v1159 = vsel %vm935, %v1150, %v1158
        %s1160 = sadd.s32 %s212, 4
        %s1161 = smul.u32 %s1160, 6
        %s1162 = smul.addr %s1161, 4
        %s1163 = scalar_lea.vmem [#allocation2], %s1162
        %v1164 = vld [vmem:[%s1163] sm:$0x8]
        %v1165 = vld [vmem:[%s1163 + $0x4] sm:$0xf]
        %v1166 = vld [vmem:[%s1163 + $0x8] sm:$0xf]
        %v1167 = vld [vmem:[%s1163 + $0x18] sm:$0x8]
        %v1168 = vld [vmem:[%s1163 + $0x1c] sm:$0xf]
        %v1169 = vld [vmem:[%s1163 + $0x20] sm:$0xf]
        %v1170 = vld [vmem:[%s1163 + $0x30] sm:$0x8]
        %v1171 = vld [vmem:[%s1163 + $0x34] sm:$0xf]
        %v1172 = vld [vmem:[%s1163 + $0x38] sm:$0xf]
        %v1173 = vld [vmem:[%s1163 + $0x48] sm:$0x8]
        %v1174 = vld [vmem:[%s1163 + $0x4c] sm:$0xf]
        %v1175 = vld [vmem:[%s1163 + $0x50] sm:$0xf]
        %v1176 = vld [vmem:[%s1163 + $0x60] sm:$0x8]
        %v1177 = vld [vmem:[%s1163 + $0x64] sm:$0xf]
        %v1178 = vld [vmem:[%s1163 + $0x68] sm:$0xf]
        %v1179 = vld [vmem:[%s1163 + $0x78] sm:$0x8]
        %v1180 = vld [vmem:[%s1163 + $0x7c] sm:$0xf]
        %v1181 = vld [vmem:[%s1163 + $0x80] sm:$0xf]
        %v1182 = vld [vmem:[%s1163 + $0x90] sm:$0x8]
        %v1183 = vld [vmem:[%s1163 + $0x94] sm:$0xf]
        %v1184 = vld [vmem:[%s1163 + $0x98] sm:$0xf]
        %v1185 = vld [vmem:[%s1163 + $0xa8] sm:$0x8]
        %v1186 = vld [vmem:[%s1163 + $0xac] sm:$0xf]
        %v1187 = vld [vmem:[%s1163 + $0xb0] sm:$0xf]
        %v1189 = vshrl.u32 %v1164, 16
        %v1191 = vrot.slane %v1189, 7
        %v1192 = vrot.slane %v1191, 4
        %v1194 = vshrl.u32 %v1165, 16
        %v1196 = vrot.slane %v1194, 7
        %v1197 = vshll.u32 %v1165, 16
        %v1199 = vor.u32 %v1196, %v1197
        %v1200 = vsel %vm728, %v1192, %v1199
        %v1201 = vrot.slane %v1196, 4
        %v1203 = vshrl.u32 %v1166, 16
        %v1205 = vrot.slane %v1203, 7
        %v1206 = vshll.u32 %v1166, 16
        %v1208 = vor.u32 %v1205, %v1206
        %v1209 = vsel %vm728, %v1201, %v1208
        %v1211 = vshrl.u32 %v1167, 16
        %v1213 = vrot.slane %v1211, 7
        %v1214 = vrot.slane %v1213, 4
        %v1216 = vshrl.u32 %v1168, 16
        %v1218 = vrot.slane %v1216, 7
        %v1219 = vshll.u32 %v1168, 16
        %v1221 = vor.u32 %v1218, %v1219
        %v1222 = vsel %vm728, %v1214, %v1221
        %v1223 = vrot.slane %v1218, 4
        %v1225 = vshrl.u32 %v1169, 16
        %v1227 = vrot.slane %v1225, 7
        %v1228 = vshll.u32 %v1169, 16
        %v1230 = vor.u32 %v1227, %v1228
        %v1231 = vsel %vm728, %v1223, %v1230
        %v1233 = vshrl.u32 %v1170, 16
        %v1235 = vrot.slane %v1233, 7
        %v1236 = vrot.slane %v1235, 4
        %v1238 = vshrl.u32 %v1171, 16
        %v1240 = vrot.slane %v1238, 7
        %v1241 = vshll.u32 %v1171, 16
        %v1243 = vor.u32 %v1240, %v1241
        %v1244 = vsel %vm728, %v1236, %v1243
        %v1245 = vrot.slane %v1240, 4
        %v1247 = vshrl.u32 %v1172, 16
        %v1249 = vrot.slane %v1247, 7
        %v1250 = vshll.u32 %v1172, 16
        %v1252 = vor.u32 %v1249, %v1250
        %v1253 = vsel %vm728, %v1245, %v1252
        %v1255 = vshrl.u32 %v1173, 16
        %v1257 = vrot.slane %v1255, 7
        %v1258 = vrot.slane %v1257, 4
        %v1260 = vshrl.u32 %v1174, 16
        %v1262 = vrot.slane %v1260, 7
        %v1263 = vshll.u32 %v1174, 16
        %v1265 = vor.u32 %v1262, %v1263
        %v1266 = vsel %vm728, %v1258, %v1265
        %v1267 = vrot.slane %v1262, 4
        %v1269 = vshrl.u32 %v1175, 16
        %v1271 = vrot.slane %v1269, 7
        %v1272 = vshll.u32 %v1175, 16
        %v1274 = vor.u32 %v1271, %v1272
        %v1275 = vsel %vm728, %v1267, %v1274
        %v1277 = vshrl.u32 %v1176, 16
        %v1279 = vrot.slane %v1277, 7
        %v1280 = vrot.slane %v1279, 4
        %v1282 = vshrl.u32 %v1177, 16
        %v1284 = vrot.slane %v1282, 7
        %v1285 = vshll.u32 %v1177, 16
        %v1287 = vor.u32 %v1284, %v1285
        %v1288 = vsel %vm728, %v1280, %v1287
        %v1289 = vrot.slane %v1284, 4
        %v1291 = vshrl.u32 %v1178, 16
        %v1293 = vrot.slane %v1291, 7
        %v1294 = vshll.u32 %v1178, 16
        %v1296 = vor.u32 %v1293, %v1294
        %v1297 = vsel %vm728, %v1289, %v1296
        %v1299 = vshrl.u32 %v1179, 16
        %v1301 = vrot.slane %v1299, 7
        %v1302 = vrot.slane %v1301, 4
        %v1304 = vshrl.u32 %v1180, 16
        %v1306 = vrot.slane %v1304, 7
        %v1307 = vshll.u32 %v1180, 16
        %v1309 = vor.u32 %v1306, %v1307
        %v1310 = vsel %vm728, %v1302, %v1309
        %v1311 = vrot.slane %v1306, 4
        %v1313 = vshrl.u32 %v1181, 16
        %v1315 = vrot.slane %v1313, 7
        %v1316 = vshll.u32 %v1181, 16
        %v1318 = vor.u32 %v1315, %v1316
        %v1319 = vsel %vm728, %v1311, %v1318
        %v1321 = vshrl.u32 %v1182, 16
        %v1323 = vrot.slane %v1321, 7
        %v1324 = vrot.slane %v1323, 4
        %v1326 = vshrl.u32 %v1183, 16
        %v1328 = vrot.slane %v1326, 7
        %v1329 = vshll.u32 %v1183, 16
        %v1331 = vor.u32 %v1328, %v1329
        %v1332 = vsel %vm728, %v1324, %v1331
        %v1333 = vrot.slane %v1328, 4
        %v1335 = vshrl.u32 %v1184, 16
        %v1337 = vrot.slane %v1335, 7
        %v1338 = vshll.u32 %v1184, 16
        %v1340 = vor.u32 %v1337, %v1338
        %v1341 = vsel %vm728, %v1333, %v1340
        %v1343 = vshrl.u32 %v1185, 16
        %v1345 = vrot.slane %v1343, 7
        %v1346 = vrot.slane %v1345, 4
        %v1348 = vshrl.u32 %v1186, 16
        %v1350 = vrot.slane %v1348, 7
        %v1351 = vshll.u32 %v1186, 16
        %v1353 = vor.u32 %v1350, %v1351
        %v1354 = vsel %vm728, %v1346, %v1353
        %v1355 = vrot.slane %v1350, 4
        %v1357 = vshrl.u32 %v1187, 16
        %v1359 = vrot.slane %v1357, 7
        %v1360 = vshll.u32 %v1187, 16
        %v1362 = vor.u32 %v1359, %v1360
        %v1363 = vsel %vm728, %v1355, %v1362
        %s1364 = smul.u32 %s212, 6
        %s1365 = smul.addr %s1364, 4
        %s1366 = scalar_lea.vmem [#allocation2], %s1365
        %v1367 = vld [vmem:[%s1366] sm:$0xe]
        %v1368 = vld [vmem:[%s1366 + $0x4] sm:$0xf]
        %v1369 = vld [vmem:[%s1366 + $0x8] sm:$0x3]
        %v1370 = vld [vmem:[%s1366 + $0x18] sm:$0xe]
        %v1371 = vld [vmem:[%s1366 + $0x1c] sm:$0xf]
        %v1372 = vld [vmem:[%s1366 + $0x20] sm:$0x3]
        %v1373 = vld [vmem:[%s1366 + $0x30] sm:$0xe]
        %v1374 = vld [vmem:[%s1366 + $0x34] sm:$0xf]
        %v1375 = vld [vmem:[%s1366 + $0x38] sm:$0x3]
        %v1376 = vld [vmem:[%s1366 + $0x48] sm:$0xe]
        %v1377 = vld [vmem:[%s1366 + $0x4c] sm:$0xf]
        %v1378 = vld [vmem:[%s1366 + $0x50] sm:$0x3]
        %v1379 = vld [vmem:[%s1366 + $0x60] sm:$0xe]
        %v1380 = vld [vmem:[%s1366 + $0x64] sm:$0xf]
        %v1381 = vld [vmem:[%s1366 + $0x68] sm:$0x3]
        %v1382 = vld [vmem:[%s1366 + $0x78] sm:$0xe]
        %v1383 = vld [vmem:[%s1366 + $0x7c] sm:$0xf]
        %v1384 = vld [vmem:[%s1366 + $0x80] sm:$0x3]
        %v1385 = vld [vmem:[%s1366 + $0x90] sm:$0xe]
        %v1386 = vld [vmem:[%s1366 + $0x94] sm:$0xf]
        %v1387 = vld [vmem:[%s1366 + $0x98] sm:$0x3]
        %v1388 = vld [vmem:[%s1366 + $0xa8] sm:$0xe]
        %v1389 = vld [vmem:[%s1366 + $0xac] sm:$0xf]
        %v1390 = vld [vmem:[%s1366 + $0xb0] sm:$0x3]
        %v1392 = vshrl.u32 %v1367, 16
        %v1394 = vrot.slane %v1392, 5
        %v1395 = vshll.u32 %v1367, 16
        %v1397 = vrot.slane %v1395, 6
        %v1398 = vor.u32 %v1394, %v1397
        %v1399 = vrot.slane %v1398, 4
        %v1401 = vshrl.u32 %v1368, 16
        %v1403 = vrot.slane %v1401, 5
        %v1404 = vshll.u32 %v1368, 16
        %v1406 = vrot.slane %v1404, 6
        %v1407 = vor.u32 %v1403, %v1406
        %v1408 = vsel %vm935, %v1399, %v1407
        %v1409 = vrot.slane %v1407, 4
        %v1411 = vshrl.u32 %v1369, 16
        %v1413 = vrot.slane %v1411, 5
        %v1414 = vshll.u32 %v1369, 16
        %v1416 = vrot.slane %v1414, 6
        %v1417 = vor.u32 %v1413, %v1416
        %v1418 = vsel %vm935, %v1409, %v1417
        %v1420 = vshrl.u32 %v1370, 16
        %v1422 = vrot.slane %v1420, 5
        %v1423 = vshll.u32 %v1370, 16
        %v1425 = vrot.slane %v1423, 6
        %v1426 = vor.u32 %v1422, %v1425
        %v1427 = vrot.slane %v1426, 4
        %v1429 = vshrl.u32 %v1371, 16
        %v1431 = vrot.slane %v1429, 5
        %v1432 = vshll.u32 %v1371, 16
        %v1434 = vrot.slane %v1432, 6
        %v1435 = vor.u32 %v1431, %v1434
        %v1436 = vsel %vm935, %v1427, %v1435
        %v1437 = vrot.slane %v1435, 4
        %v1439 = vshrl.u32 %v1372, 16
        %v1441 = vrot.slane %v1439, 5
        %v1442 = vshll.u32 %v1372, 16
        %v1444 = vrot.slane %v1442, 6
        %v1445 = vor.u32 %v1441, %v1444
        %v1446 = vsel %vm935, %v1437, %v1445
        %v1448 = vshrl.u32 %v1373, 16
        %v1450 = vrot.slane %v1448, 5
        %v1451 = vshll.u32 %v1373, 16
        %v1453 = vrot.slane %v1451, 6
        %v1454 = vor.u32 %v1450, %v1453
        %v1455 = vrot.slane %v1454, 4
        %v1457 = vshrl.u32 %v1374, 16
        %v1459 = vrot.slane %v1457, 5
        %v1460 = vshll.u32 %v1374, 16
        %v1462 = vrot.slane %v1460, 6
        %v1463 = vor.u32 %v1459, %v1462
        %v1464 = vsel %vm935, %v1455, %v1463
        %v1465 = vrot.slane %v1463, 4
        %v1467 = vshrl.u32 %v1375, 16
        %v1469 = vrot.slane %v1467, 5
        %v1470 = vshll.u32 %v1375, 16
        %v1472 = vrot.slane %v1470, 6
        %v1473 = vor.u32 %v1469, %v1472
        %v1474 = vsel %vm935, %v1465, %v1473
        %v1476 = vshrl.u32 %v1376, 16
        %v1478 = vrot.slane %v1476, 5
        %v1479 = vshll.u32 %v1376, 16
        %v1481 = vrot.slane %v1479, 6
        %v1482 = vor.u32 %v1478, %v1481
        %v1483 = vrot.slane %v1482, 4
        %v1485 = vshrl.u32 %v1377, 16
        %v1487 = vrot.slane %v1485, 5
        %v1488 = vshll.u32 %v1377, 16
        %v1490 = vrot.slane %v1488, 6
        %v1491 = vor.u32 %v1487, %v1490
        %v1492 = vsel %vm935, %v1483, %v1491
        %v1493 = vrot.slane %v1491, 4
        %v1495 = vshrl.u32 %v1378, 16
        %v1497 = vrot.slane %v1495, 5
        %v1498 = vshll.u32 %v1378, 16
        %v1500 = vrot.slane %v1498, 6
        %v1501 = vor.u32 %v1497, %v1500
        %v1502 = vsel %vm935, %v1493, %v1501
        %v1504 = vshrl.u32 %v1379, 16
        %v1506 = vrot.slane %v1504, 5
        %v1507 = vshll.u32 %v1379, 16
        %v1509 = vrot.slane %v1507, 6
        %v1510 = vor.u32 %v1506, %v1509
        %v1511 = vrot.slane %v1510, 4
        %v1513 = vshrl.u32 %v1380, 16
        %v1515 = vrot.slane %v1513, 5
        %v1516 = vshll.u32 %v1380, 16
        %v1518 = vrot.slane %v1516, 6
        %v1519 = vor.u32 %v1515, %v1518
        %v1520 = vsel %vm935, %v1511, %v1519
        %v1521 = vrot.slane %v1519, 4
        %v1523 = vshrl.u32 %v1381, 16
        %v1525 = vrot.slane %v1523, 5
        %v1526 = vshll.u32 %v1381, 16
        %v1528 = vrot.slane %v1526, 6
        %v1529 = vor.u32 %v1525, %v1528
        %v1530 = vsel %vm935, %v1521, %v1529
        %v1532 = vshrl.u32 %v1382, 16
        %v1534 = vrot.slane %v1532, 5
        %v1535 = vshll.u32 %v1382, 16
        %v1537 = vrot.slane %v1535, 6
        %v1538 = vor.u32 %v1534, %v1537
        %v1539 = vrot.slane %v1538, 4
        %v1541 = vshrl.u32 %v1383, 16
        %v1543 = vrot.slane %v1541, 5
        %v1544 = vshll.u32 %v1383, 16
        %v1546 = vrot.slane %v1544, 6
        %v1547 = vor.u32 %v1543, %v1546
        %v1548 = vsel %vm935, %v1539, %v1547
        %v1549 = vrot.slane %v1547, 4
        %v1551 = vshrl.u32 %v1384, 16
        %v1553 = vrot.slane %v1551, 5
        %v1554 = vshll.u32 %v1384, 16
        %v1556 = vrot.slane %v1554, 6
        %v1557 = vor.u32 %v1553, %v1556
        %v1558 = vsel %vm935, %v1549, %v1557
        %v1560 = vshrl.u32 %v1385, 16
        %v1562 = vrot.slane %v1560, 5
        %v1563 = vshll.u32 %v1385, 16
        %v1565 = vrot.slane %v1563, 6
        %v1566 = vor.u32 %v1562, %v1565
        %v1567 = vrot.slane %v1566, 4
        %v1569 = vshrl.u32 %v1386, 16
        %v1571 = vrot.slane %v1569, 5
        %v1572 = vshll.u32 %v1386, 16
        %v1574 = vrot.slane %v1572, 6
        %v1575 = vor.u32 %v1571, %v1574
        %v1576 = vsel %vm935, %v1567, %v1575
        %v1577 = vrot.slane %v1575, 4
        %v1579 = vshrl.u32 %v1387, 16
        %v1581 = vrot.slane %v1579, 5
        %v1582 = vshll.u32 %v1387, 16
        %v1584 = vrot.slane %v1582, 6
        %v1585 = vor.u32 %v1581, %v1584
        %v1586 = vsel %vm935, %v1577, %v1585
        %v1588 = vshrl.u32 %v1388, 16
        %v1590 = vrot.slane %v1588, 5
        %v1591 = vshll.u32 %v1388, 16
        %v1593 = vrot.slane %v1591, 6
        %v1594 = vor.u32 %v1590, %v1593
        %v1595 = vrot.slane %v1594, 4
        %v1597 = vshrl.u32 %v1389, 16
        %v1599 = vrot.slane %v1597, 5
        %v1600 = vshll.u32 %v1389, 16
        %v1602 = vrot.slane %v1600, 6
        %v1603 = vor.u32 %v1599, %v1602
        %v1604 = vsel %vm935, %v1595, %v1603
        %v1605 = vrot.slane %v1603, 4
        %v1607 = vshrl.u32 %v1390, 16
        %v1609 = vrot.slane %v1607, 5
        %v1610 = vshll.u32 %v1390, 16
        %v1612 = vrot.slane %v1610, 6
        %v1613 = vor.u32 %v1609, %v1612
        %v1614 = vsel %vm935, %v1605, %v1613
        %v1615 = vunpack.c.l.b16 %v741
        %v1616 = vunpack.c.l.b16 %v750
        %v1617 = vunpack.c.l.b16 %v763
        %v1618 = vunpack.c.l.b16 %v772
        %v1619 = vunpack.c.l.b16 %v785
        %v1620 = vunpack.c.l.b16 %v794
        %v1621 = vunpack.c.l.b16 %v807
        %v1622 = vunpack.c.l.b16 %v816
        %v1623 = vunpack.c.l.b16 %v829
        %v1624 = vunpack.c.l.b16 %v838
        %v1625 = vunpack.c.l.b16 %v851
        %v1626 = vunpack.c.l.b16 %v860
        %v1627 = vunpack.c.l.b16 %v873
        %v1628 = vunpack.c.l.b16 %v882
        %v1629 = vunpack.c.l.b16 %v895
        %v1630 = vunpack.c.l.b16 %v904
        %v1631 = vpack.c.b16 %v1616, %v1615
        %v1632 = vpack.c.b16 %v1618, %v1617
        %v1633 = vpack.c.b16 %v1620, %v1619
        %v1634 = vpack.c.b16 %v1622, %v1621
        %v1635 = vpack.c.b16 %v1624, %v1623
        %v1636 = vpack.c.b16 %v1626, %v1625
        %v1637 = vpack.c.b16 %v1628, %v1627
        %v1638 = vpack.c.b16 %v1630, %v1629
        %v1647 = vunpack.c.l.b16 %v953
        %v1648 = vunpack.c.l.b16 %v963
        %v1649 = vunpack.c.l.b16 %v981
        %v1650 = vunpack.c.l.b16 %v991
        %v1651 = vunpack.c.l.b16 %v1009
        %v1652 = vunpack.c.l.b16 %v1019
        %v1653 = vunpack.c.l.b16 %v1037
        %v1654 = vunpack.c.l.b16 %v1047
        %v1655 = vunpack.c.l.b16 %v1065
        %v1656 = vunpack.c.l.b16 %v1075
        %v1657 = vunpack.c.l.b16 %v1093
        %v1658 = vunpack.c.l.b16 %v1103
        %v1659 = vunpack.c.l.b16 %v1121
        %v1660 = vunpack.c.l.b16 %v1131
        %v1661 = vunpack.c.l.b16 %v1149
        %v1662 = vunpack.c.l.b16 %v1159
        %v1663 = vpack.c.b16 %v1648, %v1647
        %v1664 = vpack.c.b16 %v1650, %v1649
        %v1665 = vpack.c.b16 %v1652, %v1651
        %v1666 = vpack.c.b16 %v1654, %v1653
        %v1667 = vpack.c.b16 %v1656, %v1655
        %v1668 = vpack.c.b16 %v1658, %v1657
        %v1669 = vpack.c.b16 %v1660, %v1659
        %v1670 = vpack.c.b16 %v1662, %v1661
        %v1679 = vunpack.c.l.b16 %v1200
        %v1680 = vunpack.c.l.b16 %v1209
        %v1681 = vunpack.c.l.b16 %v1222
        %v1682 = vunpack.c.l.b16 %v1231
        %v1683 = vunpack.c.l.b16 %v1244
        %v1684 = vunpack.c.l.b16 %v1253
        %v1685 = vunpack.c.l.b16 %v1266
        %v1686 = vunpack.c.l.b16 %v1275
        %v1687 = vunpack.c.l.b16 %v1288
        %v1688 = vunpack.c.l.b16 %v1297
        %v1689 = vunpack.c.l.b16 %v1310
        %v1690 = vunpack.c.l.b16 %v1319
        %v1691 = vunpack.c.l.b16 %v1332
        %v1692 = vunpack.c.l.b16 %v1341
        %v1693 = vunpack.c.l.b16 %v1354
        %v1694 = vunpack.c.l.b16 %v1363
        %v1695 = vpack.c.b16 %v1680, %v1679
        %v1696 = vpack.c.b16 %v1682, %v1681
        %v1697 = vpack.c.b16 %v1684, %v1683
        %v1698 = vpack.c.b16 %v1686, %v1685
        %v1699 = vpack.c.b16 %v1688, %v1687
        %v1700 = vpack.c.b16 %v1690, %v1689
        %v1701 = vpack.c.b16 %v1692, %v1691
        %v1702 = vpack.c.b16 %v1694, %v1693
        %v1711 = vunpack.c.l.b16 %v1408
        %v1712 = vunpack.c.l.b16 %v1418
        %v1713 = vunpack.c.l.b16 %v1436
        %v1714 = vunpack.c.l.b16 %v1446
        %v1715 = vunpack.c.l.b16 %v1464
        %v1716 = vunpack.c.l.b16 %v1474
        %v1717 = vunpack.c.l.b16 %v1492
        %v1718 = vunpack.c.l.b16 %v1502
        %v1719 = vunpack.c.l.b16 %v1520
        %v1720 = vunpack.c.l.b16 %v1530
        %v1721 = vunpack.c.l.b16 %v1548
        %v1722 = vunpack.c.l.b16 %v1558
        %v1723 = vunpack.c.l.b16 %v1576
        %v1724 = vunpack.c.l.b16 %v1586
        %v1725 = vunpack.c.l.b16 %v1604
        %v1726 = vunpack.c.l.b16 %v1614
        %v1727 = vpack.c.b16 %v1712, %v1711
        %v1728 = vpack.c.b16 %v1714, %v1713
        %v1729 = vpack.c.b16 %v1716, %v1715
        %v1730 = vpack.c.b16 %v1718, %v1717
        %v1731 = vpack.c.b16 %v1720, %v1719
        %v1732 = vpack.c.b16 %v1722, %v1721
        %v1733 = vpack.c.b16 %v1724, %v1723
        %v1734 = vpack.c.b16 %v1726, %v1725
        %v1743 = vld [vmem:[%s3] sm:$0xf]
        %v1744 = vld [vmem:[%s3 + $0x4] sm:$0xf]
        %v1745 = vld [vmem:[%s3 + $0x8] sm:$0xf]
        %v1746 = vld [vmem:[%s3 + $0xc] sm:$0xf]
        %v1747 = vld [vmem:[%s3 + $0x10] sm:$0xf]
        %v1748 = vld [vmem:[%s3 + $0x14] sm:$0xf]
        %v1749 = vld [vmem:[%s3 + $0x18] sm:$0xf]
        %v1750 = vld [vmem:[%s3 + $0x1c] sm:$0xf]
        %v1751 = vld [vmem:[%s3 + $0x20] sm:$0xf]
        %v1752 = vld [vmem:[%s3 + $0x24] sm:$0xf]
        %v1753 = vld [vmem:[%s3 + $0x28] sm:$0xf]
        %v1754 = vld [vmem:[%s3 + $0x2c] sm:$0xf]
        %v1755 = vld [vmem:[%s3 + $0x30] sm:$0xf]
        %v1756 = vld [vmem:[%s3 + $0x34] sm:$0xf]
        %v1757 = vld [vmem:[%s3 + $0x38] sm:$0xf]
        %v1758 = vld [vmem:[%s3 + $0x3c] sm:$0xf]
        %v1759 = vld [vmem:[%s3 + $0x40] sm:$0xf]
        %v1760 = vld [vmem:[%s3 + $0x44] sm:$0xf]
        %v1761 = vld [vmem:[%s3 + $0x48] sm:$0xf]
        %v1762 = vld [vmem:[%s3 + $0x4c] sm:$0xf]
        %v1763 = vld [vmem:[%s3 + $0x50] sm:$0xf]
        %v1764 = vld [vmem:[%s3 + $0x54] sm:$0xf]
        %v1765 = vld [vmem:[%s3 + $0x58] sm:$0xf]
        %v1766 = vld [vmem:[%s3 + $0x5c] sm:$0xf]
        %v1767 = vld [vmem:[%s3 + $0x60] sm:$0xf]
        %v1768 = vld [vmem:[%s3 + $0x64] sm:$0xf]
        %v1769 = vld [vmem:[%s3 + $0x68] sm:$0xf]
        %v1770 = vld [vmem:[%s3 + $0x6c] sm:$0xf]
        %v1771 = vld [vmem:[%s3 + $0x70] sm:$0xf]
        %v1772 = vld [vmem:[%s3 + $0x74] sm:$0xf]
        %v1773 = vld [vmem:[%s3 + $0x78] sm:$0xf]
        %v1774 = vld [vmem:[%s3 + $0x7c] sm:$0xf]
        %v1775 = vld [vmem:[%s3 + $0x80] sm:$0xf]
        %v1776 = vld [vmem:[%s3 + $0x84] sm:$0xf]
        %v1777 = vld [vmem:[%s3 + $0x88] sm:$0xf]
        %v1778 = vld [vmem:[%s3 + $0x8c] sm:$0xf]
        %v1779 = vld [vmem:[%s3 + $0x90] sm:$0xf]
        %v1780 = vld [vmem:[%s3 + $0x94] sm:$0xf]
        %v1781 = vld [vmem:[%s3 + $0x98] sm:$0xf]
        %v1782 = vld [vmem:[%s3 + $0x9c] sm:$0xf]
        %v1783 = vld [vmem:[%s3 + $0xa0] sm:$0xf]
        %v1784 = vld [vmem:[%s3 + $0xa4] sm:$0xf]
        %v1785 = vld [vmem:[%s3 + $0xa8] sm:$0xf]
        %v1786 = vld [vmem:[%s3 + $0xac] sm:$0xf]
        %v1787 = vld [vmem:[%s3 + $0xb0] sm:$0xf]
        %v1788 = vld [vmem:[%s3 + $0xb4] sm:$0xf]
        %v1789 = vld [vmem:[%s3 + $0xb8] sm:$0xf]
        %v1790 = vld [vmem:[%s3 + $0xbc] sm:$0xf]
        %v1791 = vld [vmem:[%s3 + $0xc0] sm:$0xf]
        %v1792 = vld [vmem:[%s3 + $0xc4] sm:$0xf]
        %v1793 = vld [vmem:[%s3 + $0xc8] sm:$0xf]
        %v1794 = vld [vmem:[%s3 + $0xcc] sm:$0xf]
        %v1795 = vld [vmem:[%s3 + $0xd0] sm:$0xf]
        %v1796 = vld [vmem:[%s3 + $0xd4] sm:$0xf]
        %v1797 = vld [vmem:[%s3 + $0xd8] sm:$0xf]
        %v1798 = vld [vmem:[%s3 + $0xdc] sm:$0xf]
        %v1799 = vld [vmem:[%s3 + $0xe0] sm:$0xf]
        %v1800 = vld [vmem:[%s3 + $0xe4] sm:$0xf]
        %v1801 = vld [vmem:[%s3 + $0xe8] sm:$0xf]
        %v1802 = vld [vmem:[%s3 + $0xec] sm:$0xf]
        %v1803 = vld [vmem:[%s3 + $0xf0] sm:$0xf]
        %v1804 = vld [vmem:[%s3 + $0xf4] sm:$0xf]
        %v1805 = vld [vmem:[%s3 + $0xf8] sm:$0xf]
        %v1806 = vld [vmem:[%s3 + $0xfc] sm:$0xf]
        %v1871 = vunpack.c.l.b16 %v1743
        %v1872 = vunpack.c.l.b16 %v1744
        %v1873 = vunpack.c.l.b16 %v1745
        %v1874 = vunpack.c.l.b16 %v1746
        %v1875 = vunpack.c.l.b16 %v1747
        %v1876 = vunpack.c.l.b16 %v1748
        %v1877 = vunpack.c.l.b16 %v1749
        %v1878 = vunpack.c.l.b16 %v1750
        %v1879 = vunpack.c.l.b16 %v1751
        %v1880 = vunpack.c.l.b16 %v1752
        %v1881 = vunpack.c.l.b16 %v1753
        %v1882 = vunpack.c.l.b16 %v1754
        %v1883 = vunpack.c.l.b16 %v1755
        %v1884 = vunpack.c.l.b16 %v1756
        %v1885 = vunpack.c.l.b16 %v1757
        %v1886 = vunpack.c.l.b16 %v1758
        %v1887 = vunpack.c.l.b16 %v1759
        %v1888 = vunpack.c.l.b16 %v1760
        %v1889 = vunpack.c.l.b16 %v1761
        %v1890 = vunpack.c.l.b16 %v1762
        %v1891 = vunpack.c.l.b16 %v1763
        %v1892 = vunpack.c.l.b16 %v1764
        %v1893 = vunpack.c.l.b16 %v1765
        %v1894 = vunpack.c.l.b16 %v1766
        %v1895 = vunpack.c.l.b16 %v1767
        %v1896 = vunpack.c.l.b16 %v1768
        %v1897 = vunpack.c.l.b16 %v1769
        %v1898 = vunpack.c.l.b16 %v1770
        %v1899 = vunpack.c.l.b16 %v1771
        %v1900 = vunpack.c.l.b16 %v1772
        %v1901 = vunpack.c.l.b16 %v1773
        %v1902 = vunpack.c.l.b16 %v1774
        %v1903 = vunpack.c.l.b16 %v1775
        %v1904 = vunpack.c.l.b16 %v1776
        %v1905 = vunpack.c.l.b16 %v1777
        %v1906 = vunpack.c.l.b16 %v1778
        %v1907 = vunpack.c.l.b16 %v1779
        %v1908 = vunpack.c.l.b16 %v1780
        %v1909 = vunpack.c.l.b16 %v1781
        %v1910 = vunpack.c.l.b16 %v1782
        %v1911 = vunpack.c.l.b16 %v1783
        %v1912 = vunpack.c.l.b16 %v1784
        %v1913 = vunpack.c.l.b16 %v1785
        %v1914 = vunpack.c.l.b16 %v1786
        %v1915 = vunpack.c.l.b16 %v1787
        %v1916 = vunpack.c.l.b16 %v1788
        %v1917 = vunpack.c.l.b16 %v1789
        %v1918 = vunpack.c.l.b16 %v1790
        %v1919 = vunpack.c.l.b16 %v1791
        %v1920 = vunpack.c.l.b16 %v1792
        %v1921 = vunpack.c.l.b16 %v1793
        %v1922 = vunpack.c.l.b16 %v1794
        %v1923 = vunpack.c.l.b16 %v1795
        %v1924 = vunpack.c.l.b16 %v1796
        %v1925 = vunpack.c.l.b16 %v1797
        %v1926 = vunpack.c.l.b16 %v1798
        %v1927 = vunpack.c.l.b16 %v1799
        %v1928 = vunpack.c.l.b16 %v1800
        %v1929 = vunpack.c.l.b16 %v1801
        %v1930 = vunpack.c.l.b16 %v1802
        %v1931 = vunpack.c.l.b16 %v1803
        %v1932 = vunpack.c.l.b16 %v1804
        %v1933 = vunpack.c.l.b16 %v1805
        %v1934 = vunpack.c.l.b16 %v1806
        %v1935 = vpack.c.b16 %v1872, %v1871
        %v1936 = vpack.c.b16 %v1874, %v1873
        %v1937 = vpack.c.b16 %v1876, %v1875
        %v1938 = vpack.c.b16 %v1878, %v1877
        %v1939 = vpack.c.b16 %v1880, %v1879
        %v1940 = vpack.c.b16 %v1882, %v1881
        %v1941 = vpack.c.b16 %v1884, %v1883
        %v1942 = vpack.c.b16 %v1886, %v1885
        %v1943 = vpack.c.b16 %v1888, %v1887
        %v1944 = vpack.c.b16 %v1890, %v1889
        %v1945 = vpack.c.b16 %v1892, %v1891
        %v1946 = vpack.c.b16 %v1894, %v1893
        %v1947 = vpack.c.b16 %v1896, %v1895
        %v1948 = vpack.c.b16 %v1898, %v1897
        %v1949 = vpack.c.b16 %v1900, %v1899
        %v1950 = vpack.c.b16 %v1902, %v1901
        %v1951 = vpack.c.b16 %v1904, %v1903
        %v1952 = vpack.c.b16 %v1906, %v1905
        %v1953 = vpack.c.b16 %v1908, %v1907
        %v1954 = vpack.c.b16 %v1910, %v1909
        %v1955 = vpack.c.b16 %v1912, %v1911
        %v1956 = vpack.c.b16 %v1914, %v1913
        %v1957 = vpack.c.b16 %v1916, %v1915
        %v1958 = vpack.c.b16 %v1918, %v1917
        %v1959 = vpack.c.b16 %v1920, %v1919
        %v1960 = vpack.c.b16 %v1922, %v1921
        %v1961 = vpack.c.b16 %v1924, %v1923
        %v1962 = vpack.c.b16 %v1926, %v1925
        %v1963 = vpack.c.b16 %v1928, %v1927
        %v1964 = vpack.c.b16 %v1930, %v1929
        %v1965 = vpack.c.b16 %v1932, %v1931
        %v1966 = vpack.c.b16 %v1934, %v1933
        %1999 = vmatprep.subr.bf16.mxu0 0
        %2000 = vmatpush1.bf16.msra.mxu0 %v1942
        %2001 = vmatprep.subr.bf16.mxu0 0
        %2002 = vmatpush1.bf16.msra.mxu0 %v1941
        %2003 = vmatprep.subr.bf16.mxu0 0
        %2004 = vmatpush1.bf16.msra.mxu0 %v1940
        %2005 = vmatprep.subr.bf16.mxu0 0
        %2006 = vmatpush1.bf16.msra.mxu0 %v1939
        %2007 = vmatprep.subr.bf16.mxu0 0
        %2008 = vmatpush1.bf16.msra.mxu0 %v1938
        %2009 = vmatprep.subr.bf16.mxu0 0
        %2010 = vmatpush1.bf16.msra.mxu0 %v1937
        %2011 = vmatprep.subr.bf16.mxu0 0
        %2012 = vmatpush1.bf16.msra.mxu0 %v1936
        %2013 = vmatprep.subr.bf16.mxu0 0
        %2014 = vmatpush1.bf16.msra.mxu0 %v1935
        %2015 = vmatprep.subr.bf16.mxu0 0
        %2016 = vmatpush2.bf16.msra.mxu0 %v1950
        %2017 = vmatprep.subr.bf16.mxu0 0
        %2018 = vmatpush2.bf16.msra.mxu0 %v1949
        %2019 = vmatprep.subr.bf16.mxu0 0
        %2020 = vmatpush2.bf16.msra.mxu0 %v1948
        %2021 = vmatprep.subr.bf16.mxu0 0
        %2022 = vmatpush2.bf16.msra.mxu0 %v1947
        %2023 = vmatprep.subr.bf16.mxu0 0
        %2024 = vmatpush2.bf16.msra.mxu0 %v1946
        %2025 = vmatprep.subr.bf16.mxu0 0
        %2026 = vmatpush2.bf16.msra.mxu0 %v1945
        %2027 = vmatprep.subr.bf16.mxu0 0
        %2028 = vmatpush2.bf16.msra.mxu0 %v1944
        %2029 = vmatprep.subr.bf16.mxu0 0
        %2030 = vmatpush2.bf16.msra.mxu0 %v1943
        %2031 = vmatprep.mubr.bf16.mxu0 %v1663
        %2032 = vmatmul.mubr.bf16.gmra.mxu0 %v1631
        %v2033 = vpop.f32.mrf.mxu0
        %v2034 = vadd.f32 0.0, %v2033
        %v2035 = vpop.f32.mrf.mxu0
        %v2036 = vpop.f32.mrf.mxu0
        %v2037 = vadd.f32 0.0, %v2036
        %v2038 = vpop.f32.mrf.mxu0
        %2039 = vmatprep.mubr.bf16.mxu0 %v1664
        %2040 = vmatmul.mubr.bf16.gmra.mxu0 %v1632
        %v2041 = vpop.f32.mrf.mxu0
        %v2042 = vadd.f32 0.0, %v2041
        %v2043 = vpop.f32.mrf.mxu0
        %v2044 = vpop.f32.mrf.mxu0
        %v2045 = vadd.f32 0.0, %v2044
        %v2046 = vpop.f32.mrf.mxu0
        %2047 = vmatprep.mubr.bf16.mxu0 %v1665
        %2048 = vmatmul.mubr.bf16.gmra.mxu0 %v1633
        %v2049 = vpop.f32.mrf.mxu0
        %v2050 = vadd.f32 0.0, %v2049
        %v2051 = vpop.f32.mrf.mxu0
        %v2052 = vpop.f32.mrf.mxu0
        %v2053 = vadd.f32 0.0, %v2052
        %v2054 = vpop.f32.mrf.mxu0
        %2055 = vmatprep.mubr.bf16.mxu0 %v1666
        %2056 = vmatmul.mubr.bf16.gmra.mxu0 %v1634
        %v2057 = vpop.f32.mrf.mxu0
        %v2058 = vadd.f32 0.0, %v2057
        %v2059 = vpop.f32.mrf.mxu0
        %v2060 = vpop.f32.mrf.mxu0
        %v2061 = vadd.f32 0.0, %v2060
        %v2062 = vpop.f32.mrf.mxu0
        %2063 = vmatprep.mubr.bf16.mxu0 %v1667
        %2064 = vmatmul.mubr.bf16.gmra.mxu0 %v1635
        %v2065 = vpop.f32.mrf.mxu0
        %v2066 = vadd.f32 0.0, %v2065
        %v2067 = vpop.f32.mrf.mxu0
        %v2068 = vpop.f32.mrf.mxu0
        %v2069 = vadd.f32 0.0, %v2068
        %v2070 = vpop.f32.mrf.mxu0
        %2071 = vmatprep.mubr.bf16.mxu0 %v1668
        %2072 = vmatmul.mubr.bf16.gmra.mxu0 %v1636
        %v2073 = vpop.f32.mrf.mxu0
        %v2074 = vadd.f32 0.0, %v2073
        %v2075 = vpop.f32.mrf.mxu0
        %v2076 = vpop.f32.mrf.mxu0
        %v2077 = vadd.f32 0.0, %v2076
        %v2078 = vpop.f32.mrf.mxu0
        %2079 = vmatprep.mubr.bf16.mxu0 %v1669
        %2080 = vmatmul.mubr.bf16.gmra.mxu0 %v1637
        %v2081 = vpop.f32.mrf.mxu0
        %v2082 = vadd.f32 0.0, %v2081
        %v2083 = vpop.f32.mrf.mxu0
        %v2084 = vpop.f32.mrf.mxu0
        %v2085 = vadd.f32 0.0, %v2084
        %v2086 = vpop.f32.mrf.mxu0
        %2087 = vmatprep.mubr.bf16.mxu0 %v1670
        %2088 = vmatmul.mubr.bf16.gmra.mxu0 %v1638
        %v2089 = vpop.f32.mrf.mxu0
        %v2090 = vadd.f32 0.0, %v2089
        %v2091 = vpop.f32.mrf.mxu0
        %v2092 = vpop.f32.mrf.mxu0
        %v2093 = vadd.f32 0.0, %v2092
        %v2094 = vpop.f32.mrf.mxu0
        %2095 = vdwg.mxu0
        %2096 = vmatprep.subr.bf16.mxu0 0
        %2097 = vmatpush1.bf16.msra.mxu0 %v1958
        %2098 = vmatprep.subr.bf16.mxu0 0
        %2099 = vmatpush1.bf16.msra.mxu0 %v1957
        %2100 = vmatprep.subr.bf16.mxu0 0
        %2101 = vmatpush1.bf16.msra.mxu0 %v1956
        %2102 = vmatprep.subr.bf16.mxu0 0
        %2103 = vmatpush1.bf16.msra.mxu0 %v1955
        %2104 = vmatprep.subr.bf16.mxu0 0
        %2105 = vmatpush1.bf16.msra.mxu0 %v1954
        %2106 = vmatprep.subr.bf16.mxu0 0
        %2107 = vmatpush1.bf16.msra.mxu0 %v1953
        %2108 = vmatprep.subr.bf16.mxu0 0
        %2109 = vmatpush1.bf16.msra.mxu0 %v1952
        %2110 = vmatprep.subr.bf16.mxu0 0
        %2111 = vmatpush1.bf16.msra.mxu0 %v1951
        %2112 = vmatprep.subr.bf16.mxu0 0
        %2113 = vmatpush2.bf16.msra.mxu0 %v1966
        %2114 = vmatprep.subr.bf16.mxu0 0
        %2115 = vmatpush2.bf16.msra.mxu0 %v1965
        %2116 = vmatprep.subr.bf16.mxu0 0
        %2117 = vmatpush2.bf16.msra.mxu0 %v1964
        %2118 = vmatprep.subr.bf16.mxu0 0
        %2119 = vmatpush2.bf16.msra.mxu0 %v1963
        %2120 = vmatprep.subr.bf16.mxu0 0
        %2121 = vmatpush2.bf16.msra.mxu0 %v1962
        %2122 = vmatprep.subr.bf16.mxu0 0
        %2123 = vmatpush2.bf16.msra.mxu0 %v1961
        %2124 = vmatprep.subr.bf16.mxu0 0
        %2125 = vmatpush2.bf16.msra.mxu0 %v1960
        %2126 = vmatprep.subr.bf16.mxu0 0
        %2127 = vmatpush2.bf16.msra.mxu0 %v1959
        %2128 = vmatprep.mubr.bf16.mxu0 %v1727
        %2129 = vmatmul.mubr.bf16.gmra.mxu0 %v1695
        %v2130 = vpop.f32.mrf.mxu0
        %v2131 = vadd.f32 %v2034, %v2130
        %v2132 = vpop.f32.mrf.mxu0
        %v2133 = vpop.f32.mrf.mxu0
        %v2134 = vadd.f32 %v2037, %v2133
        %v2135 = vpop.f32.mrf.mxu0
        %2136 = vmatprep.mubr.bf16.mxu0 %v1728
        %2137 = vmatmul.mubr.bf16.gmra.mxu0 %v1696
        %v2138 = vpop.f32.mrf.mxu0
        %v2139 = vadd.f32 %v2042, %v2138
        %v2140 = vpop.f32.mrf.mxu0
        %v2141 = vpop.f32.mrf.mxu0
        %v2142 = vadd.f32 %v2045, %v2141
        %v2143 = vpop.f32.mrf.mxu0
        %2144 = vmatprep.mubr.bf16.mxu0 %v1729
        %2145 = vmatmul.mubr.bf16.gmra.mxu0 %v1697
        %v2146 = vpop.f32.mrf.mxu0
        %v2147 = vadd.f32 %v2050, %v2146
        %v2148 = vpop.f32.mrf.mxu0
        %v2149 = vpop.f32.mrf.mxu0
        %v2150 = vadd.f32 %v2053, %v2149
        %v2151 = vpop.f32.mrf.mxu0
        %2152 = vmatprep.mubr.bf16.mxu0 %v1730
        %2153 = vmatmul.mubr.bf16.gmra.mxu0 %v1698
        %v2154 = vpop.f32.mrf.mxu0
        %v2155 = vadd.f32 %v2058, %v2154
        %v2156 = vpop.f32.mrf.mxu0
        %v2157 = vpop.f32.mrf.mxu0
        %v2158 = vadd.f32 %v2061, %v2157
        %v2159 = vpop.f32.mrf.mxu0
        %2160 = vmatprep.mubr.bf16.mxu0 %v1731
        %2161 = vmatmul.mubr.bf16.gmra.mxu0 %v1699
        %v2162 = vpop.f32.mrf.mxu0
        %v2163 = vadd.f32 %v2066, %v2162
        %v2164 = vpop.f32.mrf.mxu0
        %v2165 = vpop.f32.mrf.mxu0
        %v2166 = vadd.f32 %v2069, %v2165
        %v2167 = vpop.f32.mrf.mxu0
        %2168 = vmatprep.mubr.bf16.mxu0 %v1732
        %2169 = vmatmul.mubr.bf16.gmra.mxu0 %v1700
        %v2170 = vpop.f32.mrf.mxu0
        %v2171 = vadd.f32 %v2074, %v2170
        %v2172 = vpop.f32.mrf.mxu0
        %v2173 = vpop.f32.mrf.mxu0
        %v2174 = vadd.f32 %v2077, %v2173
        %v2175 = vpop.f32.mrf.mxu0
        %2176 = vmatprep.mubr.bf16.mxu0 %v1733
        %2177 = vmatmul.mubr.bf16.gmra.mxu0 %v1701
        %v2178 = vpop.f32.mrf.mxu0
        %v2179 = vadd.f32 %v2082, %v2178
        %v2180 = vpop.f32.mrf.mxu0
        %v2181 = vpop.f32.mrf.mxu0
        %v2182 = vadd.f32 %v2085, %v2181
        %v2183 = vpop.f32.mrf.mxu0
        %2184 = vmatprep.mubr.bf16.mxu0 %v1734
        %2185 = vmatmul.mubr.bf16.gmra.mxu0 %v1702
        %v2186 = vpop.f32.mrf.mxu0
        %v2187 = vadd.f32 %v2090, %v2186
        %v2188 = vpop.f32.mrf.mxu0
        %v2189 = vpop.f32.mrf.mxu0
        %v2190 = vadd.f32 %v2093, %v2189
        %v2191 = vpop.f32.mrf.mxu0
        %2192 = vdwg.mxu0
        %v2209 = vunpack.c.l.b16 %v666
        %v2210 = vunpack.c.l.b16 %v667
        %v2211 = vunpack.c.l.b16 %v668
        %v2212 = vunpack.c.l.b16 %v669
        %v2213 = vunpack.c.l.b16 %v670
        %v2214 = vunpack.c.l.b16 %v671
        %v2215 = vunpack.c.l.b16 %v672
        %v2216 = vunpack.c.l.b16 %v673
        %v2217 = vunpack.c.l.b16 %v674
        %v2218 = vunpack.c.l.b16 %v675
        %v2219 = vunpack.c.l.b16 %v676
        %v2220 = vunpack.c.l.b16 %v677
        %v2221 = vunpack.c.l.b16 %v678
        %v2222 = vunpack.c.l.b16 %v679
        %v2223 = vunpack.c.l.b16 %v680
        %v2224 = vunpack.c.l.b16 %v681
        %v2225 = vpack.c.b16 %v2210, %v2209
        %v2226 = vpack.c.b16 %v2212, %v2211
        %v2227 = vpack.c.b16 %v2214, %v2213
        %v2228 = vpack.c.b16 %v2216, %v2215
        %v2229 = vpack.c.b16 %v2218, %v2217
        %v2230 = vpack.c.b16 %v2220, %v2219
        %v2231 = vpack.c.b16 %v2222, %v2221
        %v2232 = vpack.c.b16 %v2224, %v2223
        %v2257 = vunpack.c.l.b16 %v682
        %v2258 = vunpack.c.l.b16 %v683
        %v2259 = vunpack.c.l.b16 %v684
        %v2260 = vunpack.c.l.b16 %v685
        %v2261 = vunpack.c.l.b16 %v686
        %v2262 = vunpack.c.l.b16 %v687
        %v2263 = vunpack.c.l.b16 %v688
        %v2264 = vunpack.c.l.b16 %v689
        %v2265 = vunpack.c.l.b16 %v690
        %v2266 = vunpack.c.l.b16 %v691
        %v2267 = vunpack.c.l.b16 %v692
        %v2268 = vunpack.c.l.b16 %v693
        %v2269 = vunpack.c.l.b16 %v694
        %v2270 = vunpack.c.l.b16 %v695
        %v2271 = vunpack.c.l.b16 %v696
        %v2272 = vunpack.c.l.b16 %v697
        %v2273 = vpack.c.b16 %v2258, %v2257
        %v2274 = vpack.c.b16 %v2260, %v2259
        %v2275 = vpack.c.b16 %v2262, %v2261
        %v2276 = vpack.c.b16 %v2264, %v2263
        %v2277 = vpack.c.b16 %v2266, %v2265
        %v2278 = vpack.c.b16 %v2268, %v2267
        %v2279 = vpack.c.b16 %v2270, %v2269
        %v2280 = vpack.c.b16 %v2272, %v2271
        %2289 = vmatprep.subr.bf16.mxu0 0
        %2290 = vmatpush1.bf16.msra.mxu0 %v2280
        %2291 = vmatprep.subr.bf16.mxu0 0
        %2292 = vmatpush1.bf16.msra.mxu0 %v2279
        %2293 = vmatprep.subr.bf16.mxu0 0
        %2294 = vmatpush1.bf16.msra.mxu0 %v2278
        %2295 = vmatprep.subr.bf16.mxu0 0
        %2296 = vmatpush1.bf16.msra.mxu0 %v2277
        %2297 = vmatprep.subr.bf16.mxu0 0
        %2298 = vmatpush1.bf16.msra.mxu0 %v2276
        %2299 = vmatprep.subr.bf16.mxu0 0
        %2300 = vmatpush1.bf16.msra.mxu0 %v2275
        %2301 = vmatprep.subr.bf16.mxu0 0
        %2302 = vmatpush1.bf16.msra.mxu0 %v2274
        %2303 = vmatprep.subr.bf16.mxu0 0
        %2304 = vmatpush1.bf16.msra.mxu0 %v2273
        %2305 = vmatprep.subr.bf16.mxu0 0
        %2306 = vmatpush2.bf16.msra.mxu0 0
        %2307 = vmatprep.subr.bf16.mxu0 0
        %2308 = vmatpush2.bf16.msra.mxu0 0
        %2309 = vmatprep.subr.bf16.mxu0 0
        %2310 = vmatpush2.bf16.msra.mxu0 0
        %2311 = vmatprep.subr.bf16.mxu0 0
        %2312 = vmatpush2.bf16.msra.mxu0 0
        %2313 = vmatprep.subr.bf16.mxu0 0
        %2314 = vmatpush2.bf16.msra.mxu0 0
        %2315 = vmatprep.subr.bf16.mxu0 0
        %2316 = vmatpush2.bf16.msra.mxu0 0
        %2317 = vmatprep.subr.bf16.mxu0 0
        %2318 = vmatpush2.bf16.msra.mxu0 0
        %2319 = vmatprep.subr.bf16.mxu0 0
        %2320 = vmatpush2.bf16.msra.mxu0 0
        %2321 = vmatprep.mubr.bf16.mxu0 0
        %2322 = vmatmul.mubr.bf16.gmra.mxu0 %v2225
        %v2323 = vpop.f32.mrf.mxu0
        %v2324 = vadd.f32 %v2131, %v2323
        %v2325 = vpop.f32.mrf.mxu0
        %v2326 = vpop.f32.mrf.mxu0
        %v2327 = vadd.f32 %v2134, %v2326
        %v2328 = vpop.f32.mrf.mxu0
        %2329 = vmatprep.mubr.bf16.mxu0 0
        %2330 = vmatmul.mubr.bf16.gmra.mxu0 %v2226
        %v2331 = vpop.f32.mrf.mxu0
        %v2332 = vadd.f32 %v2139, %v2331
        %v2333 = vpop.f32.mrf.mxu0
        %v2334 = vpop.f32.mrf.mxu0
        %v2335 = vadd.f32 %v2142, %v2334
        %v2336 = vpop.f32.mrf.mxu0
        %2337 = vmatprep.mubr.bf16.mxu0 0
        %2338 = vmatmul.mubr.bf16.gmra.mxu0 %v2227
        %v2339 = vpop.f32.mrf.mxu0
        %v2340 = vadd.f32 %v2147, %v2339
        %v2341 = vpop.f32.mrf.mxu0
        %v2342 = vpop.f32.mrf.mxu0
        %v2343 = vadd.f32 %v2150, %v2342
        %v2344 = vpop.f32.mrf.mxu0
        %2345 = vmatprep.mubr.bf16.mxu0 0
        %2346 = vmatmul.mubr.bf16.gmra.mxu0 %v2228
        %v2347 = vpop.f32.mrf.mxu0
        %v2348 = vadd.f32 %v2155, %v2347
        %v2349 = vpop.f32.mrf.mxu0
        %v2350 = vpop.f32.mrf.mxu0
        %v2351 = vadd.f32 %v2158, %v2350
        %v2352 = vpop.f32.mrf.mxu0
        %2353 = vmatprep.mubr.bf16.mxu0 0
        %2354 = vmatmul.mubr.bf16.gmra.mxu0 %v2229
        %v2355 = vpop.f32.mrf.mxu0
        %v2356 = vadd.f32 %v2163, %v2355
        %v2357 = vpop.f32.mrf.mxu0
        %v2358 = vpop.f32.mrf.mxu0
        %v2359 = vadd.f32 %v2166, %v2358
        %v2360 = vpop.f32.mrf.mxu0
        %2361 = vmatprep.mubr.bf16.mxu0 0
        %2362 = vmatmul.mubr.bf16.gmra.mxu0 %v2230
        %v2363 = vpop.f32.mrf.mxu0
        %v2364 = vadd.f32 %v2171, %v2363
        %v2365 = vpop.f32.mrf.mxu0
        %v2366 = vpop.f32.mrf.mxu0
        %v2367 = vadd.f32 %v2174, %v2366
        %v2368 = vpop.f32.mrf.mxu0
        %2369 = vmatprep.mubr.bf16.mxu0 0
        %2370 = vmatmul.mubr.bf16.gmra.mxu0 %v2231
        %v2371 = vpop.f32.mrf.mxu0
        %v2372 = vadd.f32 %v2179, %v2371
        %v2373 = vpop.f32.mrf.mxu0
        %v2374 = vpop.f32.mrf.mxu0
        %v2375 = vadd.f32 %v2182, %v2374
        %v2376 = vpop.f32.mrf.mxu0
        %2377 = vmatprep.mubr.bf16.mxu0 0
        %2378 = vmatmul.mubr.bf16.gmra.mxu0 %v2232
        %v2379 = vpop.f32.mrf.mxu0
        %v2380 = vadd.f32 %v2187, %v2379
        %v2381 = vpop.f32.mrf.mxu0
        %v2382 = vpop.f32.mrf.mxu0
        %v2383 = vadd.f32 %v2190, %v2382
        %v2384 = vpop.f32.mrf.mxu0
        %2385 = vdwg.mxu0
        %v2386 = vld [vmem:[%s908 + $0xc] sm:$0xf]
        %v2387 = vld [vmem:[%s908 + $0x24] sm:$0xf]
        %v2388 = vld [vmem:[%s908 + $0x3c] sm:$0xf]
        %v2389 = vld [vmem:[%s908 + $0x54] sm:$0xf]
        %v2390 = vld [vmem:[%s908 + $0x6c] sm:$0xf]
        %v2391 = vld [vmem:[%s908 + $0x84] sm:$0xf]
        %v2392 = vld [vmem:[%s908 + $0x9c] sm:$0xf]
        %v2393 = vld [vmem:[%s908 + $0xb4] sm:$0xf]
        %v2394 = vld [vmem:[%s1163 + $0x8] sm:$0xf]
        %v2395 = vld [vmem:[%s1163 + $0xc] sm:$0xf]
        %v2396 = vld [vmem:[%s1163 + $0x20] sm:$0xf]
        %v2397 = vld [vmem:[%s1163 + $0x24] sm:$0xf]
        %v2398 = vld [vmem:[%s1163 + $0x38] sm:$0xf]
        %v2399 = vld [vmem:[%s1163 + $0x3c] sm:$0xf]
        %v2400 = vld [vmem:[%s1163 + $0x50] sm:$0xf]
        %v2401 = vld [vmem:[%s1163 + $0x54] sm:$0xf]
        %v2402 = vld [vmem:[%s1163 + $0x68] sm:$0xf]
        %v2403 = vld [vmem:[%s1163 + $0x6c] sm:$0xf]
        %v2404 = vld [vmem:[%s1163 + $0x80] sm:$0xf]
        %v2405 = vld [vmem:[%s1163 + $0x84] sm:$0xf]
        %v2406 = vld [vmem:[%s1163 + $0x98] sm:$0xf]
        %v2407 = vld [vmem:[%s1163 + $0x9c] sm:$0xf]
        %v2408 = vld [vmem:[%s1163 + $0xb0] sm:$0xf]
        %v2409 = vld [vmem:[%s1163 + $0xb4] sm:$0xf]
        %v2410 = vld [vmem:[%s1366 + $0x8] sm:$0xf]
        %v2411 = vld [vmem:[%s1366 + $0xc] sm:$0xf]
        %v2412 = vld [vmem:[%s1366 + $0x20] sm:$0xf]
        %v2413 = vld [vmem:[%s1366 + $0x24] sm:$0xf]
        %v2414 = vld [vmem:[%s1366 + $0x38] sm:$0xf]
        %v2415 = vld [vmem:[%s1366 + $0x3c] sm:$0xf]
        %v2416 = vld [vmem:[%s1366 + $0x50] sm:$0xf]
        %v2417 = vld [vmem:[%s1366 + $0x54] sm:$0xf]
        %v2418 = vld [vmem:[%s1366 + $0x68] sm:$0xf]
        %v2419 = vld [vmem:[%s1366 + $0x6c] sm:$0xf]
        %v2420 = vld [vmem:[%s1366 + $0x80] sm:$0xf]
        %v2421 = vld [vmem:[%s1366 + $0x84] sm:$0xf]
        %v2422 = vld [vmem:[%s1366 + $0x98] sm:$0xf]
        %v2423 = vld [vmem:[%s1366 + $0x9c] sm:$0xf]
        %v2424 = vld [vmem:[%s1366 + $0xb0] sm:$0xf]
        %v2425 = vld [vmem:[%s1366 + $0xb4] sm:$0xf]
        %v2442 = vunpack.c.l.b16 %v703
        %v2443 = vunpack.c.l.b16 %v704
        %v2444 = vunpack.c.l.b16 %v706
        %v2445 = vunpack.c.l.b16 %v707
        %v2446 = vunpack.c.l.b16 %v709
        %v2447 = vunpack.c.l.b16 %v710
        %v2448 = vunpack.c.l.b16 %v712
        %v2449 = vunpack.c.l.b16 %v713
        %v2450 = vunpack.c.l.b16 %v715
        %v2451 = vunpack.c.l.b16 %v716
        %v2452 = vunpack.c.l.b16 %v718
        %v2453 = vunpack.c.l.b16 %v719
        %v2454 = vunpack.c.l.b16 %v721
        %v2455 = vunpack.c.l.b16 %v722
        %v2456 = vunpack.c.l.b16 %v724
        %v2457 = vunpack.c.l.b16 %v725
        %v2458 = vpack.c.b16 %v2443, %v2442
        %v2459 = vpack.c.b16 %v2445, %v2444
        %v2460 = vpack.c.b16 %v2447, %v2446
        %v2461 = vpack.c.b16 %v2449, %v2448
        %v2462 = vpack.c.b16 %v2451, %v2450
        %v2463 = vpack.c.b16 %v2453, %v2452
        %v2464 = vpack.c.b16 %v2455, %v2454
        %v2465 = vpack.c.b16 %v2457, %v2456
        %v2490 = vunpack.c.l.b16 %v910
        %v2491 = vunpack.c.l.b16 %v2386
        %v2492 = vunpack.c.l.b16 %v913
        %v2493 = vunpack.c.l.b16 %v2387
        %v2494 = vunpack.c.l.b16 %v916
        %v2495 = vunpack.c.l.b16 %v2388
        %v2496 = vunpack.c.l.b16 %v919
        %v2497 = vunpack.c.l.b16 %v2389
        %v2498 = vunpack.c.l.b16 %v922
        %v2499 = vunpack.c.l.b16 %v2390
        %v2500 = vunpack.c.l.b16 %v925
        %v2501 = vunpack.c.l.b16 %v2391
        %v2502 = vunpack.c.l.b16 %v928
        %v2503 = vunpack.c.l.b16 %v2392
        %v2504 = vunpack.c.l.b16 %v931
        %v2505 = vunpack.c.l.b16 %v2393
        %v2506 = vpack.c.b16 %v2491, %v2490
        %v2507 = vpack.c.b16 %v2493, %v2492
        %v2508 = vpack.c.b16 %v2495, %v2494
        %v2509 = vpack.c.b16 %v2497, %v2496
        %v2510 = vpack.c.b16 %v2499, %v2498
        %v2511 = vpack.c.b16 %v2501, %v2500
        %v2512 = vpack.c.b16 %v2503, %v2502
        %v2513 = vpack.c.b16 %v2505, %v2504
        %v2538 = vunpack.c.l.b16 %v2394
        %v2539 = vunpack.c.l.b16 %v2395
        %v2540 = vunpack.c.l.b16 %v2396
        %v2541 = vunpack.c.l.b16 %v2397
        %v2542 = vunpack.c.l.b16 %v2398
        %v2543 = vunpack.c.l.b16 %v2399
        %v2544 = vunpack.c.l.b16 %v2400
        %v2545 = vunpack.c.l.b16 %v2401
        %v2546 = vunpack.c.l.b16 %v2402
        %v2547 = vunpack.c.l.b16 %v2403
        %v2548 = vunpack.c.l.b16 %v2404
        %v2549 = vunpack.c.l.b16 %v2405
        %v2550 = vunpack.c.l.b16 %v2406
        %v2551 = vunpack.c.l.b16 %v2407
        %v2552 = vunpack.c.l.b16 %v2408
        %v2553 = vunpack.c.l.b16 %v2409
        %v2554 = vpack.c.b16 %v2539, %v2538
        %v2555 = vpack.c.b16 %v2541, %v2540
        %v2556 = vpack.c.b16 %v2543, %v2542
        %v2557 = vpack.c.b16 %v2545, %v2544
        %v2558 = vpack.c.b16 %v2547, %v2546
        %v2559 = vpack.c.b16 %v2549, %v2548
        %v2560 = vpack.c.b16 %v2551, %v2550
        %v2561 = vpack.c.b16 %v2553, %v2552
        %v2586 = vunpack.c.l.b16 %v2410
        %v2587 = vunpack.c.l.b16 %v2411
        %v2588 = vunpack.c.l.b16 %v2412
        %v2589 = vunpack.c.l.b16 %v2413
        %v2590 = vunpack.c.l.b16 %v2414
        %v2591 = vunpack.c.l.b16 %v2415
        %v2592 = vunpack.c.l.b16 %v2416
        %v2593 = vunpack.c.l.b16 %v2417
        %v2594 = vunpack.c.l.b16 %v2418
        %v2595 = vunpack.c.l.b16 %v2419
        %v2596 = vunpack.c.l.b16 %v2420
        %v2597 = vunpack.c.l.b16 %v2421
        %v2598 = vunpack.c.l.b16 %v2422
        %v2599 = vunpack.c.l.b16 %v2423
        %v2600 = vunpack.c.l.b16 %v2424
        %v2601 = vunpack.c.l.b16 %v2425
        %v2602 = vpack.c.b16 %v2587, %v2586
        %v2603 = vpack.c.b16 %v2589, %v2588
        %v2604 = vpack.c.b16 %v2591, %v2590
        %v2605 = vpack.c.b16 %v2593, %v2592
        %v2606 = vpack.c.b16 %v2595, %v2594
        %v2607 = vpack.c.b16 %v2597, %v2596
        %v2608 = vpack.c.b16 %v2599, %v2598
        %v2609 = vpack.c.b16 %v2601, %v2600
        %s2618 = scalar_lea.vmem %s3, 256
        %v2619 = vld [vmem:[%s2618] sm:$0xf]
        %v2620 = vld [vmem:[%s2618 + $0x4] sm:$0xf]
        %v2621 = vld [vmem:[%s2618 + $0x8] sm:$0xf]
        %v2622 = vld [vmem:[%s2618 + $0xc] sm:$0xf]
        %v2623 = vld [vmem:[%s2618 + $0x10] sm:$0xf]
        %v2624 = vld [vmem:[%s2618 + $0x14] sm:$0xf]
        %v2625 = vld [vmem:[%s2618 + $0x18] sm:$0xf]
        %v2626 = vld [vmem:[%s2618 + $0x1c] sm:$0xf]
        %v2627 = vld [vmem:[%s2618 + $0x20] sm:$0xf]
        %v2628 = vld [vmem:[%s2618 + $0x24] sm:$0xf]
        %v2629 = vld [vmem:[%s2618 + $0x28] sm:$0xf]
        %v2630 = vld [vmem:[%s2618 + $0x2c] sm:$0xf]
        %v2631 = vld [vmem:[%s2618 + $0x30] sm:$0xf]
        %v2632 = vld [vmem:[%s2618 + $0x34] sm:$0xf]
        %v2633 = vld [vmem:[%s2618 + $0x38] sm:$0xf]
        %v2634 = vld [vmem:[%s2618 + $0x3c] sm:$0xf]
        %v2635 = vld [vmem:[%s2618 + $0x40] sm:$0xf]
        %v2636 = vld [vmem:[%s2618 + $0x44] sm:$0xf]
        %v2637 = vld [vmem:[%s2618 + $0x48] sm:$0xf]
        %v2638 = vld [vmem:[%s2618 + $0x4c] sm:$0xf]
        %v2639 = vld [vmem:[%s2618 + $0x50] sm:$0xf]
        %v2640 = vld [vmem:[%s2618 + $0x54] sm:$0xf]
        %v2641 = vld [vmem:[%s2618 + $0x58] sm:$0xf]
        %v2642 = vld [vmem:[%s2618 + $0x5c] sm:$0xf]
        %v2643 = vld [vmem:[%s2618 + $0x60] sm:$0xf]
        %v2644 = vld [vmem:[%s2618 + $0x64] sm:$0xf]
        %v2645 = vld [vmem:[%s2618 + $0x68] sm:$0xf]
        %v2646 = vld [vmem:[%s2618 + $0x6c] sm:$0xf]
        %v2647 = vld [vmem:[%s2618 + $0x70] sm:$0xf]
        %v2648 = vld [vmem:[%s2618 + $0x74] sm:$0xf]
        %v2649 = vld [vmem:[%s2618 + $0x78] sm:$0xf]
        %v2650 = vld [vmem:[%s2618 + $0x7c] sm:$0xf]
        %v2651 = vld [vmem:[%s2618 + $0x80] sm:$0xf]
        %v2652 = vld [vmem:[%s2618 + $0x84] sm:$0xf]
        %v2653 = vld [vmem:[%s2618 + $0x88] sm:$0xf]
        %v2654 = vld [vmem:[%s2618 + $0x8c] sm:$0xf]
        %v2655 = vld [vmem:[%s2618 + $0x90] sm:$0xf]
        %v2656 = vld [vmem:[%s2618 + $0x94] sm:$0xf]
        %v2657 = vld [vmem:[%s2618 + $0x98] sm:$0xf]
        %v2658 = vld [vmem:[%s2618 + $0x9c] sm:$0xf]
        %v2659 = vld [vmem:[%s2618 + $0xa0] sm:$0xf]
        %v2660 = vld [vmem:[%s2618 + $0xa4] sm:$0xf]
        %v2661 = vld [vmem:[%s2618 + $0xa8] sm:$0xf]
        %v2662 = vld [vmem:[%s2618 + $0xac] sm:$0xf]
        %v2663 = vld [vmem:[%s2618 + $0xb0] sm:$0xf]
        %v2664 = vld [vmem:[%s2618 + $0xb4] sm:$0xf]
        %v2665 = vld [vmem:[%s2618 + $0xb8] sm:$0xf]
        %v2666 = vld [vmem:[%s2618 + $0xbc] sm:$0xf]
        %v2667 = vld [vmem:[%s2618 + $0xc0] sm:$0xf]
        %v2668 = vld [vmem:[%s2618 + $0xc4] sm:$0xf]
        %v2669 = vld [vmem:[%s2618 + $0xc8] sm:$0xf]
        %v2670 = vld [vmem:[%s2618 + $0xcc] sm:$0xf]
        %v2671 = vld [vmem:[%s2618 + $0xd0] sm:$0xf]
        %v2672 = vld [vmem:[%s2618 + $0xd4] sm:$0xf]
        %v2673 = vld [vmem:[%s2618 + $0xd8] sm:$0xf]
        %v2674 = vld [vmem:[%s2618 + $0xdc] sm:$0xf]
        %v2675 = vld [vmem:[%s2618 + $0xe0] sm:$0xf]
        %v2676 = vld [vmem:[%s2618 + $0xe4] sm:$0xf]
        %v2677 = vld [vmem:[%s2618 + $0xe8] sm:$0xf]
        %v2678 = vld [vmem:[%s2618 + $0xec] sm:$0xf]
        %v2679 = vld [vmem:[%s2618 + $0xf0] sm:$0xf]
        %v2680 = vld [vmem:[%s2618 + $0xf4] sm:$0xf]
        %v2681 = vld [vmem:[%s2618 + $0xf8] sm:$0xf]
        %v2682 = vld [vmem:[%s2618 + $0xfc] sm:$0xf]
        %v2747 = vunpack.c.l.b16 %v2619
        %v2748 = vunpack.c.l.b16 %v2620
        %v2749 = vunpack.c.l.b16 %v2621
        %v2750 = vunpack.c.l.b16 %v2622
        %v2751 = vunpack.c.l.b16 %v2623
        %v2752 = vunpack.c.l.b16 %v2624
        %v2753 = vunpack.c.l.b16 %v2625
        %v2754 = vunpack.c.l.b16 %v2626
        %v2755 = vunpack.c.l.b16 %v2627
        %v2756 = vunpack.c.l.b16 %v2628
        %v2757 = vunpack.c.l.b16 %v2629
        %v2758 = vunpack.c.l.b16 %v2630
        %v2759 = vunpack.c.l.b16 %v2631
        %v2760 = vunpack.c.l.b16 %v2632
        %v2761 = vunpack.c.l.b16 %v2633
        %v2762 = vunpack.c.l.b16 %v2634
        %v2763 = vunpack.c.l.b16 %v2635
        %v2764 = vunpack.c.l.b16 %v2636
        %v2765 = vunpack.c.l.b16 %v2637
        %v2766 = vunpack.c.l.b16 %v2638
        %v2767 = vunpack.c.l.b16 %v2639
        %v2768 = vunpack.c.l.b16 %v2640
        %v2769 = vunpack.c.l.b16 %v2641
        %v2770 = vunpack.c.l.b16 %v2642
        %v2771 = vunpack.c.l.b16 %v2643
        %v2772 = vunpack.c.l.b16 %v2644
        %v2773 = vunpack.c.l.b16 %v2645
        %v2774 = vunpack.c.l.b16 %v2646
        %v2775 = vunpack.c.l.b16 %v2647
        %v2776 = vunpack.c.l.b16 %v2648
        %v2777 = vunpack.c.l.b16 %v2649
        %v2778 = vunpack.c.l.b16 %v2650
        %v2779 = vunpack.c.l.b16 %v2651
        %v2780 = vunpack.c.l.b16 %v2652
        %v2781 = vunpack.c.l.b16 %v2653
        %v2782 = vunpack.c.l.b16 %v2654
        %v2783 = vunpack.c.l.b16 %v2655
        %v2784 = vunpack.c.l.b16 %v2656
        %v2785 = vunpack.c.l.b16 %v2657
        %v2786 = vunpack.c.l.b16 %v2658
        %v2787 = vunpack.c.l.b16 %v2659
        %v2788 = vunpack.c.l.b16 %v2660
        %v2789 = vunpack.c.l.b16 %v2661
        %v2790 = vunpack.c.l.b16 %v2662
        %v2791 = vunpack.c.l.b16 %v2663
        %v2792 = vunpack.c.l.b16 %v2664
        %v2793 = vunpack.c.l.b16 %v2665
        %v2794 = vunpack.c.l.b16 %v2666
        %v2795 = vunpack.c.l.b16 %v2667
        %v2796 = vunpack.c.l.b16 %v2668
        %v2797 = vunpack.c.l.b16 %v2669
        %v2798 = vunpack.c.l.b16 %v2670
        %v2799 = vunpack.c.l.b16 %v2671
        %v2800 = vunpack.c.l.b16 %v2672
        %v2801 = vunpack.c.l.b16 %v2673
        %v2802 = vunpack.c.l.b16 %v2674
        %v2803 = vunpack.c.l.b16 %v2675
        %v2804 = vunpack.c.l.b16 %v2676
        %v2805 = vunpack.c.l.b16 %v2677
        %v2806 = vunpack.c.l.b16 %v2678
        %v2807 = vunpack.c.l.b16 %v2679
        %v2808 = vunpack.c.l.b16 %v2680
        %v2809 = vunpack.c.l.b16 %v2681
        %v2810 = vunpack.c.l.b16 %v2682
        %v2811 = vpack.c.b16 %v2748, %v2747
        %v2812 = vpack.c.b16 %v2750, %v2749
        %v2813 = vpack.c.b16 %v2752, %v2751
        %v2814 = vpack.c.b16 %v2754, %v2753
        %v2815 = vpack.c.b16 %v2756, %v2755
        %v2816 = vpack.c.b16 %v2758, %v2757
        %v2817 = vpack.c.b16 %v2760, %v2759
        %v2818 = vpack.c.b16 %v2762, %v2761
        %v2819 = vpack.c.b16 %v2764, %v2763
        %v2820 = vpack.c.b16 %v2766, %v2765
        %v2821 = vpack.c.b16 %v2768, %v2767
        %v2822 = vpack.c.b16 %v2770, %v2769
        %v2823 = vpack.c.b16 %v2772, %v2771
        %v2824 = vpack.c.b16 %v2774, %v2773
        %v2825 = vpack.c.b16 %v2776, %v2775
        %v2826 = vpack.c.b16 %v2778, %v2777
        %v2827 = vpack.c.b16 %v2780, %v2779
        %v2828 = vpack.c.b16 %v2782, %v2781
        %v2829 = vpack.c.b16 %v2784, %v2783
        %v2830 = vpack.c.b16 %v2786, %v2785
        %v2831 = vpack.c.b16 %v2788, %v2787
        %v2832 = vpack.c.b16 %v2790, %v2789
        %v2833 = vpack.c.b16 %v2792, %v2791
        %v2834 = vpack.c.b16 %v2794, %v2793
        %v2835 = vpack.c.b16 %v2796, %v2795
        %v2836 = vpack.c.b16 %v2798, %v2797
        %v2837 = vpack.c.b16 %v2800, %v2799
        %v2838 = vpack.c.b16 %v2802, %v2801
        %v2839 = vpack.c.b16 %v2804, %v2803
        %v2840 = vpack.c.b16 %v2806, %v2805
        %v2841 = vpack.c.b16 %v2808, %v2807
        %v2842 = vpack.c.b16 %v2810, %v2809
        %2875 = vmatprep.subr.bf16.mxu0 0
        %2876 = vmatpush1.bf16.msra.mxu0 %v2818
        %2877 = vmatprep.subr.bf16.mxu0 0
        %2878 = vmatpush1.bf16.msra.mxu0 %v2817
        %2879 = vmatprep.subr.bf16.mxu0 0
        %2880 = vmatpush1.bf16.msra.mxu0 %v2816
        %2881 = vmatprep.subr.bf16.mxu0 0
        %2882 = vmatpush1.bf16.msra.mxu0 %v2815
        %2883 = vmatprep.subr.bf16.mxu0 0
        %2884 = vmatpush1.bf16.msra.mxu0 %v2814
        %2885 = vmatprep.subr.bf16.mxu0 0
        %2886 = vmatpush1.bf16.msra.mxu0 %v2813
        %2887 = vmatprep.subr.bf16.mxu0 0
        %2888 = vmatpush1.bf16.msra.mxu0 %v2812
        %2889 = vmatprep.subr.bf16.mxu0 0
        %2890 = vmatpush1.bf16.msra.mxu0 %v2811
        %2891 = vmatprep.subr.bf16.mxu0 0
        %2892 = vmatpush2.bf16.msra.mxu0 %v2826
        %2893 = vmatprep.subr.bf16.mxu0 0
        %2894 = vmatpush2.bf16.msra.mxu0 %v2825
        %2895 = vmatprep.subr.bf16.mxu0 0
        %2896 = vmatpush2.bf16.msra.mxu0 %v2824
        %2897 = vmatprep.subr.bf16.mxu0 0
        %2898 = vmatpush2.bf16.msra.mxu0 %v2823
        %2899 = vmatprep.subr.bf16.mxu0 0
        %2900 = vmatpush2.bf16.msra.mxu0 %v2822
        %2901 = vmatprep.subr.bf16.mxu0 0
        %2902 = vmatpush2.bf16.msra.mxu0 %v2821
        %2903 = vmatprep.subr.bf16.mxu0 0
        %2904 = vmatpush2.bf16.msra.mxu0 %v2820
        %2905 = vmatprep.subr.bf16.mxu0 0
        %2906 = vmatpush2.bf16.msra.mxu0 %v2819
        %2907 = vmatprep.mubr.bf16.mxu0 %v2506
        %2908 = vmatmul.mubr.bf16.gmra.mxu0 %v2458
        %v2909 = vpop.f32.mrf.mxu0
        %v2910 = vadd.f32 0.0, %v2909
        %v2911 = vpop.f32.mrf.mxu0
        %v2912 = vpop.f32.mrf.mxu0
        %v2913 = vadd.f32 0.0, %v2912
        %v2914 = vpop.f32.mrf.mxu0
        %2915 = vmatprep.mubr.bf16.mxu0 %v2507
        %2916 = vmatmul.mubr.bf16.gmra.mxu0 %v2459
        %v2917 = vpop.f32.mrf.mxu0
        %v2918 = vadd.f32 0.0, %v2917
        %v2919 = vpop.f32.mrf.mxu0
        %v2920 = vpop.f32.mrf.mxu0
        %v2921 = vadd.f32 0.0, %v2920
        %v2922 = vpop.f32.mrf.mxu0
        %2923 = vmatprep.mubr.bf16.mxu0 %v2508
        %2924 = vmatmul.mubr.bf16.gmra.mxu0 %v2460
        %v2925 = vpop.f32.mrf.mxu0
        %v2926 = vadd.f32 0.0, %v2925
        %v2927 = vpop.f32.mrf.mxu0
        %v2928 = vpop.f32.mrf.mxu0
        %v2929 = vadd.f32 0.0, %v2928
        %v2930 = vpop.f32.mrf.mxu0
        %2931 = vmatprep.mubr.bf16.mxu0 %v2509
        %2932 = vmatmul.mubr.bf16.gmra.mxu0 %v2461
        %v2933 = vpop.f32.mrf.mxu0
        %v2934 = vadd.f32 0.0, %v2933
        %v2935 = vpop.f32.mrf.mxu0
        %v2936 = vpop.f32.mrf.mxu0
        %v2937 = vadd.f32 0.0, %v2936
        %v2938 = vpop.f32.mrf.mxu0
        %2939 = vmatprep.mubr.bf16.mxu0 %v2510
        %2940 = vmatmul.mubr.bf16.gmra.mxu0 %v2462
        %v2941 = vpop.f32.mrf.mxu0
        %v2942 = vadd.f32 0.0, %v2941
        %v2943 = vpop.f32.mrf.mxu0
        %v2944 = vpop.f32.mrf.mxu0
        %v2945 = vadd.f32 0.0, %v2944
        %v2946 = vpop.f32.mrf.mxu0
        %2947 = vmatprep.mubr.bf16.mxu0 %v2511
        %2948 = vmatmul.mubr.bf16.gmra.mxu0 %v2463
        %v2949 = vpop.f32.mrf.mxu0
        %v2950 = vadd.f32 0.0, %v2949
        %v2951 = vpop.f32.mrf.mxu0
        %v2952 = vpop.f32.mrf.mxu0
        %v2953 = vadd.f32 0.0, %v2952
        %v2954 = vpop.f32.mrf.mxu0
        %2955 = vmatprep.mubr.bf16.mxu0 %v2512
        %2956 = vmatmul.mubr.bf16.gmra.mxu0 %v2464
        %v2957 = vpop.f32.mrf.mxu0
        %v2958 = vadd.f32 0.0, %v2957
        %v2959 = vpop.f32.mrf.mxu0
        %v2960 = vpop.f32.mrf.mxu0
        %v2961 = vadd.f32 0.0, %v2960
        %v2962 = vpop.f32.mrf.mxu0
        %2963 = vmatprep.mubr.bf16.mxu0 %v2513
        %2964 = vmatmul.mubr.bf16.gmra.mxu0 %v2465
        %v2965 = vpop.f32.mrf.mxu0
        %v2966 = vadd.f32 0.0, %v2965
        %v2967 = vpop.f32.mrf.mxu0
        %v2968 = vpop.f32.mrf.mxu0
        %v2969 = vadd.f32 0.0, %v2968
        %v2970 = vpop.f32.mrf.mxu0
        %2971 = vdwg.mxu0
        %2972 = vmatprep.subr.bf16.mxu0 0
        %2973 = vmatpush1.bf16.msra.mxu0 %v2834
        %2974 = vmatprep.subr.bf16.mxu0 0
        %2975 = vmatpush1.bf16.msra.mxu0 %v2833
        %2976 = vmatprep.subr.bf16.mxu0 0
        %2977 = vmatpush1.bf16.msra.mxu0 %v2832
        %2978 = vmatprep.subr.bf16.mxu0 0
        %2979 = vmatpush1.bf16.msra.mxu0 %v2831
        %2980 = vmatprep.subr.bf16.mxu0 0
        %2981 = vmatpush1.bf16.msra.mxu0 %v2830
        %2982 = vmatprep.subr.bf16.mxu0 0
        %2983 = vmatpush1.bf16.msra.mxu0 %v2829
        %2984 = vmatprep.subr.bf16.mxu0 0
        %2985 = vmatpush1.bf16.msra.mxu0 %v2828
        %2986 = vmatprep.subr.bf16.mxu0 0
        %2987 = vmatpush1.bf16.msra.mxu0 %v2827
        %2988 = vmatprep.subr.bf16.mxu0 0
        %2989 = vmatpush2.bf16.msra.mxu0 %v2842
        %2990 = vmatprep.subr.bf16.mxu0 0
        %2991 = vmatpush2.bf16.msra.mxu0 %v2841
        %2992 = vmatprep.subr.bf16.mxu0 0
        %2993 = vmatpush2.bf16.msra.mxu0 %v2840
        %2994 = vmatprep.subr.bf16.mxu0 0
        %2995 = vmatpush2.bf16.msra.mxu0 %v2839
        %2996 = vmatprep.subr.bf16.mxu0 0
        %2997 = vmatpush2.bf16.msra.mxu0 %v2838
        %2998 = vmatprep.subr.bf16.mxu0 0
        %2999 = vmatpush2.bf16.msra.mxu0 %v2837
        %3000 = vmatprep.subr.bf16.mxu0 0
        %3001 = vmatpush2.bf16.msra.mxu0 %v2836
        %3002 = vmatprep.subr.bf16.mxu0 0
        %3003 = vmatpush2.bf16.msra.mxu0 %v2835
        %3004 = vmatprep.mubr.bf16.mxu0 %v2602
        %3005 = vmatmul.mubr.bf16.gmra.mxu0 %v2554
        %v3006 = vpop.f32.mrf.mxu0
        %v3007 = vadd.f32 %v2910, %v3006
        %v3008 = vpop.f32.mrf.mxu0
        %v3009 = vpop.f32.mrf.mxu0
        %v3010 = vadd.f32 %v2913, %v3009
        %v3011 = vpop.f32.mrf.mxu0
        %3012 = vmatprep.mubr.bf16.mxu0 %v2603
        %3013 = vmatmul.mubr.bf16.gmra.mxu0 %v2555
        %v3014 = vpop.f32.mrf.mxu0
        %v3015 = vadd.f32 %v2918, %v3014
        %v3016 = vpop.f32.mrf.mxu0
        %v3017 = vpop.f32.mrf.mxu0
        %v3018 = vadd.f32 %v2921, %v3017
        %v3019 = vpop.f32.mrf.mxu0
        %3020 = vmatprep.mubr.bf16.mxu0 %v2604
        %3021 = vmatmul.mubr.bf16.gmra.mxu0 %v2556
        %v3022 = vpop.f32.mrf.mxu0
        %v3023 = vadd.f32 %v2926, %v3022
        %v3024 = vpop.f32.mrf.mxu0
        %v3025 = vpop.f32.mrf.mxu0
        %v3026 = vadd.f32 %v2929, %v3025
        %v3027 = vpop.f32.mrf.mxu0
        %3028 = vmatprep.mubr.bf16.mxu0 %v2605
        %3029 = vmatmul.mubr.bf16.gmra.mxu0 %v2557
        %v3030 = vpop.f32.mrf.mxu0
        %v3031 = vadd.f32 %v2934, %v3030
        %v3032 = vpop.f32.mrf.mxu0
        %v3033 = vpop.f32.mrf.mxu0
        %v3034 = vadd.f32 %v2937, %v3033
        %v3035 = vpop.f32.mrf.mxu0
        %3036 = vmatprep.mubr.bf16.mxu0 %v2606
        %3037 = vmatmul.mubr.bf16.gmra.mxu0 %v2558
        %v3038 = vpop.f32.mrf.mxu0
        %v3039 = vadd.f32 %v2942, %v3038
        %v3040 = vpop.f32.mrf.mxu0
        %v3041 = vpop.f32.mrf.mxu0
        %v3042 = vadd.f32 %v2945, %v3041
        %v3043 = vpop.f32.mrf.mxu0
        %3044 = vmatprep.mubr.bf16.mxu0 %v2607
        %3045 = vmatmul.mubr.bf16.gmra.mxu0 %v2559
        %v3046 = vpop.f32.mrf.mxu0
        %v3047 = vadd.f32 %v2950, %v3046
        %v3048 = vpop.f32.mrf.mxu0
        %v3049 = vpop.f32.mrf.mxu0
        %v3050 = vadd.f32 %v2953, %v3049
        %v3051 = vpop.f32.mrf.mxu0
        %3052 = vmatprep.mubr.bf16.mxu0 %v2608
        %3053 = vmatmul.mubr.bf16.gmra.mxu0 %v2560
        %v3054 = vpop.f32.mrf.mxu0
        %v3055 = vadd.f32 %v2958, %v3054
        %v3056 = vpop.f32.mrf.mxu0
        %v3057 = vpop.f32.mrf.mxu0
        %v3058 = vadd.f32 %v2961, %v3057
        %v3059 = vpop.f32.mrf.mxu0
        %3060 = vmatprep.mubr.bf16.mxu0 %v2609
        %3061 = vmatmul.mubr.bf16.gmra.mxu0 %v2561
        %v3062 = vpop.f32.mrf.mxu0
        %v3063 = vadd.f32 %v2966, %v3062
        %v3064 = vpop.f32.mrf.mxu0
        %v3065 = vpop.f32.mrf.mxu0
        %v3066 = vadd.f32 %v2969, %v3065
        %v3067 = vpop.f32.mrf.mxu0
        %3068 = vdwg.mxu0
        %v3069 = vadd.f32 %v2324, %v3007
        %v3070 = vadd.f32 %v2327, %v3010
        %v3071 = vadd.f32 %v2332, %v3015
        %v3072 = vadd.f32 %v2335, %v3018
        %v3073 = vadd.f32 %v2340, %v3023
        %v3074 = vadd.f32 %v2343, %v3026
        %v3075 = vadd.f32 %v2348, %v3031
        %v3076 = vadd.f32 %v2351, %v3034
        %v3077 = vadd.f32 %v2356, %v3039
        %v3078 = vadd.f32 %v2359, %v3042
        %v3079 = vadd.f32 %v2364, %v3047
        %v3080 = vadd.f32 %v2367, %v3050
        %v3081 = vadd.f32 %v2372, %v3055
        %v3082 = vadd.f32 %v2375, %v3058
        %v3083 = vadd.f32 %v2380, %v3063
        %v3084 = vadd.f32 %v2383, %v3066
        %v3085 = vld [vmem:[%s701 + $0x8] sm:$0xf]
        %v3086 = vld [vmem:[%s701 + $0xc] sm:$0xf]
        %v3087 = vld [vmem:[%s701 + $0x10] sm:$0x1]
        %v3088 = vld [vmem:[%s701 + $0x20] sm:$0xf]
        %v3089 = vld [vmem:[%s701 + $0x24] sm:$0xf]
        %v3090 = vld [vmem:[%s701 + $0x28] sm:$0x1]
        %v3091 = vld [vmem:[%s701 + $0x38] sm:$0xf]
        %v3092 = vld [vmem:[%s701 + $0x3c] sm:$0xf]
        %v3093 = vld [vmem:[%s701 + $0x40] sm:$0x1]
        %v3094 = vld [vmem:[%s701 + $0x50] sm:$0xf]
        %v3095 = vld [vmem:[%s701 + $0x54] sm:$0xf]
        %v3096 = vld [vmem:[%s701 + $0x58] sm:$0x1]
        %v3097 = vld [vmem:[%s701 + $0x68] sm:$0xf]
        %v3098 = vld [vmem:[%s701 + $0x6c] sm:$0xf]
        %v3099 = vld [vmem:[%s701 + $0x70] sm:$0x1]
        %v3100 = vld [vmem:[%s701 + $0x80] sm:$0xf]
        %v3101 = vld [vmem:[%s701 + $0x84] sm:$0xf]
        %v3102 = vld [vmem:[%s701 + $0x88] sm:$0x1]
        %v3103 = vld [vmem:[%s701 + $0x98] sm:$0xf]
        %v3104 = vld [vmem:[%s701 + $0x9c] sm:$0xf]
        %v3105 = vld [vmem:[%s701 + $0xa0] sm:$0x1]
        %v3106 = vld [vmem:[%s701 + $0xb0] sm:$0xf]
        %v3107 = vld [vmem:[%s701 + $0xb4] sm:$0xf]
        %v3108 = vld [vmem:[%s701 + $0xb8] sm:$0x1]
        %vm3109 = vsmask.f32 3328
        %vm3110 = vsmask.f32 7440
        %vm3111 = vmor %vm3109, %vm3110
        %v3113 = vshrl.u32 %v3085, 16
        %v3115 = vrot.slane %v3113, 4
        %v3116 = vshll.u32 %v3085, 16
        %v3118 = vrot.slane %v3116, 5
        %v3119 = vor.u32 %v3115, %v3118
        %v3120 = vrot.slane %v3119, 4
        %v3122 = vshll.u32 %v3086, 16
        %v3124 = vrot.slane %v3122, 5
        %v3125 = vsel %vm3111, %v3120, %v3124
        %v3126 = vshrl.u32 %v3086, 16
        %v3128 = vrot.slane %v3126, 4
        %v3129 = vor.u32 %v3128, %v3124
        %v3130 = vrot.slane %v3129, 4
        %v3132 = vshll.u32 %v3087, 16
        %v3134 = vrot.slane %v3132, 5
        %v3135 = vsel %vm3111, %v3130, %v3134
        %v3137 = vshrl.u32 %v3088, 16
        %v3139 = vrot.slane %v3137, 4
        %v3140 = vshll.u32 %v3088, 16
        %v3142 = vrot.slane %v3140, 5
        %v3143 = vor.u32 %v3139, %v3142
        %v3144 = vrot.slane %v3143, 4
        %v3146 = vshll.u32 %v3089, 16
        %v3148 = vrot.slane %v3146, 5
        %v3149 = vsel %vm3111, %v3144, %v3148
        %v3150 = vshrl.u32 %v3089, 16
        %v3152 = vrot.slane %v3150, 4
        %v3153 = vor.u32 %v3152, %v3148
        %v3154 = vrot.slane %v3153, 4
        %v3156 = vshll.u32 %v3090, 16
        %v3158 = vrot.slane %v3156, 5
        %v3159 = vsel %vm3111, %v3154, %v3158
        %v3161 = vshrl.u32 %v3091, 16
        %v3163 = vrot.slane %v3161, 4
        %v3164 = vshll.u32 %v3091, 16
        %v3166 = vrot.slane %v3164, 5
        %v3167 = vor.u32 %v3163, %v3166
        %v3168 = vrot.slane %v3167, 4
        %v3170 = vshll.u32 %v3092, 16
        %v3172 = vrot.slane %v3170, 5
        %v3173 = vsel %vm3111, %v3168, %v3172
        %v3174 = vshrl.u32 %v3092, 16
        %v3176 = vrot.slane %v3174, 4
        %v3177 = vor.u32 %v3176, %v3172
        %v3178 = vrot.slane %v3177, 4
        %v3180 = vshll.u32 %v3093, 16
        %v3182 = vrot.slane %v3180, 5
        %v3183 = vsel %vm3111, %v3178, %v3182
        %v3185 = vshrl.u32 %v3094, 16
        %v3187 = vrot.slane %v3185, 4
        %v3188 = vshll.u32 %v3094, 16
        %v3190 = vrot.slane %v3188, 5
        %v3191 = vor.u32 %v3187, %v3190
        %v3192 = vrot.slane %v3191, 4
        %v3194 = vshll.u32 %v3095, 16
        %v3196 = vrot.slane %v3194, 5
        %v3197 = vsel %vm3111, %v3192, %v3196
        %v3198 = vshrl.u32 %v3095, 16
        %v3200 = vrot.slane %v3198, 4
        %v3201 = vor.u32 %v3200, %v3196
        %v3202 = vrot.slane %v3201, 4
        %v3204 = vshll.u32 %v3096, 16
        %v3206 = vrot.slane %v3204, 5
        %v3207 = vsel %vm3111, %v3202, %v3206
        %v3209 = vshrl.u32 %v3097, 16
        %v3211 = vrot.slane %v3209, 4
        %v3212 = vshll.u32 %v3097, 16
        %v3214 = vrot.slane %v3212, 5
        %v3215 = vor.u32 %v3211, %v3214
        %v3216 = vrot.slane %v3215, 4
        %v3218 = vshll.u32 %v3098, 16
        %v3220 = vrot.slane %v3218, 5
        %v3221 = vsel %vm3111, %v3216, %v3220
        %v3222 = vshrl.u32 %v3098, 16
        %v3224 = vrot.slane %v3222, 4
        %v3225 = vor.u32 %v3224, %v3220
        %v3226 = vrot.slane %v3225, 4
        %v3228 = vshll.u32 %v3099, 16
        %v3230 = vrot.slane %v3228, 5
        %v3231 = vsel %vm3111, %v3226, %v3230
        %v3233 = vshrl.u32 %v3100, 16
        %v3235 = vrot.slane %v3233, 4
        %v3236 = vshll.u32 %v3100, 16
        %v3238 = vrot.slane %v3236, 5
        %v3239 = vor.u32 %v3235, %v3238
        %v3240 = vrot.slane %v3239, 4
        %v3242 = vshll.u32 %v3101, 16
        %v3244 = vrot.slane %v3242, 5
        %v3245 = vsel %vm3111, %v3240, %v3244
        %v3246 = vshrl.u32 %v3101, 16
        %v3248 = vrot.slane %v3246, 4
        %v3249 = vor.u32 %v3248, %v3244
        %v3250 = vrot.slane %v3249, 4
        %v3252 = vshll.u32 %v3102, 16
        %v3254 = vrot.slane %v3252, 5
        %v3255 = vsel %vm3111, %v3250, %v3254
        %v3257 = vshrl.u32 %v3103, 16
        %v3259 = vrot.slane %v3257, 4
        %v3260 = vshll.u32 %v3103, 16
        %v3262 = vrot.slane %v3260, 5
        %v3263 = vor.u32 %v3259, %v3262
        %v3264 = vrot.slane %v3263, 4
        %v3266 = vshll.u32 %v3104, 16
        %v3268 = vrot.slane %v3266, 5
        %v3269 = vsel %vm3111, %v3264, %v3268
        %v3270 = vshrl.u32 %v3104, 16
        %v3272 = vrot.slane %v3270, 4
        %v3273 = vor.u32 %v3272, %v3268
        %v3274 = vrot.slane %v3273, 4
        %v3276 = vshll.u32 %v3105, 16
        %v3278 = vrot.slane %v3276, 5
        %v3279 = vsel %vm3111, %v3274, %v3278
        %v3281 = vshrl.u32 %v3106, 16
        %v3283 = vrot.slane %v3281, 4
        %v3284 = vshll.u32 %v3106, 16
        %v3286 = vrot.slane %v3284, 5
        %v3287 = vor.u32 %v3283, %v3286
        %v3288 = vrot.slane %v3287, 4
        %v3290 = vshll.u32 %v3107, 16
        %v3292 = vrot.slane %v3290, 5
        %v3293 = vsel %vm3111, %v3288, %v3292
        %v3294 = vshrl.u32 %v3107, 16
        %v3296 = vrot.slane %v3294, 4
        %v3297 = vor.u32 %v3296, %v3292
        %v3298 = vrot.slane %v3297, 4
        %v3300 = vshll.u32 %v3108, 16
        %v3302 = vrot.slane %v3300, 5
        %v3303 = vsel %vm3111, %v3298, %v3302
        %v3304 = vld [vmem:[%s908 + $0x8] sm:$0xc]
        %v3305 = vld [vmem:[%s908 + $0xc] sm:$0xf]
        %v3306 = vld [vmem:[%s908 + $0x10] sm:$0x7]
        %v3307 = vld [vmem:[%s908 + $0x20] sm:$0xc]
        %v3308 = vld [vmem:[%s908 + $0x24] sm:$0xf]
        %v3309 = vld [vmem:[%s908 + $0x28] sm:$0x7]
        %v3310 = vld [vmem:[%s908 + $0x38] sm:$0xc]
        %v3311 = vld [vmem:[%s908 + $0x3c] sm:$0xf]
        %v3312 = vld [vmem:[%s908 + $0x40] sm:$0x7]
        %v3313 = vld [vmem:[%s908 + $0x50] sm:$0xc]
        %v3314 = vld [vmem:[%s908 + $0x54] sm:$0xf]
        %v3315 = vld [vmem:[%s908 + $0x58] sm:$0x7]
        %v3316 = vld [vmem:[%s908 + $0x68] sm:$0xc]
        %v3317 = vld [vmem:[%s908 + $0x6c] sm:$0xf]
        %v3318 = vld [vmem:[%s908 + $0x70] sm:$0x7]
        %v3319 = vld [vmem:[%s908 + $0x80] sm:$0xc]
        %v3320 = vld [vmem:[%s908 + $0x84] sm:$0xf]
        %v3321 = vld [vmem:[%s908 + $0x88] sm:$0x7]
        %v3322 = vld [vmem:[%s908 + $0x98] sm:$0xc]
        %v3323 = vld [vmem:[%s908 + $0x9c] sm:$0xf]
        %v3324 = vld [vmem:[%s908 + $0xa0] sm:$0x7]
        %v3325 = vld [vmem:[%s908 + $0xb0] sm:$0xc]
        %v3326 = vld [vmem:[%s908 + $0xb4] sm:$0xf]
        %v3327 = vld [vmem:[%s908 + $0xb8] sm:$0x7]
        %vm3328 = vsmask.f32 1280
        %vm3329 = vsmask.f32 5392
        %vm3330 = vmor %vm3328, %vm3329
        %v3332 = vshrl.u32 %v3304, 16
        %v3334 = vrot.slane %v3332, 6
        %v3335 = vshll.u32 %v3304, 16
        %v3337 = vrot.slane %v3335, 7
        %v3338 = vor.u32 %v3334, %v3337
        %v3339 = vrot.slane %v3338, 4
        %v3341 = vshrl.u32 %v3305, 16
        %v3343 = vrot.slane %v3341, 6
        %v3344 = vshll.u32 %v3305, 16
        %v3346 = vrot.slane %v3344, 7
        %v3347 = vor.u32 %v3343, %v3346
        %v3348 = vsel %vm3330, %v3339, %v3347
        %v3349 = vrot.slane %v3347, 4
        %v3351 = vshrl.u32 %v3306, 16
        %v3353 = vrot.slane %v3351, 6
        %v3354 = vshll.u32 %v3306, 16
        %v3356 = vrot.slane %v3354, 7
        %v3357 = vor.u32 %v3353, %v3356
        %v3358 = vsel %vm3330, %v3349, %v3357
        %v3360 = vshrl.u32 %v3307, 16
        %v3362 = vrot.slane %v3360, 6
        %v3363 = vshll.u32 %v3307, 16
        %v3365 = vrot.slane %v3363, 7
        %v3366 = vor.u32 %v3362, %v3365
        %v3367 = vrot.slane %v3366, 4
        %v3369 = vshrl.u32 %v3308, 16
        %v3371 = vrot.slane %v3369, 6
        %v3372 = vshll.u32 %v3308, 16
        %v3374 = vrot.slane %v3372, 7
        %v3375 = vor.u32 %v3371, %v3374
        %v3376 = vsel %vm3330, %v3367, %v3375
        %v3377 = vrot.slane %v3375, 4
        %v3379 = vshrl.u32 %v3309, 16
        %v3381 = vrot.slane %v3379, 6
        %v3382 = vshll.u32 %v3309, 16
        %v3384 = vrot.slane %v3382, 7
        %v3385 = vor.u32 %v3381, %v3384
        %v3386 = vsel %vm3330, %v3377, %v3385
        %v3388 = vshrl.u32 %v3310, 16
        %v3390 = vrot.slane %v3388, 6
        %v3391 = vshll.u32 %v3310, 16
        %v3393 = vrot.slane %v3391, 7
        %v3394 = vor.u32 %v3390, %v3393
        %v3395 = vrot.slane %v3394, 4
        %v3397 = vshrl.u32 %v3311, 16
        %v3399 = vrot.slane %v3397, 6
        %v3400 = vshll.u32 %v3311, 16
        %v3402 = vrot.slane %v3400, 7
        %v3403 = vor.u32 %v3399, %v3402
        %v3404 = vsel %vm3330, %v3395, %v3403
        %v3405 = vrot.slane %v3403, 4
        %v3407 = vshrl.u32 %v3312, 16
        %v3409 = vrot.slane %v3407, 6
        %v3410 = vshll.u32 %v3312, 16
        %v3412 = vrot.slane %v3410, 7
        %v3413 = vor.u32 %v3409, %v3412
        %v3414 = vsel %vm3330, %v3405, %v3413
        %v3416 = vshrl.u32 %v3313, 16
        %v3418 = vrot.slane %v3416, 6
        %v3419 = vshll.u32 %v3313, 16
        %v3421 = vrot.slane %v3419, 7
        %v3422 = vor.u32 %v3418, %v3421
        %v3423 = vrot.slane %v3422, 4
        %v3425 = vshrl.u32 %v3314, 16
        %v3427 = vrot.slane %v3425, 6
        %v3428 = vshll.u32 %v3314, 16
        %v3430 = vrot.slane %v3428, 7
        %v3431 = vor.u32 %v3427, %v3430
        %v3432 = vsel %vm3330, %v3423, %v3431
        %v3433 = vrot.slane %v3431, 4
        %v3435 = vshrl.u32 %v3315, 16
        %v3437 = vrot.slane %v3435, 6
        %v3438 = vshll.u32 %v3315, 16
        %v3440 = vrot.slane %v3438, 7
        %v3441 = vor.u32 %v3437, %v3440
        %v3442 = vsel %vm3330, %v3433, %v3441
        %v3444 = vshrl.u32 %v3316, 16
        %v3446 = vrot.slane %v3444, 6
        %v3447 = vshll.u32 %v3316, 16
        %v3449 = vrot.slane %v3447, 7
        %v3450 = vor.u32 %v3446, %v3449
        %v3451 = vrot.slane %v3450, 4
        %v3453 = vshrl.u32 %v3317, 16
        %v3455 = vrot.slane %v3453, 6
        %v3456 = vshll.u32 %v3317, 16
        %v3458 = vrot.slane %v3456, 7
        %v3459 = vor.u32 %v3455, %v3458
        %v3460 = vsel %vm3330, %v3451, %v3459
        %v3461 = vrot.slane %v3459, 4
        %v3463 = vshrl.u32 %v3318, 16
        %v3465 = vrot.slane %v3463, 6
        %v3466 = vshll.u32 %v3318, 16
        %v3468 = vrot.slane %v3466, 7
        %v3469 = vor.u32 %v3465, %v3468
        %v3470 = vsel %vm3330, %v3461, %v3469
        %v3472 = vshrl.u32 %v3319, 16
        %v3474 = vrot.slane %v3472, 6
        %v3475 = vshll.u32 %v3319, 16
        %v3477 = vrot.slane %v3475, 7
        %v3478 = vor.u32 %v3474, %v3477
        %v3479 = vrot.slane %v3478, 4
        %v3481 = vshrl.u32 %v3320, 16
        %v3483 = vrot.slane %v3481, 6
        %v3484 = vshll.u32 %v3320, 16
        %v3486 = vrot.slane %v3484, 7
        %v3487 = vor.u32 %v3483, %v3486
        %v3488 = vsel %vm3330, %v3479, %v3487
        %v3489 = vrot.slane %v3487, 4
        %v3491 = vshrl.u32 %v3321, 16
        %v3493 = vrot.slane %v3491, 6
        %v3494 = vshll.u32 %v3321, 16
        %v3496 = vrot.slane %v3494, 7
        %v3497 = vor.u32 %v3493, %v3496
        %v3498 = vsel %vm3330, %v3489, %v3497
        %v3500 = vshrl.u32 %v3322, 16
        %v3502 = vrot.slane %v3500, 6
        %v3503 = vshll.u32 %v3322, 16
        %v3505 = vrot.slane %v3503, 7
        %v3506 = vor.u32 %v3502, %v3505
        %v3507 = vrot.slane %v3506, 4
        %v3509 = vshrl.u32 %v3323, 16
        %v3511 = vrot.slane %v3509, 6
        %v3512 = vshll.u32 %v3323, 16
        %v3514 = vrot.slane %v3512, 7
        %v3515 = vor.u32 %v3511, %v3514
        %v3516 = vsel %vm3330, %v3507, %v3515
        %v3517 = vrot.slane %v3515, 4
        %v3519 = vshrl.u32 %v3324, 16
        %v3521 = vrot.slane %v3519, 6
        %v3522 = vshll.u32 %v3324, 16
        %v3524 = vrot.slane %v3522, 7
        %v3525 = vor.u32 %v3521, %v3524
        %v3526 = vsel %vm3330, %v3517, %v3525
        %v3528 = vshrl.u32 %v3325, 16
        %v3530 = vrot.slane %v3528, 6
        %v3531 = vshll.u32 %v3325, 16
        %v3533 = vrot.slane %v3531, 7
        %v3534 = vor.u32 %v3530, %v3533
        %v3535 = vrot.slane %v3534, 4
        %v3537 = vshrl.u32 %v3326, 16
        %v3539 = vrot.slane %v3537, 6
        %v3540 = vshll.u32 %v3326, 16
        %v3542 = vrot.slane %v3540, 7
        %v3543 = vor.u32 %v3539, %v3542
        %v3544 = vsel %vm3330, %v3535, %v3543
        %v3545 = vrot.slane %v3543, 4
        %v3547 = vshrl.u32 %v3327, 16
        %v3549 = vrot.slane %v3547, 6
        %v3550 = vshll.u32 %v3327, 16
        %v3552 = vrot.slane %v3550, 7
        %v3553 = vor.u32 %v3549, %v3552
        %v3554 = vsel %vm3330, %v3545, %v3553
        %v3555 = vld [vmem:[%s1163 + $0xc] sm:$0xf]
        %v3556 = vld [vmem:[%s1163 + $0x10] sm:$0xf]
        %v3557 = vld [vmem:[%s1163 + $0x14] sm:$0x1]
        %v3558 = vld [vmem:[%s1163 + $0x24] sm:$0xf]
        %v3559 = vld [vmem:[%s1163 + $0x28] sm:$0xf]
        %v3560 = vld [vmem:[%s1163 + $0x2c] sm:$0x1]
        %v3561 = vld [vmem:[%s1163 + $0x3c] sm:$0xf]
        %v3562 = vld [vmem:[%s1163 + $0x40] sm:$0xf]
        %v3563 = vld [vmem:[%s1163 + $0x44] sm:$0x1]
        %v3564 = vld [vmem:[%s1163 + $0x54] sm:$0xf]
        %v3565 = vld [vmem:[%s1163 + $0x58] sm:$0xf]
        %v3566 = vld [vmem:[%s1163 + $0x5c] sm:$0x1]
        %v3567 = vld [vmem:[%s1163 + $0x6c] sm:$0xf]
        %v3568 = vld [vmem:[%s1163 + $0x70] sm:$0xf]
        %v3569 = vld [vmem:[%s1163 + $0x74] sm:$0x1]
        %v3570 = vld [vmem:[%s1163 + $0x84] sm:$0xf]
        %v3571 = vld [vmem:[%s1163 + $0x88] sm:$0xf]
        %v3572 = vld [vmem:[%s1163 + $0x8c] sm:$0x1]
        %v3573 = vld [vmem:[%s1163 + $0x9c] sm:$0xf]
        %v3574 = vld [vmem:[%s1163 + $0xa0] sm:$0xf]
        %v3575 = vld [vmem:[%s1163 + $0xa4] sm:$0x1]
        %v3576 = vld [vmem:[%s1163 + $0xb4] sm:$0xf]
        %v3577 = vld [vmem:[%s1163 + $0xb8] sm:$0xf]
        %v3578 = vld [vmem:[%s1163 + $0xbc] sm:$0x1]
        %v3580 = vshrl.u32 %v3555, 16
        %v3582 = vrot.slane %v3580, 4
        %v3583 = vshll.u32 %v3555, 16
        %v3585 = vrot.slane %v3583, 5
        %v3586 = vor.u32 %v3582, %v3585
        %v3587 = vrot.slane %v3586, 4
        %v3589 = vshll.u32 %v3556, 16
        %v3591 = vrot.slane %v3589, 5
        %v3592 = vsel %vm3111, %v3587, %v3591
        %v3593 = vshrl.u32 %v3556, 16
        %v3595 = vrot.slane %v3593, 4
        %v3596 = vor.u32 %v3595, %v3591
        %v3597 = vrot.slane %v3596, 4
        %v3599 = vshll.u32 %v3557, 16
        %v3601 = vrot.slane %v3599, 5
        %v3602 = vsel %vm3111, %v3597, %v3601
        %v3604 = vshrl.u32 %v3558, 16
        %v3606 = vrot.slane %v3604, 4
        %v3607 = vshll.u32 %v3558, 16
        %v3609 = vrot.slane %v3607, 5
        %v3610 = vor.u32 %v3606, %v3609
        %v3611 = vrot.slane %v3610, 4
        %v3613 = vshll.u32 %v3559, 16
        %v3615 = vrot.slane %v3613, 5
        %v3616 = vsel %vm3111, %v3611, %v3615
        %v3617 = vshrl.u32 %v3559, 16
        %v3619 = vrot.slane %v3617, 4
        %v3620 = vor.u32 %v3619, %v3615
        %v3621 = vrot.slane %v3620, 4
        %v3623 = vshll.u32 %v3560, 16
        %v3625 = vrot.slane %v3623, 5
        %v3626 = vsel %vm3111, %v3621, %v3625
        %v3628 = vshrl.u32 %v3561, 16
        %v3630 = vrot.slane %v3628, 4
        %v3631 = vshll.u32 %v3561, 16
        %v3633 = vrot.slane %v3631, 5
        %v3634 = vor.u32 %v3630, %v3633
        %v3635 = vrot.slane %v3634, 4
        %v3637 = vshll.u32 %v3562, 16
        %v3639 = vrot.slane %v3637, 5
        %v3640 = vsel %vm3111, %v3635, %v3639
        %v3641 = vshrl.u32 %v3562, 16
        %v3643 = vrot.slane %v3641, 4
        %v3644 = vor.u32 %v3643, %v3639
        %v3645 = vrot.slane %v3644, 4
        %v3647 = vshll.u32 %v3563, 16
        %v3649 = vrot.slane %v3647, 5
        %v3650 = vsel %vm3111, %v3645, %v3649
        %v3652 = vshrl.u32 %v3564, 16
        %v3654 = vrot.slane %v3652, 4
        %v3655 = vshll.u32 %v3564, 16
        %v3657 = vrot.slane %v3655, 5
        %v3658 = vor.u32 %v3654, %v3657
        %v3659 = vrot.slane %v3658, 4
        %v3661 = vshll.u32 %v3565, 16
        %v3663 = vrot.slane %v3661, 5
        %v3664 = vsel %vm3111, %v3659, %v3663
        %v3665 = vshrl.u32 %v3565, 16
        %v3667 = vrot.slane %v3665, 4
        %v3668 = vor.u32 %v3667, %v3663
        %v3669 = vrot.slane %v3668, 4
        %v3671 = vshll.u32 %v3566, 16
        %v3673 = vrot.slane %v3671, 5
        %v3674 = vsel %vm3111, %v3669, %v3673
        %v3676 = vshrl.u32 %v3567, 16
        %v3678 = vrot.slane %v3676, 4
        %v3679 = vshll.u32 %v3567, 16
        %v3681 = vrot.slane %v3679, 5
        %v3682 = vor.u32 %v3678, %v3681
        %v3683 = vrot.slane %v3682, 4
        %v3685 = vshll.u32 %v3568, 16
        %v3687 = vrot.slane %v3685, 5
        %v3688 = vsel %vm3111, %v3683, %v3687
        %v3689 = vshrl.u32 %v3568, 16
        %v3691 = vrot.slane %v3689, 4
        %v3692 = vor.u32 %v3691, %v3687
        %v3693 = vrot.slane %v3692, 4
        %v3695 = vshll.u32 %v3569, 16
        %v3697 = vrot.slane %v3695, 5
        %v3698 = vsel %vm3111, %v3693, %v3697
        %v3700 = vshrl.u32 %v3570, 16
        %v3702 = vrot.slane %v3700, 4
        %v3703 = vshll.u32 %v3570, 16
        %v3705 = vrot.slane %v3703, 5
        %v3706 = vor.u32 %v3702, %v3705
        %v3707 = vrot.slane %v3706, 4
        %v3709 = vshll.u32 %v3571, 16
        %v3711 = vrot.slane %v3709, 5
        %v3712 = vsel %vm3111, %v3707, %v3711
        %v3713 = vshrl.u32 %v3571, 16
        %v3715 = vrot.slane %v3713, 4
        %v3716 = vor.u32 %v3715, %v3711
        %v3717 = vrot.slane %v3716, 4
        %v3719 = vshll.u32 %v3572, 16
        %v3721 = vrot.slane %v3719, 5
        %v3722 = vsel %vm3111, %v3717, %v3721
        %v3724 = vshrl.u32 %v3573, 16
        %v3726 = vrot.slane %v3724, 4
        %v3727 = vshll.u32 %v3573, 16
        %v3729 = vrot.slane %v3727, 5
        %v3730 = vor.u32 %v3726, %v3729
        %v3731 = vrot.slane %v3730, 4
        %v3733 = vshll.u32 %v3574, 16
        %v3735 = vrot.slane %v3733, 5
        %v3736 = vsel %vm3111, %v3731, %v3735
        %v3737 = vshrl.u32 %v3574, 16
        %v3739 = vrot.slane %v3737, 4
        %v3740 = vor.u32 %v3739, %v3735
        %v3741 = vrot.slane %v3740, 4
        %v3743 = vshll.u32 %v3575, 16
        %v3745 = vrot.slane %v3743, 5
        %v3746 = vsel %vm3111, %v3741, %v3745
        %v3748 = vshrl.u32 %v3576, 16
        %v3750 = vrot.slane %v3748, 4
        %v3751 = vshll.u32 %v3576, 16
        %v3753 = vrot.slane %v3751, 5
        %v3754 = vor.u32 %v3750, %v3753
        %v3755 = vrot.slane %v3754, 4
        %v3757 = vshll.u32 %v3577, 16
        %v3759 = vrot.slane %v3757, 5
        %v3760 = vsel %vm3111, %v3755, %v3759
        %v3761 = vshrl.u32 %v3577, 16
        %v3763 = vrot.slane %v3761, 4
        %v3764 = vor.u32 %v3763, %v3759
        %v3765 = vrot.slane %v3764, 4
        %v3767 = vshll.u32 %v3578, 16
        %v3769 = vrot.slane %v3767, 5
        %v3770 = vsel %vm3111, %v3765, %v3769
        %v3771 = vld [vmem:[%s1366 + $0xc] sm:$0xc]
        %v3772 = vld [vmem:[%s1366 + $0x10] sm:$0xf]
        %v3773 = vld [vmem:[%s1366 + $0x14] sm:$0x7]
        %v3774 = vld [vmem:[%s1366 + $0x24] sm:$0xc]
        %v3775 = vld [vmem:[%s1366 + $0x28] sm:$0xf]
        %v3776 = vld [vmem:[%s1366 + $0x2c] sm:$0x7]
        %v3777 = vld [vmem:[%s1366 + $0x3c] sm:$0xc]
        %v3778 = vld [vmem:[%s1366 + $0x40] sm:$0xf]
        %v3779 = vld [vmem:[%s1366 + $0x44] sm:$0x7]
        %v3780 = vld [vmem:[%s1366 + $0x54] sm:$0xc]
        %v3781 = vld [vmem:[%s1366 + $0x58] sm:$0xf]
        %v3782 = vld [vmem:[%s1366 + $0x5c] sm:$0x7]
        %v3783 = vld [vmem:[%s1366 + $0x6c] sm:$0xc]
        %v3784 = vld [vmem:[%s1366 + $0x70] sm:$0xf]
        %v3785 = vld [vmem:[%s1366 + $0x74] sm:$0x7]
        %v3786 = vld [vmem:[%s1366 + $0x84] sm:$0xc]
        %v3787 = vld [vmem:[%s1366 + $0x88] sm:$0xf]
        %v3788 = vld [vmem:[%s1366 + $0x8c] sm:$0x7]
        %v3789 = vld [vmem:[%s1366 + $0x9c] sm:$0xc]
        %v3790 = vld [vmem:[%s1366 + $0xa0] sm:$0xf]
        %v3791 = vld [vmem:[%s1366 + $0xa4] sm:$0x7]
        %v3792 = vld [vmem:[%s1366 + $0xb4] sm:$0xc]
        %v3793 = vld [vmem:[%s1366 + $0xb8] sm:$0xf]
        %v3794 = vld [vmem:[%s1366 + $0xbc] sm:$0x7]
        %v3796 = vshrl.u32 %v3771, 16
        %v3798 = vrot.slane %v3796, 6
        %v3799 = vshll.u32 %v3771, 16
        %v3801 = vrot.slane %v3799, 7
        %v3802 = vor.u32 %v3798, %v3801
        %v3803 = vrot.slane %v3802, 4
        %v3805 = vshrl.u32 %v3772, 16
        %v3807 = vrot.slane %v3805, 6
        %v3808 = vshll.u32 %v3772, 16
        %v3810 = vrot.slane %v3808, 7
        %v3811 = vor.u32 %v3807, %v3810
        %v3812 = vsel %vm3330, %v3803, %v3811
        %v3813 = vrot.slane %v3811, 4
        %v3815 = vshrl.u32 %v3773, 16
        %v3817 = vrot.slane %v3815, 6
        %v3818 = vshll.u32 %v3773, 16
        %v3820 = vrot.slane %v3818, 7
        %v3821 = vor.u32 %v3817, %v3820
        %v3822 = vsel %vm3330, %v3813, %v3821
        %v3824 = vshrl.u32 %v3774, 16
        %v3826 = vrot.slane %v3824, 6
        %v3827 = vshll.u32 %v3774, 16
        %v3829 = vrot.slane %v3827, 7
        %v3830 = vor.u32 %v3826, %v3829
        %v3831 = vrot.slane %v3830, 4
        %v3833 = vshrl.u32 %v3775, 16
        %v3835 = vrot.slane %v3833, 6
        %v3836 = vshll.u32 %v3775, 16
        %v3838 = vrot.slane %v3836, 7
        %v3839 = vor.u32 %v3835, %v3838
        %v3840 = vsel %vm3330, %v3831, %v3839
        %v3841 = vrot.slane %v3839, 4
        %v3843 = vshrl.u32 %v3776, 16
        %v3845 = vrot.slane %v3843, 6
        %v3846 = vshll.u32 %v3776, 16
        %v3848 = vrot.slane %v3846, 7
        %v3849 = vor.u32 %v3845, %v3848
        %v3850 = vsel %vm3330, %v3841, %v3849
        %v3852 = vshrl.u32 %v3777, 16
        %v3854 = vrot.slane %v3852, 6
        %v3855 = vshll.u32 %v3777, 16
        %v3857 = vrot.slane %v3855, 7
        %v3858 = vor.u32 %v3854, %v3857
        %v3859 = vrot.slane %v3858, 4
        %v3861 = vshrl.u32 %v3778, 16
        %v3863 = vrot.slane %v3861, 6
        %v3864 = vshll.u32 %v3778, 16
        %v3866 = vrot.slane %v3864, 7
        %v3867 = vor.u32 %v3863, %v3866
        %v3868 = vsel %vm3330, %v3859, %v3867
        %v3869 = vrot.slane %v3867, 4
        %v3871 = vshrl.u32 %v3779, 16
        %v3873 = vrot.slane %v3871, 6
        %v3874 = vshll.u32 %v3779, 16
        %v3876 = vrot.slane %v3874, 7
        %v3877 = vor.u32 %v3873, %v3876
        %v3878 = vsel %vm3330, %v3869, %v3877
        %v3880 = vshrl.u32 %v3780, 16
        %v3882 = vrot.slane %v3880, 6
        %v3883 = vshll.u32 %v3780, 16
        %v3885 = vrot.slane %v3883, 7
        %v3886 = vor.u32 %v3882, %v3885
        %v3887 = vrot.slane %v3886, 4
        %v3889 = vshrl.u32 %v3781, 16
        %v3891 = vrot.slane %v3889, 6
        %v3892 = vshll.u32 %v3781, 16
        %v3894 = vrot.slane %v3892, 7
        %v3895 = vor.u32 %v3891, %v3894
        %v3896 = vsel %vm3330, %v3887, %v3895
        %v3897 = vrot.slane %v3895, 4
        %v3899 = vshrl.u32 %v3782, 16
        %v3901 = vrot.slane %v3899, 6
        %v3902 = vshll.u32 %v3782, 16
        %v3904 = vrot.slane %v3902, 7
        %v3905 = vor.u32 %v3901, %v3904
        %v3906 = vsel %vm3330, %v3897, %v3905
        %v3908 = vshrl.u32 %v3783, 16
        %v3910 = vrot.slane %v3908, 6
        %v3911 = vshll.u32 %v3783, 16
        %v3913 = vrot.slane %v3911, 7
        %v3914 = vor.u32 %v3910, %v3913
        %v3915 = vrot.slane %v3914, 4
        %v3917 = vshrl.u32 %v3784, 16
        %v3919 = vrot.slane %v3917, 6
        %v3920 = vshll.u32 %v3784, 16
        %v3922 = vrot.slane %v3920, 7
        %v3923 = vor.u32 %v3919, %v3922
        %v3924 = vsel %vm3330, %v3915, %v3923
        %v3925 = vrot.slane %v3923, 4
        %v3927 = vshrl.u32 %v3785, 16
        %v3929 = vrot.slane %v3927, 6
        %v3930 = vshll.u32 %v3785, 16
        %v3932 = vrot.slane %v3930, 7
        %v3933 = vor.u32 %v3929, %v3932
        %v3934 = vsel %vm3330, %v3925, %v3933
        %v3936 = vshrl.u32 %v3786, 16
        %v3938 = vrot.slane %v3936, 6
        %v3939 = vshll.u32 %v3786, 16
        %v3941 = vrot.slane %v3939, 7
        %v3942 = vor.u32 %v3938, %v3941
        %v3943 = vrot.slane %v3942, 4
        %v3945 = vshrl.u32 %v3787, 16
        %v3947 = vrot.slane %v3945, 6
        %v3948 = vshll.u32 %v3787, 16
        %v3950 = vrot.slane %v3948, 7
        %v3951 = vor.u32 %v3947, %v3950
        %v3952 = vsel %vm3330, %v3943, %v3951
        %v3953 = vrot.slane %v3951, 4
        %v3955 = vshrl.u32 %v3788, 16
        %v3957 = vrot.slane %v3955, 6
        %v3958 = vshll.u32 %v3788, 16
        %v3960 = vrot.slane %v3958, 7
        %v3961 = vor.u32 %v3957, %v3960
        %v3962 = vsel %vm3330, %v3953, %v3961
        %v3964 = vshrl.u32 %v3789, 16
        %v3966 = vrot.slane %v3964, 6
        %v3967 = vshll.u32 %v3789, 16
        %v3969 = vrot.slane %v3967, 7
        %v3970 = vor.u32 %v3966, %v3969
        %v3971 = vrot.slane %v3970, 4
        %v3973 = vshrl.u32 %v3790, 16
        %v3975 = vrot.slane %v3973, 6
        %v3976 = vshll.u32 %v3790, 16
        %v3978 = vrot.slane %v3976, 7
        %v3979 = vor.u32 %v3975, %v3978
        %v3980 = vsel %vm3330, %v3971, %v3979
        %v3981 = vrot.slane %v3979, 4
        %v3983 = vshrl.u32 %v3791, 16
        %v3985 = vrot.slane %v3983, 6
        %v3986 = vshll.u32 %v3791, 16
        %v3988 = vrot.slane %v3986, 7
        %v3989 = vor.u32 %v3985, %v3988
        %v3990 = vsel %vm3330, %v3981, %v3989
        %v3992 = vshrl.u32 %v3792, 16
        %v3994 = vrot.slane %v3992, 6
        %v3995 = vshll.u32 %v3792, 16
        %v3997 = vrot.slane %v3995, 7
        %v3998 = vor.u32 %v3994, %v3997
        %v3999 = vrot.slane %v3998, 4
        %v4001 = vshrl.u32 %v3793, 16
        %v4003 = vrot.slane %v4001, 6
        %v4004 = vshll.u32 %v3793, 16
        %v4006 = vrot.slane %v4004, 7
        %v4007 = vor.u32 %v4003, %v4006
        %v4008 = vsel %vm3330, %v3999, %v4007
        %v4009 = vrot.slane %v4007, 4
        %v4011 = vshrl.u32 %v3794, 16
        %v4013 = vrot.slane %v4011, 6
        %v4014 = vshll.u32 %v3794, 16
        %v4016 = vrot.slane %v4014, 7
        %v4017 = vor.u32 %v4013, %v4016
        %v4018 = vsel %vm3330, %v4009, %v4017
        %v4019 = vunpack.c.l.b16 %v3125
        %v4020 = vunpack.c.l.b16 %v3135
        %v4021 = vunpack.c.l.b16 %v3149
        %v4022 = vunpack.c.l.b16 %v3159
        %v4023 = vunpack.c.l.b16 %v3173
        %v4024 = vunpack.c.l.b16 %v3183
        %v4025 = vunpack.c.l.b16 %v3197
        %v4026 = vunpack.c.l.b16 %v3207
        %v4027 = vunpack.c.l.b16 %v3221
        %v4028 = vunpack.c.l.b16 %v3231
        %v4029 = vunpack.c.l.b16 %v3245
        %v4030 = vunpack.c.l.b16 %v3255
        %v4031 = vunpack.c.l.b16 %v3269
        %v4032 = vunpack.c.l.b16 %v3279
        %v4033 = vunpack.c.l.b16 %v3293
        %v4034 = vunpack.c.l.b16 %v3303
        %v4035 = vpack.c.b16 %v4020, %v4019
        %v4036 = vpack.c.b16 %v4022, %v4021
        %v4037 = vpack.c.b16 %v4024, %v4023
        %v4038 = vpack.c.b16 %v4026, %v4025
        %v4039 = vpack.c.b16 %v4028, %v4027
        %v4040 = vpack.c.b16 %v4030, %v4029
        %v4041 = vpack.c.b16 %v4032, %v4031
        %v4042 = vpack.c.b16 %v4034, %v4033
        %v4051 = vunpack.c.l.b16 %v3348
        %v4052 = vunpack.c.l.b16 %v3358
        %v4053 = vunpack.c.l.b16 %v3376
        %v4054 = vunpack.c.l.b16 %v3386
        %v4055 = vunpack.c.l.b16 %v3404
        %v4056 = vunpack.c.l.b16 %v3414
        %v4057 = vunpack.c.l.b16 %v3432
        %v4058 = vunpack.c.l.b16 %v3442
        %v4059 = vunpack.c.l.b16 %v3460
        %v4060 = vunpack.c.l.b16 %v3470
        %v4061 = vunpack.c.l.b16 %v3488
        %v4062 = vunpack.c.l.b16 %v3498
        %v4063 = vunpack.c.l.b16 %v3516
        %v4064 = vunpack.c.l.b16 %v3526
        %v4065 = vunpack.c.l.b16 %v3544
        %v4066 = vunpack.c.l.b16 %v3554
        %v4067 = vpack.c.b16 %v4052, %v4051
        %v4068 = vpack.c.b16 %v4054, %v4053
        %v4069 = vpack.c.b16 %v4056, %v4055
        %v4070 = vpack.c.b16 %v4058, %v4057
        %v4071 = vpack.c.b16 %v4060, %v4059
        %v4072 = vpack.c.b16 %v4062, %v4061
        %v4073 = vpack.c.b16 %v4064, %v4063
        %v4074 = vpack.c.b16 %v4066, %v4065
        %v4083 = vunpack.c.l.b16 %v3592
        %v4084 = vunpack.c.l.b16 %v3602
        %v4085 = vunpack.c.l.b16 %v3616
        %v4086 = vunpack.c.l.b16 %v3626
        %v4087 = vunpack.c.l.b16 %v3640
        %v4088 = vunpack.c.l.b16 %v3650
        %v4089 = vunpack.c.l.b16 %v3664
        %v4090 = vunpack.c.l.b16 %v3674
        %v4091 = vunpack.c.l.b16 %v3688
        %v4092 = vunpack.c.l.b16 %v3698
        %v4093 = vunpack.c.l.b16 %v3712
        %v4094 = vunpack.c.l.b16 %v3722
        %v4095 = vunpack.c.l.b16 %v3736
        %v4096 = vunpack.c.l.b16 %v3746
        %v4097 = vunpack.c.l.b16 %v3760
        %v4098 = vunpack.c.l.b16 %v3770
        %v4099 = vpack.c.b16 %v4084, %v4083
        %v4100 = vpack.c.b16 %v4086, %v4085
        %v4101 = vpack.c.b16 %v4088, %v4087
        %v4102 = vpack.c.b16 %v4090, %v4089
        %v4103 = vpack.c.b16 %v4092, %v4091
        %v4104 = vpack.c.b16 %v4094, %v4093
        %v4105 = vpack.c.b16 %v4096, %v4095
        %v4106 = vpack.c.b16 %v4098, %v4097
        %v4115 = vunpack.c.l.b16 %v3812
        %v4116 = vunpack.c.l.b16 %v3822
        %v4117 = vunpack.c.l.b16 %v3840
        %v4118 = vunpack.c.l.b16 %v3850
        %v4119 = vunpack.c.l.b16 %v3868
        %v4120 = vunpack.c.l.b16 %v3878
        %v4121 = vunpack.c.l.b16 %v3896
        %v4122 = vunpack.c.l.b16 %v3906
        %v4123 = vunpack.c.l.b16 %v3924
        %v4124 = vunpack.c.l.b16 %v3934
        %v4125 = vunpack.c.l.b16 %v3952
        %v4126 = vunpack.c.l.b16 %v3962
        %v4127 = vunpack.c.l.b16 %v3980
        %v4128 = vunpack.c.l.b16 %v3990
        %v4129 = vunpack.c.l.b16 %v4008
        %v4130 = vunpack.c.l.b16 %v4018
        %v4131 = vpack.c.b16 %v4116, %v4115
        %v4132 = vpack.c.b16 %v4118, %v4117
        %v4133 = vpack.c.b16 %v4120, %v4119
        %v4134 = vpack.c.b16 %v4122, %v4121
        %v4135 = vpack.c.b16 %v4124, %v4123
        %v4136 = vpack.c.b16 %v4126, %v4125
        %v4137 = vpack.c.b16 %v4128, %v4127
        %v4138 = vpack.c.b16 %v4130, %v4129
        %s4147 = scalar_lea.vmem %s3, 512
        %v4148 = vld [vmem:[%s4147] sm:$0xf]
        %v4149 = vld [vmem:[%s4147 + $0x4] sm:$0xf]
        %v4150 = vld [vmem:[%s4147 + $0x8] sm:$0xf]
        %v4151 = vld [vmem:[%s4147 + $0xc] sm:$0xf]
        %v4152 = vld [vmem:[%s4147 + $0x10] sm:$0xf]
        %v4153 = vld [vmem:[%s4147 + $0x14] sm:$0xf]
        %v4154 = vld [vmem:[%s4147 + $0x18] sm:$0xf]
        %v4155 = vld [vmem:[%s4147 + $0x1c] sm:$0xf]
        %v4156 = vld [vmem:[%s4147 + $0x20] sm:$0xf]
        %v4157 = vld [vmem:[%s4147 + $0x24] sm:$0xf]
        %v4158 = vld [vmem:[%s4147 + $0x28] sm:$0xf]
        %v4159 = vld [vmem:[%s4147 + $0x2c] sm:$0xf]
        %v4160 = vld [vmem:[%s4147 + $0x30] sm:$0xf]
        %v4161 = vld [vmem:[%s4147 + $0x34] sm:$0xf]
        %v4162 = vld [vmem:[%s4147 + $0x38] sm:$0xf]
        %v4163 = vld [vmem:[%s4147 + $0x3c] sm:$0xf]
        %v4164 = vld [vmem:[%s4147 + $0x40] sm:$0xf]
        %v4165 = vld [vmem:[%s4147 + $0x44] sm:$0xf]
        %v4166 = vld [vmem:[%s4147 + $0x48] sm:$0xf]
        %v4167 = vld [vmem:[%s4147 + $0x4c] sm:$0xf]
        %v4168 = vld [vmem:[%s4147 + $0x50] sm:$0xf]
        %v4169 = vld [vmem:[%s4147 + $0x54] sm:$0xf]
        %v4170 = vld [vmem:[%s4147 + $0x58] sm:$0xf]
        %v4171 = vld [vmem:[%s4147 + $0x5c] sm:$0xf]
        %v4172 = vld [vmem:[%s4147 + $0x60] sm:$0xf]
        %v4173 = vld [vmem:[%s4147 + $0x64] sm:$0xf]
        %v4174 = vld [vmem:[%s4147 + $0x68] sm:$0xf]
        %v4175 = vld [vmem:[%s4147 + $0x6c] sm:$0xf]
        %v4176 = vld [vmem:[%s4147 + $0x70] sm:$0xf]
        %v4177 = vld [vmem:[%s4147 + $0x74] sm:$0xf]
        %v4178 = vld [vmem:[%s4147 + $0x78] sm:$0xf]
        %v4179 = vld [vmem:[%s4147 + $0x7c] sm:$0xf]
        %v4180 = vld [vmem:[%s4147 + $0x80] sm:$0xf]
        %v4181 = vld [vmem:[%s4147 + $0x84] sm:$0xf]
        %v4182 = vld [vmem:[%s4147 + $0x88] sm:$0xf]
        %v4183 = vld [vmem:[%s4147 + $0x8c] sm:$0xf]
        %v4184 = vld [vmem:[%s4147 + $0x90] sm:$0xf]
        %v4185 = vld [vmem:[%s4147 + $0x94] sm:$0xf]
        %v4186 = vld [vmem:[%s4147 + $0x98] sm:$0xf]
        %v4187 = vld [vmem:[%s4147 + $0x9c] sm:$0xf]
        %v4188 = vld [vmem:[%s4147 + $0xa0] sm:$0xf]
        %v4189 = vld [vmem:[%s4147 + $0xa4] sm:$0xf]
        %v4190 = vld [vmem:[%s4147 + $0xa8] sm:$0xf]
        %v4191 = vld [vmem:[%s4147 + $0xac] sm:$0xf]
        %v4192 = vld [vmem:[%s4147 + $0xb0] sm:$0xf]
        %v4193 = vld [vmem:[%s4147 + $0xb4] sm:$0xf]
        %v4194 = vld [vmem:[%s4147 + $0xb8] sm:$0xf]
        %v4195 = vld [vmem:[%s4147 + $0xbc] sm:$0xf]
        %v4196 = vld [vmem:[%s4147 + $0xc0] sm:$0xf]
        %v4197 = vld [vmem:[%s4147 + $0xc4] sm:$0xf]
        %v4198 = vld [vmem:[%s4147 + $0xc8] sm:$0xf]
        %v4199 = vld [vmem:[%s4147 + $0xcc] sm:$0xf]
        %v4200 = vld [vmem:[%s4147 + $0xd0] sm:$0xf]
        %v4201 = vld [vmem:[%s4147 + $0xd4] sm:$0xf]
        %v4202 = vld [vmem:[%s4147 + $0xd8] sm:$0xf]
        %v4203 = vld [vmem:[%s4147 + $0xdc] sm:$0xf]
        %v4204 = vld [vmem:[%s4147 + $0xe0] sm:$0xf]
        %v4205 = vld [vmem:[%s4147 + $0xe4] sm:$0xf]
        %v4206 = vld [vmem:[%s4147 + $0xe8] sm:$0xf]
        %v4207 = vld [vmem:[%s4147 + $0xec] sm:$0xf]
        %v4208 = vld [vmem:[%s4147 + $0xf0] sm:$0xf]
        %v4209 = vld [vmem:[%s4147 + $0xf4] sm:$0xf]
        %v4210 = vld [vmem:[%s4147 + $0xf8] sm:$0xf]
        %v4211 = vld [vmem:[%s4147 + $0xfc] sm:$0xf]
        %v4276 = vunpack.c.l.b16 %v4148
        %v4277 = vunpack.c.l.b16 %v4149
        %v4278 = vunpack.c.l.b16 %v4150
        %v4279 = vunpack.c.l.b16 %v4151
        %v4280 = vunpack.c.l.b16 %v4152
        %v4281 = vunpack.c.l.b16 %v4153
        %v4282 = vunpack.c.l.b16 %v4154
        %v4283 = vunpack.c.l.b16 %v4155
        %v4284 = vunpack.c.l.b16 %v4156
        %v4285 = vunpack.c.l.b16 %v4157
        %v4286 = vunpack.c.l.b16 %v4158
        %v4287 = vunpack.c.l.b16 %v4159
        %v4288 = vunpack.c.l.b16 %v4160
        %v4289 = vunpack.c.l.b16 %v4161
        %v4290 = vunpack.c.l.b16 %v4162
        %v4291 = vunpack.c.l.b16 %v4163
        %v4292 = vunpack.c.l.b16 %v4164
        %v4293 = vunpack.c.l.b16 %v4165
        %v4294 = vunpack.c.l.b16 %v4166
        %v4295 = vunpack.c.l.b16 %v4167
        %v4296 = vunpack.c.l.b16 %v4168
        %v4297 = vunpack.c.l.b16 %v4169
        %v4298 = vunpack.c.l.b16 %v4170
        %v4299 = vunpack.c.l.b16 %v4171
        %v4300 = vunpack.c.l.b16 %v4172
        %v4301 = vunpack.c.l.b16 %v4173
        %v4302 = vunpack.c.l.b16 %v4174
        %v4303 = vunpack.c.l.b16 %v4175
        %v4304 = vunpack.c.l.b16 %v4176
        %v4305 = vunpack.c.l.b16 %v4177
        %v4306 = vunpack.c.l.b16 %v4178
        %v4307 = vunpack.c.l.b16 %v4179
        %v4308 = vunpack.c.l.b16 %v4180
        %v4309 = vunpack.c.l.b16 %v4181
        %v4310 = vunpack.c.l.b16 %v4182
        %v4311 = vunpack.c.l.b16 %v4183
        %v4312 = vunpack.c.l.b16 %v4184
        %v4313 = vunpack.c.l.b16 %v4185
        %v4314 = vunpack.c.l.b16 %v4186
        %v4315 = vunpack.c.l.b16 %v4187
        %v4316 = vunpack.c.l.b16 %v4188
        %v4317 = vunpack.c.l.b16 %v4189
        %v4318 = vunpack.c.l.b16 %v4190
        %v4319 = vunpack.c.l.b16 %v4191
        %v4320 = vunpack.c.l.b16 %v4192
        %v4321 = vunpack.c.l.b16 %v4193
        %v4322 = vunpack.c.l.b16 %v4194
        %v4323 = vunpack.c.l.b16 %v4195
        %v4324 = vunpack.c.l.b16 %v4196
        %v4325 = vunpack.c.l.b16 %v4197
        %v4326 = vunpack.c.l.b16 %v4198
        %v4327 = vunpack.c.l.b16 %v4199
        %v4328 = vunpack.c.l.b16 %v4200
        %v4329 = vunpack.c.l.b16 %v4201
        %v4330 = vunpack.c.l.b16 %v4202
        %v4331 = vunpack.c.l.b16 %v4203
        %v4332 = vunpack.c.l.b16 %v4204
        %v4333 = vunpack.c.l.b16 %v4205
        %v4334 = vunpack.c.l.b16 %v4206
        %v4335 = vunpack.c.l.b16 %v4207
        %v4336 = vunpack.c.l.b16 %v4208
        %v4337 = vunpack.c.l.b16 %v4209
        %v4338 = vunpack.c.l.b16 %v4210
        %v4339 = vunpack.c.l.b16 %v4211
        %v4340 = vpack.c.b16 %v4277, %v4276
        %v4341 = vpack.c.b16 %v4279, %v4278
        %v4342 = vpack.c.b16 %v4281, %v4280
        %v4343 = vpack.c.b16 %v4283, %v4282
        %v4344 = vpack.c.b16 %v4285, %v4284
        %v4345 = vpack.c.b16 %v4287, %v4286
        %v4346 = vpack.c.b16 %v4289, %v4288
        %v4347 = vpack.c.b16 %v4291, %v4290
        %v4348 = vpack.c.b16 %v4293, %v4292
        %v4349 = vpack.c.b16 %v4295, %v4294
        %v4350 = vpack.c.b16 %v4297, %v4296
        %v4351 = vpack.c.b16 %v4299, %v4298
        %v4352 = vpack.c.b16 %v4301, %v4300
        %v4353 = vpack.c.b16 %v4303, %v4302
        %v4354 = vpack.c.b16 %v4305, %v4304
        %v4355 = vpack.c.b16 %v4307, %v4306
        %v4356 = vpack.c.b16 %v4309, %v4308
        %v4357 = vpack.c.b16 %v4311, %v4310
        %v4358 = vpack.c.b16 %v4313, %v4312
        %v4359 = vpack.c.b16 %v4315, %v4314
        %v4360 = vpack.c.b16 %v4317, %v4316
        %v4361 = vpack.c.b16 %v4319, %v4318
        %v4362 = vpack.c.b16 %v4321, %v4320
        %v4363 = vpack.c.b16 %v4323, %v4322
        %v4364 = vpack.c.b16 %v4325, %v4324
        %v4365 = vpack.c.b16 %v4327, %v4326
        %v4366 = vpack.c.b16 %v4329, %v4328
        %v4367 = vpack.c.b16 %v4331, %v4330
        %v4368 = vpack.c.b16 %v4333, %v4332
        %v4369 = vpack.c.b16 %v4335, %v4334
        %v4370 = vpack.c.b16 %v4337, %v4336
        %v4371 = vpack.c.b16 %v4339, %v4338
        %4404 = vmatprep.subr.bf16.mxu0 0
        %4405 = vmatpush1.bf16.msra.mxu0 %v4347
        %4406 = vmatprep.subr.bf16.mxu0 0
        %4407 = vmatpush1.bf16.msra.mxu0 %v4346
        %4408 = vmatprep.subr.bf16.mxu0 0
        %4409 = vmatpush1.bf16.msra.mxu0 %v4345
        %4410 = vmatprep.subr.bf16.mxu0 0
        %4411 = vmatpush1.bf16.msra.mxu0 %v4344
        %4412 = vmatprep.subr.bf16.mxu0 0
        %4413 = vmatpush1.bf16.msra.mxu0 %v4343
        %4414 = vmatprep.subr.bf16.mxu0 0
        %4415 = vmatpush1.bf16.msra.mxu0 %v4342
        %4416 = vmatprep.subr.bf16.mxu0 0
        %4417 = vmatpush1.bf16.msra.mxu0 %v4341
        %4418 = vmatprep.subr.bf16.mxu0 0
        %4419 = vmatpush1.bf16.msra.mxu0 %v4340
        %4420 = vmatprep.subr.bf16.mxu0 0
        %4421 = vmatpush2.bf16.msra.mxu0 %v4355
        %4422 = vmatprep.subr.bf16.mxu0 0
        %4423 = vmatpush2.bf16.msra.mxu0 %v4354
        %4424 = vmatprep.subr.bf16.mxu0 0
        %4425 = vmatpush2.bf16.msra.mxu0 %v4353
        %4426 = vmatprep.subr.bf16.mxu0 0
        %4427 = vmatpush2.bf16.msra.mxu0 %v4352
        %4428 = vmatprep.subr.bf16.mxu0 0
        %4429 = vmatpush2.bf16.msra.mxu0 %v4351
        %4430 = vmatprep.subr.bf16.mxu0 0
        %4431 = vmatpush2.bf16.msra.mxu0 %v4350
        %4432 = vmatprep.subr.bf16.mxu0 0
        %4433 = vmatpush2.bf16.msra.mxu0 %v4349
        %4434 = vmatprep.subr.bf16.mxu0 0
        %4435 = vmatpush2.bf16.msra.mxu0 %v4348
        %4436 = vmatprep.mubr.bf16.mxu0 %v4067
        %4437 = vmatmul.mubr.bf16.gmra.mxu0 %v4035
        %v4438 = vpop.f32.mrf.mxu0
        %v4439 = vadd.f32 0.0, %v4438
        %v4440 = vpop.f32.mrf.mxu0
        %v4441 = vpop.f32.mrf.mxu0
        %v4442 = vadd.f32 0.0, %v4441
        %v4443 = vpop.f32.mrf.mxu0
        %4444 = vmatprep.mubr.bf16.mxu0 %v4068
        %4445 = vmatmul.mubr.bf16.gmra.mxu0 %v4036
        %v4446 = vpop.f32.mrf.mxu0
        %v4447 = vadd.f32 0.0, %v4446
        %v4448 = vpop.f32.mrf.mxu0
        %v4449 = vpop.f32.mrf.mxu0
        %v4450 = vadd.f32 0.0, %v4449
        %v4451 = vpop.f32.mrf.mxu0
        %4452 = vmatprep.mubr.bf16.mxu0 %v4069
        %4453 = vmatmul.mubr.bf16.gmra.mxu0 %v4037
        %v4454 = vpop.f32.mrf.mxu0
        %v4455 = vadd.f32 0.0, %v4454
        %v4456 = vpop.f32.mrf.mxu0
        %v4457 = vpop.f32.mrf.mxu0
        %v4458 = vadd.f32 0.0, %v4457
        %v4459 = vpop.f32.mrf.mxu0
        %4460 = vmatprep.mubr.bf16.mxu0 %v4070
        %4461 = vmatmul.mubr.bf16.gmra.mxu0 %v4038
        %v4462 = vpop.f32.mrf.mxu0
        %v4463 = vadd.f32 0.0, %v4462
        %v4464 = vpop.f32.mrf.mxu0
        %v4465 = vpop.f32.mrf.mxu0
        %v4466 = vadd.f32 0.0, %v4465
        %v4467 = vpop.f32.mrf.mxu0
        %4468 = vmatprep.mubr.bf16.mxu0 %v4071
        %4469 = vmatmul.mubr.bf16.gmra.mxu0 %v4039
        %v4470 = vpop.f32.mrf.mxu0
        %v4471 = vadd.f32 0.0, %v4470
        %v4472 = vpop.f32.mrf.mxu0
        %v4473 = vpop.f32.mrf.mxu0
        %v4474 = vadd.f32 0.0, %v4473
        %v4475 = vpop.f32.mrf.mxu0
        %4476 = vmatprep.mubr.bf16.mxu0 %v4072
        %4477 = vmatmul.mubr.bf16.gmra.mxu0 %v4040
        %v4478 = vpop.f32.mrf.mxu0
        %v4479 = vadd.f32 0.0, %v4478
        %v4480 = vpop.f32.mrf.mxu0
        %v4481 = vpop.f32.mrf.mxu0
        %v4482 = vadd.f32 0.0, %v4481
        %v4483 = vpop.f32.mrf.mxu0
        %4484 = vmatprep.mubr.bf16.mxu0 %v4073
        %4485 = vmatmul.mubr.bf16.gmra.mxu0 %v4041
        %v4486 = vpop.f32.mrf.mxu0
        %v4487 = vadd.f32 0.0, %v4486
        %v4488 = vpop.f32.mrf.mxu0
        %v4489 = vpop.f32.mrf.mxu0
        %v4490 = vadd.f32 0.0, %v4489
        %v4491 = vpop.f32.mrf.mxu0
        %4492 = vmatprep.mubr.bf16.mxu0 %v4074
        %4493 = vmatmul.mubr.bf16.gmra.mxu0 %v4042
        %v4494 = vpop.f32.mrf.mxu0
        %v4495 = vadd.f32 0.0, %v4494
        %v4496 = vpop.f32.mrf.mxu0
        %v4497 = vpop.f32.mrf.mxu0
        %v4498 = vadd.f32 0.0, %v4497
        %v4499 = vpop.f32.mrf.mxu0
        %4500 = vdwg.mxu0
        %4501 = vmatprep.subr.bf16.mxu0 0
        %4502 = vmatpush1.bf16.msra.mxu0 %v4363
        %4503 = vmatprep.subr.bf16.mxu0 0
        %4504 = vmatpush1.bf16.msra.mxu0 %v4362
        %4505 = vmatprep.subr.bf16.mxu0 0
        %4506 = vmatpush1.bf16.msra.mxu0 %v4361
        %4507 = vmatprep.subr.bf16.mxu0 0
        %4508 = vmatpush1.bf16.msra.mxu0 %v4360
        %4509 = vmatprep.subr.bf16.mxu0 0
        %4510 = vmatpush1.bf16.msra.mxu0 %v4359
        %4511 = vmatprep.subr.bf16.mxu0 0
        %4512 = vmatpush1.bf16.msra.mxu0 %v4358
        %4513 = vmatprep.subr.bf16.mxu0 0
        %4514 = vmatpush1.bf16.msra.mxu0 %v4357
        %4515 = vmatprep.subr.bf16.mxu0 0
        %4516 = vmatpush1.bf16.msra.mxu0 %v4356
        %4517 = vmatprep.subr.bf16.mxu0 0
        %4518 = vmatpush2.bf16.msra.mxu0 %v4371
        %4519 = vmatprep.subr.bf16.mxu0 0
        %4520 = vmatpush2.bf16.msra.mxu0 %v4370
        %4521 = vmatprep.subr.bf16.mxu0 0
        %4522 = vmatpush2.bf16.msra.mxu0 %v4369
        %4523 = vmatprep.subr.bf16.mxu0 0
        %4524 = vmatpush2.bf16.msra.mxu0 %v4368
        %4525 = vmatprep.subr.bf16.mxu0 0
        %4526 = vmatpush2.bf16.msra.mxu0 %v4367
        %4527 = vmatprep.subr.bf16.mxu0 0
        %4528 = vmatpush2.bf16.msra.mxu0 %v4366
        %4529 = vmatprep.subr.bf16.mxu0 0
        %4530 = vmatpush2.bf16.msra.mxu0 %v4365
        %4531 = vmatprep.subr.bf16.mxu0 0
        %4532 = vmatpush2.bf16.msra.mxu0 %v4364
        %4533 = vmatprep.mubr.bf16.mxu0 %v4131
        %4534 = vmatmul.mubr.bf16.gmra.mxu0 %v4099
        %v4535 = vpop.f32.mrf.mxu0
        %v4536 = vadd.f32 %v4439, %v4535
        %v4537 = vpop.f32.mrf.mxu0
        %v4538 = vpop.f32.mrf.mxu0
        %v4539 = vadd.f32 %v4442, %v4538
        %v4540 = vpop.f32.mrf.mxu0
        %4541 = vmatprep.mubr.bf16.mxu0 %v4132
        %4542 = vmatmul.mubr.bf16.gmra.mxu0 %v4100
        %v4543 = vpop.f32.mrf.mxu0
        %v4544 = vadd.f32 %v4447, %v4543
        %v4545 = vpop.f32.mrf.mxu0
        %v4546 = vpop.f32.mrf.mxu0
        %v4547 = vadd.f32 %v4450, %v4546
        %v4548 = vpop.f32.mrf.mxu0
        %4549 = vmatprep.mubr.bf16.mxu0 %v4133
        %4550 = vmatmul.mubr.bf16.gmra.mxu0 %v4101
        %v4551 = vpop.f32.mrf.mxu0
        %v4552 = vadd.f32 %v4455, %v4551
        %v4553 = vpop.f32.mrf.mxu0
        %v4554 = vpop.f32.mrf.mxu0
        %v4555 = vadd.f32 %v4458, %v4554
        %v4556 = vpop.f32.mrf.mxu0
        %4557 = vmatprep.mubr.bf16.mxu0 %v4134
        %4558 = vmatmul.mubr.bf16.gmra.mxu0 %v4102
        %v4559 = vpop.f32.mrf.mxu0
        %v4560 = vadd.f32 %v4463, %v4559
        %v4561 = vpop.f32.mrf.mxu0
        %v4562 = vpop.f32.mrf.mxu0
        %v4563 = vadd.f32 %v4466, %v4562
        %v4564 = vpop.f32.mrf.mxu0
        %4565 = vmatprep.mubr.bf16.mxu0 %v4135
        %4566 = vmatmul.mubr.bf16.gmra.mxu0 %v4103
        %v4567 = vpop.f32.mrf.mxu0
        %v4568 = vadd.f32 %v4471, %v4567
        %v4569 = vpop.f32.mrf.mxu0
        %v4570 = vpop.f32.mrf.mxu0
        %v4571 = vadd.f32 %v4474, %v4570
        %v4572 = vpop.f32.mrf.mxu0
        %4573 = vmatprep.mubr.bf16.mxu0 %v4136
        %4574 = vmatmul.mubr.bf16.gmra.mxu0 %v4104
        %v4575 = vpop.f32.mrf.mxu0
        %v4576 = vadd.f32 %v4479, %v4575
        %v4577 = vpop.f32.mrf.mxu0
        %v4578 = vpop.f32.mrf.mxu0
        %v4579 = vadd.f32 %v4482, %v4578
        %v4580 = vpop.f32.mrf.mxu0
        %4581 = vmatprep.mubr.bf16.mxu0 %v4137
        %4582 = vmatmul.mubr.bf16.gmra.mxu0 %v4105
        %v4583 = vpop.f32.mrf.mxu0
        %v4584 = vadd.f32 %v4487, %v4583
        %v4585 = vpop.f32.mrf.mxu0
        %v4586 = vpop.f32.mrf.mxu0
        %v4587 = vadd.f32 %v4490, %v4586
        %v4588 = vpop.f32.mrf.mxu0
        %4589 = vmatprep.mubr.bf16.mxu0 %v4138
        %4590 = vmatmul.mubr.bf16.gmra.mxu0 %v4106
        %v4591 = vpop.f32.mrf.mxu0
        %v4592 = vadd.f32 %v4495, %v4591
        %v4593 = vpop.f32.mrf.mxu0
        %v4594 = vpop.f32.mrf.mxu0
        %v4595 = vadd.f32 %v4498, %v4594
        %v4596 = vpop.f32.mrf.mxu0
        %4597 = vdwg.mxu0
        %v4598 = vadd.f32 %v3069, %v4536
        %v4599 = vadd.f32 %v3070, %v4539
        %v4600 = vadd.f32 %v3071, %v4544
        %v4601 = vadd.f32 %v3072, %v4547
        %v4602 = vadd.f32 %v3073, %v4552
        %v4603 = vadd.f32 %v3074, %v4555
        %v4604 = vadd.f32 %v3075, %v4560
        %v4605 = vadd.f32 %v3076, %v4563
        %v4606 = vadd.f32 %v3077, %v4568
        %v4607 = vadd.f32 %v3078, %v4571
        %v4608 = vadd.f32 %v3079, %v4576
        %v4609 = vadd.f32 %v3080, %v4579
        %v4610 = vadd.f32 %v3081, %v4584
        %v4611 = vadd.f32 %v3082, %v4587
        %v4612 = vadd.f32 %v3083, %v4592
        %v4613 = vadd.f32 %v3084, %v4595
        %v4614 = vld [vmem:[%s665 + $0x4] sm:$0x8]
        %v4615 = vld [vmem:[%s665 + $0x1c] sm:$0x8]
        %v4616 = vld [vmem:[%s665 + $0x34] sm:$0x8]
        %v4617 = vld [vmem:[%s665 + $0x4c] sm:$0x8]
        %v4618 = vld [vmem:[%s665 + $0x64] sm:$0x8]
        %v4619 = vld [vmem:[%s665 + $0x7c] sm:$0x8]
        %v4620 = vld [vmem:[%s665 + $0x94] sm:$0x8]
        %v4621 = vld [vmem:[%s665 + $0xac] sm:$0x8]
        %v4623 = vshrl.u32 %v4614, 16
        %v4625 = vrot.slane %v4623, 7
        %v4626 = vrot.slane %v4625, 4
        %v4628 = vshrl.u32 %v666, 16
        %v4630 = vrot.slane %v4628, 7
        %v4631 = vshll.u32 %v666, 16
        %v4633 = vor.u32 %v4630, %v4631
        %v4634 = vsel %vm728, %v4626, %v4633
        %v4635 = vrot.slane %v4630, 4
        %v4637 = vshrl.u32 %v667, 16
        %v4639 = vrot.slane %v4637, 7
        %v4640 = vshll.u32 %v667, 16
        %v4642 = vor.u32 %v4639, %v4640
        %v4643 = vsel %vm728, %v4635, %v4642
        %v4645 = vshrl.u32 %v4615, 16
        %v4647 = vrot.slane %v4645, 7
        %v4648 = vrot.slane %v4647, 4
        %v4650 = vshrl.u32 %v668, 16
        %v4652 = vrot.slane %v4650, 7
        %v4653 = vshll.u32 %v668, 16
        %v4655 = vor.u32 %v4652, %v4653
        %v4656 = vsel %vm728, %v4648, %v4655
        %v4657 = vrot.slane %v4652, 4
        %v4659 = vshrl.u32 %v669, 16
        %v4661 = vrot.slane %v4659, 7
        %v4662 = vshll.u32 %v669, 16
        %v4664 = vor.u32 %v4661, %v4662
        %v4665 = vsel %vm728, %v4657, %v4664
        %v4667 = vshrl.u32 %v4616, 16
        %v4669 = vrot.slane %v4667, 7
        %v4670 = vrot.slane %v4669, 4
        %v4672 = vshrl.u32 %v670, 16
        %v4674 = vrot.slane %v4672, 7
        %v4675 = vshll.u32 %v670, 16
        %v4677 = vor.u32 %v4674, %v4675
        %v4678 = vsel %vm728, %v4670, %v4677
        %v4679 = vrot.slane %v4674, 4
        %v4681 = vshrl.u32 %v671, 16
        %v4683 = vrot.slane %v4681, 7
        %v4684 = vshll.u32 %v671, 16
        %v4686 = vor.u32 %v4683, %v4684
        %v4687 = vsel %vm728, %v4679, %v4686
        %v4689 = vshrl.u32 %v4617, 16
        %v4691 = vrot.slane %v4689, 7
        %v4692 = vrot.slane %v4691, 4
        %v4694 = vshrl.u32 %v672, 16
        %v4696 = vrot.slane %v4694, 7
        %v4697 = vshll.u32 %v672, 16
        %v4699 = vor.u32 %v4696, %v4697
        %v4700 = vsel %vm728, %v4692, %v4699
        %v4701 = vrot.slane %v4696, 4
        %v4703 = vshrl.u32 %v673, 16
        %v4705 = vrot.slane %v4703, 7
        %v4706 = vshll.u32 %v673, 16
        %v4708 = vor.u32 %v4705, %v4706
        %v4709 = vsel %vm728, %v4701, %v4708
        %v4711 = vshrl.u32 %v4618, 16
        %v4713 = vrot.slane %v4711, 7
        %v4714 = vrot.slane %v4713, 4
        %v4716 = vshrl.u32 %v674, 16
        %v4718 = vrot.slane %v4716, 7
        %v4719 = vshll.u32 %v674, 16
        %v4721 = vor.u32 %v4718, %v4719
        %v4722 = vsel %vm728, %v4714, %v4721
        %v4723 = vrot.slane %v4718, 4
        %v4725 = vshrl.u32 %v675, 16
        %v4727 = vrot.slane %v4725, 7
        %v4728 = vshll.u32 %v675, 16
        %v4730 = vor.u32 %v4727, %v4728
        %v4731 = vsel %vm728, %v4723, %v4730
        %v4733 = vshrl.u32 %v4619, 16
        %v4735 = vrot.slane %v4733, 7
        %v4736 = vrot.slane %v4735, 4
        %v4738 = vshrl.u32 %v676, 16
        %v4740 = vrot.slane %v4738, 7
        %v4741 = vshll.u32 %v676, 16
        %v4743 = vor.u32 %v4740, %v4741
        %v4744 = vsel %vm728, %v4736, %v4743
        %v4745 = vrot.slane %v4740, 4
        %v4747 = vshrl.u32 %v677, 16
        %v4749 = vrot.slane %v4747, 7
        %v4750 = vshll.u32 %v677, 16
        %v4752 = vor.u32 %v4749, %v4750
        %v4753 = vsel %vm728, %v4745, %v4752
        %v4755 = vshrl.u32 %v4620, 16
        %v4757 = vrot.slane %v4755, 7
        %v4758 = vrot.slane %v4757, 4
        %v4760 = vshrl.u32 %v678, 16
        %v4762 = vrot.slane %v4760, 7
        %v4763 = vshll.u32 %v678, 16
        %v4765 = vor.u32 %v4762, %v4763
        %v4766 = vsel %vm728, %v4758, %v4765
        %v4767 = vrot.slane %v4762, 4
        %v4769 = vshrl.u32 %v679, 16
        %v4771 = vrot.slane %v4769, 7
        %v4772 = vshll.u32 %v679, 16
        %v4774 = vor.u32 %v4771, %v4772
        %v4775 = vsel %vm728, %v4767, %v4774
        %v4777 = vshrl.u32 %v4621, 16
        %v4779 = vrot.slane %v4777, 7
        %v4780 = vrot.slane %v4779, 4
        %v4782 = vshrl.u32 %v680, 16
        %v4784 = vrot.slane %v4782, 7
        %v4785 = vshll.u32 %v680, 16
        %v4787 = vor.u32 %v4784, %v4785
        %v4788 = vsel %vm728, %v4780, %v4787
        %v4789 = vrot.slane %v4784, 4
        %v4791 = vshrl.u32 %v681, 16
        %v4793 = vrot.slane %v4791, 7
        %v4794 = vshll.u32 %v681, 16
        %v4796 = vor.u32 %v4793, %v4794
        %v4797 = vsel %vm728, %v4789, %v4796
        %v4798 = vld [vmem:[%s665 + $0x4] sm:$0xe]
        %v4799 = vld [vmem:[%s665 + $0xc] sm:$0x3]
        %v4800 = vld [vmem:[%s665 + $0x1c] sm:$0xe]
        %v4801 = vld [vmem:[%s665 + $0x24] sm:$0x3]
        %v4802 = vld [vmem:[%s665 + $0x34] sm:$0xe]
        %v4803 = vld [vmem:[%s665 + $0x3c] sm:$0x3]
        %v4804 = vld [vmem:[%s665 + $0x4c] sm:$0xe]
        %v4805 = vld [vmem:[%s665 + $0x54] sm:$0x3]
        %v4806 = vld [vmem:[%s665 + $0x64] sm:$0xe]
        %v4807 = vld [vmem:[%s665 + $0x6c] sm:$0x3]
        %v4808 = vld [vmem:[%s665 + $0x7c] sm:$0xe]
        %v4809 = vld [vmem:[%s665 + $0x84] sm:$0x3]
        %v4810 = vld [vmem:[%s665 + $0x94] sm:$0xe]
        %v4811 = vld [vmem:[%s665 + $0x9c] sm:$0x3]
        %v4812 = vld [vmem:[%s665 + $0xac] sm:$0xe]
        %v4813 = vld [vmem:[%s665 + $0xb4] sm:$0x3]
        %v4815 = vshrl.u32 %v4798, 16
        %v4817 = vrot.slane %v4815, 5
        %v4818 = vshll.u32 %v4798, 16
        %v4820 = vrot.slane %v4818, 6
        %v4821 = vor.u32 %v4817, %v4820
        %v4822 = vrot.slane %v4821, 4
        %v4823 = vrot.slane %v4628, 5
        %v4824 = vrot.slane %v4631, 6
        %v4825 = vor.u32 %v4823, %v4824
        %v4826 = vsel %vm935, %v4822, %v4825
        %v4827 = vrot.slane %v4825, 4
        %v4829 = vshrl.u32 %v4799, 16
        %v4831 = vrot.slane %v4829, 5
        %v4832 = vshll.u32 %v4799, 16
        %v4834 = vrot.slane %v4832, 6
        %v4835 = vor.u32 %v4831, %v4834
        %v4836 = vsel %vm935, %v4827, %v4835
        %v4838 = vshrl.u32 %v4800, 16
        %v4840 = vrot.slane %v4838, 5
        %v4841 = vshll.u32 %v4800, 16
        %v4843 = vrot.slane %v4841, 6
        %v4844 = vor.u32 %v4840, %v4843
        %v4845 = vrot.slane %v4844, 4
        %v4846 = vrot.slane %v4650, 5
        %v4847 = vrot.slane %v4653, 6
        %v4848 = vor.u32 %v4846, %v4847
        %v4849 = vsel %vm935, %v4845, %v4848
        %v4850 = vrot.slane %v4848, 4
        %v4852 = vshrl.u32 %v4801, 16
        %v4854 = vrot.slane %v4852, 5
        %v4855 = vshll.u32 %v4801, 16
        %v4857 = vrot.slane %v4855, 6
        %v4858 = vor.u32 %v4854, %v4857
        %v4859 = vsel %vm935, %v4850, %v4858
        %v4861 = vshrl.u32 %v4802, 16
        %v4863 = vrot.slane %v4861, 5
        %v4864 = vshll.u32 %v4802, 16
        %v4866 = vrot.slane %v4864, 6
        %v4867 = vor.u32 %v4863, %v4866
        %v4868 = vrot.slane %v4867, 4
        %v4869 = vrot.slane %v4672, 5
        %v4870 = vrot.slane %v4675, 6
        %v4871 = vor.u32 %v4869, %v4870
        %v4872 = vsel %vm935, %v4868, %v4871
        %v4873 = vrot.slane %v4871, 4
        %v4875 = vshrl.u32 %v4803, 16
        %v4877 = vrot.slane %v4875, 5
        %v4878 = vshll.u32 %v4803, 16
        %v4880 = vrot.slane %v4878, 6
        %v4881 = vor.u32 %v4877, %v4880
        %v4882 = vsel %vm935, %v4873, %v4881
        %v4884 = vshrl.u32 %v4804, 16
        %v4886 = vrot.slane %v4884, 5
        %v4887 = vshll.u32 %v4804, 16
        %v4889 = vrot.slane %v4887, 6
        %v4890 = vor.u32 %v4886, %v4889
        %v4891 = vrot.slane %v4890, 4
        %v4892 = vrot.slane %v4694, 5
        %v4893 = vrot.slane %v4697, 6
        %v4894 = vor.u32 %v4892, %v4893
        %v4895 = vsel %vm935, %v4891, %v4894
        %v4896 = vrot.slane %v4894, 4
        %v4898 = vshrl.u32 %v4805, 16
        %v4900 = vrot.slane %v4898, 5
        %v4901 = vshll.u32 %v4805, 16
        %v4903 = vrot.slane %v4901, 6
        %v4904 = vor.u32 %v4900, %v4903
        %v4905 = vsel %vm935, %v4896, %v4904
        %v4907 = vshrl.u32 %v4806, 16
        %v4909 = vrot.slane %v4907, 5
        %v4910 = vshll.u32 %v4806, 16
        %v4912 = vrot.slane %v4910, 6
        %v4913 = vor.u32 %v4909, %v4912
        %v4914 = vrot.slane %v4913, 4
        %v4915 = vrot.slane %v4716, 5
        %v4916 = vrot.slane %v4719, 6
        %v4917 = vor.u32 %v4915, %v4916
        %v4918 = vsel %vm935, %v4914, %v4917
        %v4919 = vrot.slane %v4917, 4
        %v4921 = vshrl.u32 %v4807, 16
        %v4923 = vrot.slane %v4921, 5
        %v4924 = vshll.u32 %v4807, 16
        %v4926 = vrot.slane %v4924, 6
        %v4927 = vor.u32 %v4923, %v4926
        %v4928 = vsel %vm935, %v4919, %v4927
        %v4930 = vshrl.u32 %v4808, 16
        %v4932 = vrot.slane %v4930, 5
        %v4933 = vshll.u32 %v4808, 16
        %v4935 = vrot.slane %v4933, 6
        %v4936 = vor.u32 %v4932, %v4935
        %v4937 = vrot.slane %v4936, 4
        %v4938 = vrot.slane %v4738, 5
        %v4939 = vrot.slane %v4741, 6
        %v4940 = vor.u32 %v4938, %v4939
        %v4941 = vsel %vm935, %v4937, %v4940
        %v4942 = vrot.slane %v4940, 4
        %v4944 = vshrl.u32 %v4809, 16
        %v4946 = vrot.slane %v4944, 5
        %v4947 = vshll.u32 %v4809, 16
        %v4949 = vrot.slane %v4947, 6
        %v4950 = vor.u32 %v4946, %v4949
        %v4951 = vsel %vm935, %v4942, %v4950
        %v4953 = vshrl.u32 %v4810, 16
        %v4955 = vrot.slane %v4953, 5
        %v4956 = vshll.u32 %v4810, 16
        %v4958 = vrot.slane %v4956, 6
        %v4959 = vor.u32 %v4955, %v4958
        %v4960 = vrot.slane %v4959, 4
        %v4961 = vrot.slane %v4760, 5
        %v4962 = vrot.slane %v4763, 6
        %v4963 = vor.u32 %v4961, %v4962
        %v4964 = vsel %vm935, %v4960, %v4963
        %v4965 = vrot.slane %v4963, 4
        %v4967 = vshrl.u32 %v4811, 16
        %v4969 = vrot.slane %v4967, 5
        %v4970 = vshll.u32 %v4811, 16
        %v4972 = vrot.slane %v4970, 6
        %v4973 = vor.u32 %v4969, %v4972
        %v4974 = vsel %vm935, %v4965, %v4973
        %v4976 = vshrl.u32 %v4812, 16
        %v4978 = vrot.slane %v4976, 5
        %v4979 = vshll.u32 %v4812, 16
        %v4981 = vrot.slane %v4979, 6
        %v4982 = vor.u32 %v4978, %v4981
        %v4983 = vrot.slane %v4982, 4
        %v4984 = vrot.slane %v4782, 5
        %v4985 = vrot.slane %v4785, 6
        %v4986 = vor.u32 %v4984, %v4985
        %v4987 = vsel %vm935, %v4983, %v4986
        %v4988 = vrot.slane %v4986, 4
        %v4990 = vshrl.u32 %v4813, 16
        %v4992 = vrot.slane %v4990, 5
        %v4993 = vshll.u32 %v4813, 16
        %v4995 = vrot.slane %v4993, 6
        %v4996 = vor.u32 %v4992, %v4995
        %v4997 = vsel %vm935, %v4988, %v4996
        %v4998 = vld [vmem:[%s665] sm:$0x8]
        %v4999 = vld [vmem:[%s665 + $0x4] sm:$0xf]
        %v5000 = vld [vmem:[%s665 + $0x8] sm:$0xf]
        %v5001 = vld [vmem:[%s665 + $0x18] sm:$0x8]
        %v5002 = vld [vmem:[%s665 + $0x1c] sm:$0xf]
        %v5003 = vld [vmem:[%s665 + $0x20] sm:$0xf]
        %v5004 = vld [vmem:[%s665 + $0x30] sm:$0x8]
        %v5005 = vld [vmem:[%s665 + $0x34] sm:$0xf]
        %v5006 = vld [vmem:[%s665 + $0x38] sm:$0xf]
        %v5007 = vld [vmem:[%s665 + $0x48] sm:$0x8]
        %v5008 = vld [vmem:[%s665 + $0x4c] sm:$0xf]
        %v5009 = vld [vmem:[%s665 + $0x50] sm:$0xf]
        %v5010 = vld [vmem:[%s665 + $0x60] sm:$0x8]
        %v5011 = vld [vmem:[%s665 + $0x64] sm:$0xf]
        %v5012 = vld [vmem:[%s665 + $0x68] sm:$0xf]
        %v5013 = vld [vmem:[%s665 + $0x78] sm:$0x8]
        %v5014 = vld [vmem:[%s665 + $0x7c] sm:$0xf]
        %v5015 = vld [vmem:[%s665 + $0x80] sm:$0xf]
        %v5016 = vld [vmem:[%s665 + $0x90] sm:$0x8]
        %v5017 = vld [vmem:[%s665 + $0x94] sm:$0xf]
        %v5018 = vld [vmem:[%s665 + $0x98] sm:$0xf]
        %v5019 = vld [vmem:[%s665 + $0xa8] sm:$0x8]
        %v5020 = vld [vmem:[%s665 + $0xac] sm:$0xf]
        %v5021 = vld [vmem:[%s665 + $0xb0] sm:$0xf]
        %v5023 = vshrl.u32 %v4998, 16
        %v5025 = vrot.slane %v5023, 7
        %v5026 = vrot.slane %v5025, 4
        %v5028 = vshrl.u32 %v4999, 16
        %v5030 = vrot.slane %v5028, 7
        %v5031 = vshll.u32 %v4999, 16
        %v5033 = vor.u32 %v5030, %v5031
        %v5034 = vsel %vm728, %v5026, %v5033
        %v5035 = vrot.slane %v5030, 4
        %v5037 = vshrl.u32 %v5000, 16
        %v5039 = vrot.slane %v5037, 7
        %v5040 = vshll.u32 %v5000, 16
        %v5042 = vor.u32 %v5039, %v5040
        %v5043 = vsel %vm728, %v5035, %v5042
        %v5045 = vshrl.u32 %v5001, 16
        %v5047 = vrot.slane %v5045, 7
        %v5048 = vrot.slane %v5047, 4
        %v5050 = vshrl.u32 %v5002, 16
        %v5052 = vrot.slane %v5050, 7
        %v5053 = vshll.u32 %v5002, 16
        %v5055 = vor.u32 %v5052, %v5053
        %v5056 = vsel %vm728, %v5048, %v5055
        %v5057 = vrot.slane %v5052, 4
        %v5059 = vshrl.u32 %v5003, 16
        %v5061 = vrot.slane %v5059, 7
        %v5062 = vshll.u32 %v5003, 16
        %v5064 = vor.u32 %v5061, %v5062
        %v5065 = vsel %vm728, %v5057, %v5064
        %v5067 = vshrl.u32 %v5004, 16
        %v5069 = vrot.slane %v5067, 7
        %v5070 = vrot.slane %v5069, 4
        %v5072 = vshrl.u32 %v5005, 16
        %v5074 = vrot.slane %v5072, 7
        %v5075 = vshll.u32 %v5005, 16
        %v5077 = vor.u32 %v5074, %v5075
        %v5078 = vsel %vm728, %v5070, %v5077
        %v5079 = vrot.slane %v5074, 4
        %v5081 = vshrl.u32 %v5006, 16
        %v5083 = vrot.slane %v5081, 7
        %v5084 = vshll.u32 %v5006, 16
        %v5086 = vor.u32 %v5083, %v5084
        %v5087 = vsel %vm728, %v5079, %v5086
        %v5089 = vshrl.u32 %v5007, 16
        %v5091 = vrot.slane %v5089, 7
        %v5092 = vrot.slane %v5091, 4
        %v5094 = vshrl.u32 %v5008, 16
        %v5096 = vrot.slane %v5094, 7
        %v5097 = vshll.u32 %v5008, 16
        %v5099 = vor.u32 %v5096, %v5097
        %v5100 = vsel %vm728, %v5092, %v5099
        %v5101 = vrot.slane %v5096, 4
        %v5103 = vshrl.u32 %v5009, 16
        %v5105 = vrot.slane %v5103, 7
        %v5106 = vshll.u32 %v5009, 16
        %v5108 = vor.u32 %v5105, %v5106
        %v5109 = vsel %vm728, %v5101, %v5108
        %v5111 = vshrl.u32 %v5010, 16
        %v5113 = vrot.slane %v5111, 7
        %v5114 = vrot.slane %v5113, 4
        %v5116 = vshrl.u32 %v5011, 16
        %v5118 = vrot.slane %v5116, 7
        %v5119 = vshll.u32 %v5011, 16
        %v5121 = vor.u32 %v5118, %v5119
        %v5122 = vsel %vm728, %v5114, %v5121
        %v5123 = vrot.slane %v5118, 4
        %v5125 = vshrl.u32 %v5012, 16
        %v5127 = vrot.slane %v5125, 7
        %v5128 = vshll.u32 %v5012, 16
        %v5130 = vor.u32 %v5127, %v5128
        %v5131 = vsel %vm728, %v5123, %v5130
        %v5133 = vshrl.u32 %v5013, 16
        %v5135 = vrot.slane %v5133, 7
        %v5136 = vrot.slane %v5135, 4
        %v5138 = vshrl.u32 %v5014, 16
        %v5140 = vrot.slane %v5138, 7
        %v5141 = vshll.u32 %v5014, 16
        %v5143 = vor.u32 %v5140, %v5141
        %v5144 = vsel %vm728, %v5136, %v5143
        %v5145 = vrot.slane %v5140, 4
        %v5147 = vshrl.u32 %v5015, 16
        %v5149 = vrot.slane %v5147, 7
        %v5150 = vshll.u32 %v5015, 16
        %v5152 = vor.u32 %v5149, %v5150
        %v5153 = vsel %vm728, %v5145, %v5152
        %v5155 = vshrl.u32 %v5016, 16
        %v5157 = vrot.slane %v5155, 7
        %v5158 = vrot.slane %v5157, 4
        %v5160 = vshrl.u32 %v5017, 16
        %v5162 = vrot.slane %v5160, 7
        %v5163 = vshll.u32 %v5017, 16
        %v5165 = vor.u32 %v5162, %v5163
        %v5166 = vsel %vm728, %v5158, %v5165
        %v5167 = vrot.slane %v5162, 4
        %v5169 = vshrl.u32 %v5018, 16
        %v5171 = vrot.slane %v5169, 7
        %v5172 = vshll.u32 %v5018, 16
        %v5174 = vor.u32 %v5171, %v5172
        %v5175 = vsel %vm728, %v5167, %v5174
        %v5177 = vshrl.u32 %v5019, 16
        %v5179 = vrot.slane %v5177, 7
        %v5180 = vrot.slane %v5179, 4
        %v5182 = vshrl.u32 %v5020, 16
        %v5184 = vrot.slane %v5182, 7
        %v5185 = vshll.u32 %v5020, 16
        %v5187 = vor.u32 %v5184, %v5185
        %v5188 = vsel %vm728, %v5180, %v5187
        %v5189 = vrot.slane %v5184, 4
        %v5191 = vshrl.u32 %v5021, 16
        %v5193 = vrot.slane %v5191, 7
        %v5194 = vshll.u32 %v5021, 16
        %v5196 = vor.u32 %v5193, %v5194
        %v5197 = vsel %vm728, %v5189, %v5196
        %v5198 = vld [vmem:[%s665] sm:$0xe]
        %v5199 = vld [vmem:[%s665 + $0x8] sm:$0x3]
        %v5200 = vld [vmem:[%s665 + $0x18] sm:$0xe]
        %v5201 = vld [vmem:[%s665 + $0x20] sm:$0x3]
        %v5202 = vld [vmem:[%s665 + $0x30] sm:$0xe]
        %v5203 = vld [vmem:[%s665 + $0x38] sm:$0x3]
        %v5204 = vld [vmem:[%s665 + $0x48] sm:$0xe]
        %v5205 = vld [vmem:[%s665 + $0x50] sm:$0x3]
        %v5206 = vld [vmem:[%s665 + $0x60] sm:$0xe]
        %v5207 = vld [vmem:[%s665 + $0x68] sm:$0x3]
        %v5208 = vld [vmem:[%s665 + $0x78] sm:$0xe]
        %v5209 = vld [vmem:[%s665 + $0x80] sm:$0x3]
        %v5210 = vld [vmem:[%s665 + $0x90] sm:$0xe]
        %v5211 = vld [vmem:[%s665 + $0x98] sm:$0x3]
        %v5212 = vld [vmem:[%s665 + $0xa8] sm:$0xe]
        %v5213 = vld [vmem:[%s665 + $0xb0] sm:$0x3]
        %v5215 = vshrl.u32 %v5198, 16
        %v5217 = vrot.slane %v5215, 5
        %v5218 = vshll.u32 %v5198, 16
        %v5220 = vrot.slane %v5218, 6
        %v5221 = vor.u32 %v5217, %v5220
        %v5222 = vrot.slane %v5221, 4
        %v5223 = vrot.slane %v5028, 5
        %v5224 = vrot.slane %v5031, 6
        %v5225 = vor.u32 %v5223, %v5224
        %v5226 = vsel %vm935, %v5222, %v5225
        %v5227 = vrot.slane %v5225, 4
        %v5229 = vshrl.u32 %v5199, 16
        %v5231 = vrot.slane %v5229, 5
        %v5232 = vshll.u32 %v5199, 16
        %v5234 = vrot.slane %v5232, 6
        %v5235 = vor.u32 %v5231, %v5234
        %v5236 = vsel %vm935, %v5227, %v5235
        %v5238 = vshrl.u32 %v5200, 16
        %v5240 = vrot.slane %v5238, 5
        %v5241 = vshll.u32 %v5200, 16
        %v5243 = vrot.slane %v5241, 6
        %v5244 = vor.u32 %v5240, %v5243
        %v5245 = vrot.slane %v5244, 4
        %v5246 = vrot.slane %v5050, 5
        %v5247 = vrot.slane %v5053, 6
        %v5248 = vor.u32 %v5246, %v5247
        %v5249 = vsel %vm935, %v5245, %v5248
        %v5250 = vrot.slane %v5248, 4
        %v5252 = vshrl.u32 %v5201, 16
        %v5254 = vrot.slane %v5252, 5
        %v5255 = vshll.u32 %v5201, 16
        %v5257 = vrot.slane %v5255, 6
        %v5258 = vor.u32 %v5254, %v5257
        %v5259 = vsel %vm935, %v5250, %v5258
        %v5261 = vshrl.u32 %v5202, 16
        %v5263 = vrot.slane %v5261, 5
        %v5264 = vshll.u32 %v5202, 16
        %v5266 = vrot.slane %v5264, 6
        %v5267 = vor.u32 %v5263, %v5266
        %v5268 = vrot.slane %v5267, 4
        %v5269 = vrot.slane %v5072, 5
        %v5270 = vrot.slane %v5075, 6
        %v5271 = vor.u32 %v5269, %v5270
        %v5272 = vsel %vm935, %v5268, %v5271
        %v5273 = vrot.slane %v5271, 4
        %v5275 = vshrl.u32 %v5203, 16
        %v5277 = vrot.slane %v5275, 5
        %v5278 = vshll.u32 %v5203, 16
        %v5280 = vrot.slane %v5278, 6
        %v5281 = vor.u32 %v5277, %v5280
        %v5282 = vsel %vm935, %v5273, %v5281
        %v5284 = vshrl.u32 %v5204, 16
        %v5286 = vrot.slane %v5284, 5
        %v5287 = vshll.u32 %v5204, 16
        %v5289 = vrot.slane %v5287, 6
        %v5290 = vor.u32 %v5286, %v5289
        %v5291 = vrot.slane %v5290, 4
        %v5292 = vrot.slane %v5094, 5
        %v5293 = vrot.slane %v5097, 6
        %v5294 = vor.u32 %v5292, %v5293
        %v5295 = vsel %vm935, %v5291, %v5294
        %v5296 = vrot.slane %v5294, 4
        %v5298 = vshrl.u32 %v5205, 16
        %v5300 = vrot.slane %v5298, 5
        %v5301 = vshll.u32 %v5205, 16
        %v5303 = vrot.slane %v5301, 6
        %v5304 = vor.u32 %v5300, %v5303
        %v5305 = vsel %vm935, %v5296, %v5304
        %v5307 = vshrl.u32 %v5206, 16
        %v5309 = vrot.slane %v5307, 5
        %v5310 = vshll.u32 %v5206, 16
        %v5312 = vrot.slane %v5310, 6
        %v5313 = vor.u32 %v5309, %v5312
        %v5314 = vrot.slane %v5313, 4
        %v5315 = vrot.slane %v5116, 5
        %v5316 = vrot.slane %v5119, 6
        %v5317 = vor.u32 %v5315, %v5316
        %v5318 = vsel %vm935, %v5314, %v5317
        %v5319 = vrot.slane %v5317, 4
        %v5321 = vshrl.u32 %v5207, 16
        %v5323 = vrot.slane %v5321, 5
        %v5324 = vshll.u32 %v5207, 16
        %v5326 = vrot.slane %v5324, 6
        %v5327 = vor.u32 %v5323, %v5326
        %v5328 = vsel %vm935, %v5319, %v5327
        %v5330 = vshrl.u32 %v5208, 16
        %v5332 = vrot.slane %v5330, 5
        %v5333 = vshll.u32 %v5208, 16
        %v5335 = vrot.slane %v5333, 6
        %v5336 = vor.u32 %v5332, %v5335
        %v5337 = vrot.slane %v5336, 4
        %v5338 = vrot.slane %v5138, 5
        %v5339 = vrot.slane %v5141, 6
        %v5340 = vor.u32 %v5338, %v5339
        %v5341 = vsel %vm935, %v5337, %v5340
        %v5342 = vrot.slane %v5340, 4
        %v5344 = vshrl.u32 %v5209, 16
        %v5346 = vrot.slane %v5344, 5
        %v5347 = vshll.u32 %v5209, 16
        %v5349 = vrot.slane %v5347, 6
        %v5350 = vor.u32 %v5346, %v5349
        %v5351 = vsel %vm935, %v5342, %v5350
        %v5353 = vshrl.u32 %v5210, 16
        %v5355 = vrot.slane %v5353, 5
        %v5356 = vshll.u32 %v5210, 16
        %v5358 = vrot.slane %v5356, 6
        %v5359 = vor.u32 %v5355, %v5358
        %v5360 = vrot.slane %v5359, 4
        %v5361 = vrot.slane %v5160, 5
        %v5362 = vrot.slane %v5163, 6
        %v5363 = vor.u32 %v5361, %v5362
        %v5364 = vsel %vm935, %v5360, %v5363
        %v5365 = vrot.slane %v5363, 4
        %v5367 = vshrl.u32 %v5211, 16
        %v5369 = vrot.slane %v5367, 5
        %v5370 = vshll.u32 %v5211, 16
        %v5372 = vrot.slane %v5370, 6
        %v5373 = vor.u32 %v5369, %v5372
        %v5374 = vsel %vm935, %v5365, %v5373
        %v5376 = vshrl.u32 %v5212, 16
        %v5378 = vrot.slane %v5376, 5
        %v5379 = vshll.u32 %v5212, 16
        %v5381 = vrot.slane %v5379, 6
        %v5382 = vor.u32 %v5378, %v5381
        %v5383 = vrot.slane %v5382, 4
        %v5384 = vrot.slane %v5182, 5
        %v5385 = vrot.slane %v5185, 6
        %v5386 = vor.u32 %v5384, %v5385
        %v5387 = vsel %vm935, %v5383, %v5386
        %v5388 = vrot.slane %v5386, 4
        %v5390 = vshrl.u32 %v5213, 16
        %v5392 = vrot.slane %v5390, 5
        %v5393 = vshll.u32 %v5213, 16
        %v5395 = vrot.slane %v5393, 6
        %v5396 = vor.u32 %v5392, %v5395
        %v5397 = vsel %vm935, %v5388, %v5396
        %v5398 = vunpack.c.l.b16 %v4634
        %v5399 = vunpack.c.l.b16 %v4643
        %v5400 = vunpack.c.l.b16 %v4656
        %v5401 = vunpack.c.l.b16 %v4665
        %v5402 = vunpack.c.l.b16 %v4678
        %v5403 = vunpack.c.l.b16 %v4687
        %v5404 = vunpack.c.l.b16 %v4700
        %v5405 = vunpack.c.l.b16 %v4709
        %v5406 = vunpack.c.l.b16 %v4722
        %v5407 = vunpack.c.l.b16 %v4731
        %v5408 = vunpack.c.l.b16 %v4744
        %v5409 = vunpack.c.l.b16 %v4753
        %v5410 = vunpack.c.l.b16 %v4766
        %v5411 = vunpack.c.l.b16 %v4775
        %v5412 = vunpack.c.l.b16 %v4788
        %v5413 = vunpack.c.l.b16 %v4797
        %v5414 = vpack.c.b16 %v5399, %v5398
        %v5415 = vpack.c.b16 %v5401, %v5400
        %v5416 = vpack.c.b16 %v5403, %v5402
        %v5417 = vpack.c.b16 %v5405, %v5404
        %v5418 = vpack.c.b16 %v5407, %v5406
        %v5419 = vpack.c.b16 %v5409, %v5408
        %v5420 = vpack.c.b16 %v5411, %v5410
        %v5421 = vpack.c.b16 %v5413, %v5412
        %v5430 = vunpack.c.l.b16 %v4826
        %v5431 = vunpack.c.l.b16 %v4836
        %v5432 = vunpack.c.l.b16 %v4849
        %v5433 = vunpack.c.l.b16 %v4859
        %v5434 = vunpack.c.l.b16 %v4872
        %v5435 = vunpack.c.l.b16 %v4882
        %v5436 = vunpack.c.l.b16 %v4895
        %v5437 = vunpack.c.l.b16 %v4905
        %v5438 = vunpack.c.l.b16 %v4918
        %v5439 = vunpack.c.l.b16 %v4928
        %v5440 = vunpack.c.l.b16 %v4941
        %v5441 = vunpack.c.l.b16 %v4951
        %v5442 = vunpack.c.l.b16 %v4964
        %v5443 = vunpack.c.l.b16 %v4974
        %v5444 = vunpack.c.l.b16 %v4987
        %v5445 = vunpack.c.l.b16 %v4997
        %v5446 = vpack.c.b16 %v5431, %v5430
        %v5447 = vpack.c.b16 %v5433, %v5432
        %v5448 = vpack.c.b16 %v5435, %v5434
        %v5449 = vpack.c.b16 %v5437, %v5436
        %v5450 = vpack.c.b16 %v5439, %v5438
        %v5451 = vpack.c.b16 %v5441, %v5440
        %v5452 = vpack.c.b16 %v5443, %v5442
        %v5453 = vpack.c.b16 %v5445, %v5444
        %v5462 = vunpack.c.l.b16 %v5034
        %v5463 = vunpack.c.l.b16 %v5043
        %v5464 = vunpack.c.l.b16 %v5056
        %v5465 = vunpack.c.l.b16 %v5065
        %v5466 = vunpack.c.l.b16 %v5078
        %v5467 = vunpack.c.l.b16 %v5087
        %v5468 = vunpack.c.l.b16 %v5100
        %v5469 = vunpack.c.l.b16 %v5109
        %v5470 = vunpack.c.l.b16 %v5122
        %v5471 = vunpack.c.l.b16 %v5131
        %v5472 = vunpack.c.l.b16 %v5144
        %v5473 = vunpack.c.l.b16 %v5153
        %v5474 = vunpack.c.l.b16 %v5166
        %v5475 = vunpack.c.l.b16 %v5175
        %v5476 = vunpack.c.l.b16 %v5188
        %v5477 = vunpack.c.l.b16 %v5197
        %v5478 = vpack.c.b16 %v5463, %v5462
        %v5479 = vpack.c.b16 %v5465, %v5464
        %v5480 = vpack.c.b16 %v5467, %v5466
        %v5481 = vpack.c.b16 %v5469, %v5468
        %v5482 = vpack.c.b16 %v5471, %v5470
        %v5483 = vpack.c.b16 %v5473, %v5472
        %v5484 = vpack.c.b16 %v5475, %v5474
        %v5485 = vpack.c.b16 %v5477, %v5476
        %v5494 = vunpack.c.l.b16 %v5226
        %v5495 = vunpack.c.l.b16 %v5236
        %v5496 = vunpack.c.l.b16 %v5249
        %v5497 = vunpack.c.l.b16 %v5259
        %v5498 = vunpack.c.l.b16 %v5272
        %v5499 = vunpack.c.l.b16 %v5282
        %v5500 = vunpack.c.l.b16 %v5295
        %v5501 = vunpack.c.l.b16 %v5305
        %v5502 = vunpack.c.l.b16 %v5318
        %v5503 = vunpack.c.l.b16 %v5328
        %v5504 = vunpack.c.l.b16 %v5341
        %v5505 = vunpack.c.l.b16 %v5351
        %v5506 = vunpack.c.l.b16 %v5364
        %v5507 = vunpack.c.l.b16 %v5374
        %v5508 = vunpack.c.l.b16 %v5387
        %v5509 = vunpack.c.l.b16 %v5397
        %v5510 = vpack.c.b16 %v5495, %v5494
        %v5511 = vpack.c.b16 %v5497, %v5496
        %v5512 = vpack.c.b16 %v5499, %v5498
        %v5513 = vpack.c.b16 %v5501, %v5500
        %v5514 = vpack.c.b16 %v5503, %v5502
        %v5515 = vpack.c.b16 %v5505, %v5504
        %v5516 = vpack.c.b16 %v5507, %v5506
        %v5517 = vpack.c.b16 %v5509, %v5508
        %s5526 = scalar_lea.vmem %s3, 768
        %v5527 = vld [vmem:[%s5526] sm:$0xf]
        %v5528 = vld [vmem:[%s5526 + $0x4] sm:$0xf]
        %v5529 = vld [vmem:[%s5526 + $0x8] sm:$0xf]
        %v5530 = vld [vmem:[%s5526 + $0xc] sm:$0xf]
        %v5531 = vld [vmem:[%s5526 + $0x10] sm:$0xf]
        %v5532 = vld [vmem:[%s5526 + $0x14] sm:$0xf]
        %v5533 = vld [vmem:[%s5526 + $0x18] sm:$0xf]
        %v5534 = vld [vmem:[%s5526 + $0x1c] sm:$0xf]
        %v5535 = vld [vmem:[%s5526 + $0x20] sm:$0xf]
        %v5536 = vld [vmem:[%s5526 + $0x24] sm:$0xf]
        %v5537 = vld [vmem:[%s5526 + $0x28] sm:$0xf]
        %v5538 = vld [vmem:[%s5526 + $0x2c] sm:$0xf]
        %v5539 = vld [vmem:[%s5526 + $0x30] sm:$0xf]
        %v5540 = vld [vmem:[%s5526 + $0x34] sm:$0xf]
        %v5541 = vld [vmem:[%s5526 + $0x38] sm:$0xf]
        %v5542 = vld [vmem:[%s5526 + $0x3c] sm:$0xf]
        %v5543 = vld [vmem:[%s5526 + $0x40] sm:$0xf]
        %v5544 = vld [vmem:[%s5526 + $0x44] sm:$0xf]
        %v5545 = vld [vmem:[%s5526 + $0x48] sm:$0xf]
        %v5546 = vld [vmem:[%s5526 + $0x4c] sm:$0xf]
        %v5547 = vld [vmem:[%s5526 + $0x50] sm:$0xf]
        %v5548 = vld [vmem:[%s5526 + $0x54] sm:$0xf]
        %v5549 = vld [vmem:[%s5526 + $0x58] sm:$0xf]
        %v5550 = vld [vmem:[%s5526 + $0x5c] sm:$0xf]
        %v5551 = vld [vmem:[%s5526 + $0x60] sm:$0xf]
        %v5552 = vld [vmem:[%s5526 + $0x64] sm:$0xf]
        %v5553 = vld [vmem:[%s5526 + $0x68] sm:$0xf]
        %v5554 = vld [vmem:[%s5526 + $0x6c] sm:$0xf]
        %v5555 = vld [vmem:[%s5526 + $0x70] sm:$0xf]
        %v5556 = vld [vmem:[%s5526 + $0x74] sm:$0xf]
        %v5557 = vld [vmem:[%s5526 + $0x78] sm:$0xf]
        %v5558 = vld [vmem:[%s5526 + $0x7c] sm:$0xf]
        %v5559 = vld [vmem:[%s5526 + $0x80] sm:$0xf]
        %v5560 = vld [vmem:[%s5526 + $0x84] sm:$0xf]
        %v5561 = vld [vmem:[%s5526 + $0x88] sm:$0xf]
        %v5562 = vld [vmem:[%s5526 + $0x8c] sm:$0xf]
        %v5563 = vld [vmem:[%s5526 + $0x90] sm:$0xf]
        %v5564 = vld [vmem:[%s5526 + $0x94] sm:$0xf]
        %v5565 = vld [vmem:[%s5526 + $0x98] sm:$0xf]
        %v5566 = vld [vmem:[%s5526 + $0x9c] sm:$0xf]
        %v5567 = vld [vmem:[%s5526 + $0xa0] sm:$0xf]
        %v5568 = vld [vmem:[%s5526 + $0xa4] sm:$0xf]
        %v5569 = vld [vmem:[%s5526 + $0xa8] sm:$0xf]
        %v5570 = vld [vmem:[%s5526 + $0xac] sm:$0xf]
        %v5571 = vld [vmem:[%s5526 + $0xb0] sm:$0xf]
        %v5572 = vld [vmem:[%s5526 + $0xb4] sm:$0xf]
        %v5573 = vld [vmem:[%s5526 + $0xb8] sm:$0xf]
        %v5574 = vld [vmem:[%s5526 + $0xbc] sm:$0xf]
        %v5575 = vld [vmem:[%s5526 + $0xc0] sm:$0xf]
        %v5576 = vld [vmem:[%s5526 + $0xc4] sm:$0xf]
        %v5577 = vld [vmem:[%s5526 + $0xc8] sm:$0xf]
        %v5578 = vld [vmem:[%s5526 + $0xcc] sm:$0xf]
        %v5579 = vld [vmem:[%s5526 + $0xd0] sm:$0xf]
        %v5580 = vld [vmem:[%s5526 + $0xd4] sm:$0xf]
        %v5581 = vld [vmem:[%s5526 + $0xd8] sm:$0xf]
        %v5582 = vld [vmem:[%s5526 + $0xdc] sm:$0xf]
        %v5583 = vld [vmem:[%s5526 + $0xe0] sm:$0xf]
        %v5584 = vld [vmem:[%s5526 + $0xe4] sm:$0xf]
        %v5585 = vld [vmem:[%s5526 + $0xe8] sm:$0xf]
        %v5586 = vld [vmem:[%s5526 + $0xec] sm:$0xf]
        %v5587 = vld [vmem:[%s5526 + $0xf0] sm:$0xf]
        %v5588 = vld [vmem:[%s5526 + $0xf4] sm:$0xf]
        %v5589 = vld [vmem:[%s5526 + $0xf8] sm:$0xf]
        %v5590 = vld [vmem:[%s5526 + $0xfc] sm:$0xf]
        %v5655 = vunpack.c.l.b16 %v5527
        %v5656 = vunpack.c.l.b16 %v5528
        %v5657 = vunpack.c.l.b16 %v5529
        %v5658 = vunpack.c.l.b16 %v5530
        %v5659 = vunpack.c.l.b16 %v5531
        %v5660 = vunpack.c.l.b16 %v5532
        %v5661 = vunpack.c.l.b16 %v5533
        %v5662 = vunpack.c.l.b16 %v5534
        %v5663 = vunpack.c.l.b16 %v5535
        %v5664 = vunpack.c.l.b16 %v5536
        %v5665 = vunpack.c.l.b16 %v5537
        %v5666 = vunpack.c.l.b16 %v5538
        %v5667 = vunpack.c.l.b16 %v5539
        %v5668 = vunpack.c.l.b16 %v5540
        %v5669 = vunpack.c.l.b16 %v5541
        %v5670 = vunpack.c.l.b16 %v5542
        %v5671 = vunpack.c.l.b16 %v5543
        %v5672 = vunpack.c.l.b16 %v5544
        %v5673 = vunpack.c.l.b16 %v5545
        %v5674 = vunpack.c.l.b16 %v5546
        %v5675 = vunpack.c.l.b16 %v5547
        %v5676 = vunpack.c.l.b16 %v5548
        %v5677 = vunpack.c.l.b16 %v5549
        %v5678 = vunpack.c.l.b16 %v5550
        %v5679 = vunpack.c.l.b16 %v5551
        %v5680 = vunpack.c.l.b16 %v5552
        %v5681 = vunpack.c.l.b16 %v5553
        %v5682 = vunpack.c.l.b16 %v5554
        %v5683 = vunpack.c.l.b16 %v5555
        %v5684 = vunpack.c.l.b16 %v5556
        %v5685 = vunpack.c.l.b16 %v5557
        %v5686 = vunpack.c.l.b16 %v5558
        %v5687 = vunpack.c.l.b16 %v5559
        %v5688 = vunpack.c.l.b16 %v5560
        %v5689 = vunpack.c.l.b16 %v5561
        %v5690 = vunpack.c.l.b16 %v5562
        %v5691 = vunpack.c.l.b16 %v5563
        %v5692 = vunpack.c.l.b16 %v5564
        %v5693 = vunpack.c.l.b16 %v5565
        %v5694 = vunpack.c.l.b16 %v5566
        %v5695 = vunpack.c.l.b16 %v5567
        %v5696 = vunpack.c.l.b16 %v5568
        %v5697 = vunpack.c.l.b16 %v5569
        %v5698 = vunpack.c.l.b16 %v5570
        %v5699 = vunpack.c.l.b16 %v5571
        %v5700 = vunpack.c.l.b16 %v5572
        %v5701 = vunpack.c.l.b16 %v5573
        %v5702 = vunpack.c.l.b16 %v5574
        %v5703 = vunpack.c.l.b16 %v5575
        %v5704 = vunpack.c.l.b16 %v5576
        %v5705 = vunpack.c.l.b16 %v5577
        %v5706 = vunpack.c.l.b16 %v5578
        %v5707 = vunpack.c.l.b16 %v5579
        %v5708 = vunpack.c.l.b16 %v5580
        %v5709 = vunpack.c.l.b16 %v5581
        %v5710 = vunpack.c.l.b16 %v5582
        %v5711 = vunpack.c.l.b16 %v5583
        %v5712 = vunpack.c.l.b16 %v5584
        %v5713 = vunpack.c.l.b16 %v5585
        %v5714 = vunpack.c.l.b16 %v5586
        %v5715 = vunpack.c.l.b16 %v5587
        %v5716 = vunpack.c.l.b16 %v5588
        %v5717 = vunpack.c.l.b16 %v5589
        %v5718 = vunpack.c.l.b16 %v5590
        %v5719 = vpack.c.b16 %v5656, %v5655
        %v5720 = vpack.c.b16 %v5658, %v5657
        %v5721 = vpack.c.b16 %v5660, %v5659
        %v5722 = vpack.c.b16 %v5662, %v5661
        %v5723 = vpack.c.b16 %v5664, %v5663
        %v5724 = vpack.c.b16 %v5666, %v5665
        %v5725 = vpack.c.b16 %v5668, %v5667
        %v5726 = vpack.c.b16 %v5670, %v5669
        %v5727 = vpack.c.b16 %v5672, %v5671
        %v5728 = vpack.c.b16 %v5674, %v5673
        %v5729 = vpack.c.b16 %v5676, %v5675
        %v5730 = vpack.c.b16 %v5678, %v5677
        %v5731 = vpack.c.b16 %v5680, %v5679
        %v5732 = vpack.c.b16 %v5682, %v5681
        %v5733 = vpack.c.b16 %v5684, %v5683
        %v5734 = vpack.c.b16 %v5686, %v5685
        %v5735 = vpack.c.b16 %v5688, %v5687
        %v5736 = vpack.c.b16 %v5690, %v5689
        %v5737 = vpack.c.b16 %v5692, %v5691
        %v5738 = vpack.c.b16 %v5694, %v5693
        %v5739 = vpack.c.b16 %v5696, %v5695
        %v5740 = vpack.c.b16 %v5698, %v5697
        %v5741 = vpack.c.b16 %v5700, %v5699
        %v5742 = vpack.c.b16 %v5702, %v5701
        %v5743 = vpack.c.b16 %v5704, %v5703
        %v5744 = vpack.c.b16 %v5706, %v5705
        %v5745 = vpack.c.b16 %v5708, %v5707
        %v5746 = vpack.c.b16 %v5710, %v5709
        %v5747 = vpack.c.b16 %v5712, %v5711
        %v5748 = vpack.c.b16 %v5714, %v5713
        %v5749 = vpack.c.b16 %v5716, %v5715
        %v5750 = vpack.c.b16 %v5718, %v5717
        %5783 = vmatprep.subr.bf16.mxu0 0
        %5784 = vmatpush1.bf16.msra.mxu0 %v5726
        %5785 = vmatprep.subr.bf16.mxu0 0
        %5786 = vmatpush1.bf16.msra.mxu0 %v5725
        %5787 = vmatprep.subr.bf16.mxu0 0
        %5788 = vmatpush1.bf16.msra.mxu0 %v5724
        %5789 = vmatprep.subr.bf16.mxu0 0
        %5790 = vmatpush1.bf16.msra.mxu0 %v5723
        %5791 = vmatprep.subr.bf16.mxu0 0
        %5792 = vmatpush1.bf16.msra.mxu0 %v5722
        %5793 = vmatprep.subr.bf16.mxu0 0
        %5794 = vmatpush1.bf16.msra.mxu0 %v5721
        %5795 = vmatprep.subr.bf16.mxu0 0
        %5796 = vmatpush1.bf16.msra.mxu0 %v5720
        %5797 = vmatprep.subr.bf16.mxu0 0
        %5798 = vmatpush1.bf16.msra.mxu0 %v5719
        %5799 = vmatprep.subr.bf16.mxu0 0
        %5800 = vmatpush2.bf16.msra.mxu0 %v5734
        %5801 = vmatprep.subr.bf16.mxu0 0
        %5802 = vmatpush2.bf16.msra.mxu0 %v5733
        %5803 = vmatprep.subr.bf16.mxu0 0
        %5804 = vmatpush2.bf16.msra.mxu0 %v5732
        %5805 = vmatprep.subr.bf16.mxu0 0
        %5806 = vmatpush2.bf16.msra.mxu0 %v5731
        %5807 = vmatprep.subr.bf16.mxu0 0
        %5808 = vmatpush2.bf16.msra.mxu0 %v5730
        %5809 = vmatprep.subr.bf16.mxu0 0
        %5810 = vmatpush2.bf16.msra.mxu0 %v5729
        %5811 = vmatprep.subr.bf16.mxu0 0
        %5812 = vmatpush2.bf16.msra.mxu0 %v5728
        %5813 = vmatprep.subr.bf16.mxu0 0
        %5814 = vmatpush2.bf16.msra.mxu0 %v5727
        %5815 = vmatprep.mubr.bf16.mxu0 %v5446
        %5816 = vmatmul.mubr.bf16.gmra.mxu0 %v5414
        %v5817 = vpop.f32.mrf.mxu0
        %v5818 = vadd.f32 0.0, %v5817
        %v5819 = vpop.f32.mrf.mxu0
        %v5820 = vpop.f32.mrf.mxu0
        %v5821 = vadd.f32 0.0, %v5820
        %v5822 = vpop.f32.mrf.mxu0
        %5823 = vmatprep.mubr.bf16.mxu0 %v5447
        %5824 = vmatmul.mubr.bf16.gmra.mxu0 %v5415
        %v5825 = vpop.f32.mrf.mxu0
        %v5826 = vadd.f32 0.0, %v5825
        %v5827 = vpop.f32.mrf.mxu0
        %v5828 = vpop.f32.mrf.mxu0
        %v5829 = vadd.f32 0.0, %v5828
        %v5830 = vpop.f32.mrf.mxu0
        %5831 = vmatprep.mubr.bf16.mxu0 %v5448
        %5832 = vmatmul.mubr.bf16.gmra.mxu0 %v5416
        %v5833 = vpop.f32.mrf.mxu0
        %v5834 = vadd.f32 0.0, %v5833
        %v5835 = vpop.f32.mrf.mxu0
        %v5836 = vpop.f32.mrf.mxu0
        %v5837 = vadd.f32 0.0, %v5836
        %v5838 = vpop.f32.mrf.mxu0
        %5839 = vmatprep.mubr.bf16.mxu0 %v5449
        %5840 = vmatmul.mubr.bf16.gmra.mxu0 %v5417
        %v5841 = vpop.f32.mrf.mxu0
        %v5842 = vadd.f32 0.0, %v5841
        %v5843 = vpop.f32.mrf.mxu0
        %v5844 = vpop.f32.mrf.mxu0
        %v5845 = vadd.f32 0.0, %v5844
        %v5846 = vpop.f32.mrf.mxu0
        %5847 = vmatprep.mubr.bf16.mxu0 %v5450
        %5848 = vmatmul.mubr.bf16.gmra.mxu0 %v5418
        %v5849 = vpop.f32.mrf.mxu0
        %v5850 = vadd.f32 0.0, %v5849
        %v5851 = vpop.f32.mrf.mxu0
        %v5852 = vpop.f32.mrf.mxu0
        %v5853 = vadd.f32 0.0, %v5852
        %v5854 = vpop.f32.mrf.mxu0
        %5855 = vmatprep.mubr.bf16.mxu0 %v5451
        %5856 = vmatmul.mubr.bf16.gmra.mxu0 %v5419
        %v5857 = vpop.f32.mrf.mxu0
        %v5858 = vadd.f32 0.0, %v5857
        %v5859 = vpop.f32.mrf.mxu0
        %v5860 = vpop.f32.mrf.mxu0
        %v5861 = vadd.f32 0.0, %v5860
        %v5862 = vpop.f32.mrf.mxu0
        %5863 = vmatprep.mubr.bf16.mxu0 %v5452
        %5864 = vmatmul.mubr.bf16.gmra.mxu0 %v5420
        %v5865 = vpop.f32.mrf.mxu0
        %v5866 = vadd.f32 0.0, %v5865
        %v5867 = vpop.f32.mrf.mxu0
        %v5868 = vpop.f32.mrf.mxu0
        %v5869 = vadd.f32 0.0, %v5868
        %v5870 = vpop.f32.mrf.mxu0
        %5871 = vmatprep.mubr.bf16.mxu0 %v5453
        %5872 = vmatmul.mubr.bf16.gmra.mxu0 %v5421
        %v5873 = vpop.f32.mrf.mxu0
        %v5874 = vadd.f32 0.0, %v5873
        %v5875 = vpop.f32.mrf.mxu0
        %v5876 = vpop.f32.mrf.mxu0
        %v5877 = vadd.f32 0.0, %v5876
        %v5878 = vpop.f32.mrf.mxu0
        %5879 = vdwg.mxu0
        %5880 = vmatprep.subr.bf16.mxu0 0
        %5881 = vmatpush1.bf16.msra.mxu0 %v5742
        %5882 = vmatprep.subr.bf16.mxu0 0
        %5883 = vmatpush1.bf16.msra.mxu0 %v5741
        %5884 = vmatprep.subr.bf16.mxu0 0
        %5885 = vmatpush1.bf16.msra.mxu0 %v5740
        %5886 = vmatprep.subr.bf16.mxu0 0
        %5887 = vmatpush1.bf16.msra.mxu0 %v5739
        %5888 = vmatprep.subr.bf16.mxu0 0
        %5889 = vmatpush1.bf16.msra.mxu0 %v5738
        %5890 = vmatprep.subr.bf16.mxu0 0
        %5891 = vmatpush1.bf16.msra.mxu0 %v5737
        %5892 = vmatprep.subr.bf16.mxu0 0
        %5893 = vmatpush1.bf16.msra.mxu0 %v5736
        %5894 = vmatprep.subr.bf16.mxu0 0
        %5895 = vmatpush1.bf16.msra.mxu0 %v5735
        %5896 = vmatprep.subr.bf16.mxu0 0
        %5897 = vmatpush2.bf16.msra.mxu0 %v5750
        %5898 = vmatprep.subr.bf16.mxu0 0
        %5899 = vmatpush2.bf16.msra.mxu0 %v5749
        %5900 = vmatprep.subr.bf16.mxu0 0
        %5901 = vmatpush2.bf16.msra.mxu0 %v5748
        %5902 = vmatprep.subr.bf16.mxu0 0
        %5903 = vmatpush2.bf16.msra.mxu0 %v5747
        %5904 = vmatprep.subr.bf16.mxu0 0
        %5905 = vmatpush2.bf16.msra.mxu0 %v5746
        %5906 = vmatprep.subr.bf16.mxu0 0
        %5907 = vmatpush2.bf16.msra.mxu0 %v5745
        %5908 = vmatprep.subr.bf16.mxu0 0
        %5909 = vmatpush2.bf16.msra.mxu0 %v5744
        %5910 = vmatprep.subr.bf16.mxu0 0
        %5911 = vmatpush2.bf16.msra.mxu0 %v5743
        %5912 = vmatprep.mubr.bf16.mxu0 %v5510
        %5913 = vmatmul.mubr.bf16.gmra.mxu0 %v5478
        %v5914 = vpop.f32.mrf.mxu0
        %v5915 = vadd.f32 %v5818, %v5914
        %v5916 = vpop.f32.mrf.mxu0
        %v5917 = vpop.f32.mrf.mxu0
        %v5918 = vadd.f32 %v5821, %v5917
        %v5919 = vpop.f32.mrf.mxu0
        %5920 = vmatprep.mubr.bf16.mxu0 %v5511
        %5921 = vmatmul.mubr.bf16.gmra.mxu0 %v5479
        %v5922 = vpop.f32.mrf.mxu0
        %v5923 = vadd.f32 %v5826, %v5922
        %v5924 = vpop.f32.mrf.mxu0
        %v5925 = vpop.f32.mrf.mxu0
        %v5926 = vadd.f32 %v5829, %v5925
        %v5927 = vpop.f32.mrf.mxu0
        %5928 = vmatprep.mubr.bf16.mxu0 %v5512
        %5929 = vmatmul.mubr.bf16.gmra.mxu0 %v5480
        %v5930 = vpop.f32.mrf.mxu0
        %v5931 = vadd.f32 %v5834, %v5930
        %v5932 = vpop.f32.mrf.mxu0
        %v5933 = vpop.f32.mrf.mxu0
        %v5934 = vadd.f32 %v5837, %v5933
        %v5935 = vpop.f32.mrf.mxu0
        %5936 = vmatprep.mubr.bf16.mxu0 %v5513
        %5937 = vmatmul.mubr.bf16.gmra.mxu0 %v5481
        %v5938 = vpop.f32.mrf.mxu0
        %v5939 = vadd.f32 %v5842, %v5938
        %v5940 = vpop.f32.mrf.mxu0
        %v5941 = vpop.f32.mrf.mxu0
        %v5942 = vadd.f32 %v5845, %v5941
        %v5943 = vpop.f32.mrf.mxu0
        %5944 = vmatprep.mubr.bf16.mxu0 %v5514
        %5945 = vmatmul.mubr.bf16.gmra.mxu0 %v5482
        %v5946 = vpop.f32.mrf.mxu0
        %v5947 = vadd.f32 %v5850, %v5946
        %v5948 = vpop.f32.mrf.mxu0
        %v5949 = vpop.f32.mrf.mxu0
        %v5950 = vadd.f32 %v5853, %v5949
        %v5951 = vpop.f32.mrf.mxu0
        %5952 = vmatprep.mubr.bf16.mxu0 %v5515
        %5953 = vmatmul.mubr.bf16.gmra.mxu0 %v5483
        %v5954 = vpop.f32.mrf.mxu0
        %v5955 = vadd.f32 %v5858, %v5954
        %v5956 = vpop.f32.mrf.mxu0
        %v5957 = vpop.f32.mrf.mxu0
        %v5958 = vadd.f32 %v5861, %v5957
        %v5959 = vpop.f32.mrf.mxu0
        %5960 = vmatprep.mubr.bf16.mxu0 %v5516
        %5961 = vmatmul.mubr.bf16.gmra.mxu0 %v5484
        %v5962 = vpop.f32.mrf.mxu0
        %v5963 = vadd.f32 %v5866, %v5962
        %v5964 = vpop.f32.mrf.mxu0
        %v5965 = vpop.f32.mrf.mxu0
        %v5966 = vadd.f32 %v5869, %v5965
        %v5967 = vpop.f32.mrf.mxu0
        %5968 = vmatprep.mubr.bf16.mxu0 %v5517
        %5969 = vmatmul.mubr.bf16.gmra.mxu0 %v5485
        %v5970 = vpop.f32.mrf.mxu0
        %v5971 = vadd.f32 %v5874, %v5970
        %v5972 = vpop.f32.mrf.mxu0
        %v5973 = vpop.f32.mrf.mxu0
        %v5974 = vadd.f32 %v5877, %v5973
        %v5975 = vpop.f32.mrf.mxu0
        %5976 = vdwg.mxu0
        %v5977 = vadd.f32 %v4598, %v5915
        %v5978 = vadd.f32 %v4599, %v5918
        %v5979 = vadd.f32 %v4600, %v5923
        %v5980 = vadd.f32 %v4601, %v5926
        %v5981 = vadd.f32 %v4602, %v5931
        %v5982 = vadd.f32 %v4603, %v5934
        %v5983 = vadd.f32 %v4604, %v5939
        %v5984 = vadd.f32 %v4605, %v5942
        %v5985 = vadd.f32 %v4606, %v5947
        %v5986 = vadd.f32 %v4607, %v5950
        %v5987 = vadd.f32 %v4608, %v5955
        %v5988 = vadd.f32 %v4609, %v5958
        %v5989 = vadd.f32 %v4610, %v5963
        %v5990 = vadd.f32 %v4611, %v5966
        %v5991 = vadd.f32 %v4612, %v5971
        %v5992 = vadd.f32 %v4613, %v5974
        %v5993 = vld [vmem:[%s665 + $0x8] sm:$0xf]
        %v5994 = vld [vmem:[%s665 + $0xc] sm:$0xf]
        %v5995 = vld [vmem:[%s665 + $0x10] sm:$0x1]
        %v5996 = vld [vmem:[%s665 + $0x20] sm:$0xf]
        %v5997 = vld [vmem:[%s665 + $0x24] sm:$0xf]
        %v5998 = vld [vmem:[%s665 + $0x28] sm:$0x1]
        %v5999 = vld [vmem:[%s665 + $0x38] sm:$0xf]
        %v6000 = vld [vmem:[%s665 + $0x3c] sm:$0xf]
        %v6001 = vld [vmem:[%s665 + $0x40] sm:$0x1]
        %v6002 = vld [vmem:[%s665 + $0x50] sm:$0xf]
        %v6003 = vld [vmem:[%s665 + $0x54] sm:$0xf]
        %v6004 = vld [vmem:[%s665 + $0x58] sm:$0x1]
        %v6005 = vld [vmem:[%s665 + $0x68] sm:$0xf]
        %v6006 = vld [vmem:[%s665 + $0x6c] sm:$0xf]
        %v6007 = vld [vmem:[%s665 + $0x70] sm:$0x1]
        %v6008 = vld [vmem:[%s665 + $0x80] sm:$0xf]
        %v6009 = vld [vmem:[%s665 + $0x84] sm:$0xf]
        %v6010 = vld [vmem:[%s665 + $0x88] sm:$0x1]
        %v6011 = vld [vmem:[%s665 + $0x98] sm:$0xf]
        %v6012 = vld [vmem:[%s665 + $0x9c] sm:$0xf]
        %v6013 = vld [vmem:[%s665 + $0xa0] sm:$0x1]
        %v6014 = vld [vmem:[%s665 + $0xb0] sm:$0xf]
        %v6015 = vld [vmem:[%s665 + $0xb4] sm:$0xf]
        %v6016 = vld [vmem:[%s665 + $0xb8] sm:$0x1]
        %v6018 = vshrl.u32 %v5993, 16
        %v6020 = vrot.slane %v6018, 4
        %v6021 = vshll.u32 %v5993, 16
        %v6023 = vrot.slane %v6021, 5
        %v6024 = vor.u32 %v6020, %v6023
        %v6025 = vrot.slane %v6024, 4
        %v6027 = vshll.u32 %v5994, 16
        %v6029 = vrot.slane %v6027, 5
        %v6030 = vsel %vm3111, %v6025, %v6029
        %v6031 = vshrl.u32 %v5994, 16
        %v6033 = vrot.slane %v6031, 4
        %v6034 = vor.u32 %v6033, %v6029
        %v6035 = vrot.slane %v6034, 4
        %v6037 = vshll.u32 %v5995, 16
        %v6039 = vrot.slane %v6037, 5
        %v6040 = vsel %vm3111, %v6035, %v6039
        %v6042 = vshrl.u32 %v5996, 16
        %v6044 = vrot.slane %v6042, 4
        %v6045 = vshll.u32 %v5996, 16
        %v6047 = vrot.slane %v6045, 5
        %v6048 = vor.u32 %v6044, %v6047
        %v6049 = vrot.slane %v6048, 4
        %v6051 = vshll.u32 %v5997, 16
        %v6053 = vrot.slane %v6051, 5
        %v6054 = vsel %vm3111, %v6049, %v6053
        %v6055 = vshrl.u32 %v5997, 16
        %v6057 = vrot.slane %v6055, 4
        %v6058 = vor.u32 %v6057, %v6053
        %v6059 = vrot.slane %v6058, 4
        %v6061 = vshll.u32 %v5998, 16
        %v6063 = vrot.slane %v6061, 5
        %v6064 = vsel %vm3111, %v6059, %v6063
        %v6066 = vshrl.u32 %v5999, 16
        %v6068 = vrot.slane %v6066, 4
        %v6069 = vshll.u32 %v5999, 16
        %v6071 = vrot.slane %v6069, 5
        %v6072 = vor.u32 %v6068, %v6071
        %v6073 = vrot.slane %v6072, 4
        %v6075 = vshll.u32 %v6000, 16
        %v6077 = vrot.slane %v6075, 5
        %v6078 = vsel %vm3111, %v6073, %v6077
        %v6079 = vshrl.u32 %v6000, 16
        %v6081 = vrot.slane %v6079, 4
        %v6082 = vor.u32 %v6081, %v6077
        %v6083 = vrot.slane %v6082, 4
        %v6085 = vshll.u32 %v6001, 16
        %v6087 = vrot.slane %v6085, 5
        %v6088 = vsel %vm3111, %v6083, %v6087
        %v6090 = vshrl.u32 %v6002, 16
        %v6092 = vrot.slane %v6090, 4
        %v6093 = vshll.u32 %v6002, 16
        %v6095 = vrot.slane %v6093, 5
        %v6096 = vor.u32 %v6092, %v6095
        %v6097 = vrot.slane %v6096, 4
        %v6099 = vshll.u32 %v6003, 16
        %v6101 = vrot.slane %v6099, 5
        %v6102 = vsel %vm3111, %v6097, %v6101
        %v6103 = vshrl.u32 %v6003, 16
        %v6105 = vrot.slane %v6103, 4
        %v6106 = vor.u32 %v6105, %v6101
        %v6107 = vrot.slane %v6106, 4
        %v6109 = vshll.u32 %v6004, 16
        %v6111 = vrot.slane %v6109, 5
        %v6112 = vsel %vm3111, %v6107, %v6111
        %v6114 = vshrl.u32 %v6005, 16
        %v6116 = vrot.slane %v6114, 4
        %v6117 = vshll.u32 %v6005, 16
        %v6119 = vrot.slane %v6117, 5
        %v6120 = vor.u32 %v6116, %v6119
        %v6121 = vrot.slane %v6120, 4
        %v6123 = vshll.u32 %v6006, 16
        %v6125 = vrot.slane %v6123, 5
        %v6126 = vsel %vm3111, %v6121, %v6125
        %v6127 = vshrl.u32 %v6006, 16
        %v6129 = vrot.slane %v6127, 4
        %v6130 = vor.u32 %v6129, %v6125
        %v6131 = vrot.slane %v6130, 4
        %v6133 = vshll.u32 %v6007, 16
        %v6135 = vrot.slane %v6133, 5
        %v6136 = vsel %vm3111, %v6131, %v6135
        %v6138 = vshrl.u32 %v6008, 16
        %v6140 = vrot.slane %v6138, 4
        %v6141 = vshll.u32 %v6008, 16
        %v6143 = vrot.slane %v6141, 5
        %v6144 = vor.u32 %v6140, %v6143
        %v6145 = vrot.slane %v6144, 4
        %v6147 = vshll.u32 %v6009, 16
        %v6149 = vrot.slane %v6147, 5
        %v6150 = vsel %vm3111, %v6145, %v6149
        %v6151 = vshrl.u32 %v6009, 16
        %v6153 = vrot.slane %v6151, 4
        %v6154 = vor.u32 %v6153, %v6149
        %v6155 = vrot.slane %v6154, 4
        %v6157 = vshll.u32 %v6010, 16
        %v6159 = vrot.slane %v6157, 5
        %v6160 = vsel %vm3111, %v6155, %v6159
        %v6162 = vshrl.u32 %v6011, 16
        %v6164 = vrot.slane %v6162, 4
        %v6165 = vshll.u32 %v6011, 16
        %v6167 = vrot.slane %v6165, 5
        %v6168 = vor.u32 %v6164, %v6167
        %v6169 = vrot.slane %v6168, 4
        %v6171 = vshll.u32 %v6012, 16
        %v6173 = vrot.slane %v6171, 5
        %v6174 = vsel %vm3111, %v6169, %v6173
        %v6175 = vshrl.u32 %v6012, 16
        %v6177 = vrot.slane %v6175, 4
        %v6178 = vor.u32 %v6177, %v6173
        %v6179 = vrot.slane %v6178, 4
        %v6181 = vshll.u32 %v6013, 16
        %v6183 = vrot.slane %v6181, 5
        %v6184 = vsel %vm3111, %v6179, %v6183
        %v6186 = vshrl.u32 %v6014, 16
        %v6188 = vrot.slane %v6186, 4
        %v6189 = vshll.u32 %v6014, 16
        %v6191 = vrot.slane %v6189, 5
        %v6192 = vor.u32 %v6188, %v6191
        %v6193 = vrot.slane %v6192, 4
        %v6195 = vshll.u32 %v6015, 16
        %v6197 = vrot.slane %v6195, 5
        %v6198 = vsel %vm3111, %v6193, %v6197
        %v6199 = vshrl.u32 %v6015, 16
        %v6201 = vrot.slane %v6199, 4
        %v6202 = vor.u32 %v6201, %v6197
        %v6203 = vrot.slane %v6202, 4
        %v6205 = vshll.u32 %v6016, 16
        %v6207 = vrot.slane %v6205, 5
        %v6208 = vsel %vm3111, %v6203, %v6207
        %v6209 = vld [vmem:[%s665 + $0x8] sm:$0xc]
        %v6210 = vld [vmem:[%s665 + $0x10] sm:$0x7]
        %v6211 = vld [vmem:[%s665 + $0x20] sm:$0xc]
        %v6212 = vld [vmem:[%s665 + $0x28] sm:$0x7]
        %v6213 = vld [vmem:[%s665 + $0x38] sm:$0xc]
        %v6214 = vld [vmem:[%s665 + $0x40] sm:$0x7]
        %v6215 = vld [vmem:[%s665 + $0x50] sm:$0xc]
        %v6216 = vld [vmem:[%s665 + $0x58] sm:$0x7]
        %v6217 = vld [vmem:[%s665 + $0x68] sm:$0xc]
        %v6218 = vld [vmem:[%s665 + $0x70] sm:$0x7]
        %v6219 = vld [vmem:[%s665 + $0x80] sm:$0xc]
        %v6220 = vld [vmem:[%s665 + $0x88] sm:$0x7]
        %v6221 = vld [vmem:[%s665 + $0x98] sm:$0xc]
        %v6222 = vld [vmem:[%s665 + $0xa0] sm:$0x7]
        %v6223 = vld [vmem:[%s665 + $0xb0] sm:$0xc]
        %v6224 = vld [vmem:[%s665 + $0xb8] sm:$0x7]
        %v6226 = vshrl.u32 %v6209, 16
        %v6228 = vrot.slane %v6226, 6
        %v6229 = vshll.u32 %v6209, 16
        %v6231 = vrot.slane %v6229, 7
        %v6232 = vor.u32 %v6228, %v6231
        %v6233 = vrot.slane %v6232, 4
        %v6234 = vrot.slane %v6031, 6
        %v6235 = vrot.slane %v6027, 7
        %v6236 = vor.u32 %v6234, %v6235
        %v6237 = vsel %vm3330, %v6233, %v6236
        %v6238 = vrot.slane %v6236, 4
        %v6240 = vshrl.u32 %v6210, 16
        %v6242 = vrot.slane %v6240, 6
        %v6243 = vshll.u32 %v6210, 16
        %v6245 = vrot.slane %v6243, 7
        %v6246 = vor.u32 %v6242, %v6245
        %v6247 = vsel %vm3330, %v6238, %v6246
        %v6249 = vshrl.u32 %v6211, 16
        %v6251 = vrot.slane %v6249, 6
        %v6252 = vshll.u32 %v6211, 16
        %v6254 = vrot.slane %v6252, 7
        %v6255 = vor.u32 %v6251, %v6254
        %v6256 = vrot.slane %v6255, 4
        %v6257 = vrot.slane %v6055, 6
        %v6258 = vrot.slane %v6051, 7
        %v6259 = vor.u32 %v6257, %v6258
        %v6260 = vsel %vm3330, %v6256, %v6259
        %v6261 = vrot.slane %v6259, 4
        %v6263 = vshrl.u32 %v6212, 16
        %v6265 = vrot.slane %v6263, 6
        %v6266 = vshll.u32 %v6212, 16
        %v6268 = vrot.slane %v6266, 7
        %v6269 = vor.u32 %v6265, %v6268
        %v6270 = vsel %vm3330, %v6261, %v6269
        %v6272 = vshrl.u32 %v6213, 16
        %v6274 = vrot.slane %v6272, 6
        %v6275 = vshll.u32 %v6213, 16
        %v6277 = vrot.slane %v6275, 7
        %v6278 = vor.u32 %v6274, %v6277
        %v6279 = vrot.slane %v6278, 4
        %v6280 = vrot.slane %v6079, 6
        %v6281 = vrot.slane %v6075, 7
        %v6282 = vor.u32 %v6280, %v6281
        %v6283 = vsel %vm3330, %v6279, %v6282
        %v6284 = vrot.slane %v6282, 4
        %v6286 = vshrl.u32 %v6214, 16
        %v6288 = vrot.slane %v6286, 6
        %v6289 = vshll.u32 %v6214, 16
        %v6291 = vrot.slane %v6289, 7
        %v6292 = vor.u32 %v6288, %v6291
        %v6293 = vsel %vm3330, %v6284, %v6292
        %v6295 = vshrl.u32 %v6215, 16
        %v6297 = vrot.slane %v6295, 6
        %v6298 = vshll.u32 %v6215, 16
        %v6300 = vrot.slane %v6298, 7
        %v6301 = vor.u32 %v6297, %v6300
        %v6302 = vrot.slane %v6301, 4
        %v6303 = vrot.slane %v6103, 6
        %v6304 = vrot.slane %v6099, 7
        %v6305 = vor.u32 %v6303, %v6304
        %v6306 = vsel %vm3330, %v6302, %v6305
        %v6307 = vrot.slane %v6305, 4
        %v6309 = vshrl.u32 %v6216, 16
        %v6311 = vrot.slane %v6309, 6
        %v6312 = vshll.u32 %v6216, 16
        %v6314 = vrot.slane %v6312, 7
        %v6315 = vor.u32 %v6311, %v6314
        %v6316 = vsel %vm3330, %v6307, %v6315
        %v6318 = vshrl.u32 %v6217, 16
        %v6320 = vrot.slane %v6318, 6
        %v6321 = vshll.u32 %v6217, 16
        %v6323 = vrot.slane %v6321, 7
        %v6324 = vor.u32 %v6320, %v6323
        %v6325 = vrot.slane %v6324, 4
        %v6326 = vrot.slane %v6127, 6
        %v6327 = vrot.slane %v6123, 7
        %v6328 = vor.u32 %v6326, %v6327
        %v6329 = vsel %vm3330, %v6325, %v6328
        %v6330 = vrot.slane %v6328, 4
        %v6332 = vshrl.u32 %v6218, 16
        %v6334 = vrot.slane %v6332, 6
        %v6335 = vshll.u32 %v6218, 16
        %v6337 = vrot.slane %v6335, 7
        %v6338 = vor.u32 %v6334, %v6337
        %v6339 = vsel %vm3330, %v6330, %v6338
        %v6341 = vshrl.u32 %v6219, 16
        %v6343 = vrot.slane %v6341, 6
        %v6344 = vshll.u32 %v6219, 16
        %v6346 = vrot.slane %v6344, 7
        %v6347 = vor.u32 %v6343, %v6346
        %v6348 = vrot.slane %v6347, 4
        %v6349 = vrot.slane %v6151, 6
        %v6350 = vrot.slane %v6147, 7
        %v6351 = vor.u32 %v6349, %v6350
        %v6352 = vsel %vm3330, %v6348, %v6351
        %v6353 = vrot.slane %v6351, 4
        %v6355 = vshrl.u32 %v6220, 16
        %v6357 = vrot.slane %v6355, 6
        %v6358 = vshll.u32 %v6220, 16
        %v6360 = vrot.slane %v6358, 7
        %v6361 = vor.u32 %v6357, %v6360
        %v6362 = vsel %vm3330, %v6353, %v6361
        %v6364 = vshrl.u32 %v6221, 16
        %v6366 = vrot.slane %v6364, 6
        %v6367 = vshll.u32 %v6221, 16
        %v6369 = vrot.slane %v6367, 7
        %v6370 = vor.u32 %v6366, %v6369
        %v6371 = vrot.slane %v6370, 4
        %v6372 = vrot.slane %v6175, 6
        %v6373 = vrot.slane %v6171, 7
        %v6374 = vor.u32 %v6372, %v6373
        %v6375 = vsel %vm3330, %v6371, %v6374
        %v6376 = vrot.slane %v6374, 4
        %v6378 = vshrl.u32 %v6222, 16
        %v6380 = vrot.slane %v6378, 6
        %v6381 = vshll.u32 %v6222, 16
        %v6383 = vrot.slane %v6381, 7
        %v6384 = vor.u32 %v6380, %v6383
        %v6385 = vsel %vm3330, %v6376, %v6384
        %v6387 = vshrl.u32 %v6223, 16
        %v6389 = vrot.slane %v6387, 6
        %v6390 = vshll.u32 %v6223, 16
        %v6392 = vrot.slane %v6390, 7
        %v6393 = vor.u32 %v6389, %v6392
        %v6394 = vrot.slane %v6393, 4
        %v6395 = vrot.slane %v6199, 6
        %v6396 = vrot.slane %v6195, 7
        %v6397 = vor.u32 %v6395, %v6396
        %v6398 = vsel %vm3330, %v6394, %v6397
        %v6399 = vrot.slane %v6397, 4
        %v6401 = vshrl.u32 %v6224, 16
        %v6403 = vrot.slane %v6401, 6
        %v6404 = vshll.u32 %v6224, 16
        %v6406 = vrot.slane %v6404, 7
        %v6407 = vor.u32 %v6403, %v6406
        %v6408 = vsel %vm3330, %v6399, %v6407
        %v6409 = vld [vmem:[%s665 + $0x10] sm:$0xf]
        %v6410 = vld [vmem:[%s665 + $0x14] sm:$0x1]
        %v6411 = vld [vmem:[%s665 + $0x28] sm:$0xf]
        %v6412 = vld [vmem:[%s665 + $0x2c] sm:$0x1]
        %v6413 = vld [vmem:[%s665 + $0x40] sm:$0xf]
        %v6414 = vld [vmem:[%s665 + $0x44] sm:$0x1]
        %v6415 = vld [vmem:[%s665 + $0x58] sm:$0xf]
        %v6416 = vld [vmem:[%s665 + $0x5c] sm:$0x1]
        %v6417 = vld [vmem:[%s665 + $0x70] sm:$0xf]
        %v6418 = vld [vmem:[%s665 + $0x74] sm:$0x1]
        %v6419 = vld [vmem:[%s665 + $0x88] sm:$0xf]
        %v6420 = vld [vmem:[%s665 + $0x8c] sm:$0x1]
        %v6421 = vld [vmem:[%s665 + $0xa0] sm:$0xf]
        %v6422 = vld [vmem:[%s665 + $0xa4] sm:$0x1]
        %v6423 = vld [vmem:[%s665 + $0xb8] sm:$0xf]
        %v6424 = vld [vmem:[%s665 + $0xbc] sm:$0x1]
        %v6426 = vshll.u32 %v6409, 16
        %v6428 = vrot.slane %v6426, 5
        %v6429 = vsel %vm3111, %v6035, %v6428
        %v6430 = vshrl.u32 %v6409, 16
        %v6432 = vrot.slane %v6430, 4
        %v6433 = vor.u32 %v6432, %v6428
        %v6434 = vrot.slane %v6433, 4
        %v6436 = vshll.u32 %v6410, 16
        %v6438 = vrot.slane %v6436, 5
        %v6439 = vsel %vm3111, %v6434, %v6438
        %v6441 = vshll.u32 %v6411, 16
        %v6443 = vrot.slane %v6441, 5
        %v6444 = vsel %vm3111, %v6059, %v6443
        %v6445 = vshrl.u32 %v6411, 16
        %v6447 = vrot.slane %v6445, 4
        %v6448 = vor.u32 %v6447, %v6443
        %v6449 = vrot.slane %v6448, 4
        %v6451 = vshll.u32 %v6412, 16
        %v6453 = vrot.slane %v6451, 5
        %v6454 = vsel %vm3111, %v6449, %v6453
        %v6456 = vshll.u32 %v6413, 16
        %v6458 = vrot.slane %v6456, 5
        %v6459 = vsel %vm3111, %v6083, %v6458
        %v6460 = vshrl.u32 %v6413, 16
        %v6462 = vrot.slane %v6460, 4
        %v6463 = vor.u32 %v6462, %v6458
        %v6464 = vrot.slane %v6463, 4
        %v6466 = vshll.u32 %v6414, 16
        %v6468 = vrot.slane %v6466, 5
        %v6469 = vsel %vm3111, %v6464, %v6468
        %v6471 = vshll.u32 %v6415, 16
        %v6473 = vrot.slane %v6471, 5
        %v6474 = vsel %vm3111, %v6107, %v6473
        %v6475 = vshrl.u32 %v6415, 16
        %v6477 = vrot.slane %v6475, 4
        %v6478 = vor.u32 %v6477, %v6473
        %v6479 = vrot.slane %v6478, 4
        %v6481 = vshll.u32 %v6416, 16
        %v6483 = vrot.slane %v6481, 5
        %v6484 = vsel %vm3111, %v6479, %v6483
        %v6486 = vshll.u32 %v6417, 16
        %v6488 = vrot.slane %v6486, 5
        %v6489 = vsel %vm3111, %v6131, %v6488
        %v6490 = vshrl.u32 %v6417, 16
        %v6492 = vrot.slane %v6490, 4
        %v6493 = vor.u32 %v6492, %v6488
        %v6494 = vrot.slane %v6493, 4
        %v6496 = vshll.u32 %v6418, 16
        %v6498 = vrot.slane %v6496, 5
        %v6499 = vsel %vm3111, %v6494, %v6498
        %v6501 = vshll.u32 %v6419, 16
        %v6503 = vrot.slane %v6501, 5
        %v6504 = vsel %vm3111, %v6155, %v6503
        %v6505 = vshrl.u32 %v6419, 16
        %v6507 = vrot.slane %v6505, 4
        %v6508 = vor.u32 %v6507, %v6503
        %v6509 = vrot.slane %v6508, 4
        %v6511 = vshll.u32 %v6420, 16
        %v6513 = vrot.slane %v6511, 5
        %v6514 = vsel %vm3111, %v6509, %v6513
        %v6516 = vshll.u32 %v6421, 16
        %v6518 = vrot.slane %v6516, 5
        %v6519 = vsel %vm3111, %v6179, %v6518
        %v6520 = vshrl.u32 %v6421, 16
        %v6522 = vrot.slane %v6520, 4
        %v6523 = vor.u32 %v6522, %v6518
        %v6524 = vrot.slane %v6523, 4
        %v6526 = vshll.u32 %v6422, 16
        %v6528 = vrot.slane %v6526, 5
        %v6529 = vsel %vm3111, %v6524, %v6528
        %v6531 = vshll.u32 %v6423, 16
        %v6533 = vrot.slane %v6531, 5
        %v6534 = vsel %vm3111, %v6203, %v6533
        %v6535 = vshrl.u32 %v6423, 16
        %v6537 = vrot.slane %v6535, 4
        %v6538 = vor.u32 %v6537, %v6533
        %v6539 = vrot.slane %v6538, 4
        %v6541 = vshll.u32 %v6424, 16
        %v6543 = vrot.slane %v6541, 5
        %v6544 = vsel %vm3111, %v6539, %v6543
        %v6545 = vld [vmem:[%s665 + $0xc] sm:$0xc]
        %v6546 = vld [vmem:[%s665 + $0x14] sm:$0x7]
        %v6547 = vld [vmem:[%s665 + $0x24] sm:$0xc]
        %v6548 = vld [vmem:[%s665 + $0x2c] sm:$0x7]
        %v6549 = vld [vmem:[%s665 + $0x3c] sm:$0xc]
        %v6550 = vld [vmem:[%s665 + $0x44] sm:$0x7]
        %v6551 = vld [vmem:[%s665 + $0x54] sm:$0xc]
        %v6552 = vld [vmem:[%s665 + $0x5c] sm:$0x7]
        %v6553 = vld [vmem:[%s665 + $0x6c] sm:$0xc]
        %v6554 = vld [vmem:[%s665 + $0x74] sm:$0x7]
        %v6555 = vld [vmem:[%s665 + $0x84] sm:$0xc]
        %v6556 = vld [vmem:[%s665 + $0x8c] sm:$0x7]
        %v6557 = vld [vmem:[%s665 + $0x9c] sm:$0xc]
        %v6558 = vld [vmem:[%s665 + $0xa4] sm:$0x7]
        %v6559 = vld [vmem:[%s665 + $0xb4] sm:$0xc]
        %v6560 = vld [vmem:[%s665 + $0xbc] sm:$0x7]
        %v6562 = vshrl.u32 %v6545, 16
        %v6564 = vrot.slane %v6562, 6
        %v6565 = vshll.u32 %v6545, 16
        %v6567 = vrot.slane %v6565, 7
        %v6568 = vor.u32 %v6564, %v6567
        %v6569 = vrot.slane %v6568, 4
        %v6570 = vrot.slane %v6430, 6
        %v6571 = vrot.slane %v6426, 7
        %v6572 = vor.u32 %v6570, %v6571
        %v6573 = vsel %vm3330, %v6569, %v6572
        %v6574 = vrot.slane %v6572, 4
        %v6576 = vshrl.u32 %v6546, 16
        %v6578 = vrot.slane %v6576, 6
        %v6579 = vshll.u32 %v6546, 16
        %v6581 = vrot.slane %v6579, 7
        %v6582 = vor.u32 %v6578, %v6581
        %v6583 = vsel %vm3330, %v6574, %v6582
        %v6585 = vshrl.u32 %v6547, 16
        %v6587 = vrot.slane %v6585, 6
        %v6588 = vshll.u32 %v6547, 16
        %v6590 = vrot.slane %v6588, 7
        %v6591 = vor.u32 %v6587, %v6590
        %v6592 = vrot.slane %v6591, 4
        %v6593 = vrot.slane %v6445, 6
        %v6594 = vrot.slane %v6441, 7
        %v6595 = vor.u32 %v6593, %v6594
        %v6596 = vsel %vm3330, %v6592, %v6595
        %v6597 = vrot.slane %v6595, 4
        %v6599 = vshrl.u32 %v6548, 16
        %v6601 = vrot.slane %v6599, 6
        %v6602 = vshll.u32 %v6548, 16
        %v6604 = vrot.slane %v6602, 7
        %v6605 = vor.u32 %v6601, %v6604
        %v6606 = vsel %vm3330, %v6597, %v6605
        %v6608 = vshrl.u32 %v6549, 16
        %v6610 = vrot.slane %v6608, 6
        %v6611 = vshll.u32 %v6549, 16
        %v6613 = vrot.slane %v6611, 7
        %v6614 = vor.u32 %v6610, %v6613
        %v6615 = vrot.slane %v6614, 4
        %v6616 = vrot.slane %v6460, 6
        %v6617 = vrot.slane %v6456, 7
        %v6618 = vor.u32 %v6616, %v6617
        %v6619 = vsel %vm3330, %v6615, %v6618
        %v6620 = vrot.slane %v6618, 4
        %v6622 = vshrl.u32 %v6550, 16
        %v6624 = vrot.slane %v6622, 6
        %v6625 = vshll.u32 %v6550, 16
        %v6627 = vrot.slane %v6625, 7
        %v6628 = vor.u32 %v6624, %v6627
        %v6629 = vsel %vm3330, %v6620, %v6628
        %v6631 = vshrl.u32 %v6551, 16
        %v6633 = vrot.slane %v6631, 6
        %v6634 = vshll.u32 %v6551, 16
        %v6636 = vrot.slane %v6634, 7
        %v6637 = vor.u32 %v6633, %v6636
        %v6638 = vrot.slane %v6637, 4
        %v6639 = vrot.slane %v6475, 6
        %v6640 = vrot.slane %v6471, 7
        %v6641 = vor.u32 %v6639, %v6640
        %v6642 = vsel %vm3330, %v6638, %v6641
        %v6643 = vrot.slane %v6641, 4
        %v6645 = vshrl.u32 %v6552, 16
        %v6647 = vrot.slane %v6645, 6
        %v6648 = vshll.u32 %v6552, 16
        %v6650 = vrot.slane %v6648, 7
        %v6651 = vor.u32 %v6647, %v6650
        %v6652 = vsel %vm3330, %v6643, %v6651
        %v6654 = vshrl.u32 %v6553, 16
        %v6656 = vrot.slane %v6654, 6
        %v6657 = vshll.u32 %v6553, 16
        %v6659 = vrot.slane %v6657, 7
        %v6660 = vor.u32 %v6656, %v6659
        %v6661 = vrot.slane %v6660, 4
        %v6662 = vrot.slane %v6490, 6
        %v6663 = vrot.slane %v6486, 7
        %v6664 = vor.u32 %v6662, %v6663
        %v6665 = vsel %vm3330, %v6661, %v6664
        %v6666 = vrot.slane %v6664, 4
        %v6668 = vshrl.u32 %v6554, 16
        %v6670 = vrot.slane %v6668, 6
        %v6671 = vshll.u32 %v6554, 16
        %v6673 = vrot.slane %v6671, 7
        %v6674 = vor.u32 %v6670, %v6673
        %v6675 = vsel %vm3330, %v6666, %v6674
        %v6677 = vshrl.u32 %v6555, 16
        %v6679 = vrot.slane %v6677, 6
        %v6680 = vshll.u32 %v6555, 16
        %v6682 = vrot.slane %v6680, 7
        %v6683 = vor.u32 %v6679, %v6682
        %v6684 = vrot.slane %v6683, 4
        %v6685 = vrot.slane %v6505, 6
        %v6686 = vrot.slane %v6501, 7
        %v6687 = vor.u32 %v6685, %v6686
        %v6688 = vsel %vm3330, %v6684, %v6687
        %v6689 = vrot.slane %v6687, 4
        %v6691 = vshrl.u32 %v6556, 16
        %v6693 = vrot.slane %v6691, 6
        %v6694 = vshll.u32 %v6556, 16
        %v6696 = vrot.slane %v6694, 7
        %v6697 = vor.u32 %v6693, %v6696
        %v6698 = vsel %vm3330, %v6689, %v6697
        %v6700 = vshrl.u32 %v6557, 16
        %v6702 = vrot.slane %v6700, 6
        %v6703 = vshll.u32 %v6557, 16
        %v6705 = vrot.slane %v6703, 7
        %v6706 = vor.u32 %v6702, %v6705
        %v6707 = vrot.slane %v6706, 4
        %v6708 = vrot.slane %v6520, 6
        %v6709 = vrot.slane %v6516, 7
        %v6710 = vor.u32 %v6708, %v6709
        %v6711 = vsel %vm3330, %v6707, %v6710
        %v6712 = vrot.slane %v6710, 4
        %v6714 = vshrl.u32 %v6558, 16
        %v6716 = vrot.slane %v6714, 6
        %v6717 = vshll.u32 %v6558, 16
        %v6719 = vrot.slane %v6717, 7
        %v6720 = vor.u32 %v6716, %v6719
        %v6721 = vsel %vm3330, %v6712, %v6720
        %v6723 = vshrl.u32 %v6559, 16
        %v6725 = vrot.slane %v6723, 6
        %v6726 = vshll.u32 %v6559, 16
        %v6728 = vrot.slane %v6726, 7
        %v6729 = vor.u32 %v6725, %v6728
        %v6730 = vrot.slane %v6729, 4
        %v6731 = vrot.slane %v6535, 6
        %v6732 = vrot.slane %v6531, 7
        %v6733 = vor.u32 %v6731, %v6732
        %v6734 = vsel %vm3330, %v6730, %v6733
        %v6735 = vrot.slane %v6733, 4
        %v6737 = vshrl.u32 %v6560, 16
        %v6739 = vrot.slane %v6737, 6
        %v6740 = vshll.u32 %v6560, 16
        %v6742 = vrot.slane %v6740, 7
        %v6743 = vor.u32 %v6739, %v6742
        %v6744 = vsel %vm3330, %v6735, %v6743
        %v6745 = vunpack.c.l.b16 %v6030
        %v6746 = vunpack.c.l.b16 %v6040
        %v6747 = vunpack.c.l.b16 %v6054
        %v6748 = vunpack.c.l.b16 %v6064
        %v6749 = vunpack.c.l.b16 %v6078
        %v6750 = vunpack.c.l.b16 %v6088
        %v6751 = vunpack.c.l.b16 %v6102
        %v6752 = vunpack.c.l.b16 %v6112
        %v6753 = vunpack.c.l.b16 %v6126
        %v6754 = vunpack.c.l.b16 %v6136
        %v6755 = vunpack.c.l.b16 %v6150
        %v6756 = vunpack.c.l.b16 %v6160
        %v6757 = vunpack.c.l.b16 %v6174
        %v6758 = vunpack.c.l.b16 %v6184
        %v6759 = vunpack.c.l.b16 %v6198
        %v6760 = vunpack.c.l.b16 %v6208
        %v6761 = vpack.c.b16 %v6746, %v6745
        %v6762 = vpack.c.b16 %v6748, %v6747
        %v6763 = vpack.c.b16 %v6750, %v6749
        %v6764 = vpack.c.b16 %v6752, %v6751
        %v6765 = vpack.c.b16 %v6754, %v6753
        %v6766 = vpack.c.b16 %v6756, %v6755
        %v6767 = vpack.c.b16 %v6758, %v6757
        %v6768 = vpack.c.b16 %v6760, %v6759
        %v6777 = vunpack.c.l.b16 %v6237
        %v6778 = vunpack.c.l.b16 %v6247
        %v6779 = vunpack.c.l.b16 %v6260
        %v6780 = vunpack.c.l.b16 %v6270
        %v6781 = vunpack.c.l.b16 %v6283
        %v6782 = vunpack.c.l.b16 %v6293
        %v6783 = vunpack.c.l.b16 %v6306
        %v6784 = vunpack.c.l.b16 %v6316
        %v6785 = vunpack.c.l.b16 %v6329
        %v6786 = vunpack.c.l.b16 %v6339
        %v6787 = vunpack.c.l.b16 %v6352
        %v6788 = vunpack.c.l.b16 %v6362
        %v6789 = vunpack.c.l.b16 %v6375
        %v6790 = vunpack.c.l.b16 %v6385
        %v6791 = vunpack.c.l.b16 %v6398
        %v6792 = vunpack.c.l.b16 %v6408
        %v6793 = vpack.c.b16 %v6778, %v6777
        %v6794 = vpack.c.b16 %v6780, %v6779
        %v6795 = vpack.c.b16 %v6782, %v6781
        %v6796 = vpack.c.b16 %v6784, %v6783
        %v6797 = vpack.c.b16 %v6786, %v6785
        %v6798 = vpack.c.b16 %v6788, %v6787
        %v6799 = vpack.c.b16 %v6790, %v6789
        %v6800 = vpack.c.b16 %v6792, %v6791
        %v6809 = vunpack.c.l.b16 %v6429
        %v6810 = vunpack.c.l.b16 %v6439
        %v6811 = vunpack.c.l.b16 %v6444
        %v6812 = vunpack.c.l.b16 %v6454
        %v6813 = vunpack.c.l.b16 %v6459
        %v6814 = vunpack.c.l.b16 %v6469
        %v6815 = vunpack.c.l.b16 %v6474
        %v6816 = vunpack.c.l.b16 %v6484
        %v6817 = vunpack.c.l.b16 %v6489
        %v6818 = vunpack.c.l.b16 %v6499
        %v6819 = vunpack.c.l.b16 %v6504
        %v6820 = vunpack.c.l.b16 %v6514
        %v6821 = vunpack.c.l.b16 %v6519
        %v6822 = vunpack.c.l.b16 %v6529
        %v6823 = vunpack.c.l.b16 %v6534
        %v6824 = vunpack.c.l.b16 %v6544
        %v6825 = vpack.c.b16 %v6810, %v6809
        %v6826 = vpack.c.b16 %v6812, %v6811
        %v6827 = vpack.c.b16 %v6814, %v6813
        %v6828 = vpack.c.b16 %v6816, %v6815
        %v6829 = vpack.c.b16 %v6818, %v6817
        %v6830 = vpack.c.b16 %v6820, %v6819
        %v6831 = vpack.c.b16 %v6822, %v6821
        %v6832 = vpack.c.b16 %v6824, %v6823
        %v6841 = vunpack.c.l.b16 %v6573
        %v6842 = vunpack.c.l.b16 %v6583
        %v6843 = vunpack.c.l.b16 %v6596
        %v6844 = vunpack.c.l.b16 %v6606
        %v6845 = vunpack.c.l.b16 %v6619
        %v6846 = vunpack.c.l.b16 %v6629
        %v6847 = vunpack.c.l.b16 %v6642
        %v6848 = vunpack.c.l.b16 %v6652
        %v6849 = vunpack.c.l.b16 %v6665
        %v6850 = vunpack.c.l.b16 %v6675
        %v6851 = vunpack.c.l.b16 %v6688
        %v6852 = vunpack.c.l.b16 %v6698
        %v6853 = vunpack.c.l.b16 %v6711
        %v6854 = vunpack.c.l.b16 %v6721
        %v6855 = vunpack.c.l.b16 %v6734
        %v6856 = vunpack.c.l.b16 %v6744
        %v6857 = vpack.c.b16 %v6842, %v6841
        %v6858 = vpack.c.b16 %v6844, %v6843
        %v6859 = vpack.c.b16 %v6846, %v6845
        %v6860 = vpack.c.b16 %v6848, %v6847
        %v6861 = vpack.c.b16 %v6850, %v6849
        %v6862 = vpack.c.b16 %v6852, %v6851
        %v6863 = vpack.c.b16 %v6854, %v6853
        %v6864 = vpack.c.b16 %v6856, %v6855
        %s6873 = scalar_lea.vmem %s3, 1024
        %v6874 = vld [vmem:[%s6873] sm:$0xf]
        %v6875 = vld [vmem:[%s6873 + $0x4] sm:$0xf]
        %v6876 = vld [vmem:[%s6873 + $0x8] sm:$0xf]
        %v6877 = vld [vmem:[%s6873 + $0xc] sm:$0xf]
        %v6878 = vld [vmem:[%s6873 + $0x10] sm:$0xf]
        %v6879 = vld [vmem:[%s6873 + $0x14] sm:$0xf]
        %v6880 = vld [vmem:[%s6873 + $0x18] sm:$0xf]
        %v6881 = vld [vmem:[%s6873 + $0x1c] sm:$0xf]
        %v6882 = vld [vmem:[%s6873 + $0x20] sm:$0xf]
        %v6883 = vld [vmem:[%s6873 + $0x24] sm:$0xf]
        %v6884 = vld [vmem:[%s6873 + $0x28] sm:$0xf]
        %v6885 = vld [vmem:[%s6873 + $0x2c] sm:$0xf]
        %v6886 = vld [vmem:[%s6873 + $0x30] sm:$0xf]
        %v6887 = vld [vmem:[%s6873 + $0x34] sm:$0xf]
        %v6888 = vld [vmem:[%s6873 + $0x38] sm:$0xf]
        %v6889 = vld [vmem:[%s6873 + $0x3c] sm:$0xf]
        %v6890 = vld [vmem:[%s6873 + $0x40] sm:$0xf]
        %v6891 = vld [vmem:[%s6873 + $0x44] sm:$0xf]
        %v6892 = vld [vmem:[%s6873 + $0x48] sm:$0xf]
        %v6893 = vld [vmem:[%s6873 + $0x4c] sm:$0xf]
        %v6894 = vld [vmem:[%s6873 + $0x50] sm:$0xf]
        %v6895 = vld [vmem:[%s6873 + $0x54] sm:$0xf]
        %v6896 = vld [vmem:[%s6873 + $0x58] sm:$0xf]
        %v6897 = vld [vmem:[%s6873 + $0x5c] sm:$0xf]
        %v6898 = vld [vmem:[%s6873 + $0x60] sm:$0xf]
        %v6899 = vld [vmem:[%s6873 + $0x64] sm:$0xf]
        %v6900 = vld [vmem:[%s6873 + $0x68] sm:$0xf]
        %v6901 = vld [vmem:[%s6873 + $0x6c] sm:$0xf]
        %v6902 = vld [vmem:[%s6873 + $0x70] sm:$0xf]
        %v6903 = vld [vmem:[%s6873 + $0x74] sm:$0xf]
        %v6904 = vld [vmem:[%s6873 + $0x78] sm:$0xf]
        %v6905 = vld [vmem:[%s6873 + $0x7c] sm:$0xf]
        %v6906 = vld [vmem:[%s6873 + $0x80] sm:$0xf]
        %v6907 = vld [vmem:[%s6873 + $0x84] sm:$0xf]
        %v6908 = vld [vmem:[%s6873 + $0x88] sm:$0xf]
        %v6909 = vld [vmem:[%s6873 + $0x8c] sm:$0xf]
        %v6910 = vld [vmem:[%s6873 + $0x90] sm:$0xf]
        %v6911 = vld [vmem:[%s6873 + $0x94] sm:$0xf]
        %v6912 = vld [vmem:[%s6873 + $0x98] sm:$0xf]
        %v6913 = vld [vmem:[%s6873 + $0x9c] sm:$0xf]
        %v6914 = vld [vmem:[%s6873 + $0xa0] sm:$0xf]
        %v6915 = vld [vmem:[%s6873 + $0xa4] sm:$0xf]
        %v6916 = vld [vmem:[%s6873 + $0xa8] sm:$0xf]
        %v6917 = vld [vmem:[%s6873 + $0xac] sm:$0xf]
        %v6918 = vld [vmem:[%s6873 + $0xb0] sm:$0xf]
        %v6919 = vld [vmem:[%s6873 + $0xb4] sm:$0xf]
        %v6920 = vld [vmem:[%s6873 + $0xb8] sm:$0xf]
        %v6921 = vld [vmem:[%s6873 + $0xbc] sm:$0xf]
        %v6922 = vld [vmem:[%s6873 + $0xc0] sm:$0xf]
        %v6923 = vld [vmem:[%s6873 + $0xc4] sm:$0xf]
        %v6924 = vld [vmem:[%s6873 + $0xc8] sm:$0xf]
        %v6925 = vld [vmem:[%s6873 + $0xcc] sm:$0xf]
        %v6926 = vld [vmem:[%s6873 + $0xd0] sm:$0xf]
        %v6927 = vld [vmem:[%s6873 + $0xd4] sm:$0xf]
        %v6928 = vld [vmem:[%s6873 + $0xd8] sm:$0xf]
        %v6929 = vld [vmem:[%s6873 + $0xdc] sm:$0xf]
        %v6930 = vld [vmem:[%s6873 + $0xe0] sm:$0xf]
        %v6931 = vld [vmem:[%s6873 + $0xe4] sm:$0xf]
        %v6932 = vld [vmem:[%s6873 + $0xe8] sm:$0xf]
        %v6933 = vld [vmem:[%s6873 + $0xec] sm:$0xf]
        %v6934 = vld [vmem:[%s6873 + $0xf0] sm:$0xf]
        %v6935 = vld [vmem:[%s6873 + $0xf4] sm:$0xf]
        %v6936 = vld [vmem:[%s6873 + $0xf8] sm:$0xf]
        %v6937 = vld [vmem:[%s6873 + $0xfc] sm:$0xf]
        %v7002 = vunpack.c.l.b16 %v6874
        %v7003 = vunpack.c.l.b16 %v6875
        %v7004 = vunpack.c.l.b16 %v6876
        %v7005 = vunpack.c.l.b16 %v6877
        %v7006 = vunpack.c.l.b16 %v6878
        %v7007 = vunpack.c.l.b16 %v6879
        %v7008 = vunpack.c.l.b16 %v6880
        %v7009 = vunpack.c.l.b16 %v6881
        %v7010 = vunpack.c.l.b16 %v6882
        %v7011 = vunpack.c.l.b16 %v6883
        %v7012 = vunpack.c.l.b16 %v6884
        %v7013 = vunpack.c.l.b16 %v6885
        %v7014 = vunpack.c.l.b16 %v6886
        %v7015 = vunpack.c.l.b16 %v6887
        %v7016 = vunpack.c.l.b16 %v6888
        %v7017 = vunpack.c.l.b16 %v6889
        %v7018 = vunpack.c.l.b16 %v6890
        %v7019 = vunpack.c.l.b16 %v6891
        %v7020 = vunpack.c.l.b16 %v6892
        %v7021 = vunpack.c.l.b16 %v6893
        %v7022 = vunpack.c.l.b16 %v6894
        %v7023 = vunpack.c.l.b16 %v6895
        %v7024 = vunpack.c.l.b16 %v6896
        %v7025 = vunpack.c.l.b16 %v6897
        %v7026 = vunpack.c.l.b16 %v6898
        %v7027 = vunpack.c.l.b16 %v6899
        %v7028 = vunpack.c.l.b16 %v6900
        %v7029 = vunpack.c.l.b16 %v6901
        %v7030 = vunpack.c.l.b16 %v6902
        %v7031 = vunpack.c.l.b16 %v6903
        %v7032 = vunpack.c.l.b16 %v6904
        %v7033 = vunpack.c.l.b16 %v6905
        %v7034 = vunpack.c.l.b16 %v6906
        %v7035 = vunpack.c.l.b16 %v6907
        %v7036 = vunpack.c.l.b16 %v6908
        %v7037 = vunpack.c.l.b16 %v6909
        %v7038 = vunpack.c.l.b16 %v6910
        %v7039 = vunpack.c.l.b16 %v6911
        %v7040 = vunpack.c.l.b16 %v6912
        %v7041 = vunpack.c.l.b16 %v6913
        %v7042 = vunpack.c.l.b16 %v6914
        %v7043 = vunpack.c.l.b16 %v6915
        %v7044 = vunpack.c.l.b16 %v6916
        %v7045 = vunpack.c.l.b16 %v6917
        %v7046 = vunpack.c.l.b16 %v6918
        %v7047 = vunpack.c.l.b16 %v6919
        %v7048 = vunpack.c.l.b16 %v6920
        %v7049 = vunpack.c.l.b16 %v6921
        %v7050 = vunpack.c.l.b16 %v6922
        %v7051 = vunpack.c.l.b16 %v6923
        %v7052 = vunpack.c.l.b16 %v6924
        %v7053 = vunpack.c.l.b16 %v6925
        %v7054 = vunpack.c.l.b16 %v6926
        %v7055 = vunpack.c.l.b16 %v6927
        %v7056 = vunpack.c.l.b16 %v6928
        %v7057 = vunpack.c.l.b16 %v6929
        %v7058 = vunpack.c.l.b16 %v6930
        %v7059 = vunpack.c.l.b16 %v6931
        %v7060 = vunpack.c.l.b16 %v6932
        %v7061 = vunpack.c.l.b16 %v6933
        %v7062 = vunpack.c.l.b16 %v6934
        %v7063 = vunpack.c.l.b16 %v6935
        %v7064 = vunpack.c.l.b16 %v6936
        %v7065 = vunpack.c.l.b16 %v6937
        %v7066 = vpack.c.b16 %v7003, %v7002
        %v7067 = vpack.c.b16 %v7005, %v7004
        %v7068 = vpack.c.b16 %v7007, %v7006
        %v7069 = vpack.c.b16 %v7009, %v7008
        %v7070 = vpack.c.b16 %v7011, %v7010
        %v7071 = vpack.c.b16 %v7013, %v7012
        %v7072 = vpack.c.b16 %v7015, %v7014
        %v7073 = vpack.c.b16 %v7017, %v7016
        %v7074 = vpack.c.b16 %v7019, %v7018
        %v7075 = vpack.c.b16 %v7021, %v7020
        %v7076 = vpack.c.b16 %v7023, %v7022
        %v7077 = vpack.c.b16 %v7025, %v7024
        %v7078 = vpack.c.b16 %v7027, %v7026
        %v7079 = vpack.c.b16 %v7029, %v7028
        %v7080 = vpack.c.b16 %v7031, %v7030
        %v7081 = vpack.c.b16 %v7033, %v7032
        %v7082 = vpack.c.b16 %v7035, %v7034
        %v7083 = vpack.c.b16 %v7037, %v7036
        %v7084 = vpack.c.b16 %v7039, %v7038
        %v7085 = vpack.c.b16 %v7041, %v7040
        %v7086 = vpack.c.b16 %v7043, %v7042
        %v7087 = vpack.c.b16 %v7045, %v7044
        %v7088 = vpack.c.b16 %v7047, %v7046
        %v7089 = vpack.c.b16 %v7049, %v7048
        %v7090 = vpack.c.b16 %v7051, %v7050
        %v7091 = vpack.c.b16 %v7053, %v7052
        %v7092 = vpack.c.b16 %v7055, %v7054
        %v7093 = vpack.c.b16 %v7057, %v7056
        %v7094 = vpack.c.b16 %v7059, %v7058
        %v7095 = vpack.c.b16 %v7061, %v7060
        %v7096 = vpack.c.b16 %v7063, %v7062
        %v7097 = vpack.c.b16 %v7065, %v7064
        %7130 = vmatprep.subr.bf16.mxu0 0
        %7131 = vmatpush1.bf16.msra.mxu0 %v7073
        %7132 = vmatprep.subr.bf16.mxu0 0
        %7133 = vmatpush1.bf16.msra.mxu0 %v7072
        %7134 = vmatprep.subr.bf16.mxu0 0
        %7135 = vmatpush1.bf16.msra.mxu0 %v7071
        %7136 = vmatprep.subr.bf16.mxu0 0
        %7137 = vmatpush1.bf16.msra.mxu0 %v7070
        %7138 = vmatprep.subr.bf16.mxu0 0
        %7139 = vmatpush1.bf16.msra.mxu0 %v7069
        %7140 = vmatprep.subr.bf16.mxu0 0
        %7141 = vmatpush1.bf16.msra.mxu0 %v7068
        %7142 = vmatprep.subr.bf16.mxu0 0
        %7143 = vmatpush1.bf16.msra.mxu0 %v7067
        %7144 = vmatprep.subr.bf16.mxu0 0
        %7145 = vmatpush1.bf16.msra.mxu0 %v7066
        %7146 = vmatprep.subr.bf16.mxu0 0
        %7147 = vmatpush2.bf16.msra.mxu0 %v7081
        %7148 = vmatprep.subr.bf16.mxu0 0
        %7149 = vmatpush2.bf16.msra.mxu0 %v7080
        %7150 = vmatprep.subr.bf16.mxu0 0
        %7151 = vmatpush2.bf16.msra.mxu0 %v7079
        %7152 = vmatprep.subr.bf16.mxu0 0
        %7153 = vmatpush2.bf16.msra.mxu0 %v7078
        %7154 = vmatprep.subr.bf16.mxu0 0
        %7155 = vmatpush2.bf16.msra.mxu0 %v7077
        %7156 = vmatprep.subr.bf16.mxu0 0
        %7157 = vmatpush2.bf16.msra.mxu0 %v7076
        %7158 = vmatprep.subr.bf16.mxu0 0
        %7159 = vmatpush2.bf16.msra.mxu0 %v7075
        %7160 = vmatprep.subr.bf16.mxu0 0
        %7161 = vmatpush2.bf16.msra.mxu0 %v7074
        %7162 = vmatprep.mubr.bf16.mxu0 %v6793
        %7163 = vmatmul.mubr.bf16.gmra.mxu0 %v6761
        %v7164 = vpop.f32.mrf.mxu0
        %v7165 = vadd.f32 0.0, %v7164
        %v7166 = vpop.f32.mrf.mxu0
        %v7167 = vpop.f32.mrf.mxu0
        %v7168 = vadd.f32 0.0, %v7167
        %v7169 = vpop.f32.mrf.mxu0
        %7170 = vmatprep.mubr.bf16.mxu0 %v6794
        %7171 = vmatmul.mubr.bf16.gmra.mxu0 %v6762
        %v7172 = vpop.f32.mrf.mxu0
        %v7173 = vadd.f32 0.0, %v7172
        %v7174 = vpop.f32.mrf.mxu0
        %v7175 = vpop.f32.mrf.mxu0
        %v7176 = vadd.f32 0.0, %v7175
        %v7177 = vpop.f32.mrf.mxu0
        %7178 = vmatprep.mubr.bf16.mxu0 %v6795
        %7179 = vmatmul.mubr.bf16.gmra.mxu0 %v6763
        %v7180 = vpop.f32.mrf.mxu0
        %v7181 = vadd.f32 0.0, %v7180
        %v7182 = vpop.f32.mrf.mxu0
        %v7183 = vpop.f32.mrf.mxu0
        %v7184 = vadd.f32 0.0, %v7183
        %v7185 = vpop.f32.mrf.mxu0
        %7186 = vmatprep.mubr.bf16.mxu0 %v6796
        %7187 = vmatmul.mubr.bf16.gmra.mxu0 %v6764
        %v7188 = vpop.f32.mrf.mxu0
        %v7189 = vadd.f32 0.0, %v7188
        %v7190 = vpop.f32.mrf.mxu0
        %v7191 = vpop.f32.mrf.mxu0
        %v7192 = vadd.f32 0.0, %v7191
        %v7193 = vpop.f32.mrf.mxu0
        %7194 = vmatprep.mubr.bf16.mxu0 %v6797
        %7195 = vmatmul.mubr.bf16.gmra.mxu0 %v6765
        %v7196 = vpop.f32.mrf.mxu0
        %v7197 = vadd.f32 0.0, %v7196
        %v7198 = vpop.f32.mrf.mxu0
        %v7199 = vpop.f32.mrf.mxu0
        %v7200 = vadd.f32 0.0, %v7199
        %v7201 = vpop.f32.mrf.mxu0
        %7202 = vmatprep.mubr.bf16.mxu0 %v6798
        %7203 = vmatmul.mubr.bf16.gmra.mxu0 %v6766
        %v7204 = vpop.f32.mrf.mxu0
        %v7205 = vadd.f32 0.0, %v7204
        %v7206 = vpop.f32.mrf.mxu0
        %v7207 = vpop.f32.mrf.mxu0
        %v7208 = vadd.f32 0.0, %v7207
        %v7209 = vpop.f32.mrf.mxu0
        %7210 = vmatprep.mubr.bf16.mxu0 %v6799
        %7211 = vmatmul.mubr.bf16.gmra.mxu0 %v6767
        %v7212 = vpop.f32.mrf.mxu0
        %v7213 = vadd.f32 0.0, %v7212
        %v7214 = vpop.f32.mrf.mxu0
        %v7215 = vpop.f32.mrf.mxu0
        %v7216 = vadd.f32 0.0, %v7215
        %v7217 = vpop.f32.mrf.mxu0
        %7218 = vmatprep.mubr.bf16.mxu0 %v6800
        %7219 = vmatmul.mubr.bf16.gmra.mxu0 %v6768
        %v7220 = vpop.f32.mrf.mxu0
        %v7221 = vadd.f32 0.0, %v7220
        %v7222 = vpop.f32.mrf.mxu0
        %v7223 = vpop.f32.mrf.mxu0
        %v7224 = vadd.f32 0.0, %v7223
        %v7225 = vpop.f32.mrf.mxu0
        %7226 = vdwg.mxu0
        %7227 = vmatprep.subr.bf16.mxu0 0
        %7228 = vmatpush1.bf16.msra.mxu0 %v7089
        %7229 = vmatprep.subr.bf16.mxu0 0
        %7230 = vmatpush1.bf16.msra.mxu0 %v7088
        %7231 = vmatprep.subr.bf16.mxu0 0
        %7232 = vmatpush1.bf16.msra.mxu0 %v7087
        %7233 = vmatprep.subr.bf16.mxu0 0
        %7234 = vmatpush1.bf16.msra.mxu0 %v7086
        %7235 = vmatprep.subr.bf16.mxu0 0
        %7236 = vmatpush1.bf16.msra.mxu0 %v7085
        %7237 = vmatprep.subr.bf16.mxu0 0
        %7238 = vmatpush1.bf16.msra.mxu0 %v7084
        %7239 = vmatprep.subr.bf16.mxu0 0
        %7240 = vmatpush1.bf16.msra.mxu0 %v7083
        %7241 = vmatprep.subr.bf16.mxu0 0
        %7242 = vmatpush1.bf16.msra.mxu0 %v7082
        %7243 = vmatprep.subr.bf16.mxu0 0
        %7244 = vmatpush2.bf16.msra.mxu0 %v7097
        %7245 = vmatprep.subr.bf16.mxu0 0
        %7246 = vmatpush2.bf16.msra.mxu0 %v7096
        %7247 = vmatprep.subr.bf16.mxu0 0
        %7248 = vmatpush2.bf16.msra.mxu0 %v7095
        %7249 = vmatprep.subr.bf16.mxu0 0
        %7250 = vmatpush2.bf16.msra.mxu0 %v7094
        %7251 = vmatprep.subr.bf16.mxu0 0
        %7252 = vmatpush2.bf16.msra.mxu0 %v7093
        %7253 = vmatprep.subr.bf16.mxu0 0
        %7254 = vmatpush2.bf16.msra.mxu0 %v7092
        %7255 = vmatprep.subr.bf16.mxu0 0
        %7256 = vmatpush2.bf16.msra.mxu0 %v7091
        %7257 = vmatprep.subr.bf16.mxu0 0
        %7258 = vmatpush2.bf16.msra.mxu0 %v7090
        %7259 = vmatprep.mubr.bf16.mxu0 %v6857
        %7260 = vmatmul.mubr.bf16.gmra.mxu0 %v6825
        %v7261 = vpop.f32.mrf.mxu0
        %v7262 = vadd.f32 %v7165, %v7261
        %v7263 = vpop.f32.mrf.mxu0
        %v7264 = vpop.f32.mrf.mxu0
        %v7265 = vadd.f32 %v7168, %v7264
        %v7266 = vpop.f32.mrf.mxu0
        %7267 = vmatprep.mubr.bf16.mxu0 %v6858
        %7268 = vmatmul.mubr.bf16.gmra.mxu0 %v6826
        %v7269 = vpop.f32.mrf.mxu0
        %v7270 = vadd.f32 %v7173, %v7269
        %v7271 = vpop.f32.mrf.mxu0
        %v7272 = vpop.f32.mrf.mxu0
        %v7273 = vadd.f32 %v7176, %v7272
        %v7274 = vpop.f32.mrf.mxu0
        %7275 = vmatprep.mubr.bf16.mxu0 %v6859
        %7276 = vmatmul.mubr.bf16.gmra.mxu0 %v6827
        %v7277 = vpop.f32.mrf.mxu0
        %v7278 = vadd.f32 %v7181, %v7277
        %v7279 = vpop.f32.mrf.mxu0
        %v7280 = vpop.f32.mrf.mxu0
        %v7281 = vadd.f32 %v7184, %v7280
        %v7282 = vpop.f32.mrf.mxu0
        %7283 = vmatprep.mubr.bf16.mxu0 %v6860
        %7284 = vmatmul.mubr.bf16.gmra.mxu0 %v6828
        %v7285 = vpop.f32.mrf.mxu0
        %v7286 = vadd.f32 %v7189, %v7285
        %v7287 = vpop.f32.mrf.mxu0
        %v7288 = vpop.f32.mrf.mxu0
        %v7289 = vadd.f32 %v7192, %v7288
        %v7290 = vpop.f32.mrf.mxu0
        %7291 = vmatprep.mubr.bf16.mxu0 %v6861
        %7292 = vmatmul.mubr.bf16.gmra.mxu0 %v6829
        %v7293 = vpop.f32.mrf.mxu0
        %v7294 = vadd.f32 %v7197, %v7293
        %v7295 = vpop.f32.mrf.mxu0
        %v7296 = vpop.f32.mrf.mxu0
        %v7297 = vadd.f32 %v7200, %v7296
        %v7298 = vpop.f32.mrf.mxu0
        %7299 = vmatprep.mubr.bf16.mxu0 %v6862
        %7300 = vmatmul.mubr.bf16.gmra.mxu0 %v6830
        %v7301 = vpop.f32.mrf.mxu0
        %v7302 = vadd.f32 %v7205, %v7301
        %v7303 = vpop.f32.mrf.mxu0
        %v7304 = vpop.f32.mrf.mxu0
        %v7305 = vadd.f32 %v7208, %v7304
        %v7306 = vpop.f32.mrf.mxu0
        %7307 = vmatprep.mubr.bf16.mxu0 %v6863
        %7308 = vmatmul.mubr.bf16.gmra.mxu0 %v6831
        %v7309 = vpop.f32.mrf.mxu0
        %v7310 = vadd.f32 %v7213, %v7309
        %v7311 = vpop.f32.mrf.mxu0
        %v7312 = vpop.f32.mrf.mxu0
        %v7313 = vadd.f32 %v7216, %v7312
        %v7314 = vpop.f32.mrf.mxu0
        %7315 = vmatprep.mubr.bf16.mxu0 %v6864
        %7316 = vmatmul.mubr.bf16.gmra.mxu0 %v6832
        %v7317 = vpop.f32.mrf.mxu0
        %v7318 = vadd.f32 %v7221, %v7317
        %v7319 = vpop.f32.mrf.mxu0
        %v7320 = vpop.f32.mrf.mxu0
        %v7321 = vadd.f32 %v7224, %v7320
        %v7322 = vpop.f32.mrf.mxu0
        %7323 = vdwg.mxu0
        %v7324 = vadd.f32 %v5977, %v7262
        %v7325 = vadd.f32 %v5978, %v7265
        %v7326 = vadd.f32 %v5979, %v7270
        %v7327 = vadd.f32 %v5980, %v7273
        %v7328 = vadd.f32 %v5981, %v7278
        %v7329 = vadd.f32 %v5982, %v7281
        %v7330 = vadd.f32 %v5983, %v7286
        %v7331 = vadd.f32 %v5984, %v7289
        %v7332 = vadd.f32 %v5985, %v7294
        %v7333 = vadd.f32 %v5986, %v7297
        %v7334 = vadd.f32 %v5987, %v7302
        %v7335 = vadd.f32 %v5988, %v7305
        %v7336 = vadd.f32 %v5989, %v7310
        %v7337 = vadd.f32 %v5990, %v7313
        %v7338 = vadd.f32 %v5991, %v7318
        %v7339 = vadd.f32 %v5992, %v7321
        %s7340 = sadd.s32 %s212, 14
        %s7341 = smul.u32 %s7340, 6
        %s7342 = smul.addr %s7341, 4
        %s7343 = scalar_lea.vmem [#allocation2], %s7342
        %v7344 = vld [vmem:[%s7343 + $0x4] sm:$0x8]
        %v7345 = vld [vmem:[%s7343 + $0x8] sm:$0xf]
        %v7346 = vld [vmem:[%s7343 + $0xc] sm:$0xf]
        %v7347 = vld [vmem:[%s7343 + $0x1c] sm:$0x8]
        %v7348 = vld [vmem:[%s7343 + $0x20] sm:$0xf]
        %v7349 = vld [vmem:[%s7343 + $0x24] sm:$0xf]
        %v7350 = vld [vmem:[%s7343 + $0x34] sm:$0x8]
        %v7351 = vld [vmem:[%s7343 + $0x38] sm:$0xf]
        %v7352 = vld [vmem:[%s7343 + $0x3c] sm:$0xf]
        %v7353 = vld [vmem:[%s7343 + $0x4c] sm:$0x8]
        %v7354 = vld [vmem:[%s7343 + $0x50] sm:$0xf]
        %v7355 = vld [vmem:[%s7343 + $0x54] sm:$0xf]
        %v7356 = vld [vmem:[%s7343 + $0x64] sm:$0x8]
        %v7357 = vld [vmem:[%s7343 + $0x68] sm:$0xf]
        %v7358 = vld [vmem:[%s7343 + $0x6c] sm:$0xf]
        %v7359 = vld [vmem:[%s7343 + $0x7c] sm:$0x8]
        %v7360 = vld [vmem:[%s7343 + $0x80] sm:$0xf]
        %v7361 = vld [vmem:[%s7343 + $0x84] sm:$0xf]
        %v7362 = vld [vmem:[%s7343 + $0x94] sm:$0x8]
        %v7363 = vld [vmem:[%s7343 + $0x98] sm:$0xf]
        %v7364 = vld [vmem:[%s7343 + $0x9c] sm:$0xf]
        %v7365 = vld [vmem:[%s7343 + $0xac] sm:$0x8]
        %v7366 = vld [vmem:[%s7343 + $0xb0] sm:$0xf]
        %v7367 = vld [vmem:[%s7343 + $0xb4] sm:$0xf]
        %v7369 = vshrl.u32 %v7344, 16
        %v7371 = vrot.slane %v7369, 7
        %v7372 = vrot.slane %v7371, 4
        %v7374 = vshrl.u32 %v7345, 16
        %v7376 = vrot.slane %v7374, 7
        %v7377 = vshll.u32 %v7345, 16
        %v7379 = vor.u32 %v7376, %v7377
        %v7380 = vsel %vm728, %v7372, %v7379
        %v7381 = vrot.slane %v7376, 4
        %v7383 = vshrl.u32 %v7346, 16
        %v7385 = vrot.slane %v7383, 7
        %v7386 = vshll.u32 %v7346, 16
        %v7388 = vor.u32 %v7385, %v7386
        %v7389 = vsel %vm728, %v7381, %v7388
        %v7391 = vshrl.u32 %v7347, 16
        %v7393 = vrot.slane %v7391, 7
        %v7394 = vrot.slane %v7393, 4
        %v7396 = vshrl.u32 %v7348, 16
        %v7398 = vrot.slane %v7396, 7
        %v7399 = vshll.u32 %v7348, 16
        %v7401 = vor.u32 %v7398, %v7399
        %v7402 = vsel %vm728, %v7394, %v7401
        %v7403 = vrot.slane %v7398, 4
        %v7405 = vshrl.u32 %v7349, 16
        %v7407 = vrot.slane %v7405, 7
        %v7408 = vshll.u32 %v7349, 16
        %v7410 = vor.u32 %v7407, %v7408
        %v7411 = vsel %vm728, %v7403, %v7410
        %v7413 = vshrl.u32 %v7350, 16
        %v7415 = vrot.slane %v7413, 7
        %v7416 = vrot.slane %v7415, 4
        %v7418 = vshrl.u32 %v7351, 16
        %v7420 = vrot.slane %v7418, 7
        %v7421 = vshll.u32 %v7351, 16
        %v7423 = vor.u32 %v7420, %v7421
        %v7424 = vsel %vm728, %v7416, %v7423
        %v7425 = vrot.slane %v7420, 4
        %v7427 = vshrl.u32 %v7352, 16
        %v7429 = vrot.slane %v7427, 7
        %v7430 = vshll.u32 %v7352, 16
        %v7432 = vor.u32 %v7429, %v7430
        %v7433 = vsel %vm728, %v7425, %v7432
        %v7435 = vshrl.u32 %v7353, 16
        %v7437 = vrot.slane %v7435, 7
        %v7438 = vrot.slane %v7437, 4
        %v7440 = vshrl.u32 %v7354, 16
        %v7442 = vrot.slane %v7440, 7
        %v7443 = vshll.u32 %v7354, 16
        %v7445 = vor.u32 %v7442, %v7443
        %v7446 = vsel %vm728, %v7438, %v7445
        %v7447 = vrot.slane %v7442, 4
        %v7449 = vshrl.u32 %v7355, 16
        %v7451 = vrot.slane %v7449, 7
        %v7452 = vshll.u32 %v7355, 16
        %v7454 = vor.u32 %v7451, %v7452
        %v7455 = vsel %vm728, %v7447, %v7454
        %v7457 = vshrl.u32 %v7356, 16
        %v7459 = vrot.slane %v7457, 7
        %v7460 = vrot.slane %v7459, 4
        %v7462 = vshrl.u32 %v7357, 16
        %v7464 = vrot.slane %v7462, 7
        %v7465 = vshll.u32 %v7357, 16
        %v7467 = vor.u32 %v7464, %v7465
        %v7468 = vsel %vm728, %v7460, %v7467
        %v7469 = vrot.slane %v7464, 4
        %v7471 = vshrl.u32 %v7358, 16
        %v7473 = vrot.slane %v7471, 7
        %v7474 = vshll.u32 %v7358, 16
        %v7476 = vor.u32 %v7473, %v7474
        %v7477 = vsel %vm728, %v7469, %v7476
        %v7479 = vshrl.u32 %v7359, 16
        %v7481 = vrot.slane %v7479, 7
        %v7482 = vrot.slane %v7481, 4
        %v7484 = vshrl.u32 %v7360, 16
        %v7486 = vrot.slane %v7484, 7
        %v7487 = vshll.u32 %v7360, 16
        %v7489 = vor.u32 %v7486, %v7487
        %v7490 = vsel %vm728, %v7482, %v7489
        %v7491 = vrot.slane %v7486, 4
        %v7493 = vshrl.u32 %v7361, 16
        %v7495 = vrot.slane %v7493, 7
        %v7496 = vshll.u32 %v7361, 16
        %v7498 = vor.u32 %v7495, %v7496
        %v7499 = vsel %vm728, %v7491, %v7498
        %v7501 = vshrl.u32 %v7362, 16
        %v7503 = vrot.slane %v7501, 7
        %v7504 = vrot.slane %v7503, 4
        %v7506 = vshrl.u32 %v7363, 16
        %v7508 = vrot.slane %v7506, 7
        %v7509 = vshll.u32 %v7363, 16
        %v7511 = vor.u32 %v7508, %v7509
        %v7512 = vsel %vm728, %v7504, %v7511
        %v7513 = vrot.slane %v7508, 4
        %v7515 = vshrl.u32 %v7364, 16
        %v7517 = vrot.slane %v7515, 7
        %v7518 = vshll.u32 %v7364, 16
        %v7520 = vor.u32 %v7517, %v7518
        %v7521 = vsel %vm728, %v7513, %v7520
        %v7523 = vshrl.u32 %v7365, 16
        %v7525 = vrot.slane %v7523, 7
        %v7526 = vrot.slane %v7525, 4
        %v7528 = vshrl.u32 %v7366, 16
        %v7530 = vrot.slane %v7528, 7
        %v7531 = vshll.u32 %v7366, 16
        %v7533 = vor.u32 %v7530, %v7531
        %v7534 = vsel %vm728, %v7526, %v7533
        %v7535 = vrot.slane %v7530, 4
        %v7537 = vshrl.u32 %v7367, 16
        %v7539 = vrot.slane %v7537, 7
        %v7540 = vshll.u32 %v7367, 16
        %v7542 = vor.u32 %v7539, %v7540
        %v7543 = vsel %vm728, %v7535, %v7542
        %s7544 = sadd.s32 %s212, 18
        %s7545 = smul.u32 %s7544, 6
        %s7546 = smul.addr %s7545, 4
        %s7547 = scalar_lea.vmem [#allocation2], %s7546
        %v7548 = vld [vmem:[%s7547 + $0x4] sm:$0xe]
        %v7549 = vld [vmem:[%s7547 + $0x8] sm:$0xf]
        %v7550 = vld [vmem:[%s7547 + $0xc] sm:$0x3]
        %v7551 = vld [vmem:[%s7547 + $0x1c] sm:$0xe]
        %v7552 = vld [vmem:[%s7547 + $0x20] sm:$0xf]
        %v7553 = vld [vmem:[%s7547 + $0x24] sm:$0x3]
        %v7554 = vld [vmem:[%s7547 + $0x34] sm:$0xe]
        %v7555 = vld [vmem:[%s7547 + $0x38] sm:$0xf]
        %v7556 = vld [vmem:[%s7547 + $0x3c] sm:$0x3]
        %v7557 = vld [vmem:[%s7547 + $0x4c] sm:$0xe]
        %v7558 = vld [vmem:[%s7547 + $0x50] sm:$0xf]
        %v7559 = vld [vmem:[%s7547 + $0x54] sm:$0x3]
        %v7560 = vld [vmem:[%s7547 + $0x64] sm:$0xe]
        %v7561 = vld [vmem:[%s7547 + $0x68] sm:$0xf]
        %v7562 = vld [vmem:[%s7547 + $0x6c] sm:$0x3]
        %v7563 = vld [vmem:[%s7547 + $0x7c] sm:$0xe]
        %v7564 = vld [vmem:[%s7547 + $0x80] sm:$0xf]
        %v7565 = vld [vmem:[%s7547 + $0x84] sm:$0x3]
        %v7566 = vld [vmem:[%s7547 + $0x94] sm:$0xe]
        %v7567 = vld [vmem:[%s7547 + $0x98] sm:$0xf]
        %v7568 = vld [vmem:[%s7547 + $0x9c] sm:$0x3]
        %v7569 = vld [vmem:[%s7547 + $0xac] sm:$0xe]
        %v7570 = vld [vmem:[%s7547 + $0xb0] sm:$0xf]
        %v7571 = vld [vmem:[%s7547 + $0xb4] sm:$0x3]
        %v7573 = vshrl.u32 %v7548, 16
        %v7575 = vrot.slane %v7573, 5
        %v7576 = vshll.u32 %v7548, 16
        %v7578 = vrot.slane %v7576, 6
        %v7579 = vor.u32 %v7575, %v7578
        %v7580 = vrot.slane %v7579, 4
        %v7582 = vshrl.u32 %v7549, 16
        %v7584 = vrot.slane %v7582, 5
        %v7585 = vshll.u32 %v7549, 16
        %v7587 = vrot.slane %v7585, 6
        %v7588 = vor.u32 %v7584, %v7587
        %v7589 = vsel %vm935, %v7580, %v7588
        %v7590 = vrot.slane %v7588, 4
        %v7592 = vshrl.u32 %v7550, 16
        %v7594 = vrot.slane %v7592, 5
        %v7595 = vshll.u32 %v7550, 16
        %v7597 = vrot.slane %v7595, 6
        %v7598 = vor.u32 %v7594, %v7597
        %v7599 = vsel %vm935, %v7590, %v7598
        %v7601 = vshrl.u32 %v7551, 16
        %v7603 = vrot.slane %v7601, 5
        %v7604 = vshll.u32 %v7551, 16
        %v7606 = vrot.slane %v7604, 6
        %v7607 = vor.u32 %v7603, %v7606
        %v7608 = vrot.slane %v7607, 4
        %v7610 = vshrl.u32 %v7552, 16
        %v7612 = vrot.slane %v7610, 5
        %v7613 = vshll.u32 %v7552, 16
        %v7615 = vrot.slane %v7613, 6
        %v7616 = vor.u32 %v7612, %v7615
        %v7617 = vsel %vm935, %v7608, %v7616
        %v7618 = vrot.slane %v7616, 4
        %v7620 = vshrl.u32 %v7553, 16
        %v7622 = vrot.slane %v7620, 5
        %v7623 = vshll.u32 %v7553, 16
        %v7625 = vrot.slane %v7623, 6
        %v7626 = vor.u32 %v7622, %v7625
        %v7627 = vsel %vm935, %v7618, %v7626
        %v7629 = vshrl.u32 %v7554, 16
        %v7631 = vrot.slane %v7629, 5
        %v7632 = vshll.u32 %v7554, 16
        %v7634 = vrot.slane %v7632, 6
        %v7635 = vor.u32 %v7631, %v7634
        %v7636 = vrot.slane %v7635, 4
        %v7638 = vshrl.u32 %v7555, 16
        %v7640 = vrot.slane %v7638, 5
        %v7641 = vshll.u32 %v7555, 16
        %v7643 = vrot.slane %v7641, 6
        %v7644 = vor.u32 %v7640, %v7643
        %v7645 = vsel %vm935, %v7636, %v7644
        %v7646 = vrot.slane %v7644, 4
        %v7648 = vshrl.u32 %v7556, 16
        %v7650 = vrot.slane %v7648, 5
        %v7651 = vshll.u32 %v7556, 16
        %v7653 = vrot.slane %v7651, 6
        %v7654 = vor.u32 %v7650, %v7653
        %v7655 = vsel %vm935, %v7646, %v7654
        %v7657 = vshrl.u32 %v7557, 16
        %v7659 = vrot.slane %v7657, 5
        %v7660 = vshll.u32 %v7557, 16
        %v7662 = vrot.slane %v7660, 6
        %v7663 = vor.u32 %v7659, %v7662
        %v7664 = vrot.slane %v7663, 4
        %v7666 = vshrl.u32 %v7558, 16
        %v7668 = vrot.slane %v7666, 5
        %v7669 = vshll.u32 %v7558, 16
        %v7671 = vrot.slane %v7669, 6
        %v7672 = vor.u32 %v7668, %v7671
        %v7673 = vsel %vm935, %v7664, %v7672
        %v7674 = vrot.slane %v7672, 4
        %v7676 = vshrl.u32 %v7559, 16
        %v7678 = vrot.slane %v7676, 5
        %v7679 = vshll.u32 %v7559, 16
        %v7681 = vrot.slane %v7679, 6
        %v7682 = vor.u32 %v7678, %v7681
        %v7683 = vsel %vm935, %v7674, %v7682
        %v7685 = vshrl.u32 %v7560, 16
        %v7687 = vrot.slane %v7685, 5
        %v7688 = vshll.u32 %v7560, 16
        %v7690 = vrot.slane %v7688, 6
        %v7691 = vor.u32 %v7687, %v7690
        %v7692 = vrot.slane %v7691, 4
        %v7694 = vshrl.u32 %v7561, 16
        %v7696 = vrot.slane %v7694, 5
        %v7697 = vshll.u32 %v7561, 16
        %v7699 = vrot.slane %v7697, 6
        %v7700 = vor.u32 %v7696, %v7699
        %v7701 = vsel %vm935, %v7692, %v7700
        %v7702 = vrot.slane %v7700, 4
        %v7704 = vshrl.u32 %v7562, 16
        %v7706 = vrot.slane %v7704, 5
        %v7707 = vshll.u32 %v7562, 16
        %v7709 = vrot.slane %v7707, 6
        %v7710 = vor.u32 %v7706, %v7709
        %v7711 = vsel %vm935, %v7702, %v7710
        %v7713 = vshrl.u32 %v7563, 16
        %v7715 = vrot.slane %v7713, 5
        %v7716 = vshll.u32 %v7563, 16
        %v7718 = vrot.slane %v7716, 6
        %v7719 = vor.u32 %v7715, %v7718
        %v7720 = vrot.slane %v7719, 4
        %v7722 = vshrl.u32 %v7564, 16
        %v7724 = vrot.slane %v7722, 5
        %v7725 = vshll.u32 %v7564, 16
        %v7727 = vrot.slane %v7725, 6
        %v7728 = vor.u32 %v7724, %v7727
        %v7729 = vsel %vm935, %v7720, %v7728
        %v7730 = vrot.slane %v7728, 4
        %v7732 = vshrl.u32 %v7565, 16
        %v7734 = vrot.slane %v7732, 5
        %v7735 = vshll.u32 %v7565, 16
        %v7737 = vrot.slane %v7735, 6
        %v7738 = vor.u32 %v7734, %v7737
        %v7739 = vsel %vm935, %v7730, %v7738
        %v7741 = vshrl.u32 %v7566, 16
        %v7743 = vrot.slane %v7741, 5
        %v7744 = vshll.u32 %v7566, 16
        %v7746 = vrot.slane %v7744, 6
        %v7747 = vor.u32 %v7743, %v7746
        %v7748 = vrot.slane %v7747, 4
        %v7750 = vshrl.u32 %v7567, 16
        %v7752 = vrot.slane %v7750, 5
        %v7753 = vshll.u32 %v7567, 16
        %v7755 = vrot.slane %v7753, 6
        %v7756 = vor.u32 %v7752, %v7755
        %v7757 = vsel %vm935, %v7748, %v7756
        %v7758 = vrot.slane %v7756, 4
        %v7760 = vshrl.u32 %v7568, 16
        %v7762 = vrot.slane %v7760, 5
        %v7763 = vshll.u32 %v7568, 16
        %v7765 = vrot.slane %v7763, 6
        %v7766 = vor.u32 %v7762, %v7765
        %v7767 = vsel %vm935, %v7758, %v7766
        %v7769 = vshrl.u32 %v7569, 16
        %v7771 = vrot.slane %v7769, 5
        %v7772 = vshll.u32 %v7569, 16
        %v7774 = vrot.slane %v7772, 6
        %v7775 = vor.u32 %v7771, %v7774
        %v7776 = vrot.slane %v7775, 4
        %v7778 = vshrl.u32 %v7570, 16
        %v7780 = vrot.slane %v7778, 5
        %v7781 = vshll.u32 %v7570, 16
        %v7783 = vrot.slane %v7781, 6
        %v7784 = vor.u32 %v7780, %v7783
        %v7785 = vsel %vm935, %v7776, %v7784
        %v7786 = vrot.slane %v7784, 4
        %v7788 = vshrl.u32 %v7571, 16
        %v7790 = vrot.slane %v7788, 5
        %v7791 = vshll.u32 %v7571, 16
        %v7793 = vrot.slane %v7791, 6
        %v7794 = vor.u32 %v7790, %v7793
        %v7795 = vsel %vm935, %v7786, %v7794
        %s7796 = sadd.s32 %s212, 22
        %s7797 = smul.u32 %s7796, 6
        %s7798 = smul.addr %s7797, 4
        %s7799 = scalar_lea.vmem [#allocation2], %s7798
        %v7800 = vld [vmem:[%s7799] sm:$0x8]
        %v7801 = vld [vmem:[%s7799 + $0x4] sm:$0xf]
        %v7802 = vld [vmem:[%s7799 + $0x8] sm:$0xf]
        %v7803 = vld [vmem:[%s7799 + $0x18] sm:$0x8]
        %v7804 = vld [vmem:[%s7799 + $0x1c] sm:$0xf]
        %v7805 = vld [vmem:[%s7799 + $0x20] sm:$0xf]
        %v7806 = vld [vmem:[%s7799 + $0x30] sm:$0x8]
        %v7807 = vld [vmem:[%s7799 + $0x34] sm:$0xf]
        %v7808 = vld [vmem:[%s7799 + $0x38] sm:$0xf]
        %v7809 = vld [vmem:[%s7799 + $0x48] sm:$0x8]
        %v7810 = vld [vmem:[%s7799 + $0x4c] sm:$0xf]
        %v7811 = vld [vmem:[%s7799 + $0x50] sm:$0xf]
        %v7812 = vld [vmem:[%s7799 + $0x60] sm:$0x8]
        %v7813 = vld [vmem:[%s7799 + $0x64] sm:$0xf]
        %v7814 = vld [vmem:[%s7799 + $0x68] sm:$0xf]
        %v7815 = vld [vmem:[%s7799 + $0x78] sm:$0x8]
        %v7816 = vld [vmem:[%s7799 + $0x7c] sm:$0xf]
        %v7817 = vld [vmem:[%s7799 + $0x80] sm:$0xf]
        %v7818 = vld [vmem:[%s7799 + $0x90] sm:$0x8]
        %v7819 = vld [vmem:[%s7799 + $0x94] sm:$0xf]
        %v7820 = vld [vmem:[%s7799 + $0x98] sm:$0xf]
        %v7821 = vld [vmem:[%s7799 + $0xa8] sm:$0x8]
        %v7822 = vld [vmem:[%s7799 + $0xac] sm:$0xf]
        %v7823 = vld [vmem:[%s7799 + $0xb0] sm:$0xf]
        %v7825 = vshrl.u32 %v7800, 16
        %v7827 = vrot.slane %v7825, 7
        %v7828 = vrot.slane %v7827, 4
        %v7830 = vshrl.u32 %v7801, 16
        %v7832 = vrot.slane %v7830, 7
        %v7833 = vshll.u32 %v7801, 16
        %v7835 = vor.u32 %v7832, %v7833
        %v7836 = vsel %vm728, %v7828, %v7835
        %v7837 = vrot.slane %v7832, 4
        %v7839 = vshrl.u32 %v7802, 16
        %v7841 = vrot.slane %v7839, 7
        %v7842 = vshll.u32 %v7802, 16
        %v7844 = vor.u32 %v7841, %v7842
        %v7845 = vsel %vm728, %v7837, %v7844
        %v7847 = vshrl.u32 %v7803, 16
        %v7849 = vrot.slane %v7847, 7
        %v7850 = vrot.slane %v7849, 4
        %v7852 = vshrl.u32 %v7804, 16
        %v7854 = vrot.slane %v7852, 7
        %v7855 = vshll.u32 %v7804, 16
        %v7857 = vor.u32 %v7854, %v7855
        %v7858 = vsel %vm728, %v7850, %v7857
        %v7859 = vrot.slane %v7854, 4
        %v7861 = vshrl.u32 %v7805, 16
        %v7863 = vrot.slane %v7861, 7
        %v7864 = vshll.u32 %v7805, 16
        %v7866 = vor.u32 %v7863, %v7864
        %v7867 = vsel %vm728, %v7859, %v7866
        %v7869 = vshrl.u32 %v7806, 16
        %v7871 = vrot.slane %v7869, 7
        %v7872 = vrot.slane %v7871, 4
        %v7874 = vshrl.u32 %v7807, 16
        %v7876 = vrot.slane %v7874, 7
        %v7877 = vshll.u32 %v7807, 16
        %v7879 = vor.u32 %v7876, %v7877
        %v7880 = vsel %vm728, %v7872, %v7879
        %v7881 = vrot.slane %v7876, 4
        %v7883 = vshrl.u32 %v7808, 16
        %v7885 = vrot.slane %v7883, 7
        %v7886 = vshll.u32 %v7808, 16
        %v7888 = vor.u32 %v7885, %v7886
        %v7889 = vsel %vm728, %v7881, %v7888
        %v7891 = vshrl.u32 %v7809, 16
        %v7893 = vrot.slane %v7891, 7
        %v7894 = vrot.slane %v7893, 4
        %v7896 = vshrl.u32 %v7810, 16
        %v7898 = vrot.slane %v7896, 7
        %v7899 = vshll.u32 %v7810, 16
        %v7901 = vor.u32 %v7898, %v7899
        %v7902 = vsel %vm728, %v7894, %v7901
        %v7903 = vrot.slane %v7898, 4
        %v7905 = vshrl.u32 %v7811, 16
        %v7907 = vrot.slane %v7905, 7
        %v7908 = vshll.u32 %v7811, 16
        %v7910 = vor.u32 %v7907, %v7908
        %v7911 = vsel %vm728, %v7903, %v7910
        %v7913 = vshrl.u32 %v7812, 16
        %v7915 = vrot.slane %v7913, 7
        %v7916 = vrot.slane %v7915, 4
        %v7918 = vshrl.u32 %v7813, 16
        %v7920 = vrot.slane %v7918, 7
        %v7921 = vshll.u32 %v7813, 16
        %v7923 = vor.u32 %v7920, %v7921
        %v7924 = vsel %vm728, %v7916, %v7923
        %v7925 = vrot.slane %v7920, 4
        %v7927 = vshrl.u32 %v7814, 16
        %v7929 = vrot.slane %v7927, 7
        %v7930 = vshll.u32 %v7814, 16
        %v7932 = vor.u32 %v7929, %v7930
        %v7933 = vsel %vm728, %v7925, %v7932
        %v7935 = vshrl.u32 %v7815, 16
        %v7937 = vrot.slane %v7935, 7
        %v7938 = vrot.slane %v7937, 4
        %v7940 = vshrl.u32 %v7816, 16
        %v7942 = vrot.slane %v7940, 7
        %v7943 = vshll.u32 %v7816, 16
        %v7945 = vor.u32 %v7942, %v7943
        %v7946 = vsel %vm728, %v7938, %v7945
        %v7947 = vrot.slane %v7942, 4
        %v7949 = vshrl.u32 %v7817, 16
        %v7951 = vrot.slane %v7949, 7
        %v7952 = vshll.u32 %v7817, 16
        %v7954 = vor.u32 %v7951, %v7952
        %v7955 = vsel %vm728, %v7947, %v7954
        %v7957 = vshrl.u32 %v7818, 16
        %v7959 = vrot.slane %v7957, 7
        %v7960 = vrot.slane %v7959, 4
        %v7962 = vshrl.u32 %v7819, 16
        %v7964 = vrot.slane %v7962, 7
        %v7965 = vshll.u32 %v7819, 16
        %v7967 = vor.u32 %v7964, %v7965
        %v7968 = vsel %vm728, %v7960, %v7967
        %v7969 = vrot.slane %v7964, 4
        %v7971 = vshrl.u32 %v7820, 16
        %v7973 = vrot.slane %v7971, 7
        %v7974 = vshll.u32 %v7820, 16
        %v7976 = vor.u32 %v7973, %v7974
        %v7977 = vsel %vm728, %v7969, %v7976
        %v7979 = vshrl.u32 %v7821, 16
        %v7981 = vrot.slane %v7979, 7
        %v7982 = vrot.slane %v7981, 4
        %v7984 = vshrl.u32 %v7822, 16
        %v7986 = vrot.slane %v7984, 7
        %v7987 = vshll.u32 %v7822, 16
        %v7989 = vor.u32 %v7986, %v7987
        %v7990 = vsel %vm728, %v7982, %v7989
        %v7991 = vrot.slane %v7986, 4
        %v7993 = vshrl.u32 %v7823, 16
        %v7995 = vrot.slane %v7993, 7
        %v7996 = vshll.u32 %v7823, 16
        %v7998 = vor.u32 %v7995, %v7996
        %v7999 = vsel %vm728, %v7991, %v7998
        %s8000 = sadd.s32 %s212, 26
        %s8001 = smul.u32 %s8000, 6
        %s8002 = smul.addr %s8001, 4
        %s8003 = scalar_lea.vmem [#allocation2], %s8002
        %v8004 = vld [vmem:[%s8003] sm:$0xe]
        %v8005 = vld [vmem:[%s8003 + $0x4] sm:$0xf]
        %v8006 = vld [vmem:[%s8003 + $0x8] sm:$0x3]
        %v8007 = vld [vmem:[%s8003 + $0x18] sm:$0xe]
        %v8008 = vld [vmem:[%s8003 + $0x1c] sm:$0xf]
        %v8009 = vld [vmem:[%s8003 + $0x20] sm:$0x3]
        %v8010 = vld [vmem:[%s8003 + $0x30] sm:$0xe]
        %v8011 = vld [vmem:[%s8003 + $0x34] sm:$0xf]
        %v8012 = vld [vmem:[%s8003 + $0x38] sm:$0x3]
        %v8013 = vld [vmem:[%s8003 + $0x48] sm:$0xe]
        %v8014 = vld [vmem:[%s8003 + $0x4c] sm:$0xf]
        %v8015 = vld [vmem:[%s8003 + $0x50] sm:$0x3]
        %v8016 = vld [vmem:[%s8003 + $0x60] sm:$0xe]
        %v8017 = vld [vmem:[%s8003 + $0x64] sm:$0xf]
        %v8018 = vld [vmem:[%s8003 + $0x68] sm:$0x3]
        %v8019 = vld [vmem:[%s8003 + $0x78] sm:$0xe]
        %v8020 = vld [vmem:[%s8003 + $0x7c] sm:$0xf]
        %v8021 = vld [vmem:[%s8003 + $0x80] sm:$0x3]
        %v8022 = vld [vmem:[%s8003 + $0x90] sm:$0xe]
        %v8023 = vld [vmem:[%s8003 + $0x94] sm:$0xf]
        %v8024 = vld [vmem:[%s8003 + $0x98] sm:$0x3]
        %v8025 = vld [vmem:[%s8003 + $0xa8] sm:$0xe]
        %v8026 = vld [vmem:[%s8003 + $0xac] sm:$0xf]
        %v8027 = vld [vmem:[%s8003 + $0xb0] sm:$0x3]
        %v8029 = vshrl.u32 %v8004, 16
        %v8031 = vrot.slane %v8029, 5
        %v8032 = vshll.u32 %v8004, 16
        %v8034 = vrot.slane %v8032, 6
        %v8035 = vor.u32 %v8031, %v8034
        %v8036 = vrot.slane %v8035, 4
        %v8038 = vshrl.u32 %v8005, 16
        %v8040 = vrot.slane %v8038, 5
        %v8041 = vshll.u32 %v8005, 16
        %v8043 = vrot.slane %v8041, 6
        %v8044 = vor.u32 %v8040, %v8043
        %v8045 = vsel %vm935, %v8036, %v8044
        %v8046 = vrot.slane %v8044, 4
        %v8048 = vshrl.u32 %v8006, 16
        %v8050 = vrot.slane %v8048, 5
        %v8051 = vshll.u32 %v8006, 16
        %v8053 = vrot.slane %v8051, 6
        %v8054 = vor.u32 %v8050, %v8053
        %v8055 = vsel %vm935, %v8046, %v8054
        %v8057 = vshrl.u32 %v8007, 16
        %v8059 = vrot.slane %v8057, 5
        %v8060 = vshll.u32 %v8007, 16
        %v8062 = vrot.slane %v8060, 6
        %v8063 = vor.u32 %v8059, %v8062
        %v8064 = vrot.slane %v8063, 4
        %v8066 = vshrl.u32 %v8008, 16
        %v8068 = vrot.slane %v8066, 5
        %v8069 = vshll.u32 %v8008, 16
        %v8071 = vrot.slane %v8069, 6
        %v8072 = vor.u32 %v8068, %v8071
        %v8073 = vsel %vm935, %v8064, %v8072
        %v8074 = vrot.slane %v8072, 4
        %v8076 = vshrl.u32 %v8009, 16
        %v8078 = vrot.slane %v8076, 5
        %v8079 = vshll.u32 %v8009, 16
        %v8081 = vrot.slane %v8079, 6
        %v8082 = vor.u32 %v8078, %v8081
        %v8083 = vsel %vm935, %v8074, %v8082
        %v8085 = vshrl.u32 %v8010, 16
        %v8087 = vrot.slane %v8085, 5
        %v8088 = vshll.u32 %v8010, 16
        %v8090 = vrot.slane %v8088, 6
        %v8091 = vor.u32 %v8087, %v8090
        %v8092 = vrot.slane %v8091, 4
        %v8094 = vshrl.u32 %v8011, 16
        %v8096 = vrot.slane %v8094, 5
        %v8097 = vshll.u32 %v8011, 16
        %v8099 = vrot.slane %v8097, 6
        %v8100 = vor.u32 %v8096, %v8099
        %v8101 = vsel %vm935, %v8092, %v8100
        %v8102 = vrot.slane %v8100, 4
        %v8104 = vshrl.u32 %v8012, 16
        %v8106 = vrot.slane %v8104, 5
        %v8107 = vshll.u32 %v8012, 16
        %v8109 = vrot.slane %v8107, 6
        %v8110 = vor.u32 %v8106, %v8109
        %v8111 = vsel %vm935, %v8102, %v8110
        %v8113 = vshrl.u32 %v8013, 16
        %v8115 = vrot.slane %v8113, 5
        %v8116 = vshll.u32 %v8013, 16
        %v8118 = vrot.slane %v8116, 6
        %v8119 = vor.u32 %v8115, %v8118
        %v8120 = vrot.slane %v8119, 4
        %v8122 = vshrl.u32 %v8014, 16
        %v8124 = vrot.slane %v8122, 5
        %v8125 = vshll.u32 %v8014, 16
        %v8127 = vrot.slane %v8125, 6
        %v8128 = vor.u32 %v8124, %v8127
        %v8129 = vsel %vm935, %v8120, %v8128
        %v8130 = vrot.slane %v8128, 4
        %v8132 = vshrl.u32 %v8015, 16
        %v8134 = vrot.slane %v8132, 5
        %v8135 = vshll.u32 %v8015, 16
        %v8137 = vrot.slane %v8135, 6
        %v8138 = vor.u32 %v8134, %v8137
        %v8139 = vsel %vm935, %v8130, %v8138
        %v8141 = vshrl.u32 %v8016, 16
        %v8143 = vrot.slane %v8141, 5
        %v8144 = vshll.u32 %v8016, 16
        %v8146 = vrot.slane %v8144, 6
        %v8147 = vor.u32 %v8143, %v8146
        %v8148 = vrot.slane %v8147, 4
        %v8150 = vshrl.u32 %v8017, 16
        %v8152 = vrot.slane %v8150, 5
        %v8153 = vshll.u32 %v8017, 16
        %v8155 = vrot.slane %v8153, 6
        %v8156 = vor.u32 %v8152, %v8155
        %v8157 = vsel %vm935, %v8148, %v8156
        %v8158 = vrot.slane %v8156, 4
        %v8160 = vshrl.u32 %v8018, 16
        %v8162 = vrot.slane %v8160, 5
        %v8163 = vshll.u32 %v8018, 16
        %v8165 = vrot.slane %v8163, 6
        %v8166 = vor.u32 %v8162, %v8165
        %v8167 = vsel %vm935, %v8158, %v8166
        %v8169 = vshrl.u32 %v8019, 16
        %v8171 = vrot.slane %v8169, 5
        %v8172 = vshll.u32 %v8019, 16
        %v8174 = vrot.slane %v8172, 6
        %v8175 = vor.u32 %v8171, %v8174
        %v8176 = vrot.slane %v8175, 4
        %v8178 = vshrl.u32 %v8020, 16
        %v8180 = vrot.slane %v8178, 5
        %v8181 = vshll.u32 %v8020, 16
        %v8183 = vrot.slane %v8181, 6
        %v8184 = vor.u32 %v8180, %v8183
        %v8185 = vsel %vm935, %v8176, %v8184
        %v8186 = vrot.slane %v8184, 4
        %v8188 = vshrl.u32 %v8021, 16
        %v8190 = vrot.slane %v8188, 5
        %v8191 = vshll.u32 %v8021, 16
        %v8193 = vrot.slane %v8191, 6
        %v8194 = vor.u32 %v8190, %v8193
        %v8195 = vsel %vm935, %v8186, %v8194
        %v8197 = vshrl.u32 %v8022, 16
        %v8199 = vrot.slane %v8197, 5
        %v8200 = vshll.u32 %v8022, 16
        %v8202 = vrot.slane %v8200, 6
        %v8203 = vor.u32 %v8199, %v8202
        %v8204 = vrot.slane %v8203, 4
        %v8206 = vshrl.u32 %v8023, 16
        %v8208 = vrot.slane %v8206, 5
        %v8209 = vshll.u32 %v8023, 16
        %v8211 = vrot.slane %v8209, 6
        %v8212 = vor.u32 %v8208, %v8211
        %v8213 = vsel %vm935, %v8204, %v8212
        %v8214 = vrot.slane %v8212, 4
        %v8216 = vshrl.u32 %v8024, 16
        %v8218 = vrot.slane %v8216, 5
        %v8219 = vshll.u32 %v8024, 16
        %v8221 = vrot.slane %v8219, 6
        %v8222 = vor.u32 %v8218, %v8221
        %v8223 = vsel %vm935, %v8214, %v8222
        %v8225 = vshrl.u32 %v8025, 16
        %v8227 = vrot.slane %v8225, 5
        %v8228 = vshll.u32 %v8025, 16
        %v8230 = vrot.slane %v8228, 6
        %v8231 = vor.u32 %v8227, %v8230
        %v8232 = vrot.slane %v8231, 4
        %v8234 = vshrl.u32 %v8026, 16
        %v8236 = vrot.slane %v8234, 5
        %v8237 = vshll.u32 %v8026, 16
        %v8239 = vrot.slane %v8237, 6
        %v8240 = vor.u32 %v8236, %v8239
        %v8241 = vsel %vm935, %v8232, %v8240
        %v8242 = vrot.slane %v8240, 4
        %v8244 = vshrl.u32 %v8027, 16
        %v8246 = vrot.slane %v8244, 5
        %v8247 = vshll.u32 %v8027, 16
        %v8249 = vrot.slane %v8247, 6
        %v8250 = vor.u32 %v8246, %v8249
        %v8251 = vsel %vm935, %v8242, %v8250
        %v8252 = vunpack.c.l.b16 %v7380
        %v8253 = vunpack.c.l.b16 %v7389
        %v8254 = vunpack.c.l.b16 %v7402
        %v8255 = vunpack.c.l.b16 %v7411
        %v8256 = vunpack.c.l.b16 %v7424
        %v8257 = vunpack.c.l.b16 %v7433
        %v8258 = vunpack.c.l.b16 %v7446
        %v8259 = vunpack.c.l.b16 %v7455
        %v8260 = vunpack.c.l.b16 %v7468
        %v8261 = vunpack.c.l.b16 %v7477
        %v8262 = vunpack.c.l.b16 %v7490
        %v8263 = vunpack.c.l.b16 %v7499
        %v8264 = vunpack.c.l.b16 %v7512
        %v8265 = vunpack.c.l.b16 %v7521
        %v8266 = vunpack.c.l.b16 %v7534
        %v8267 = vunpack.c.l.b16 %v7543
        %v8268 = vpack.c.b16 %v8253, %v8252
        %v8269 = vpack.c.b16 %v8255, %v8254
        %v8270 = vpack.c.b16 %v8257, %v8256
        %v8271 = vpack.c.b16 %v8259, %v8258
        %v8272 = vpack.c.b16 %v8261, %v8260
        %v8273 = vpack.c.b16 %v8263, %v8262
        %v8274 = vpack.c.b16 %v8265, %v8264
        %v8275 = vpack.c.b16 %v8267, %v8266
        %v8284 = vunpack.c.l.b16 %v7589
        %v8285 = vunpack.c.l.b16 %v7599
        %v8286 = vunpack.c.l.b16 %v7617
        %v8287 = vunpack.c.l.b16 %v7627
        %v8288 = vunpack.c.l.b16 %v7645
        %v8289 = vunpack.c.l.b16 %v7655
        %v8290 = vunpack.c.l.b16 %v7673
        %v8291 = vunpack.c.l.b16 %v7683
        %v8292 = vunpack.c.l.b16 %v7701
        %v8293 = vunpack.c.l.b16 %v7711
        %v8294 = vunpack.c.l.b16 %v7729
        %v8295 = vunpack.c.l.b16 %v7739
        %v8296 = vunpack.c.l.b16 %v7757
        %v8297 = vunpack.c.l.b16 %v7767
        %v8298 = vunpack.c.l.b16 %v7785
        %v8299 = vunpack.c.l.b16 %v7795
        %v8300 = vpack.c.b16 %v8285, %v8284
        %v8301 = vpack.c.b16 %v8287, %v8286
        %v8302 = vpack.c.b16 %v8289, %v8288
        %v8303 = vpack.c.b16 %v8291, %v8290
        %v8304 = vpack.c.b16 %v8293, %v8292
        %v8305 = vpack.c.b16 %v8295, %v8294
        %v8306 = vpack.c.b16 %v8297, %v8296
        %v8307 = vpack.c.b16 %v8299, %v8298
        %v8316 = vunpack.c.l.b16 %v7836
        %v8317 = vunpack.c.l.b16 %v7845
        %v8318 = vunpack.c.l.b16 %v7858
        %v8319 = vunpack.c.l.b16 %v7867
        %v8320 = vunpack.c.l.b16 %v7880
        %v8321 = vunpack.c.l.b16 %v7889
        %v8322 = vunpack.c.l.b16 %v7902
        %v8323 = vunpack.c.l.b16 %v7911
        %v8324 = vunpack.c.l.b16 %v7924
        %v8325 = vunpack.c.l.b16 %v7933
        %v8326 = vunpack.c.l.b16 %v7946
        %v8327 = vunpack.c.l.b16 %v7955
        %v8328 = vunpack.c.l.b16 %v7968
        %v8329 = vunpack.c.l.b16 %v7977
        %v8330 = vunpack.c.l.b16 %v7990
        %v8331 = vunpack.c.l.b16 %v7999
        %v8332 = vpack.c.b16 %v8317, %v8316
        %v8333 = vpack.c.b16 %v8319, %v8318
        %v8334 = vpack.c.b16 %v8321, %v8320
        %v8335 = vpack.c.b16 %v8323, %v8322
        %v8336 = vpack.c.b16 %v8325, %v8324
        %v8337 = vpack.c.b16 %v8327, %v8326
        %v8338 = vpack.c.b16 %v8329, %v8328
        %v8339 = vpack.c.b16 %v8331, %v8330
        %v8348 = vunpack.c.l.b16 %v8045
        %v8349 = vunpack.c.l.b16 %v8055
        %v8350 = vunpack.c.l.b16 %v8073
        %v8351 = vunpack.c.l.b16 %v8083
        %v8352 = vunpack.c.l.b16 %v8101
        %v8353 = vunpack.c.l.b16 %v8111
        %v8354 = vunpack.c.l.b16 %v8129
        %v8355 = vunpack.c.l.b16 %v8139
        %v8356 = vunpack.c.l.b16 %v8157
        %v8357 = vunpack.c.l.b16 %v8167
        %v8358 = vunpack.c.l.b16 %v8185
        %v8359 = vunpack.c.l.b16 %v8195
        %v8360 = vunpack.c.l.b16 %v8213
        %v8361 = vunpack.c.l.b16 %v8223
        %v8362 = vunpack.c.l.b16 %v8241
        %v8363 = vunpack.c.l.b16 %v8251
        %v8364 = vpack.c.b16 %v8349, %v8348
        %v8365 = vpack.c.b16 %v8351, %v8350
        %v8366 = vpack.c.b16 %v8353, %v8352
        %v8367 = vpack.c.b16 %v8355, %v8354
        %v8368 = vpack.c.b16 %v8357, %v8356
        %v8369 = vpack.c.b16 %v8359, %v8358
        %v8370 = vpack.c.b16 %v8361, %v8360
        %v8371 = vpack.c.b16 %v8363, %v8362
        %s8380 = scalar_lea.vmem %s3, 1280
        %v8381 = vld [vmem:[%s8380] sm:$0xf]
        %v8382 = vld [vmem:[%s8380 + $0x4] sm:$0xf]
        %v8383 = vld [vmem:[%s8380 + $0x8] sm:$0xf]
        %v8384 = vld [vmem:[%s8380 + $0xc] sm:$0xf]
        %v8385 = vld [vmem:[%s8380 + $0x10] sm:$0xf]
        %v8386 = vld [vmem:[%s8380 + $0x14] sm:$0xf]
        %v8387 = vld [vmem:[%s8380 + $0x18] sm:$0xf]
        %v8388 = vld [vmem:[%s8380 + $0x1c] sm:$0xf]
        %v8389 = vld [vmem:[%s8380 + $0x20] sm:$0xf]
        %v8390 = vld [vmem:[%s8380 + $0x24] sm:$0xf]
        %v8391 = vld [vmem:[%s8380 + $0x28] sm:$0xf]
        %v8392 = vld [vmem:[%s8380 + $0x2c] sm:$0xf]
        %v8393 = vld [vmem:[%s8380 + $0x30] sm:$0xf]
        %v8394 = vld [vmem:[%s8380 + $0x34] sm:$0xf]
        %v8395 = vld [vmem:[%s8380 + $0x38] sm:$0xf]
        %v8396 = vld [vmem:[%s8380 + $0x3c] sm:$0xf]
        %v8397 = vld [vmem:[%s8380 + $0x40] sm:$0xf]
        %v8398 = vld [vmem:[%s8380 + $0x44] sm:$0xf]
        %v8399 = vld [vmem:[%s8380 + $0x48] sm:$0xf]
        %v8400 = vld [vmem:[%s8380 + $0x4c] sm:$0xf]
        %v8401 = vld [vmem:[%s8380 + $0x50] sm:$0xf]
        %v8402 = vld [vmem:[%s8380 + $0x54] sm:$0xf]
        %v8403 = vld [vmem:[%s8380 + $0x58] sm:$0xf]
        %v8404 = vld [vmem:[%s8380 + $0x5c] sm:$0xf]
        %v8405 = vld [vmem:[%s8380 + $0x60] sm:$0xf]
        %v8406 = vld [vmem:[%s8380 + $0x64] sm:$0xf]
        %v8407 = vld [vmem:[%s8380 + $0x68] sm:$0xf]
        %v8408 = vld [vmem:[%s8380 + $0x6c] sm:$0xf]
        %v8409 = vld [vmem:[%s8380 + $0x70] sm:$0xf]
        %v8410 = vld [vmem:[%s8380 + $0x74] sm:$0xf]
        %v8411 = vld [vmem:[%s8380 + $0x78] sm:$0xf]
        %v8412 = vld [vmem:[%s8380 + $0x7c] sm:$0xf]
        %v8413 = vld [vmem:[%s8380 + $0x80] sm:$0xf]
        %v8414 = vld [vmem:[%s8380 + $0x84] sm:$0xf]
        %v8415 = vld [vmem:[%s8380 + $0x88] sm:$0xf]
        %v8416 = vld [vmem:[%s8380 + $0x8c] sm:$0xf]
        %v8417 = vld [vmem:[%s8380 + $0x90] sm:$0xf]
        %v8418 = vld [vmem:[%s8380 + $0x94] sm:$0xf]
        %v8419 = vld [vmem:[%s8380 + $0x98] sm:$0xf]
        %v8420 = vld [vmem:[%s8380 + $0x9c] sm:$0xf]
        %v8421 = vld [vmem:[%s8380 + $0xa0] sm:$0xf]
        %v8422 = vld [vmem:[%s8380 + $0xa4] sm:$0xf]
        %v8423 = vld [vmem:[%s8380 + $0xa8] sm:$0xf]
        %v8424 = vld [vmem:[%s8380 + $0xac] sm:$0xf]
        %v8425 = vld [vmem:[%s8380 + $0xb0] sm:$0xf]
        %v8426 = vld [vmem:[%s8380 + $0xb4] sm:$0xf]
        %v8427 = vld [vmem:[%s8380 + $0xb8] sm:$0xf]
        %v8428 = vld [vmem:[%s8380 + $0xbc] sm:$0xf]
        %v8429 = vld [vmem:[%s8380 + $0xc0] sm:$0xf]
        %v8430 = vld [vmem:[%s8380 + $0xc4] sm:$0xf]
        %v8431 = vld [vmem:[%s8380 + $0xc8] sm:$0xf]
        %v8432 = vld [vmem:[%s8380 + $0xcc] sm:$0xf]
        %v8433 = vld [vmem:[%s8380 + $0xd0] sm:$0xf]
        %v8434 = vld [vmem:[%s8380 + $0xd4] sm:$0xf]
        %v8435 = vld [vmem:[%s8380 + $0xd8] sm:$0xf]
        %v8436 = vld [vmem:[%s8380 + $0xdc] sm:$0xf]
        %v8437 = vld [vmem:[%s8380 + $0xe0] sm:$0xf]
        %v8438 = vld [vmem:[%s8380 + $0xe4] sm:$0xf]
        %v8439 = vld [vmem:[%s8380 + $0xe8] sm:$0xf]
        %v8440 = vld [vmem:[%s8380 + $0xec] sm:$0xf]
        %v8441 = vld [vmem:[%s8380 + $0xf0] sm:$0xf]
        %v8442 = vld [vmem:[%s8380 + $0xf4] sm:$0xf]
        %v8443 = vld [vmem:[%s8380 + $0xf8] sm:$0xf]
        %v8444 = vld [vmem:[%s8380 + $0xfc] sm:$0xf]
        %v8509 = vunpack.c.l.b16 %v8381
        %v8510 = vunpack.c.l.b16 %v8382
        %v8511 = vunpack.c.l.b16 %v8383
        %v8512 = vunpack.c.l.b16 %v8384
        %v8513 = vunpack.c.l.b16 %v8385
        %v8514 = vunpack.c.l.b16 %v8386
        %v8515 = vunpack.c.l.b16 %v8387
        %v8516 = vunpack.c.l.b16 %v8388
        %v8517 = vunpack.c.l.b16 %v8389
        %v8518 = vunpack.c.l.b16 %v8390
        %v8519 = vunpack.c.l.b16 %v8391
        %v8520 = vunpack.c.l.b16 %v8392
        %v8521 = vunpack.c.l.b16 %v8393
        %v8522 = vunpack.c.l.b16 %v8394
        %v8523 = vunpack.c.l.b16 %v8395
        %v8524 = vunpack.c.l.b16 %v8396
        %v8525 = vunpack.c.l.b16 %v8397
        %v8526 = vunpack.c.l.b16 %v8398
        %v8527 = vunpack.c.l.b16 %v8399
        %v8528 = vunpack.c.l.b16 %v8400
        %v8529 = vunpack.c.l.b16 %v8401
        %v8530 = vunpack.c.l.b16 %v8402
        %v8531 = vunpack.c.l.b16 %v8403
        %v8532 = vunpack.c.l.b16 %v8404
        %v8533 = vunpack.c.l.b16 %v8405
        %v8534 = vunpack.c.l.b16 %v8406
        %v8535 = vunpack.c.l.b16 %v8407
        %v8536 = vunpack.c.l.b16 %v8408
        %v8537 = vunpack.c.l.b16 %v8409
        %v8538 = vunpack.c.l.b16 %v8410
        %v8539 = vunpack.c.l.b16 %v8411
        %v8540 = vunpack.c.l.b16 %v8412
        %v8541 = vunpack.c.l.b16 %v8413
        %v8542 = vunpack.c.l.b16 %v8414
        %v8543 = vunpack.c.l.b16 %v8415
        %v8544 = vunpack.c.l.b16 %v8416
        %v8545 = vunpack.c.l.b16 %v8417
        %v8546 = vunpack.c.l.b16 %v8418
        %v8547 = vunpack.c.l.b16 %v8419
        %v8548 = vunpack.c.l.b16 %v8420
        %v8549 = vunpack.c.l.b16 %v8421
        %v8550 = vunpack.c.l.b16 %v8422
        %v8551 = vunpack.c.l.b16 %v8423
        %v8552 = vunpack.c.l.b16 %v8424
        %v8553 = vunpack.c.l.b16 %v8425
        %v8554 = vunpack.c.l.b16 %v8426
        %v8555 = vunpack.c.l.b16 %v8427
        %v8556 = vunpack.c.l.b16 %v8428
        %v8557 = vunpack.c.l.b16 %v8429
        %v8558 = vunpack.c.l.b16 %v8430
        %v8559 = vunpack.c.l.b16 %v8431
        %v8560 = vunpack.c.l.b16 %v8432
        %v8561 = vunpack.c.l.b16 %v8433
        %v8562 = vunpack.c.l.b16 %v8434
        %v8563 = vunpack.c.l.b16 %v8435
        %v8564 = vunpack.c.l.b16 %v8436
        %v8565 = vunpack.c.l.b16 %v8437
        %v8566 = vunpack.c.l.b16 %v8438
        %v8567 = vunpack.c.l.b16 %v8439
        %v8568 = vunpack.c.l.b16 %v8440
        %v8569 = vunpack.c.l.b16 %v8441
        %v8570 = vunpack.c.l.b16 %v8442
        %v8571 = vunpack.c.l.b16 %v8443
        %v8572 = vunpack.c.l.b16 %v8444
        %v8573 = vpack.c.b16 %v8510, %v8509
        %v8574 = vpack.c.b16 %v8512, %v8511
        %v8575 = vpack.c.b16 %v8514, %v8513
        %v8576 = vpack.c.b16 %v8516, %v8515
        %v8577 = vpack.c.b16 %v8518, %v8517
        %v8578 = vpack.c.b16 %v8520, %v8519
        %v8579 = vpack.c.b16 %v8522, %v8521
        %v8580 = vpack.c.b16 %v8524, %v8523
        %v8581 = vpack.c.b16 %v8526, %v8525
        %v8582 = vpack.c.b16 %v8528, %v8527
        %v8583 = vpack.c.b16 %v8530, %v8529
        %v8584 = vpack.c.b16 %v8532, %v8531
        %v8585 = vpack.c.b16 %v8534, %v8533
        %v8586 = vpack.c.b16 %v8536, %v8535
        %v8587 = vpack.c.b16 %v8538, %v8537
        %v8588 = vpack.c.b16 %v8540, %v8539
        %v8589 = vpack.c.b16 %v8542, %v8541
        %v8590 = vpack.c.b16 %v8544, %v8543
        %v8591 = vpack.c.b16 %v8546, %v8545
        %v8592 = vpack.c.b16 %v8548, %v8547
        %v8593 = vpack.c.b16 %v8550, %v8549
        %v8594 = vpack.c.b16 %v8552, %v8551
        %v8595 = vpack.c.b16 %v8554, %v8553
        %v8596 = vpack.c.b16 %v8556, %v8555
        %v8597 = vpack.c.b16 %v8558, %v8557
        %v8598 = vpack.c.b16 %v8560, %v8559
        %v8599 = vpack.c.b16 %v8562, %v8561
        %v8600 = vpack.c.b16 %v8564, %v8563
        %v8601 = vpack.c.b16 %v8566, %v8565
        %v8602 = vpack.c.b16 %v8568, %v8567
        %v8603 = vpack.c.b16 %v8570, %v8569
        %v8604 = vpack.c.b16 %v8572, %v8571
        %8637 = vmatprep.subr.bf16.mxu0 0
        %8638 = vmatpush1.bf16.msra.mxu0 %v8580
        %8639 = vmatprep.subr.bf16.mxu0 0
        %8640 = vmatpush1.bf16.msra.mxu0 %v8579
        %8641 = vmatprep.subr.bf16.mxu0 0
        %8642 = vmatpush1.bf16.msra.mxu0 %v8578
        %8643 = vmatprep.subr.bf16.mxu0 0
        %8644 = vmatpush1.bf16.msra.mxu0 %v8577
        %8645 = vmatprep.subr.bf16.mxu0 0
        %8646 = vmatpush1.bf16.msra.mxu0 %v8576
        %8647 = vmatprep.subr.bf16.mxu0 0
        %8648 = vmatpush1.bf16.msra.mxu0 %v8575
        %8649 = vmatprep.subr.bf16.mxu0 0
        %8650 = vmatpush1.bf16.msra.mxu0 %v8574
        %8651 = vmatprep.subr.bf16.mxu0 0
        %8652 = vmatpush1.bf16.msra.mxu0 %v8573
        %8653 = vmatprep.subr.bf16.mxu0 0
        %8654 = vmatpush2.bf16.msra.mxu0 %v8588
        %8655 = vmatprep.subr.bf16.mxu0 0
        %8656 = vmatpush2.bf16.msra.mxu0 %v8587
        %8657 = vmatprep.subr.bf16.mxu0 0
        %8658 = vmatpush2.bf16.msra.mxu0 %v8586
        %8659 = vmatprep.subr.bf16.mxu0 0
        %8660 = vmatpush2.bf16.msra.mxu0 %v8585
        %8661 = vmatprep.subr.bf16.mxu0 0
        %8662 = vmatpush2.bf16.msra.mxu0 %v8584
        %8663 = vmatprep.subr.bf16.mxu0 0
        %8664 = vmatpush2.bf16.msra.mxu0 %v8583
        %8665 = vmatprep.subr.bf16.mxu0 0
        %8666 = vmatpush2.bf16.msra.mxu0 %v8582
        %8667 = vmatprep.subr.bf16.mxu0 0
        %8668 = vmatpush2.bf16.msra.mxu0 %v8581
        %8669 = vmatprep.mubr.bf16.mxu0 %v8300
        %8670 = vmatmul.mubr.bf16.gmra.mxu0 %v8268
        %v8671 = vpop.f32.mrf.mxu0
        %v8672 = vadd.f32 0.0, %v8671
        %v8673 = vpop.f32.mrf.mxu0
        %v8674 = vpop.f32.mrf.mxu0
        %v8675 = vadd.f32 0.0, %v8674
        %v8676 = vpop.f32.mrf.mxu0
        %8677 = vmatprep.mubr.bf16.mxu0 %v8301
        %8678 = vmatmul.mubr.bf16.gmra.mxu0 %v8269
        %v8679 = vpop.f32.mrf.mxu0
        %v8680 = vadd.f32 0.0, %v8679
        %v8681 = vpop.f32.mrf.mxu0
        %v8682 = vpop.f32.mrf.mxu0
        %v8683 = vadd.f32 0.0, %v8682
        %v8684 = vpop.f32.mrf.mxu0
        %8685 = vmatprep.mubr.bf16.mxu0 %v8302
        %8686 = vmatmul.mubr.bf16.gmra.mxu0 %v8270
        %v8687 = vpop.f32.mrf.mxu0
        %v8688 = vadd.f32 0.0, %v8687
        %v8689 = vpop.f32.mrf.mxu0
        %v8690 = vpop.f32.mrf.mxu0
        %v8691 = vadd.f32 0.0, %v8690
        %v8692 = vpop.f32.mrf.mxu0
        %8693 = vmatprep.mubr.bf16.mxu0 %v8303
        %8694 = vmatmul.mubr.bf16.gmra.mxu0 %v8271
        %v8695 = vpop.f32.mrf.mxu0
        %v8696 = vadd.f32 0.0, %v8695
        %v8697 = vpop.f32.mrf.mxu0
        %v8698 = vpop.f32.mrf.mxu0
        %v8699 = vadd.f32 0.0, %v8698
        %v8700 = vpop.f32.mrf.mxu0
        %8701 = vmatprep.mubr.bf16.mxu0 %v8304
        %8702 = vmatmul.mubr.bf16.gmra.mxu0 %v8272
        %v8703 = vpop.f32.mrf.mxu0
        %v8704 = vadd.f32 0.0, %v8703
        %v8705 = vpop.f32.mrf.mxu0
        %v8706 = vpop.f32.mrf.mxu0
        %v8707 = vadd.f32 0.0, %v8706
        %v8708 = vpop.f32.mrf.mxu0
        %8709 = vmatprep.mubr.bf16.mxu0 %v8305
        %8710 = vmatmul.mubr.bf16.gmra.mxu0 %v8273
        %v8711 = vpop.f32.mrf.mxu0
        %v8712 = vadd.f32 0.0, %v8711
        %v8713 = vpop.f32.mrf.mxu0
        %v8714 = vpop.f32.mrf.mxu0
        %v8715 = vadd.f32 0.0, %v8714
        %v8716 = vpop.f32.mrf.mxu0
        %8717 = vmatprep.mubr.bf16.mxu0 %v8306
        %8718 = vmatmul.mubr.bf16.gmra.mxu0 %v8274
        %v8719 = vpop.f32.mrf.mxu0
        %v8720 = vadd.f32 0.0, %v8719
        %v8721 = vpop.f32.mrf.mxu0
        %v8722 = vpop.f32.mrf.mxu0
        %v8723 = vadd.f32 0.0, %v8722
        %v8724 = vpop.f32.mrf.mxu0
        %8725 = vmatprep.mubr.bf16.mxu0 %v8307
        %8726 = vmatmul.mubr.bf16.gmra.mxu0 %v8275
        %v8727 = vpop.f32.mrf.mxu0
        %v8728 = vadd.f32 0.0, %v8727
        %v8729 = vpop.f32.mrf.mxu0
        %v8730 = vpop.f32.mrf.mxu0
        %v8731 = vadd.f32 0.0, %v8730
        %v8732 = vpop.f32.mrf.mxu0
        %8733 = vdwg.mxu0
        %8734 = vmatprep.subr.bf16.mxu0 0
        %8735 = vmatpush1.bf16.msra.mxu0 %v8596
        %8736 = vmatprep.subr.bf16.mxu0 0
        %8737 = vmatpush1.bf16.msra.mxu0 %v8595
        %8738 = vmatprep.subr.bf16.mxu0 0
        %8739 = vmatpush1.bf16.msra.mxu0 %v8594
        %8740 = vmatprep.subr.bf16.mxu0 0
        %8741 = vmatpush1.bf16.msra.mxu0 %v8593
        %8742 = vmatprep.subr.bf16.mxu0 0
        %8743 = vmatpush1.bf16.msra.mxu0 %v8592
        %8744 = vmatprep.subr.bf16.mxu0 0
        %8745 = vmatpush1.bf16.msra.mxu0 %v8591
        %8746 = vmatprep.subr.bf16.mxu0 0
        %8747 = vmatpush1.bf16.msra.mxu0 %v8590
        %8748 = vmatprep.subr.bf16.mxu0 0
        %8749 = vmatpush1.bf16.msra.mxu0 %v8589
        %8750 = vmatprep.subr.bf16.mxu0 0
        %8751 = vmatpush2.bf16.msra.mxu0 %v8604
        %8752 = vmatprep.subr.bf16.mxu0 0
        %8753 = vmatpush2.bf16.msra.mxu0 %v8603
        %8754 = vmatprep.subr.bf16.mxu0 0
        %8755 = vmatpush2.bf16.msra.mxu0 %v8602
        %8756 = vmatprep.subr.bf16.mxu0 0
        %8757 = vmatpush2.bf16.msra.mxu0 %v8601
        %8758 = vmatprep.subr.bf16.mxu0 0
        %8759 = vmatpush2.bf16.msra.mxu0 %v8600
        %8760 = vmatprep.subr.bf16.mxu0 0
        %8761 = vmatpush2.bf16.msra.mxu0 %v8599
        %8762 = vmatprep.subr.bf16.mxu0 0
        %8763 = vmatpush2.bf16.msra.mxu0 %v8598
        %8764 = vmatprep.subr.bf16.mxu0 0
        %8765 = vmatpush2.bf16.msra.mxu0 %v8597
        %8766 = vmatprep.mubr.bf16.mxu0 %v8364
        %8767 = vmatmul.mubr.bf16.gmra.mxu0 %v8332
        %v8768 = vpop.f32.mrf.mxu0
        %v8769 = vadd.f32 %v8672, %v8768
        %v8770 = vpop.f32.mrf.mxu0
        %v8771 = vpop.f32.mrf.mxu0
        %v8772 = vadd.f32 %v8675, %v8771
        %v8773 = vpop.f32.mrf.mxu0
        %8774 = vmatprep.mubr.bf16.mxu0 %v8365
        %8775 = vmatmul.mubr.bf16.gmra.mxu0 %v8333
        %v8776 = vpop.f32.mrf.mxu0
        %v8777 = vadd.f32 %v8680, %v8776
        %v8778 = vpop.f32.mrf.mxu0
        %v8779 = vpop.f32.mrf.mxu0
        %v8780 = vadd.f32 %v8683, %v8779
        %v8781 = vpop.f32.mrf.mxu0
        %8782 = vmatprep.mubr.bf16.mxu0 %v8366
        %8783 = vmatmul.mubr.bf16.gmra.mxu0 %v8334
        %v8784 = vpop.f32.mrf.mxu0
        %v8785 = vadd.f32 %v8688, %v8784
        %v8786 = vpop.f32.mrf.mxu0
        %v8787 = vpop.f32.mrf.mxu0
        %v8788 = vadd.f32 %v8691, %v8787
        %v8789 = vpop.f32.mrf.mxu0
        %8790 = vmatprep.mubr.bf16.mxu0 %v8367
        %8791 = vmatmul.mubr.bf16.gmra.mxu0 %v8335
        %v8792 = vpop.f32.mrf.mxu0
        %v8793 = vadd.f32 %v8696, %v8792
        %v8794 = vpop.f32.mrf.mxu0
        %v8795 = vpop.f32.mrf.mxu0
        %v8796 = vadd.f32 %v8699, %v8795
        %v8797 = vpop.f32.mrf.mxu0
        %8798 = vmatprep.mubr.bf16.mxu0 %v8368
        %8799 = vmatmul.mubr.bf16.gmra.mxu0 %v8336
        %v8800 = vpop.f32.mrf.mxu0
        %v8801 = vadd.f32 %v8704, %v8800
        %v8802 = vpop.f32.mrf.mxu0
        %v8803 = vpop.f32.mrf.mxu0
        %v8804 = vadd.f32 %v8707, %v8803
        %v8805 = vpop.f32.mrf.mxu0
        %8806 = vmatprep.mubr.bf16.mxu0 %v8369
        %8807 = vmatmul.mubr.bf16.gmra.mxu0 %v8337
        %v8808 = vpop.f32.mrf.mxu0
        %v8809 = vadd.f32 %v8712, %v8808
        %v8810 = vpop.f32.mrf.mxu0
        %v8811 = vpop.f32.mrf.mxu0
        %v8812 = vadd.f32 %v8715, %v8811
        %v8813 = vpop.f32.mrf.mxu0
        %8814 = vmatprep.mubr.bf16.mxu0 %v8370
        %8815 = vmatmul.mubr.bf16.gmra.mxu0 %v8338
        %v8816 = vpop.f32.mrf.mxu0
        %v8817 = vadd.f32 %v8720, %v8816
        %v8818 = vpop.f32.mrf.mxu0
        %v8819 = vpop.f32.mrf.mxu0
        %v8820 = vadd.f32 %v8723, %v8819
        %v8821 = vpop.f32.mrf.mxu0
        %8822 = vmatprep.mubr.bf16.mxu0 %v8371
        %8823 = vmatmul.mubr.bf16.gmra.mxu0 %v8339
        %v8824 = vpop.f32.mrf.mxu0
        %v8825 = vadd.f32 %v8728, %v8824
        %v8826 = vpop.f32.mrf.mxu0
        %v8827 = vpop.f32.mrf.mxu0
        %v8828 = vadd.f32 %v8731, %v8827
        %v8829 = vpop.f32.mrf.mxu0
        %8830 = vdwg.mxu0
        %v8831 = vadd.f32 %v7324, %v8769
        %v8832 = vadd.f32 %v7325, %v8772
        %v8833 = vadd.f32 %v7326, %v8777
        %v8834 = vadd.f32 %v7327, %v8780
        %v8835 = vadd.f32 %v7328, %v8785
        %v8836 = vadd.f32 %v7329, %v8788
        %v8837 = vadd.f32 %v7330, %v8793
        %v8838 = vadd.f32 %v7331, %v8796
        %v8839 = vadd.f32 %v7332, %v8801
        %v8840 = vadd.f32 %v7333, %v8804
        %v8841 = vadd.f32 %v7334, %v8809
        %v8842 = vadd.f32 %v7335, %v8812
        %v8843 = vadd.f32 %v7336, %v8817
        %v8844 = vadd.f32 %v7337, %v8820
        %v8845 = vadd.f32 %v7338, %v8825
        %v8846 = vadd.f32 %v7339, %v8828
        %v8847 = vld [vmem:[%s7547 + $0xc] sm:$0xf]
        %v8848 = vld [vmem:[%s7547 + $0x24] sm:$0xf]
        %v8849 = vld [vmem:[%s7547 + $0x3c] sm:$0xf]
        %v8850 = vld [vmem:[%s7547 + $0x54] sm:$0xf]
        %v8851 = vld [vmem:[%s7547 + $0x6c] sm:$0xf]
        %v8852 = vld [vmem:[%s7547 + $0x84] sm:$0xf]
        %v8853 = vld [vmem:[%s7547 + $0x9c] sm:$0xf]
        %v8854 = vld [vmem:[%s7547 + $0xb4] sm:$0xf]
        %v8855 = vld [vmem:[%s7799 + $0x8] sm:$0xf]
        %v8856 = vld [vmem:[%s7799 + $0xc] sm:$0xf]
        %v8857 = vld [vmem:[%s7799 + $0x20] sm:$0xf]
        %v8858 = vld [vmem:[%s7799 + $0x24] sm:$0xf]
        %v8859 = vld [vmem:[%s7799 + $0x38] sm:$0xf]
        %v8860 = vld [vmem:[%s7799 + $0x3c] sm:$0xf]
        %v8861 = vld [vmem:[%s7799 + $0x50] sm:$0xf]
        %v8862 = vld [vmem:[%s7799 + $0x54] sm:$0xf]
        %v8863 = vld [vmem:[%s7799 + $0x68] sm:$0xf]
        %v8864 = vld [vmem:[%s7799 + $0x6c] sm:$0xf]
        %v8865 = vld [vmem:[%s7799 + $0x80] sm:$0xf]
        %v8866 = vld [vmem:[%s7799 + $0x84] sm:$0xf]
        %v8867 = vld [vmem:[%s7799 + $0x98] sm:$0xf]
        %v8868 = vld [vmem:[%s7799 + $0x9c] sm:$0xf]
        %v8869 = vld [vmem:[%s7799 + $0xb0] sm:$0xf]
        %v8870 = vld [vmem:[%s7799 + $0xb4] sm:$0xf]
        %v8871 = vld [vmem:[%s8003 + $0x8] sm:$0xf]
        %v8872 = vld [vmem:[%s8003 + $0xc] sm:$0xf]
        %v8873 = vld [vmem:[%s8003 + $0x20] sm:$0xf]
        %v8874 = vld [vmem:[%s8003 + $0x24] sm:$0xf]
        %v8875 = vld [vmem:[%s8003 + $0x38] sm:$0xf]
        %v8876 = vld [vmem:[%s8003 + $0x3c] sm:$0xf]
        %v8877 = vld [vmem:[%s8003 + $0x50] sm:$0xf]
        %v8878 = vld [vmem:[%s8003 + $0x54] sm:$0xf]
        %v8879 = vld [vmem:[%s8003 + $0x68] sm:$0xf]
        %v8880 = vld [vmem:[%s8003 + $0x6c] sm:$0xf]
        %v8881 = vld [vmem:[%s8003 + $0x80] sm:$0xf]
        %v8882 = vld [vmem:[%s8003 + $0x84] sm:$0xf]
        %v8883 = vld [vmem:[%s8003 + $0x98] sm:$0xf]
        %v8884 = vld [vmem:[%s8003 + $0x9c] sm:$0xf]
        %v8885 = vld [vmem:[%s8003 + $0xb0] sm:$0xf]
        %v8886 = vld [vmem:[%s8003 + $0xb4] sm:$0xf]
        %v8903 = vunpack.c.l.b16 %v7345
        %v8904 = vunpack.c.l.b16 %v7346
        %v8905 = vunpack.c.l.b16 %v7348
        %v8906 = vunpack.c.l.b16 %v7349
        %v8907 = vunpack.c.l.b16 %v7351
        %v8908 = vunpack.c.l.b16 %v7352
        %v8909 = vunpack.c.l.b16 %v7354
        %v8910 = vunpack.c.l.b16 %v7355
        %v8911 = vunpack.c.l.b16 %v7357
        %v8912 = vunpack.c.l.b16 %v7358
        %v8913 = vunpack.c.l.b16 %v7360
        %v8914 = vunpack.c.l.b16 %v7361
        %v8915 = vunpack.c.l.b16 %v7363
        %v8916 = vunpack.c.l.b16 %v7364
        %v8917 = vunpack.c.l.b16 %v7366
        %v8918 = vunpack.c.l.b16 %v7367
        %v8919 = vpack.c.b16 %v8904, %v8903
        %v8920 = vpack.c.b16 %v8906, %v8905
        %v8921 = vpack.c.b16 %v8908, %v8907
        %v8922 = vpack.c.b16 %v8910, %v8909
        %v8923 = vpack.c.b16 %v8912, %v8911
        %v8924 = vpack.c.b16 %v8914, %v8913
        %v8925 = vpack.c.b16 %v8916, %v8915
        %v8926 = vpack.c.b16 %v8918, %v8917
        %v8951 = vunpack.c.l.b16 %v7549
        %v8952 = vunpack.c.l.b16 %v8847
        %v8953 = vunpack.c.l.b16 %v7552
        %v8954 = vunpack.c.l.b16 %v8848
        %v8955 = vunpack.c.l.b16 %v7555
        %v8956 = vunpack.c.l.b16 %v8849
        %v8957 = vunpack.c.l.b16 %v7558
        %v8958 = vunpack.c.l.b16 %v8850
        %v8959 = vunpack.c.l.b16 %v7561
        %v8960 = vunpack.c.l.b16 %v8851
        %v8961 = vunpack.c.l.b16 %v7564
        %v8962 = vunpack.c.l.b16 %v8852
        %v8963 = vunpack.c.l.b16 %v7567
        %v8964 = vunpack.c.l.b16 %v8853
        %v8965 = vunpack.c.l.b16 %v7570
        %v8966 = vunpack.c.l.b16 %v8854
        %v8967 = vpack.c.b16 %v8952, %v8951
        %v8968 = vpack.c.b16 %v8954, %v8953
        %v8969 = vpack.c.b16 %v8956, %v8955
        %v8970 = vpack.c.b16 %v8958, %v8957
        %v8971 = vpack.c.b16 %v8960, %v8959
        %v8972 = vpack.c.b16 %v8962, %v8961
        %v8973 = vpack.c.b16 %v8964, %v8963
        %v8974 = vpack.c.b16 %v8966, %v8965
        %v8999 = vunpack.c.l.b16 %v8855
        %v9000 = vunpack.c.l.b16 %v8856
        %v9001 = vunpack.c.l.b16 %v8857
        %v9002 = vunpack.c.l.b16 %v8858
        %v9003 = vunpack.c.l.b16 %v8859
        %v9004 = vunpack.c.l.b16 %v8860
        %v9005 = vunpack.c.l.b16 %v8861
        %v9006 = vunpack.c.l.b16 %v8862
        %v9007 = vunpack.c.l.b16 %v8863
        %v9008 = vunpack.c.l.b16 %v8864
        %v9009 = vunpack.c.l.b16 %v8865
        %v9010 = vunpack.c.l.b16 %v8866
        %v9011 = vunpack.c.l.b16 %v8867
        %v9012 = vunpack.c.l.b16 %v8868
        %v9013 = vunpack.c.l.b16 %v8869
        %v9014 = vunpack.c.l.b16 %v8870
        %v9015 = vpack.c.b16 %v9000, %v8999
        %v9016 = vpack.c.b16 %v9002, %v9001
        %v9017 = vpack.c.b16 %v9004, %v9003
        %v9018 = vpack.c.b16 %v9006, %v9005
        %v9019 = vpack.c.b16 %v9008, %v9007
        %v9020 = vpack.c.b16 %v9010, %v9009
        %v9021 = vpack.c.b16 %v9012, %v9011
        %v9022 = vpack.c.b16 %v9014, %v9013
        %v9047 = vunpack.c.l.b16 %v8871
        %v9048 = vunpack.c.l.b16 %v8872
        %v9049 = vunpack.c.l.b16 %v8873
        %v9050 = vunpack.c.l.b16 %v8874
        %v9051 = vunpack.c.l.b16 %v8875
        %v9052 = vunpack.c.l.b16 %v8876
        %v9053 = vunpack.c.l.b16 %v8877
        %v9054 = vunpack.c.l.b16 %v8878
        %v9055 = vunpack.c.l.b16 %v8879
        %v9056 = vunpack.c.l.b16 %v8880
        %v9057 = vunpack.c.l.b16 %v8881
        %v9058 = vunpack.c.l.b16 %v8882
        %v9059 = vunpack.c.l.b16 %v8883
        %v9060 = vunpack.c.l.b16 %v8884
        %v9061 = vunpack.c.l.b16 %v8885
        %v9062 = vunpack.c.l.b16 %v8886
        %v9063 = vpack.c.b16 %v9048, %v9047
        %v9064 = vpack.c.b16 %v9050, %v9049
        %v9065 = vpack.c.b16 %v9052, %v9051
        %v9066 = vpack.c.b16 %v9054, %v9053
        %v9067 = vpack.c.b16 %v9056, %v9055
        %v9068 = vpack.c.b16 %v9058, %v9057
        %v9069 = vpack.c.b16 %v9060, %v9059
        %v9070 = vpack.c.b16 %v9062, %v9061
        %s9079 = scalar_lea.vmem %s3, 1536
        %v9080 = vld [vmem:[%s9079] sm:$0xf]
        %v9081 = vld [vmem:[%s9079 + $0x4] sm:$0xf]
        %v9082 = vld [vmem:[%s9079 + $0x8] sm:$0xf]
        %v9083 = vld [vmem:[%s9079 + $0xc] sm:$0xf]
        %v9084 = vld [vmem:[%s9079 + $0x10] sm:$0xf]
        %v9085 = vld [vmem:[%s9079 + $0x14] sm:$0xf]
        %v9086 = vld [vmem:[%s9079 + $0x18] sm:$0xf]
        %v9087 = vld [vmem:[%s9079 + $0x1c] sm:$0xf]
        %v9088 = vld [vmem:[%s9079 + $0x20] sm:$0xf]
        %v9089 = vld [vmem:[%s9079 + $0x24] sm:$0xf]
        %v9090 = vld [vmem:[%s9079 + $0x28] sm:$0xf]
        %v9091 = vld [vmem:[%s9079 + $0x2c] sm:$0xf]
        %v9092 = vld [vmem:[%s9079 + $0x30] sm:$0xf]
        %v9093 = vld [vmem:[%s9079 + $0x34] sm:$0xf]
        %v9094 = vld [vmem:[%s9079 + $0x38] sm:$0xf]
        %v9095 = vld [vmem:[%s9079 + $0x3c] sm:$0xf]
        %v9096 = vld [vmem:[%s9079 + $0x40] sm:$0xf]
        %v9097 = vld [vmem:[%s9079 + $0x44] sm:$0xf]
        %v9098 = vld [vmem:[%s9079 + $0x48] sm:$0xf]
        %v9099 = vld [vmem:[%s9079 + $0x4c] sm:$0xf]
        %v9100 = vld [vmem:[%s9079 + $0x50] sm:$0xf]
        %v9101 = vld [vmem:[%s9079 + $0x54] sm:$0xf]
        %v9102 = vld [vmem:[%s9079 + $0x58] sm:$0xf]
        %v9103 = vld [vmem:[%s9079 + $0x5c] sm:$0xf]
        %v9104 = vld [vmem:[%s9079 + $0x60] sm:$0xf]
        %v9105 = vld [vmem:[%s9079 + $0x64] sm:$0xf]
        %v9106 = vld [vmem:[%s9079 + $0x68] sm:$0xf]
        %v9107 = vld [vmem:[%s9079 + $0x6c] sm:$0xf]
        %v9108 = vld [vmem:[%s9079 + $0x70] sm:$0xf]
        %v9109 = vld [vmem:[%s9079 + $0x74] sm:$0xf]
        %v9110 = vld [vmem:[%s9079 + $0x78] sm:$0xf]
        %v9111 = vld [vmem:[%s9079 + $0x7c] sm:$0xf]
        %v9112 = vld [vmem:[%s9079 + $0x80] sm:$0xf]
        %v9113 = vld [vmem:[%s9079 + $0x84] sm:$0xf]
        %v9114 = vld [vmem:[%s9079 + $0x88] sm:$0xf]
        %v9115 = vld [vmem:[%s9079 + $0x8c] sm:$0xf]
        %v9116 = vld [vmem:[%s9079 + $0x90] sm:$0xf]
        %v9117 = vld [vmem:[%s9079 + $0x94] sm:$0xf]
        %v9118 = vld [vmem:[%s9079 + $0x98] sm:$0xf]
        %v9119 = vld [vmem:[%s9079 + $0x9c] sm:$0xf]
        %v9120 = vld [vmem:[%s9079 + $0xa0] sm:$0xf]
        %v9121 = vld [vmem:[%s9079 + $0xa4] sm:$0xf]
        %v9122 = vld [vmem:[%s9079 + $0xa8] sm:$0xf]
        %v9123 = vld [vmem:[%s9079 + $0xac] sm:$0xf]
        %v9124 = vld [vmem:[%s9079 + $0xb0] sm:$0xf]
        %v9125 = vld [vmem:[%s9079 + $0xb4] sm:$0xf]
        %v9126 = vld [vmem:[%s9079 + $0xb8] sm:$0xf]
        %v9127 = vld [vmem:[%s9079 + $0xbc] sm:$0xf]
        %v9128 = vld [vmem:[%s9079 + $0xc0] sm:$0xf]
        %v9129 = vld [vmem:[%s9079 + $0xc4] sm:$0xf]
        %v9130 = vld [vmem:[%s9079 + $0xc8] sm:$0xf]
        %v9131 = vld [vmem:[%s9079 + $0xcc] sm:$0xf]
        %v9132 = vld [vmem:[%s9079 + $0xd0] sm:$0xf]
        %v9133 = vld [vmem:[%s9079 + $0xd4] sm:$0xf]
        %v9134 = vld [vmem:[%s9079 + $0xd8] sm:$0xf]
        %v9135 = vld [vmem:[%s9079 + $0xdc] sm:$0xf]
        %v9136 = vld [vmem:[%s9079 + $0xe0] sm:$0xf]
        %v9137 = vld [vmem:[%s9079 + $0xe4] sm:$0xf]
        %v9138 = vld [vmem:[%s9079 + $0xe8] sm:$0xf]
        %v9139 = vld [vmem:[%s9079 + $0xec] sm:$0xf]
        %v9140 = vld [vmem:[%s9079 + $0xf0] sm:$0xf]
        %v9141 = vld [vmem:[%s9079 + $0xf4] sm:$0xf]
        %v9142 = vld [vmem:[%s9079 + $0xf8] sm:$0xf]
        %v9143 = vld [vmem:[%s9079 + $0xfc] sm:$0xf]
        %v9208 = vunpack.c.l.b16 %v9080
        %v9209 = vunpack.c.l.b16 %v9081
        %v9210 = vunpack.c.l.b16 %v9082
        %v9211 = vunpack.c.l.b16 %v9083
        %v9212 = vunpack.c.l.b16 %v9084
        %v9213 = vunpack.c.l.b16 %v9085
        %v9214 = vunpack.c.l.b16 %v9086
        %v9215 = vunpack.c.l.b16 %v9087
        %v9216 = vunpack.c.l.b16 %v9088
        %v9217 = vunpack.c.l.b16 %v9089
        %v9218 = vunpack.c.l.b16 %v9090
        %v9219 = vunpack.c.l.b16 %v9091
        %v9220 = vunpack.c.l.b16 %v9092
        %v9221 = vunpack.c.l.b16 %v9093
        %v9222 = vunpack.c.l.b16 %v9094
        %v9223 = vunpack.c.l.b16 %v9095
        %v9224 = vunpack.c.l.b16 %v9096
        %v9225 = vunpack.c.l.b16 %v9097
        %v9226 = vunpack.c.l.b16 %v9098
        %v9227 = vunpack.c.l.b16 %v9099
        %v9228 = vunpack.c.l.b16 %v9100
        %v9229 = vunpack.c.l.b16 %v9101
        %v9230 = vunpack.c.l.b16 %v9102
        %v9231 = vunpack.c.l.b16 %v9103
        %v9232 = vunpack.c.l.b16 %v9104
        %v9233 = vunpack.c.l.b16 %v9105
        %v9234 = vunpack.c.l.b16 %v9106
        %v9235 = vunpack.c.l.b16 %v9107
        %v9236 = vunpack.c.l.b16 %v9108
        %v9237 = vunpack.c.l.b16 %v9109
        %v9238 = vunpack.c.l.b16 %v9110
        %v9239 = vunpack.c.l.b16 %v9111
        %v9240 = vunpack.c.l.b16 %v9112
        %v9241 = vunpack.c.l.b16 %v9113
        %v9242 = vunpack.c.l.b16 %v9114
        %v9243 = vunpack.c.l.b16 %v9115
        %v9244 = vunpack.c.l.b16 %v9116
        %v9245 = vunpack.c.l.b16 %v9117
        %v9246 = vunpack.c.l.b16 %v9118
        %v9247 = vunpack.c.l.b16 %v9119
        %v9248 = vunpack.c.l.b16 %v9120
        %v9249 = vunpack.c.l.b16 %v9121
        %v9250 = vunpack.c.l.b16 %v9122
        %v9251 = vunpack.c.l.b16 %v9123
        %v9252 = vunpack.c.l.b16 %v9124
        %v9253 = vunpack.c.l.b16 %v9125
        %v9254 = vunpack.c.l.b16 %v9126
        %v9255 = vunpack.c.l.b16 %v9127
        %v9256 = vunpack.c.l.b16 %v9128
        %v9257 = vunpack.c.l.b16 %v9129
        %v9258 = vunpack.c.l.b16 %v9130
        %v9259 = vunpack.c.l.b16 %v9131
        %v9260 = vunpack.c.l.b16 %v9132
        %v9261 = vunpack.c.l.b16 %v9133
        %v9262 = vunpack.c.l.b16 %v9134
        %v9263 = vunpack.c.l.b16 %v9135
        %v9264 = vunpack.c.l.b16 %v9136
        %v9265 = vunpack.c.l.b16 %v9137
        %v9266 = vunpack.c.l.b16 %v9138
        %v9267 = vunpack.c.l.b16 %v9139
        %v9268 = vunpack.c.l.b16 %v9140
        %v9269 = vunpack.c.l.b16 %v9141
        %v9270 = vunpack.c.l.b16 %v9142
        %v9271 = vunpack.c.l.b16 %v9143
        %v9272 = vpack.c.b16 %v9209, %v9208
        %v9273 = vpack.c.b16 %v9211, %v9210
        %v9274 = vpack.c.b16 %v9213, %v9212
        %v9275 = vpack.c.b16 %v9215, %v9214
        %v9276 = vpack.c.b16 %v9217, %v9216
        %v9277 = vpack.c.b16 %v9219, %v9218
        %v9278 = vpack.c.b16 %v9221, %v9220
        %v9279 = vpack.c.b16 %v9223, %v9222
        %v9280 = vpack.c.b16 %v9225, %v9224
        %v9281 = vpack.c.b16 %v9227, %v9226
        %v9282 = vpack.c.b16 %v9229, %v9228
        %v9283 = vpack.c.b16 %v9231, %v9230
        %v9284 = vpack.c.b16 %v9233, %v9232
        %v9285 = vpack.c.b16 %v9235, %v9234
        %v9286 = vpack.c.b16 %v9237, %v9236
        %v9287 = vpack.c.b16 %v9239, %v9238
        %v9288 = vpack.c.b16 %v9241, %v9240
        %v9289 = vpack.c.b16 %v9243, %v9242
        %v9290 = vpack.c.b16 %v9245, %v9244
        %v9291 = vpack.c.b16 %v9247, %v9246
        %v9292 = vpack.c.b16 %v9249, %v9248
        %v9293 = vpack.c.b16 %v9251, %v9250
        %v9294 = vpack.c.b16 %v9253, %v9252
        %v9295 = vpack.c.b16 %v9255, %v9254
        %v9296 = vpack.c.b16 %v9257, %v9256
        %v9297 = vpack.c.b16 %v9259, %v9258
        %v9298 = vpack.c.b16 %v9261, %v9260
        %v9299 = vpack.c.b16 %v9263, %v9262
        %v9300 = vpack.c.b16 %v9265, %v9264
        %v9301 = vpack.c.b16 %v9267, %v9266
        %v9302 = vpack.c.b16 %v9269, %v9268
        %v9303 = vpack.c.b16 %v9271, %v9270
        %9336 = vmatprep.subr.bf16.mxu0 0
        %9337 = vmatpush1.bf16.msra.mxu0 %v9279
        %9338 = vmatprep.subr.bf16.mxu0 0
        %9339 = vmatpush1.bf16.msra.mxu0 %v9278
        %9340 = vmatprep.subr.bf16.mxu0 0
        %9341 = vmatpush1.bf16.msra.mxu0 %v9277
        %9342 = vmatprep.subr.bf16.mxu0 0
        %9343 = vmatpush1.bf16.msra.mxu0 %v9276
        %9344 = vmatprep.subr.bf16.mxu0 0
        %9345 = vmatpush1.bf16.msra.mxu0 %v9275
        %9346 = vmatprep.subr.bf16.mxu0 0
        %9347 = vmatpush1.bf16.msra.mxu0 %v9274
        %9348 = vmatprep.subr.bf16.mxu0 0
        %9349 = vmatpush1.bf16.msra.mxu0 %v9273
        %9350 = vmatprep.subr.bf16.mxu0 0
        %9351 = vmatpush1.bf16.msra.mxu0 %v9272
        %9352 = vmatprep.subr.bf16.mxu0 0
        %9353 = vmatpush2.bf16.msra.mxu0 %v9287
        %9354 = vmatprep.subr.bf16.mxu0 0
        %9355 = vmatpush2.bf16.msra.mxu0 %v9286
        %9356 = vmatprep.subr.bf16.mxu0 0
        %9357 = vmatpush2.bf16.msra.mxu0 %v9285
        %9358 = vmatprep.subr.bf16.mxu0 0
        %9359 = vmatpush2.bf16.msra.mxu0 %v9284
        %9360 = vmatprep.subr.bf16.mxu0 0
        %9361 = vmatpush2.bf16.msra.mxu0 %v9283
        %9362 = vmatprep.subr.bf16.mxu0 0
        %9363 = vmatpush2.bf16.msra.mxu0 %v9282
        %9364 = vmatprep.subr.bf16.mxu0 0
        %9365 = vmatpush2.bf16.msra.mxu0 %v9281
        %9366 = vmatprep.subr.bf16.mxu0 0
        %9367 = vmatpush2.bf16.msra.mxu0 %v9280
        %9368 = vmatprep.mubr.bf16.mxu0 %v8967
        %9369 = vmatmul.mubr.bf16.gmra.mxu0 %v8919
        %v9370 = vpop.f32.mrf.mxu0
        %v9371 = vadd.f32 0.0, %v9370
        %v9372 = vpop.f32.mrf.mxu0
        %v9373 = vpop.f32.mrf.mxu0
        %v9374 = vadd.f32 0.0, %v9373
        %v9375 = vpop.f32.mrf.mxu0
        %9376 = vmatprep.mubr.bf16.mxu0 %v8968
        %9377 = vmatmul.mubr.bf16.gmra.mxu0 %v8920
        %v9378 = vpop.f32.mrf.mxu0
        %v9379 = vadd.f32 0.0, %v9378
        %v9380 = vpop.f32.mrf.mxu0
        %v9381 = vpop.f32.mrf.mxu0
        %v9382 = vadd.f32 0.0, %v9381
        %v9383 = vpop.f32.mrf.mxu0
        %9384 = vmatprep.mubr.bf16.mxu0 %v8969
        %9385 = vmatmul.mubr.bf16.gmra.mxu0 %v8921
        %v9386 = vpop.f32.mrf.mxu0
        %v9387 = vadd.f32 0.0, %v9386
        %v9388 = vpop.f32.mrf.mxu0
        %v9389 = vpop.f32.mrf.mxu0
        %v9390 = vadd.f32 0.0, %v9389
        %v9391 = vpop.f32.mrf.mxu0
        %9392 = vmatprep.mubr.bf16.mxu0 %v8970
        %9393 = vmatmul.mubr.bf16.gmra.mxu0 %v8922
        %v9394 = vpop.f32.mrf.mxu0
        %v9395 = vadd.f32 0.0, %v9394
        %v9396 = vpop.f32.mrf.mxu0
        %v9397 = vpop.f32.mrf.mxu0
        %v9398 = vadd.f32 0.0, %v9397
        %v9399 = vpop.f32.mrf.mxu0
        %9400 = vmatprep.mubr.bf16.mxu0 %v8971
        %9401 = vmatmul.mubr.bf16.gmra.mxu0 %v8923
        %v9402 = vpop.f32.mrf.mxu0
        %v9403 = vadd.f32 0.0, %v9402
        %v9404 = vpop.f32.mrf.mxu0
        %v9405 = vpop.f32.mrf.mxu0
        %v9406 = vadd.f32 0.0, %v9405
        %v9407 = vpop.f32.mrf.mxu0
        %9408 = vmatprep.mubr.bf16.mxu0 %v8972
        %9409 = vmatmul.mubr.bf16.gmra.mxu0 %v8924
        %v9410 = vpop.f32.mrf.mxu0
        %v9411 = vadd.f32 0.0, %v9410
        %v9412 = vpop.f32.mrf.mxu0
        %v9413 = vpop.f32.mrf.mxu0
        %v9414 = vadd.f32 0.0, %v9413
        %v9415 = vpop.f32.mrf.mxu0
        %9416 = vmatprep.mubr.bf16.mxu0 %v8973
        %9417 = vmatmul.mubr.bf16.gmra.mxu0 %v8925
        %v9418 = vpop.f32.mrf.mxu0
        %v9419 = vadd.f32 0.0, %v9418
        %v9420 = vpop.f32.mrf.mxu0
        %v9421 = vpop.f32.mrf.mxu0
        %v9422 = vadd.f32 0.0, %v9421
        %v9423 = vpop.f32.mrf.mxu0
        %9424 = vmatprep.mubr.bf16.mxu0 %v8974
        %9425 = vmatmul.mubr.bf16.gmra.mxu0 %v8926
        %v9426 = vpop.f32.mrf.mxu0
        %v9427 = vadd.f32 0.0, %v9426
        %v9428 = vpop.f32.mrf.mxu0
        %v9429 = vpop.f32.mrf.mxu0
        %v9430 = vadd.f32 0.0, %v9429
        %v9431 = vpop.f32.mrf.mxu0
        %9432 = vdwg.mxu0
        %9433 = vmatprep.subr.bf16.mxu0 0
        %9434 = vmatpush1.bf16.msra.mxu0 %v9295
        %9435 = vmatprep.subr.bf16.mxu0 0
        %9436 = vmatpush1.bf16.msra.mxu0 %v9294
        %9437 = vmatprep.subr.bf16.mxu0 0
        %9438 = vmatpush1.bf16.msra.mxu0 %v9293
        %9439 = vmatprep.subr.bf16.mxu0 0
        %9440 = vmatpush1.bf16.msra.mxu0 %v9292
        %9441 = vmatprep.subr.bf16.mxu0 0
        %9442 = vmatpush1.bf16.msra.mxu0 %v9291
        %9443 = vmatprep.subr.bf16.mxu0 0
        %9444 = vmatpush1.bf16.msra.mxu0 %v9290
        %9445 = vmatprep.subr.bf16.mxu0 0
        %9446 = vmatpush1.bf16.msra.mxu0 %v9289
        %9447 = vmatprep.subr.bf16.mxu0 0
        %9448 = vmatpush1.bf16.msra.mxu0 %v9288
        %9449 = vmatprep.subr.bf16.mxu0 0
        %9450 = vmatpush2.bf16.msra.mxu0 %v9303
        %9451 = vmatprep.subr.bf16.mxu0 0
        %9452 = vmatpush2.bf16.msra.mxu0 %v9302
        %9453 = vmatprep.subr.bf16.mxu0 0
        %9454 = vmatpush2.bf16.msra.mxu0 %v9301
        %9455 = vmatprep.subr.bf16.mxu0 0
        %9456 = vmatpush2.bf16.msra.mxu0 %v9300
        %9457 = vmatprep.subr.bf16.mxu0 0
        %9458 = vmatpush2.bf16.msra.mxu0 %v9299
        %9459 = vmatprep.subr.bf16.mxu0 0
        %9460 = vmatpush2.bf16.msra.mxu0 %v9298
        %9461 = vmatprep.subr.bf16.mxu0 0
        %9462 = vmatpush2.bf16.msra.mxu0 %v9297
        %9463 = vmatprep.subr.bf16.mxu0 0
        %9464 = vmatpush2.bf16.msra.mxu0 %v9296
        %9465 = vmatprep.mubr.bf16.mxu0 %v9063
        %9466 = vmatmul.mubr.bf16.gmra.mxu0 %v9015
        %v9467 = vpop.f32.mrf.mxu0
        %v9468 = vadd.f32 %v9371, %v9467
        %v9469 = vpop.f32.mrf.mxu0
        %v9470 = vpop.f32.mrf.mxu0
        %v9471 = vadd.f32 %v9374, %v9470
        %v9472 = vpop.f32.mrf.mxu0
        %9473 = vmatprep.mubr.bf16.mxu0 %v9064
        %9474 = vmatmul.mubr.bf16.gmra.mxu0 %v9016
        %v9475 = vpop.f32.mrf.mxu0
        %v9476 = vadd.f32 %v9379, %v9475
        %v9477 = vpop.f32.mrf.mxu0
        %v9478 = vpop.f32.mrf.mxu0
        %v9479 = vadd.f32 %v9382, %v9478
        %v9480 = vpop.f32.mrf.mxu0
        %9481 = vmatprep.mubr.bf16.mxu0 %v9065
        %9482 = vmatmul.mubr.bf16.gmra.mxu0 %v9017
        %v9483 = vpop.f32.mrf.mxu0
        %v9484 = vadd.f32 %v9387, %v9483
        %v9485 = vpop.f32.mrf.mxu0
        %v9486 = vpop.f32.mrf.mxu0
        %v9487 = vadd.f32 %v9390, %v9486
        %v9488 = vpop.f32.mrf.mxu0
        %9489 = vmatprep.mubr.bf16.mxu0 %v9066
        %9490 = vmatmul.mubr.bf16.gmra.mxu0 %v9018
        %v9491 = vpop.f32.mrf.mxu0
        %v9492 = vadd.f32 %v9395, %v9491
        %v9493 = vpop.f32.mrf.mxu0
        %v9494 = vpop.f32.mrf.mxu0
        %v9495 = vadd.f32 %v9398, %v9494
        %v9496 = vpop.f32.mrf.mxu0
        %9497 = vmatprep.mubr.bf16.mxu0 %v9067
        %9498 = vmatmul.mubr.bf16.gmra.mxu0 %v9019
        %v9499 = vpop.f32.mrf.mxu0
        %v9500 = vadd.f32 %v9403, %v9499
        %v9501 = vpop.f32.mrf.mxu0
        %v9502 = vpop.f32.mrf.mxu0
        %v9503 = vadd.f32 %v9406, %v9502
        %v9504 = vpop.f32.mrf.mxu0
        %9505 = vmatprep.mubr.bf16.mxu0 %v9068
        %9506 = vmatmul.mubr.bf16.gmra.mxu0 %v9020
        %v9507 = vpop.f32.mrf.mxu0
        %v9508 = vadd.f32 %v9411, %v9507
        %v9509 = vpop.f32.mrf.mxu0
        %v9510 = vpop.f32.mrf.mxu0
        %v9511 = vadd.f32 %v9414, %v9510
        %v9512 = vpop.f32.mrf.mxu0
        %9513 = vmatprep.mubr.bf16.mxu0 %v9069
        %9514 = vmatmul.mubr.bf16.gmra.mxu0 %v9021
        %v9515 = vpop.f32.mrf.mxu0
        %v9516 = vadd.f32 %v9419, %v9515
        %v9517 = vpop.f32.mrf.mxu0
        %v9518 = vpop.f32.mrf.mxu0
        %v9519 = vadd.f32 %v9422, %v9518
        %v9520 = vpop.f32.mrf.mxu0
        %9521 = vmatprep.mubr.bf16.mxu0 %v9070
        %9522 = vmatmul.mubr.bf16.gmra.mxu0 %v9022
        %v9523 = vpop.f32.mrf.mxu0
        %v9524 = vadd.f32 %v9427, %v9523
        %v9525 = vpop.f32.mrf.mxu0
        %v9526 = vpop.f32.mrf.mxu0
        %v9527 = vadd.f32 %v9430, %v9526
        %v9528 = vpop.f32.mrf.mxu0
        %9529 = vdwg.mxu0
        %v9530 = vadd.f32 %v8831, %v9468
        %v9531 = vadd.f32 %v8832, %v9471
        %v9532 = vadd.f32 %v8833, %v9476
        %v9533 = vadd.f32 %v8834, %v9479
        %v9534 = vadd.f32 %v8835, %v9484
        %v9535 = vadd.f32 %v8836, %v9487
        %v9536 = vadd.f32 %v8837, %v9492
        %v9537 = vadd.f32 %v8838, %v9495
        %v9538 = vadd.f32 %v8839, %v9500
        %v9539 = vadd.f32 %v8840, %v9503
        %v9540 = vadd.f32 %v8841, %v9508
        %v9541 = vadd.f32 %v8842, %v9511
        %v9542 = vadd.f32 %v8843, %v9516
        %v9543 = vadd.f32 %v8844, %v9519
        %v9544 = vadd.f32 %v8845, %v9524
        %v9545 = vadd.f32 %v8846, %v9527
        %v9546 = vld [vmem:[%s7343 + $0x8] sm:$0xf]
        %v9547 = vld [vmem:[%s7343 + $0xc] sm:$0xf]
        %v9548 = vld [vmem:[%s7343 + $0x10] sm:$0x1]
        %v9549 = vld [vmem:[%s7343 + $0x20] sm:$0xf]
        %v9550 = vld [vmem:[%s7343 + $0x24] sm:$0xf]
        %v9551 = vld [vmem:[%s7343 + $0x28] sm:$0x1]
        %v9552 = vld [vmem:[%s7343 + $0x38] sm:$0xf]
        %v9553 = vld [vmem:[%s7343 + $0x3c] sm:$0xf]
        %v9554 = vld [vmem:[%s7343 + $0x40] sm:$0x1]
        %v9555 = vld [vmem:[%s7343 + $0x50] sm:$0xf]
        %v9556 = vld [vmem:[%s7343 + $0x54] sm:$0xf]
        %v9557 = vld [vmem:[%s7343 + $0x58] sm:$0x1]
        %v9558 = vld [vmem:[%s7343 + $0x68] sm:$0xf]
        %v9559 = vld [vmem:[%s7343 + $0x6c] sm:$0xf]
        %v9560 = vld [vmem:[%s7343 + $0x70] sm:$0x1]
        %v9561 = vld [vmem:[%s7343 + $0x80] sm:$0xf]
        %v9562 = vld [vmem:[%s7343 + $0x84] sm:$0xf]
        %v9563 = vld [vmem:[%s7343 + $0x88] sm:$0x1]
        %v9564 = vld [vmem:[%s7343 + $0x98] sm:$0xf]
        %v9565 = vld [vmem:[%s7343 + $0x9c] sm:$0xf]
        %v9566 = vld [vmem:[%s7343 + $0xa0] sm:$0x1]
        %v9567 = vld [vmem:[%s7343 + $0xb0] sm:$0xf]
        %v9568 = vld [vmem:[%s7343 + $0xb4] sm:$0xf]
        %v9569 = vld [vmem:[%s7343 + $0xb8] sm:$0x1]
        %v9571 = vshrl.u32 %v9546, 16
        %v9573 = vrot.slane %v9571, 4
        %v9574 = vshll.u32 %v9546, 16
        %v9576 = vrot.slane %v9574, 5
        %v9577 = vor.u32 %v9573, %v9576
        %v9578 = vrot.slane %v9577, 4
        %v9580 = vshll.u32 %v9547, 16
        %v9582 = vrot.slane %v9580, 5
        %v9583 = vsel %vm3111, %v9578, %v9582
        %v9584 = vshrl.u32 %v9547, 16
        %v9586 = vrot.slane %v9584, 4
        %v9587 = vor.u32 %v9586, %v9582
        %v9588 = vrot.slane %v9587, 4
        %v9590 = vshll.u32 %v9548, 16
        %v9592 = vrot.slane %v9590, 5
        %v9593 = vsel %vm3111, %v9588, %v9592
        %v9595 = vshrl.u32 %v9549, 16
        %v9597 = vrot.slane %v9595, 4
        %v9598 = vshll.u32 %v9549, 16
        %v9600 = vrot.slane %v9598, 5
        %v9601 = vor.u32 %v9597, %v9600
        %v9602 = vrot.slane %v9601, 4
        %v9604 = vshll.u32 %v9550, 16
        %v9606 = vrot.slane %v9604, 5
        %v9607 = vsel %vm3111, %v9602, %v9606
        %v9608 = vshrl.u32 %v9550, 16
        %v9610 = vrot.slane %v9608, 4
        %v9611 = vor.u32 %v9610, %v9606
        %v9612 = vrot.slane %v9611, 4
        %v9614 = vshll.u32 %v9551, 16
        %v9616 = vrot.slane %v9614, 5
        %v9617 = vsel %vm3111, %v9612, %v9616
        %v9619 = vshrl.u32 %v9552, 16
        %v9621 = vrot.slane %v9619, 4
        %v9622 = vshll.u32 %v9552, 16
        %v9624 = vrot.slane %v9622, 5
        %v9625 = vor.u32 %v9621, %v9624
        %v9626 = vrot.slane %v9625, 4
        %v9628 = vshll.u32 %v9553, 16
        %v9630 = vrot.slane %v9628, 5
        %v9631 = vsel %vm3111, %v9626, %v9630
        %v9632 = vshrl.u32 %v9553, 16
        %v9634 = vrot.slane %v9632, 4
        %v9635 = vor.u32 %v9634, %v9630
        %v9636 = vrot.slane %v9635, 4
        %v9638 = vshll.u32 %v9554, 16
        %v9640 = vrot.slane %v9638, 5
        %v9641 = vsel %vm3111, %v9636, %v9640
        %v9643 = vshrl.u32 %v9555, 16
        %v9645 = vrot.slane %v9643, 4
        %v9646 = vshll.u32 %v9555, 16
        %v9648 = vrot.slane %v9646, 5
        %v9649 = vor.u32 %v9645, %v9648
        %v9650 = vrot.slane %v9649, 4
        %v9652 = vshll.u32 %v9556, 16
        %v9654 = vrot.slane %v9652, 5
        %v9655 = vsel %vm3111, %v9650, %v9654
        %v9656 = vshrl.u32 %v9556, 16
        %v9658 = vrot.slane %v9656, 4
        %v9659 = vor.u32 %v9658, %v9654
        %v9660 = vrot.slane %v9659, 4
        %v9662 = vshll.u32 %v9557, 16
        %v9664 = vrot.slane %v9662, 5
        %v9665 = vsel %vm3111, %v9660, %v9664
        %v9667 = vshrl.u32 %v9558, 16
        %v9669 = vrot.slane %v9667, 4
        %v9670 = vshll.u32 %v9558, 16
        %v9672 = vrot.slane %v9670, 5
        %v9673 = vor.u32 %v9669, %v9672
        %v9674 = vrot.slane %v9673, 4
        %v9676 = vshll.u32 %v9559, 16
        %v9678 = vrot.slane %v9676, 5
        %v9679 = vsel %vm3111, %v9674, %v9678
        %v9680 = vshrl.u32 %v9559, 16
        %v9682 = vrot.slane %v9680, 4
        %v9683 = vor.u32 %v9682, %v9678
        %v9684 = vrot.slane %v9683, 4
        %v9686 = vshll.u32 %v9560, 16
        %v9688 = vrot.slane %v9686, 5
        %v9689 = vsel %vm3111, %v9684, %v9688
        %v9691 = vshrl.u32 %v9561, 16
        %v9693 = vrot.slane %v9691, 4
        %v9694 = vshll.u32 %v9561, 16
        %v9696 = vrot.slane %v9694, 5
        %v9697 = vor.u32 %v9693, %v9696
        %v9698 = vrot.slane %v9697, 4
        %v9700 = vshll.u32 %v9562, 16
        %v9702 = vrot.slane %v9700, 5
        %v9703 = vsel %vm3111, %v9698, %v9702
        %v9704 = vshrl.u32 %v9562, 16
        %v9706 = vrot.slane %v9704, 4
        %v9707 = vor.u32 %v9706, %v9702
        %v9708 = vrot.slane %v9707, 4
        %v9710 = vshll.u32 %v9563, 16
        %v9712 = vrot.slane %v9710, 5
        %v9713 = vsel %vm3111, %v9708, %v9712
        %v9715 = vshrl.u32 %v9564, 16
        %v9717 = vrot.slane %v9715, 4
        %v9718 = vshll.u32 %v9564, 16
        %v9720 = vrot.slane %v9718, 5
        %v9721 = vor.u32 %v9717, %v9720
        %v9722 = vrot.slane %v9721, 4
        %v9724 = vshll.u32 %v9565, 16
        %v9726 = vrot.slane %v9724, 5
        %v9727 = vsel %vm3111, %v9722, %v9726
        %v9728 = vshrl.u32 %v9565, 16
        %v9730 = vrot.slane %v9728, 4
        %v9731 = vor.u32 %v9730, %v9726
        %v9732 = vrot.slane %v9731, 4
        %v9734 = vshll.u32 %v9566, 16
        %v9736 = vrot.slane %v9734, 5
        %v9737 = vsel %vm3111, %v9732, %v9736
        %v9739 = vshrl.u32 %v9567, 16
        %v9741 = vrot.slane %v9739, 4
        %v9742 = vshll.u32 %v9567, 16
        %v9744 = vrot.slane %v9742, 5
        %v9745 = vor.u32 %v9741, %v9744
        %v9746 = vrot.slane %v9745, 4
        %v9748 = vshll.u32 %v9568, 16
        %v9750 = vrot.slane %v9748, 5
        %v9751 = vsel %vm3111, %v9746, %v9750
        %v9752 = vshrl.u32 %v9568, 16
        %v9754 = vrot.slane %v9752, 4
        %v9755 = vor.u32 %v9754, %v9750
        %v9756 = vrot.slane %v9755, 4
        %v9758 = vshll.u32 %v9569, 16
        %v9760 = vrot.slane %v9758, 5
        %v9761 = vsel %vm3111, %v9756, %v9760
        %v9762 = vld [vmem:[%s7547 + $0x8] sm:$0xc]
        %v9763 = vld [vmem:[%s7547 + $0xc] sm:$0xf]
        %v9764 = vld [vmem:[%s7547 + $0x10] sm:$0x7]
        %v9765 = vld [vmem:[%s7547 + $0x20] sm:$0xc]
        %v9766 = vld [vmem:[%s7547 + $0x24] sm:$0xf]
        %v9767 = vld [vmem:[%s7547 + $0x28] sm:$0x7]
        %v9768 = vld [vmem:[%s7547 + $0x38] sm:$0xc]
        %v9769 = vld [vmem:[%s7547 + $0x3c] sm:$0xf]
        %v9770 = vld [vmem:[%s7547 + $0x40] sm:$0x7]
        %v9771 = vld [vmem:[%s7547 + $0x50] sm:$0xc]
        %v9772 = vld [vmem:[%s7547 + $0x54] sm:$0xf]
        %v9773 = vld [vmem:[%s7547 + $0x58] sm:$0x7]
        %v9774 = vld [vmem:[%s7547 + $0x68] sm:$0xc]
        %v9775 = vld [vmem:[%s7547 + $0x6c] sm:$0xf]
        %v9776 = vld [vmem:[%s7547 + $0x70] sm:$0x7]
        %v9777 = vld [vmem:[%s7547 + $0x80] sm:$0xc]
        %v9778 = vld [vmem:[%s7547 + $0x84] sm:$0xf]
        %v9779 = vld [vmem:[%s7547 + $0x88] sm:$0x7]
        %v9780 = vld [vmem:[%s7547 + $0x98] sm:$0xc]
        %v9781 = vld [vmem:[%s7547 + $0x9c] sm:$0xf]
        %v9782 = vld [vmem:[%s7547 + $0xa0] sm:$0x7]
        %v9783 = vld [vmem:[%s7547 + $0xb0] sm:$0xc]
        %v9784 = vld [vmem:[%s7547 + $0xb4] sm:$0xf]
        %v9785 = vld [vmem:[%s7547 + $0xb8] sm:$0x7]
        %v9787 = vshrl.u32 %v9762, 16
        %v9789 = vrot.slane %v9787, 6
        %v9790 = vshll.u32 %v9762, 16
        %v9792 = vrot.slane %v9790, 7
        %v9793 = vor.u32 %v9789, %v9792
        %v9794 = vrot.slane %v9793, 4
        %v9796 = vshrl.u32 %v9763, 16
        %v9798 = vrot.slane %v9796, 6
        %v9799 = vshll.u32 %v9763, 16
        %v9801 = vrot.slane %v9799, 7
        %v9802 = vor.u32 %v9798, %v9801
        %v9803 = vsel %vm3330, %v9794, %v9802
        %v9804 = vrot.slane %v9802, 4
        %v9806 = vshrl.u32 %v9764, 16
        %v9808 = vrot.slane %v9806, 6
        %v9809 = vshll.u32 %v9764, 16
        %v9811 = vrot.slane %v9809, 7
        %v9812 = vor.u32 %v9808, %v9811
        %v9813 = vsel %vm3330, %v9804, %v9812
        %v9815 = vshrl.u32 %v9765, 16
        %v9817 = vrot.slane %v9815, 6
        %v9818 = vshll.u32 %v9765, 16
        %v9820 = vrot.slane %v9818, 7
        %v9821 = vor.u32 %v9817, %v9820
        %v9822 = vrot.slane %v9821, 4
        %v9824 = vshrl.u32 %v9766, 16
        %v9826 = vrot.slane %v9824, 6
        %v9827 = vshll.u32 %v9766, 16
        %v9829 = vrot.slane %v9827, 7
        %v9830 = vor.u32 %v9826, %v9829
        %v9831 = vsel %vm3330, %v9822, %v9830
        %v9832 = vrot.slane %v9830, 4
        %v9834 = vshrl.u32 %v9767, 16
        %v9836 = vrot.slane %v9834, 6
        %v9837 = vshll.u32 %v9767, 16
        %v9839 = vrot.slane %v9837, 7
        %v9840 = vor.u32 %v9836, %v9839
        %v9841 = vsel %vm3330, %v9832, %v9840
        %v9843 = vshrl.u32 %v9768, 16
        %v9845 = vrot.slane %v9843, 6
        %v9846 = vshll.u32 %v9768, 16
        %v9848 = vrot.slane %v9846, 7
        %v9849 = vor.u32 %v9845, %v9848
        %v9850 = vrot.slane %v9849, 4
        %v9852 = vshrl.u32 %v9769, 16
        %v9854 = vrot.slane %v9852, 6
        %v9855 = vshll.u32 %v9769, 16
        %v9857 = vrot.slane %v9855, 7
        %v9858 = vor.u32 %v9854, %v9857
        %v9859 = vsel %vm3330, %v9850, %v9858
        %v9860 = vrot.slane %v9858, 4
        %v9862 = vshrl.u32 %v9770, 16
        %v9864 = vrot.slane %v9862, 6
        %v9865 = vshll.u32 %v9770, 16
        %v9867 = vrot.slane %v9865, 7
        %v9868 = vor.u32 %v9864, %v9867
        %v9869 = vsel %vm3330, %v9860, %v9868
        %v9871 = vshrl.u32 %v9771, 16
        %v9873 = vrot.slane %v9871, 6
        %v9874 = vshll.u32 %v9771, 16
        %v9876 = vrot.slane %v9874, 7
        %v9877 = vor.u32 %v9873, %v9876
        %v9878 = vrot.slane %v9877, 4
        %v9880 = vshrl.u32 %v9772, 16
        %v9882 = vrot.slane %v9880, 6
        %v9883 = vshll.u32 %v9772, 16
        %v9885 = vrot.slane %v9883, 7
        %v9886 = vor.u32 %v9882, %v9885
        %v9887 = vsel %vm3330, %v9878, %v9886
        %v9888 = vrot.slane %v9886, 4
        %v9890 = vshrl.u32 %v9773, 16
        %v9892 = vrot.slane %v9890, 6
        %v9893 = vshll.u32 %v9773, 16
        %v9895 = vrot.slane %v9893, 7
        %v9896 = vor.u32 %v9892, %v9895
        %v9897 = vsel %vm3330, %v9888, %v9896
        %v9899 = vshrl.u32 %v9774, 16
        %v9901 = vrot.slane %v9899, 6
        %v9902 = vshll.u32 %v9774, 16
        %v9904 = vrot.slane %v9902, 7
        %v9905 = vor.u32 %v9901, %v9904
        %v9906 = vrot.slane %v9905, 4
        %v9908 = vshrl.u32 %v9775, 16
        %v9910 = vrot.slane %v9908, 6
        %v9911 = vshll.u32 %v9775, 16
        %v9913 = vrot.slane %v9911, 7
        %v9914 = vor.u32 %v9910, %v9913
        %v9915 = vsel %vm3330, %v9906, %v9914
        %v9916 = vrot.slane %v9914, 4
        %v9918 = vshrl.u32 %v9776, 16
        %v9920 = vrot.slane %v9918, 6
        %v9921 = vshll.u32 %v9776, 16
        %v9923 = vrot.slane %v9921, 7
        %v9924 = vor.u32 %v9920, %v9923
        %v9925 = vsel %vm3330, %v9916, %v9924
        %v9927 = vshrl.u32 %v9777, 16
        %v9929 = vrot.slane %v9927, 6
        %v9930 = vshll.u32 %v9777, 16
        %v9932 = vrot.slane %v9930, 7
        %v9933 = vor.u32 %v9929, %v9932
        %v9934 = vrot.slane %v9933, 4
        %v9936 = vshrl.u32 %v9778, 16
        %v9938 = vrot.slane %v9936, 6
        %v9939 = vshll.u32 %v9778, 16
        %v9941 = vrot.slane %v9939, 7
        %v9942 = vor.u32 %v9938, %v9941
        %v9943 = vsel %vm3330, %v9934, %v9942
        %v9944 = vrot.slane %v9942, 4
        %v9946 = vshrl.u32 %v9779, 16
        %v9948 = vrot.slane %v9946, 6
        %v9949 = vshll.u32 %v9779, 16
        %v9951 = vrot.slane %v9949, 7
        %v9952 = vor.u32 %v9948, %v9951
        %v9953 = vsel %vm3330, %v9944, %v9952
        %v9955 = vshrl.u32 %v9780, 16
        %v9957 = vrot.slane %v9955, 6
        %v9958 = vshll.u32 %v9780, 16
        %v9960 = vrot.slane %v9958, 7
        %v9961 = vor.u32 %v9957, %v9960
        %v9962 = vrot.slane %v9961, 4
        %v9964 = vshrl.u32 %v9781, 16
        %v9966 = vrot.slane %v9964, 6
        %v9967 = vshll.u32 %v9781, 16
        %v9969 = vrot.slane %v9967, 7
        %v9970 = vor.u32 %v9966, %v9969
        %v9971 = vsel %vm3330, %v9962, %v9970
        %v9972 = vrot.slane %v9970, 4
        %v9974 = vshrl.u32 %v9782, 16
        %v9976 = vrot.slane %v9974, 6
        %v9977 = vshll.u32 %v9782, 16
        %v9979 = vrot.slane %v9977, 7
        %v9980 = vor.u32 %v9976, %v9979
        %v9981 = vsel %vm3330, %v9972, %v9980
        %v9983 = vshrl.u32 %v9783, 16
        %v9985 = vrot.slane %v9983, 6
        %v9986 = vshll.u32 %v9783, 16
        %v9988 = vrot.slane %v9986, 7
        %v9989 = vor.u32 %v9985, %v9988
        %v9990 = vrot.slane %v9989, 4
        %v9992 = vshrl.u32 %v9784, 16
        %v9994 = vrot.slane %v9992, 6
        %v9995 = vshll.u32 %v9784, 16
        %v9997 = vrot.slane %v9995, 7
        %v9998 = vor.u32 %v9994, %v9997
        %v9999 = vsel %vm3330, %v9990, %v9998
        %v10000 = vrot.slane %v9998, 4
        %v10002 = vshrl.u32 %v9785, 16
        %v10004 = vrot.slane %v10002, 6
        %v10005 = vshll.u32 %v9785, 16
        %v10007 = vrot.slane %v10005, 7
        %v10008 = vor.u32 %v10004, %v10007
        %v10009 = vsel %vm3330, %v10000, %v10008
        %v10010 = vld [vmem:[%s7799 + $0xc] sm:$0xf]
        %v10011 = vld [vmem:[%s7799 + $0x10] sm:$0xf]
        %v10012 = vld [vmem:[%s7799 + $0x14] sm:$0x1]
        %v10013 = vld [vmem:[%s7799 + $0x24] sm:$0xf]
        %v10014 = vld [vmem:[%s7799 + $0x28] sm:$0xf]
        %v10015 = vld [vmem:[%s7799 + $0x2c] sm:$0x1]
        %v10016 = vld [vmem:[%s7799 + $0x3c] sm:$0xf]
        %v10017 = vld [vmem:[%s7799 + $0x40] sm:$0xf]
        %v10018 = vld [vmem:[%s7799 + $0x44] sm:$0x1]
        %v10019 = vld [vmem:[%s7799 + $0x54] sm:$0xf]
        %v10020 = vld [vmem:[%s7799 + $0x58] sm:$0xf]
        %v10021 = vld [vmem:[%s7799 + $0x5c] sm:$0x1]
        %v10022 = vld [vmem:[%s7799 + $0x6c] sm:$0xf]
        %v10023 = vld [vmem:[%s7799 + $0x70] sm:$0xf]
        %v10024 = vld [vmem:[%s7799 + $0x74] sm:$0x1]
        %v10025 = vld [vmem:[%s7799 + $0x84] sm:$0xf]
        %v10026 = vld [vmem:[%s7799 + $0x88] sm:$0xf]
        %v10027 = vld [vmem:[%s7799 + $0x8c] sm:$0x1]
        %v10028 = vld [vmem:[%s7799 + $0x9c] sm:$0xf]
        %v10029 = vld [vmem:[%s7799 + $0xa0] sm:$0xf]
        %v10030 = vld [vmem:[%s7799 + $0xa4] sm:$0x1]
        %v10031 = vld [vmem:[%s7799 + $0xb4] sm:$0xf]
        %v10032 = vld [vmem:[%s7799 + $0xb8] sm:$0xf]
        %v10033 = vld [vmem:[%s7799 + $0xbc] sm:$0x1]
        %v10035 = vshrl.u32 %v10010, 16
        %v10037 = vrot.slane %v10035, 4
        %v10038 = vshll.u32 %v10010, 16
        %v10040 = vrot.slane %v10038, 5
        %v10041 = vor.u32 %v10037, %v10040
        %v10042 = vrot.slane %v10041, 4
        %v10044 = vshll.u32 %v10011, 16
        %v10046 = vrot.slane %v10044, 5
        %v10047 = vsel %vm3111, %v10042, %v10046
        %v10048 = vshrl.u32 %v10011, 16
        %v10050 = vrot.slane %v10048, 4
        %v10051 = vor.u32 %v10050, %v10046
        %v10052 = vrot.slane %v10051, 4
        %v10054 = vshll.u32 %v10012, 16
        %v10056 = vrot.slane %v10054, 5
        %v10057 = vsel %vm3111, %v10052, %v10056
        %v10059 = vshrl.u32 %v10013, 16
        %v10061 = vrot.slane %v10059, 4
        %v10062 = vshll.u32 %v10013, 16
        %v10064 = vrot.slane %v10062, 5
        %v10065 = vor.u32 %v10061, %v10064
        %v10066 = vrot.slane %v10065, 4
        %v10068 = vshll.u32 %v10014, 16
        %v10070 = vrot.slane %v10068, 5
        %v10071 = vsel %vm3111, %v10066, %v10070
        %v10072 = vshrl.u32 %v10014, 16
        %v10074 = vrot.slane %v10072, 4
        %v10075 = vor.u32 %v10074, %v10070
        %v10076 = vrot.slane %v10075, 4
        %v10078 = vshll.u32 %v10015, 16
        %v10080 = vrot.slane %v10078, 5
        %v10081 = vsel %vm3111, %v10076, %v10080
        %v10083 = vshrl.u32 %v10016, 16
        %v10085 = vrot.slane %v10083, 4
        %v10086 = vshll.u32 %v10016, 16
        %v10088 = vrot.slane %v10086, 5
        %v10089 = vor.u32 %v10085, %v10088
        %v10090 = vrot.slane %v10089, 4
        %v10092 = vshll.u32 %v10017, 16
        %v10094 = vrot.slane %v10092, 5
        %v10095 = vsel %vm3111, %v10090, %v10094
        %v10096 = vshrl.u32 %v10017, 16
        %v10098 = vrot.slane %v10096, 4
        %v10099 = vor.u32 %v10098, %v10094
        %v10100 = vrot.slane %v10099, 4
        %v10102 = vshll.u32 %v10018, 16
        %v10104 = vrot.slane %v10102, 5
        %v10105 = vsel %vm3111, %v10100, %v10104
        %v10107 = vshrl.u32 %v10019, 16
        %v10109 = vrot.slane %v10107, 4
        %v10110 = vshll.u32 %v10019, 16
        %v10112 = vrot.slane %v10110, 5
        %v10113 = vor.u32 %v10109, %v10112
        %v10114 = vrot.slane %v10113, 4
        %v10116 = vshll.u32 %v10020, 16
        %v10118 = vrot.slane %v10116, 5
        %v10119 = vsel %vm3111, %v10114, %v10118
        %v10120 = vshrl.u32 %v10020, 16
        %v10122 = vrot.slane %v10120, 4
        %v10123 = vor.u32 %v10122, %v10118
        %v10124 = vrot.slane %v10123, 4
        %v10126 = vshll.u32 %v10021, 16
        %v10128 = vrot.slane %v10126, 5
        %v10129 = vsel %vm3111, %v10124, %v10128
        %v10131 = vshrl.u32 %v10022, 16
        %v10133 = vrot.slane %v10131, 4
        %v10134 = vshll.u32 %v10022, 16
        %v10136 = vrot.slane %v10134, 5
        %v10137 = vor.u32 %v10133, %v10136
        %v10138 = vrot.slane %v10137, 4
        %v10140 = vshll.u32 %v10023, 16
        %v10142 = vrot.slane %v10140, 5
        %v10143 = vsel %vm3111, %v10138, %v10142
        %v10144 = vshrl.u32 %v10023, 16
        %v10146 = vrot.slane %v10144, 4
        %v10147 = vor.u32 %v10146, %v10142
        %v10148 = vrot.slane %v10147, 4
        %v10150 = vshll.u32 %v10024, 16
        %v10152 = vrot.slane %v10150, 5
        %v10153 = vsel %vm3111, %v10148, %v10152
        %v10155 = vshrl.u32 %v10025, 16
        %v10157 = vrot.slane %v10155, 4
        %v10158 = vshll.u32 %v10025, 16
        %v10160 = vrot.slane %v10158, 5
        %v10161 = vor.u32 %v10157, %v10160
        %v10162 = vrot.slane %v10161, 4
        %v10164 = vshll.u32 %v10026, 16
        %v10166 = vrot.slane %v10164, 5
        %v10167 = vsel %vm3111, %v10162, %v10166
        %v10168 = vshrl.u32 %v10026, 16
        %v10170 = vrot.slane %v10168, 4
        %v10171 = vor.u32 %v10170, %v10166
        %v10172 = vrot.slane %v10171, 4
        %v10174 = vshll.u32 %v10027, 16
        %v10176 = vrot.slane %v10174, 5
        %v10177 = vsel %vm3111, %v10172, %v10176
        %v10179 = vshrl.u32 %v10028, 16
        %v10181 = vrot.slane %v10179, 4
        %v10182 = vshll.u32 %v10028, 16
        %v10184 = vrot.slane %v10182, 5
        %v10185 = vor.u32 %v10181, %v10184
        %v10186 = vrot.slane %v10185, 4
        %v10188 = vshll.u32 %v10029, 16
        %v10190 = vrot.slane %v10188, 5
        %v10191 = vsel %vm3111, %v10186, %v10190
        %v10192 = vshrl.u32 %v10029, 16
        %v10194 = vrot.slane %v10192, 4
        %v10195 = vor.u32 %v10194, %v10190
        %v10196 = vrot.slane %v10195, 4
        %v10198 = vshll.u32 %v10030, 16
        %v10200 = vrot.slane %v10198, 5
        %v10201 = vsel %vm3111, %v10196, %v10200
        %v10203 = vshrl.u32 %v10031, 16
        %v10205 = vrot.slane %v10203, 4
        %v10206 = vshll.u32 %v10031, 16
        %v10208 = vrot.slane %v10206, 5
        %v10209 = vor.u32 %v10205, %v10208
        %v10210 = vrot.slane %v10209, 4
        %v10212 = vshll.u32 %v10032, 16
        %v10214 = vrot.slane %v10212, 5
        %v10215 = vsel %vm3111, %v10210, %v10214
        %v10216 = vshrl.u32 %v10032, 16
        %v10218 = vrot.slane %v10216, 4
        %v10219 = vor.u32 %v10218, %v10214
        %v10220 = vrot.slane %v10219, 4
        %v10222 = vshll.u32 %v10033, 16
        %v10224 = vrot.slane %v10222, 5
        %v10225 = vsel %vm3111, %v10220, %v10224
        %v10226 = vld [vmem:[%s8003 + $0xc] sm:$0xc]
        %v10227 = vld [vmem:[%s8003 + $0x10] sm:$0xf]
        %v10228 = vld [vmem:[%s8003 + $0x14] sm:$0x7]
        %v10229 = vld [vmem:[%s8003 + $0x24] sm:$0xc]
        %v10230 = vld [vmem:[%s8003 + $0x28] sm:$0xf]
        %v10231 = vld [vmem:[%s8003 + $0x2c] sm:$0x7]
        %v10232 = vld [vmem:[%s8003 + $0x3c] sm:$0xc]
        %v10233 = vld [vmem:[%s8003 + $0x40] sm:$0xf]
        %v10234 = vld [vmem:[%s8003 + $0x44] sm:$0x7]
        %v10235 = vld [vmem:[%s8003 + $0x54] sm:$0xc]
        %v10236 = vld [vmem:[%s8003 + $0x58] sm:$0xf]
        %v10237 = vld [vmem:[%s8003 + $0x5c] sm:$0x7]
        %v10238 = vld [vmem:[%s8003 + $0x6c] sm:$0xc]
        %v10239 = vld [vmem:[%s8003 + $0x70] sm:$0xf]
        %v10240 = vld [vmem:[%s8003 + $0x74] sm:$0x7]
        %v10241 = vld [vmem:[%s8003 + $0x84] sm:$0xc]
        %v10242 = vld [vmem:[%s8003 + $0x88] sm:$0xf]
        %v10243 = vld [vmem:[%s8003 + $0x8c] sm:$0x7]
        %v10244 = vld [vmem:[%s8003 + $0x9c] sm:$0xc]
        %v10245 = vld [vmem:[%s8003 + $0xa0] sm:$0xf]
        %v10246 = vld [vmem:[%s8003 + $0xa4] sm:$0x7]
        %v10247 = vld [vmem:[%s8003 + $0xb4] sm:$0xc]
        %v10248 = vld [vmem:[%s8003 + $0xb8] sm:$0xf]
        %v10249 = vld [vmem:[%s8003 + $0xbc] sm:$0x7]
        %v10251 = vshrl.u32 %v10226, 16
        %v10253 = vrot.slane %v10251, 6
        %v10254 = vshll.u32 %v10226, 16
        %v10256 = vrot.slane %v10254, 7
        %v10257 = vor.u32 %v10253, %v10256
        %v10258 = vrot.slane %v10257, 4
        %v10260 = vshrl.u32 %v10227, 16
        %v10262 = vrot.slane %v10260, 6
        %v10263 = vshll.u32 %v10227, 16
        %v10265 = vrot.slane %v10263, 7
        %v10266 = vor.u32 %v10262, %v10265
        %v10267 = vsel %vm3330, %v10258, %v10266
        %v10268 = vrot.slane %v10266, 4
        %v10270 = vshrl.u32 %v10228, 16
        %v10272 = vrot.slane %v10270, 6
        %v10273 = vshll.u32 %v10228, 16
        %v10275 = vrot.slane %v10273, 7
        %v10276 = vor.u32 %v10272, %v10275
        %v10277 = vsel %vm3330, %v10268, %v10276
        %v10279 = vshrl.u32 %v10229, 16
        %v10281 = vrot.slane %v10279, 6
        %v10282 = vshll.u32 %v10229, 16
        %v10284 = vrot.slane %v10282, 7
        %v10285 = vor.u32 %v10281, %v10284
        %v10286 = vrot.slane %v10285, 4
        %v10288 = vshrl.u32 %v10230, 16
        %v10290 = vrot.slane %v10288, 6
        %v10291 = vshll.u32 %v10230, 16
        %v10293 = vrot.slane %v10291, 7
        %v10294 = vor.u32 %v10290, %v10293
        %v10295 = vsel %vm3330, %v10286, %v10294
        %v10296 = vrot.slane %v10294, 4
        %v10298 = vshrl.u32 %v10231, 16
        %v10300 = vrot.slane %v10298, 6
        %v10301 = vshll.u32 %v10231, 16
        %v10303 = vrot.slane %v10301, 7
        %v10304 = vor.u32 %v10300, %v10303
        %v10305 = vsel %vm3330, %v10296, %v10304
        %v10307 = vshrl.u32 %v10232, 16
        %v10309 = vrot.slane %v10307, 6
        %v10310 = vshll.u32 %v10232, 16
        %v10312 = vrot.slane %v10310, 7
        %v10313 = vor.u32 %v10309, %v10312
        %v10314 = vrot.slane %v10313, 4
        %v10316 = vshrl.u32 %v10233, 16
        %v10318 = vrot.slane %v10316, 6
        %v10319 = vshll.u32 %v10233, 16
        %v10321 = vrot.slane %v10319, 7
        %v10322 = vor.u32 %v10318, %v10321
        %v10323 = vsel %vm3330, %v10314, %v10322
        %v10324 = vrot.slane %v10322, 4
        %v10326 = vshrl.u32 %v10234, 16
        %v10328 = vrot.slane %v10326, 6
        %v10329 = vshll.u32 %v10234, 16
        %v10331 = vrot.slane %v10329, 7
        %v10332 = vor.u32 %v10328, %v10331
        %v10333 = vsel %vm3330, %v10324, %v10332
        %v10335 = vshrl.u32 %v10235, 16
        %v10337 = vrot.slane %v10335, 6
        %v10338 = vshll.u32 %v10235, 16
        %v10340 = vrot.slane %v10338, 7
        %v10341 = vor.u32 %v10337, %v10340
        %v10342 = vrot.slane %v10341, 4
        %v10344 = vshrl.u32 %v10236, 16
        %v10346 = vrot.slane %v10344, 6
        %v10347 = vshll.u32 %v10236, 16
        %v10349 = vrot.slane %v10347, 7
        %v10350 = vor.u32 %v10346, %v10349
        %v10351 = vsel %vm3330, %v10342, %v10350
        %v10352 = vrot.slane %v10350, 4
        %v10354 = vshrl.u32 %v10237, 16
        %v10356 = vrot.slane %v10354, 6
        %v10357 = vshll.u32 %v10237, 16
        %v10359 = vrot.slane %v10357, 7
        %v10360 = vor.u32 %v10356, %v10359
        %v10361 = vsel %vm3330, %v10352, %v10360
        %v10363 = vshrl.u32 %v10238, 16
        %v10365 = vrot.slane %v10363, 6
        %v10366 = vshll.u32 %v10238, 16
        %v10368 = vrot.slane %v10366, 7
        %v10369 = vor.u32 %v10365, %v10368
        %v10370 = vrot.slane %v10369, 4
        %v10372 = vshrl.u32 %v10239, 16
        %v10374 = vrot.slane %v10372, 6
        %v10375 = vshll.u32 %v10239, 16
        %v10377 = vrot.slane %v10375, 7
        %v10378 = vor.u32 %v10374, %v10377
        %v10379 = vsel %vm3330, %v10370, %v10378
        %v10380 = vrot.slane %v10378, 4
        %v10382 = vshrl.u32 %v10240, 16
        %v10384 = vrot.slane %v10382, 6
        %v10385 = vshll.u32 %v10240, 16
        %v10387 = vrot.slane %v10385, 7
        %v10388 = vor.u32 %v10384, %v10387
        %v10389 = vsel %vm3330, %v10380, %v10388
        %v10391 = vshrl.u32 %v10241, 16
        %v10393 = vrot.slane %v10391, 6
        %v10394 = vshll.u32 %v10241, 16
        %v10396 = vrot.slane %v10394, 7
        %v10397 = vor.u32 %v10393, %v10396
        %v10398 = vrot.slane %v10397, 4
        %v10400 = vshrl.u32 %v10242, 16
        %v10402 = vrot.slane %v10400, 6
        %v10403 = vshll.u32 %v10242, 16
        %v10405 = vrot.slane %v10403, 7
        %v10406 = vor.u32 %v10402, %v10405
        %v10407 = vsel %vm3330, %v10398, %v10406
        %v10408 = vrot.slane %v10406, 4
        %v10410 = vshrl.u32 %v10243, 16
        %v10412 = vrot.slane %v10410, 6
        %v10413 = vshll.u32 %v10243, 16
        %v10415 = vrot.slane %v10413, 7
        %v10416 = vor.u32 %v10412, %v10415
        %v10417 = vsel %vm3330, %v10408, %v10416
        %v10419 = vshrl.u32 %v10244, 16
        %v10421 = vrot.slane %v10419, 6
        %v10422 = vshll.u32 %v10244, 16
        %v10424 = vrot.slane %v10422, 7
        %v10425 = vor.u32 %v10421, %v10424
        %v10426 = vrot.slane %v10425, 4
        %v10428 = vshrl.u32 %v10245, 16
        %v10430 = vrot.slane %v10428, 6
        %v10431 = vshll.u32 %v10245, 16
        %v10433 = vrot.slane %v10431, 7
        %v10434 = vor.u32 %v10430, %v10433
        %v10435 = vsel %vm3330, %v10426, %v10434
        %v10436 = vrot.slane %v10434, 4
        %v10438 = vshrl.u32 %v10246, 16
        %v10440 = vrot.slane %v10438, 6
        %v10441 = vshll.u32 %v10246, 16
        %v10443 = vrot.slane %v10441, 7
        %v10444 = vor.u32 %v10440, %v10443
        %v10445 = vsel %vm3330, %v10436, %v10444
        %v10447 = vshrl.u32 %v10247, 16
        %v10449 = vrot.slane %v10447, 6
        %v10450 = vshll.u32 %v10247, 16
        %v10452 = vrot.slane %v10450, 7
        %v10453 = vor.u32 %v10449, %v10452
        %v10454 = vrot.slane %v10453, 4
        %v10456 = vshrl.u32 %v10248, 16
        %v10458 = vrot.slane %v10456, 6
        %v10459 = vshll.u32 %v10248, 16
        %v10461 = vrot.slane %v10459, 7
        %v10462 = vor.u32 %v10458, %v10461
        %v10463 = vsel %vm3330, %v10454, %v10462
        %v10464 = vrot.slane %v10462, 4
        %v10466 = vshrl.u32 %v10249, 16
        %v10468 = vrot.slane %v10466, 6
        %v10469 = vshll.u32 %v10249, 16
        %v10471 = vrot.slane %v10469, 7
        %v10472 = vor.u32 %v10468, %v10471
        %v10473 = vsel %vm3330, %v10464, %v10472
        %v10474 = vunpack.c.l.b16 %v9583
        %v10475 = vunpack.c.l.b16 %v9593
        %v10476 = vunpack.c.l.b16 %v9607
        %v10477 = vunpack.c.l.b16 %v9617
        %v10478 = vunpack.c.l.b16 %v9631
        %v10479 = vunpack.c.l.b16 %v9641
        %v10480 = vunpack.c.l.b16 %v9655
        %v10481 = vunpack.c.l.b16 %v9665
        %v10482 = vunpack.c.l.b16 %v9679
        %v10483 = vunpack.c.l.b16 %v9689
        %v10484 = vunpack.c.l.b16 %v9703
        %v10485 = vunpack.c.l.b16 %v9713
        %v10486 = vunpack.c.l.b16 %v9727
        %v10487 = vunpack.c.l.b16 %v9737
        %v10488 = vunpack.c.l.b16 %v9751
        %v10489 = vunpack.c.l.b16 %v9761
        %v10490 = vpack.c.b16 %v10475, %v10474
        %v10491 = vpack.c.b16 %v10477, %v10476
        %v10492 = vpack.c.b16 %v10479, %v10478
        %v10493 = vpack.c.b16 %v10481, %v10480
        %v10494 = vpack.c.b16 %v10483, %v10482
        %v10495 = vpack.c.b16 %v10485, %v10484
        %v10496 = vpack.c.b16 %v10487, %v10486
        %v10497 = vpack.c.b16 %v10489, %v10488
        %v10506 = vunpack.c.l.b16 %v9803
        %v10507 = vunpack.c.l.b16 %v9813
        %v10508 = vunpack.c.l.b16 %v9831
        %v10509 = vunpack.c.l.b16 %v9841
        %v10510 = vunpack.c.l.b16 %v9859
        %v10511 = vunpack.c.l.b16 %v9869
        %v10512 = vunpack.c.l.b16 %v9887
        %v10513 = vunpack.c.l.b16 %v9897
        %v10514 = vunpack.c.l.b16 %v9915
        %v10515 = vunpack.c.l.b16 %v9925
        %v10516 = vunpack.c.l.b16 %v9943
        %v10517 = vunpack.c.l.b16 %v9953
        %v10518 = vunpack.c.l.b16 %v9971
        %v10519 = vunpack.c.l.b16 %v9981
        %v10520 = vunpack.c.l.b16 %v9999
        %v10521 = vunpack.c.l.b16 %v10009
        %v10522 = vpack.c.b16 %v10507, %v10506
        %v10523 = vpack.c.b16 %v10509, %v10508
        %v10524 = vpack.c.b16 %v10511, %v10510
        %v10525 = vpack.c.b16 %v10513, %v10512
        %v10526 = vpack.c.b16 %v10515, %v10514
        %v10527 = vpack.c.b16 %v10517, %v10516
        %v10528 = vpack.c.b16 %v10519, %v10518
        %v10529 = vpack.c.b16 %v10521, %v10520
        %v10538 = vunpack.c.l.b16 %v10047
        %v10539 = vunpack.c.l.b16 %v10057
        %v10540 = vunpack.c.l.b16 %v10071
        %v10541 = vunpack.c.l.b16 %v10081
        %v10542 = vunpack.c.l.b16 %v10095
        %v10543 = vunpack.c.l.b16 %v10105
        %v10544 = vunpack.c.l.b16 %v10119
        %v10545 = vunpack.c.l.b16 %v10129
        %v10546 = vunpack.c.l.b16 %v10143
        %v10547 = vunpack.c.l.b16 %v10153
        %v10548 = vunpack.c.l.b16 %v10167
        %v10549 = vunpack.c.l.b16 %v10177
        %v10550 = vunpack.c.l.b16 %v10191
        %v10551 = vunpack.c.l.b16 %v10201
        %v10552 = vunpack.c.l.b16 %v10215
        %v10553 = vunpack.c.l.b16 %v10225
        %v10554 = vpack.c.b16 %v10539, %v10538
        %v10555 = vpack.c.b16 %v10541, %v10540
        %v10556 = vpack.c.b16 %v10543, %v10542
        %v10557 = vpack.c.b16 %v10545, %v10544
        %v10558 = vpack.c.b16 %v10547, %v10546
        %v10559 = vpack.c.b16 %v10549, %v10548
        %v10560 = vpack.c.b16 %v10551, %v10550
        %v10561 = vpack.c.b16 %v10553, %v10552
        %v10570 = vunpack.c.l.b16 %v10267
        %v10571 = vunpack.c.l.b16 %v10277
        %v10572 = vunpack.c.l.b16 %v10295
        %v10573 = vunpack.c.l.b16 %v10305
        %v10574 = vunpack.c.l.b16 %v10323
        %v10575 = vunpack.c.l.b16 %v10333
        %v10576 = vunpack.c.l.b16 %v10351
        %v10577 = vunpack.c.l.b16 %v10361
        %v10578 = vunpack.c.l.b16 %v10379
        %v10579 = vunpack.c.l.b16 %v10389
        %v10580 = vunpack.c.l.b16 %v10407
        %v10581 = vunpack.c.l.b16 %v10417
        %v10582 = vunpack.c.l.b16 %v10435
        %v10583 = vunpack.c.l.b16 %v10445
        %v10584 = vunpack.c.l.b16 %v10463
        %v10585 = vunpack.c.l.b16 %v10473
        %v10586 = vpack.c.b16 %v10571, %v10570
        %v10587 = vpack.c.b16 %v10573, %v10572
        %v10588 = vpack.c.b16 %v10575, %v10574
        %v10589 = vpack.c.b16 %v10577, %v10576
        %v10590 = vpack.c.b16 %v10579, %v10578
        %v10591 = vpack.c.b16 %v10581, %v10580
        %v10592 = vpack.c.b16 %v10583, %v10582
        %v10593 = vpack.c.b16 %v10585, %v10584
        %s10602 = scalar_lea.vmem %s3, 1792
        %v10603 = vld [vmem:[%s10602] sm:$0xf]
        %v10604 = vld [vmem:[%s10602 + $0x4] sm:$0xf]
        %v10605 = vld [vmem:[%s10602 + $0x8] sm:$0xf]
        %v10606 = vld [vmem:[%s10602 + $0xc] sm:$0xf]
        %v10607 = vld [vmem:[%s10602 + $0x10] sm:$0xf]
        %v10608 = vld [vmem:[%s10602 + $0x14] sm:$0xf]
        %v10609 = vld [vmem:[%s10602 + $0x18] sm:$0xf]
        %v10610 = vld [vmem:[%s10602 + $0x1c] sm:$0xf]
        %v10611 = vld [vmem:[%s10602 + $0x20] sm:$0xf]
        %v10612 = vld [vmem:[%s10602 + $0x24] sm:$0xf]
        %v10613 = vld [vmem:[%s10602 + $0x28] sm:$0xf]
        %v10614 = vld [vmem:[%s10602 + $0x2c] sm:$0xf]
        %v10615 = vld [vmem:[%s10602 + $0x30] sm:$0xf]
        %v10616 = vld [vmem:[%s10602 + $0x34] sm:$0xf]
        %v10617 = vld [vmem:[%s10602 + $0x38] sm:$0xf]
        %v10618 = vld [vmem:[%s10602 + $0x3c] sm:$0xf]
        %v10619 = vld [vmem:[%s10602 + $0x40] sm:$0xf]
        %v10620 = vld [vmem:[%s10602 + $0x44] sm:$0xf]
        %v10621 = vld [vmem:[%s10602 + $0x48] sm:$0xf]
        %v10622 = vld [vmem:[%s10602 + $0x4c] sm:$0xf]
        %v10623 = vld [vmem:[%s10602 + $0x50] sm:$0xf]
        %v10624 = vld [vmem:[%s10602 + $0x54] sm:$0xf]
        %v10625 = vld [vmem:[%s10602 + $0x58] sm:$0xf]
        %v10626 = vld [vmem:[%s10602 + $0x5c] sm:$0xf]
        %v10627 = vld [vmem:[%s10602 + $0x60] sm:$0xf]
        %v10628 = vld [vmem:[%s10602 + $0x64] sm:$0xf]
        %v10629 = vld [vmem:[%s10602 + $0x68] sm:$0xf]
        %v10630 = vld [vmem:[%s10602 + $0x6c] sm:$0xf]
        %v10631 = vld [vmem:[%s10602 + $0x70] sm:$0xf]
        %v10632 = vld [vmem:[%s10602 + $0x74] sm:$0xf]
        %v10633 = vld [vmem:[%s10602 + $0x78] sm:$0xf]
        %v10634 = vld [vmem:[%s10602 + $0x7c] sm:$0xf]
        %v10635 = vld [vmem:[%s10602 + $0x80] sm:$0xf]
        %v10636 = vld [vmem:[%s10602 + $0x84] sm:$0xf]
        %v10637 = vld [vmem:[%s10602 + $0x88] sm:$0xf]
        %v10638 = vld [vmem:[%s10602 + $0x8c] sm:$0xf]
        %v10639 = vld [vmem:[%s10602 + $0x90] sm:$0xf]
        %v10640 = vld [vmem:[%s10602 + $0x94] sm:$0xf]
        %v10641 = vld [vmem:[%s10602 + $0x98] sm:$0xf]
        %v10642 = vld [vmem:[%s10602 + $0x9c] sm:$0xf]
        %v10643 = vld [vmem:[%s10602 + $0xa0] sm:$0xf]
        %v10644 = vld [vmem:[%s10602 + $0xa4] sm:$0xf]
        %v10645 = vld [vmem:[%s10602 + $0xa8] sm:$0xf]
        %v10646 = vld [vmem:[%s10602 + $0xac] sm:$0xf]
        %v10647 = vld [vmem:[%s10602 + $0xb0] sm:$0xf]
        %v10648 = vld [vmem:[%s10602 + $0xb4] sm:$0xf]
        %v10649 = vld [vmem:[%s10602 + $0xb8] sm:$0xf]
        %v10650 = vld [vmem:[%s10602 + $0xbc] sm:$0xf]
        %v10651 = vld [vmem:[%s10602 + $0xc0] sm:$0xf]
        %v10652 = vld [vmem:[%s10602 + $0xc4] sm:$0xf]
        %v10653 = vld [vmem:[%s10602 + $0xc8] sm:$0xf]
        %v10654 = vld [vmem:[%s10602 + $0xcc] sm:$0xf]
        %v10655 = vld [vmem:[%s10602 + $0xd0] sm:$0xf]
        %v10656 = vld [vmem:[%s10602 + $0xd4] sm:$0xf]
        %v10657 = vld [vmem:[%s10602 + $0xd8] sm:$0xf]
        %v10658 = vld [vmem:[%s10602 + $0xdc] sm:$0xf]
        %v10659 = vld [vmem:[%s10602 + $0xe0] sm:$0xf]
        %v10660 = vld [vmem:[%s10602 + $0xe4] sm:$0xf]
        %v10661 = vld [vmem:[%s10602 + $0xe8] sm:$0xf]
        %v10662 = vld [vmem:[%s10602 + $0xec] sm:$0xf]
        %v10663 = vld [vmem:[%s10602 + $0xf0] sm:$0xf]
        %v10664 = vld [vmem:[%s10602 + $0xf4] sm:$0xf]
        %v10665 = vld [vmem:[%s10602 + $0xf8] sm:$0xf]
        %v10666 = vld [vmem:[%s10602 + $0xfc] sm:$0xf]
        %v10731 = vunpack.c.l.b16 %v10603
        %v10732 = vunpack.c.l.b16 %v10604
        %v10733 = vunpack.c.l.b16 %v10605
        %v10734 = vunpack.c.l.b16 %v10606
        %v10735 = vunpack.c.l.b16 %v10607
        %v10736 = vunpack.c.l.b16 %v10608
        %v10737 = vunpack.c.l.b16 %v10609
        %v10738 = vunpack.c.l.b16 %v10610
        %v10739 = vunpack.c.l.b16 %v10611
        %v10740 = vunpack.c.l.b16 %v10612
        %v10741 = vunpack.c.l.b16 %v10613
        %v10742 = vunpack.c.l.b16 %v10614
        %v10743 = vunpack.c.l.b16 %v10615
        %v10744 = vunpack.c.l.b16 %v10616
        %v10745 = vunpack.c.l.b16 %v10617
        %v10746 = vunpack.c.l.b16 %v10618
        %v10747 = vunpack.c.l.b16 %v10619
        %v10748 = vunpack.c.l.b16 %v10620
        %v10749 = vunpack.c.l.b16 %v10621
        %v10750 = vunpack.c.l.b16 %v10622
        %v10751 = vunpack.c.l.b16 %v10623
        %v10752 = vunpack.c.l.b16 %v10624
        %v10753 = vunpack.c.l.b16 %v10625
        %v10754 = vunpack.c.l.b16 %v10626
        %v10755 = vunpack.c.l.b16 %v10627
        %v10756 = vunpack.c.l.b16 %v10628
        %v10757 = vunpack.c.l.b16 %v10629
        %v10758 = vunpack.c.l.b16 %v10630
        %v10759 = vunpack.c.l.b16 %v10631
        %v10760 = vunpack.c.l.b16 %v10632
        %v10761 = vunpack.c.l.b16 %v10633
        %v10762 = vunpack.c.l.b16 %v10634
        %v10763 = vunpack.c.l.b16 %v10635
        %v10764 = vunpack.c.l.b16 %v10636
        %v10765 = vunpack.c.l.b16 %v10637
        %v10766 = vunpack.c.l.b16 %v10638
        %v10767 = vunpack.c.l.b16 %v10639
        %v10768 = vunpack.c.l.b16 %v10640
        %v10769 = vunpack.c.l.b16 %v10641
        %v10770 = vunpack.c.l.b16 %v10642
        %v10771 = vunpack.c.l.b16 %v10643
        %v10772 = vunpack.c.l.b16 %v10644
        %v10773 = vunpack.c.l.b16 %v10645
        %v10774 = vunpack.c.l.b16 %v10646
        %v10775 = vunpack.c.l.b16 %v10647
        %v10776 = vunpack.c.l.b16 %v10648
        %v10777 = vunpack.c.l.b16 %v10649
        %v10778 = vunpack.c.l.b16 %v10650
        %v10779 = vunpack.c.l.b16 %v10651
        %v10780 = vunpack.c.l.b16 %v10652
        %v10781 = vunpack.c.l.b16 %v10653
        %v10782 = vunpack.c.l.b16 %v10654
        %v10783 = vunpack.c.l.b16 %v10655
        %v10784 = vunpack.c.l.b16 %v10656
        %v10785 = vunpack.c.l.b16 %v10657
        %v10786 = vunpack.c.l.b16 %v10658
        %v10787 = vunpack.c.l.b16 %v10659
        %v10788 = vunpack.c.l.b16 %v10660
        %v10789 = vunpack.c.l.b16 %v10661
        %v10790 = vunpack.c.l.b16 %v10662
        %v10791 = vunpack.c.l.b16 %v10663
        %v10792 = vunpack.c.l.b16 %v10664
        %v10793 = vunpack.c.l.b16 %v10665
        %v10794 = vunpack.c.l.b16 %v10666
        %v10795 = vpack.c.b16 %v10732, %v10731
        %v10796 = vpack.c.b16 %v10734, %v10733
        %v10797 = vpack.c.b16 %v10736, %v10735
        %v10798 = vpack.c.b16 %v10738, %v10737
        %v10799 = vpack.c.b16 %v10740, %v10739
        %v10800 = vpack.c.b16 %v10742, %v10741
        %v10801 = vpack.c.b16 %v10744, %v10743
        %v10802 = vpack.c.b16 %v10746, %v10745
        %v10803 = vpack.c.b16 %v10748, %v10747
        %v10804 = vpack.c.b16 %v10750, %v10749
        %v10805 = vpack.c.b16 %v10752, %v10751
        %v10806 = vpack.c.b16 %v10754, %v10753
        %v10807 = vpack.c.b16 %v10756, %v10755
        %v10808 = vpack.c.b16 %v10758, %v10757
        %v10809 = vpack.c.b16 %v10760, %v10759
        %v10810 = vpack.c.b16 %v10762, %v10761
        %v10811 = vpack.c.b16 %v10764, %v10763
        %v10812 = vpack.c.b16 %v10766, %v10765
        %v10813 = vpack.c.b16 %v10768, %v10767
        %v10814 = vpack.c.b16 %v10770, %v10769
        %v10815 = vpack.c.b16 %v10772, %v10771
        %v10816 = vpack.c.b16 %v10774, %v10773
        %v10817 = vpack.c.b16 %v10776, %v10775
        %v10818 = vpack.c.b16 %v10778, %v10777
        %v10819 = vpack.c.b16 %v10780, %v10779
        %v10820 = vpack.c.b16 %v10782, %v10781
        %v10821 = vpack.c.b16 %v10784, %v10783
        %v10822 = vpack.c.b16 %v10786, %v10785
        %v10823 = vpack.c.b16 %v10788, %v10787
        %v10824 = vpack.c.b16 %v10790, %v10789
        %v10825 = vpack.c.b16 %v10792, %v10791
        %v10826 = vpack.c.b16 %v10794, %v10793
        %10859 = vmatprep.subr.bf16.mxu0 0
        %10860 = vmatpush1.bf16.msra.mxu0 %v10802
        %10861 = vmatprep.subr.bf16.mxu0 0
        %10862 = vmatpush1.bf16.msra.mxu0 %v10801
        %10863 = vmatprep.subr.bf16.mxu0 0
        %10864 = vmatpush1.bf16.msra.mxu0 %v10800
        %10865 = vmatprep.subr.bf16.mxu0 0
        %10866 = vmatpush1.bf16.msra.mxu0 %v10799
        %10867 = vmatprep.subr.bf16.mxu0 0
        %10868 = vmatpush1.bf16.msra.mxu0 %v10798
        %10869 = vmatprep.subr.bf16.mxu0 0
        %10870 = vmatpush1.bf16.msra.mxu0 %v10797
        %10871 = vmatprep.subr.bf16.mxu0 0
        %10872 = vmatpush1.bf16.msra.mxu0 %v10796
        %10873 = vmatprep.subr.bf16.mxu0 0
        %10874 = vmatpush1.bf16.msra.mxu0 %v10795
        %10875 = vmatprep.subr.bf16.mxu0 0
        %10876 = vmatpush2.bf16.msra.mxu0 %v10810
        %10877 = vmatprep.subr.bf16.mxu0 0
        %10878 = vmatpush2.bf16.msra.mxu0 %v10809
        %10879 = vmatprep.subr.bf16.mxu0 0
        %10880 = vmatpush2.bf16.msra.mxu0 %v10808
        %10881 = vmatprep.subr.bf16.mxu0 0
        %10882 = vmatpush2.bf16.msra.mxu0 %v10807
        %10883 = vmatprep.subr.bf16.mxu0 0
        %10884 = vmatpush2.bf16.msra.mxu0 %v10806
        %10885 = vmatprep.subr.bf16.mxu0 0
        %10886 = vmatpush2.bf16.msra.mxu0 %v10805
        %10887 = vmatprep.subr.bf16.mxu0 0
        %10888 = vmatpush2.bf16.msra.mxu0 %v10804
        %10889 = vmatprep.subr.bf16.mxu0 0
        %10890 = vmatpush2.bf16.msra.mxu0 %v10803
        %10891 = vmatprep.mubr.bf16.mxu0 %v10522
        %10892 = vmatmul.mubr.bf16.gmra.mxu0 %v10490
        %v10893 = vpop.f32.mrf.mxu0
        %v10894 = vadd.f32 0.0, %v10893
        %v10895 = vpop.f32.mrf.mxu0
        %v10896 = vpop.f32.mrf.mxu0
        %v10897 = vadd.f32 0.0, %v10896
        %v10898 = vpop.f32.mrf.mxu0
        %10899 = vmatprep.mubr.bf16.mxu0 %v10523
        %10900 = vmatmul.mubr.bf16.gmra.mxu0 %v10491
        %v10901 = vpop.f32.mrf.mxu0
        %v10902 = vadd.f32 0.0, %v10901
        %v10903 = vpop.f32.mrf.mxu0
        %v10904 = vpop.f32.mrf.mxu0
        %v10905 = vadd.f32 0.0, %v10904
        %v10906 = vpop.f32.mrf.mxu0
        %10907 = vmatprep.mubr.bf16.mxu0 %v10524
        %10908 = vmatmul.mubr.bf16.gmra.mxu0 %v10492
        %v10909 = vpop.f32.mrf.mxu0
        %v10910 = vadd.f32 0.0, %v10909
        %v10911 = vpop.f32.mrf.mxu0
        %v10912 = vpop.f32.mrf.mxu0
        %v10913 = vadd.f32 0.0, %v10912
        %v10914 = vpop.f32.mrf.mxu0
        %10915 = vmatprep.mubr.bf16.mxu0 %v10525
        %10916 = vmatmul.mubr.bf16.gmra.mxu0 %v10493
        %v10917 = vpop.f32.mrf.mxu0
        %v10918 = vadd.f32 0.0, %v10917
        %v10919 = vpop.f32.mrf.mxu0
        %v10920 = vpop.f32.mrf.mxu0
        %v10921 = vadd.f32 0.0, %v10920
        %v10922 = vpop.f32.mrf.mxu0
        %10923 = vmatprep.mubr.bf16.mxu0 %v10526
        %10924 = vmatmul.mubr.bf16.gmra.mxu0 %v10494
        %v10925 = vpop.f32.mrf.mxu0
        %v10926 = vadd.f32 0.0, %v10925
        %v10927 = vpop.f32.mrf.mxu0
        %v10928 = vpop.f32.mrf.mxu0
        %v10929 = vadd.f32 0.0, %v10928
        %v10930 = vpop.f32.mrf.mxu0
        %10931 = vmatprep.mubr.bf16.mxu0 %v10527
        %10932 = vmatmul.mubr.bf16.gmra.mxu0 %v10495
        %v10933 = vpop.f32.mrf.mxu0
        %v10934 = vadd.f32 0.0, %v10933
        %v10935 = vpop.f32.mrf.mxu0
        %v10936 = vpop.f32.mrf.mxu0
        %v10937 = vadd.f32 0.0, %v10936
        %v10938 = vpop.f32.mrf.mxu0
        %10939 = vmatprep.mubr.bf16.mxu0 %v10528
        %10940 = vmatmul.mubr.bf16.gmra.mxu0 %v10496
        %v10941 = vpop.f32.mrf.mxu0
        %v10942 = vadd.f32 0.0, %v10941
        %v10943 = vpop.f32.mrf.mxu0
        %v10944 = vpop.f32.mrf.mxu0
        %v10945 = vadd.f32 0.0, %v10944
        %v10946 = vpop.f32.mrf.mxu0
        %10947 = vmatprep.mubr.bf16.mxu0 %v10529
        %10948 = vmatmul.mubr.bf16.gmra.mxu0 %v10497
        %v10949 = vpop.f32.mrf.mxu0
        %v10950 = vadd.f32 0.0, %v10949
        %v10951 = vpop.f32.mrf.mxu0
        %v10952 = vpop.f32.mrf.mxu0
        %v10953 = vadd.f32 0.0, %v10952
        %v10954 = vpop.f32.mrf.mxu0
        %10955 = vdwg.mxu0
        %10956 = vmatprep.subr.bf16.mxu0 0
        %10957 = vmatpush1.bf16.msra.mxu0 %v10818
        %10958 = vmatprep.subr.bf16.mxu0 0
        %10959 = vmatpush1.bf16.msra.mxu0 %v10817
        %10960 = vmatprep.subr.bf16.mxu0 0
        %10961 = vmatpush1.bf16.msra.mxu0 %v10816
        %10962 = vmatprep.subr.bf16.mxu0 0
        %10963 = vmatpush1.bf16.msra.mxu0 %v10815
        %10964 = vmatprep.subr.bf16.mxu0 0
        %10965 = vmatpush1.bf16.msra.mxu0 %v10814
        %10966 = vmatprep.subr.bf16.mxu0 0
        %10967 = vmatpush1.bf16.msra.mxu0 %v10813
        %10968 = vmatprep.subr.bf16.mxu0 0
        %10969 = vmatpush1.bf16.msra.mxu0 %v10812
        %10970 = vmatprep.subr.bf16.mxu0 0
        %10971 = vmatpush1.bf16.msra.mxu0 %v10811
        %10972 = vmatprep.subr.bf16.mxu0 0
        %10973 = vmatpush2.bf16.msra.mxu0 %v10826
        %10974 = vmatprep.subr.bf16.mxu0 0
        %10975 = vmatpush2.bf16.msra.mxu0 %v10825
        %10976 = vmatprep.subr.bf16.mxu0 0
        %10977 = vmatpush2.bf16.msra.mxu0 %v10824
        %10978 = vmatprep.subr.bf16.mxu0 0
        %10979 = vmatpush2.bf16.msra.mxu0 %v10823
        %10980 = vmatprep.subr.bf16.mxu0 0
        %10981 = vmatpush2.bf16.msra.mxu0 %v10822
        %10982 = vmatprep.subr.bf16.mxu0 0
        %10983 = vmatpush2.bf16.msra.mxu0 %v10821
        %10984 = vmatprep.subr.bf16.mxu0 0
        %10985 = vmatpush2.bf16.msra.mxu0 %v10820
        %10986 = vmatprep.subr.bf16.mxu0 0
        %10987 = vmatpush2.bf16.msra.mxu0 %v10819
        %10988 = vmatprep.mubr.bf16.mxu0 %v10586
        %10989 = vmatmul.mubr.bf16.gmra.mxu0 %v10554
        %v10990 = vpop.f32.mrf.mxu0
        %v10991 = vadd.f32 %v10894, %v10990
        %v10992 = vpop.f32.mrf.mxu0
        %v10993 = vpop.f32.mrf.mxu0
        %v10994 = vadd.f32 %v10897, %v10993
        %v10995 = vpop.f32.mrf.mxu0
        %10996 = vmatprep.mubr.bf16.mxu0 %v10587
        %10997 = vmatmul.mubr.bf16.gmra.mxu0 %v10555
        %v10998 = vpop.f32.mrf.mxu0
        %v10999 = vadd.f32 %v10902, %v10998
        %v11000 = vpop.f32.mrf.mxu0
        %v11001 = vpop.f32.mrf.mxu0
        %v11002 = vadd.f32 %v10905, %v11001
        %v11003 = vpop.f32.mrf.mxu0
        %11004 = vmatprep.mubr.bf16.mxu0 %v10588
        %11005 = vmatmul.mubr.bf16.gmra.mxu0 %v10556
        %v11006 = vpop.f32.mrf.mxu0
        %v11007 = vadd.f32 %v10910, %v11006
        %v11008 = vpop.f32.mrf.mxu0
        %v11009 = vpop.f32.mrf.mxu0
        %v11010 = vadd.f32 %v10913, %v11009
        %v11011 = vpop.f32.mrf.mxu0
        %11012 = vmatprep.mubr.bf16.mxu0 %v10589
        %11013 = vmatmul.mubr.bf16.gmra.mxu0 %v10557
        %v11014 = vpop.f32.mrf.mxu0
        %v11015 = vadd.f32 %v10918, %v11014
        %v11016 = vpop.f32.mrf.mxu0
        %v11017 = vpop.f32.mrf.mxu0
        %v11018 = vadd.f32 %v10921, %v11017
        %v11019 = vpop.f32.mrf.mxu0
        %11020 = vmatprep.mubr.bf16.mxu0 %v10590
        %11021 = vmatmul.mubr.bf16.gmra.mxu0 %v10558
        %v11022 = vpop.f32.mrf.mxu0
        %v11023 = vadd.f32 %v10926, %v11022
        %v11024 = vpop.f32.mrf.mxu0
        %v11025 = vpop.f32.mrf.mxu0
        %v11026 = vadd.f32 %v10929, %v11025
        %v11027 = vpop.f32.mrf.mxu0
        %11028 = vmatprep.mubr.bf16.mxu0 %v10591
        %11029 = vmatmul.mubr.bf16.gmra.mxu0 %v10559
        %v11030 = vpop.f32.mrf.mxu0
        %v11031 = vadd.f32 %v10934, %v11030
        %v11032 = vpop.f32.mrf.mxu0
        %v11033 = vpop.f32.mrf.mxu0
        %v11034 = vadd.f32 %v10937, %v11033
        %v11035 = vpop.f32.mrf.mxu0
        %11036 = vmatprep.mubr.bf16.mxu0 %v10592
        %11037 = vmatmul.mubr.bf16.gmra.mxu0 %v10560
        %v11038 = vpop.f32.mrf.mxu0
        %v11039 = vadd.f32 %v10942, %v11038
        %v11040 = vpop.f32.mrf.mxu0
        %v11041 = vpop.f32.mrf.mxu0
        %v11042 = vadd.f32 %v10945, %v11041
        %v11043 = vpop.f32.mrf.mxu0
        %11044 = vmatprep.mubr.bf16.mxu0 %v10593
        %11045 = vmatmul.mubr.bf16.gmra.mxu0 %v10561
        %v11046 = vpop.f32.mrf.mxu0
        %v11047 = vadd.f32 %v10950, %v11046
        %v11048 = vpop.f32.mrf.mxu0
        %v11049 = vpop.f32.mrf.mxu0
        %v11050 = vadd.f32 %v10953, %v11049
        %v11051 = vpop.f32.mrf.mxu0
        %11052 = vdwg.mxu0
        %v11053 = vadd.f32 %v9530, %v10991
        %v11054 = vadd.f32 %v9531, %v10994
        %v11055 = vadd.f32 %v9532, %v10999
        %v11056 = vadd.f32 %v9533, %v11002
        %v11057 = vadd.f32 %v9534, %v11007
        %v11058 = vadd.f32 %v9535, %v11010
        %v11059 = vadd.f32 %v9536, %v11015
        %v11060 = vadd.f32 %v9537, %v11018
        %v11061 = vadd.f32 %v9538, %v11023
        %v11062 = vadd.f32 %v9539, %v11026
        %v11063 = vadd.f32 %v9540, %v11031
        %v11064 = vadd.f32 %v9541, %v11034
        %v11065 = vadd.f32 %v9542, %v11039
        %v11066 = vadd.f32 %v9543, %v11042
        %v11067 = vadd.f32 %v9544, %v11047
        %v11068 = vadd.f32 %v9545, %v11050
        %v11069 = vld [vmem:[%s2] sm:$0x1]
        %v11071 = vlaneseq
        %v11072 = vshrl.u32 %v11071, 7
        %v11073 = vsub.s32 0, %v11072
        %v11074 = vrot.slane %v11069, %v11073
        %v11076 = vadd.f32 %v11053, %v11074
        %v11077 = vadd.f32 %v11054, %v11074
        %v11078 = vadd.f32 %v11055, %v11074
        %v11079 = vadd.f32 %v11056, %v11074
        %v11080 = vadd.f32 %v11057, %v11074
        %v11081 = vadd.f32 %v11058, %v11074
        %v11082 = vadd.f32 %v11059, %v11074
        %v11083 = vadd.f32 %v11060, %v11074
        %v11084 = vadd.f32 %v11061, %v11074
        %v11085 = vadd.f32 %v11062, %v11074
        %v11086 = vadd.f32 %v11063, %v11074
        %v11087 = vadd.f32 %v11064, %v11074
        %v11088 = vadd.f32 %v11065, %v11074
        %v11089 = vadd.f32 %v11066, %v11074
        %v11090 = vadd.f32 %v11067, %v11074
        %v11091 = vadd.f32 %v11068, %v11074
        %11092 = vst [vmem:[%s204] sm:$0xff] %v11076
        %11093 = vst [vmem:[%s204 + $0x8] sm:$0xff] %v11077
        %11094 = vst [vmem:[%s204 + $0x10] sm:$0xff] %v11078
        %11095 = vst [vmem:[%s204 + $0x18] sm:$0xff] %v11079
        %11096 = vst [vmem:[%s204 + $0x20] sm:$0xff] %v11080
        %11097 = vst [vmem:[%s204 + $0x28] sm:$0xff] %v11081
        %11098 = vst [vmem:[%s204 + $0x30] sm:$0xff] %v11082
        %11099 = vst [vmem:[%s204 + $0x38] sm:$0xff] %v11083
        %11100 = vst [vmem:[%s204 + $0x40] sm:$0xff] %v11084
        %11101 = vst [vmem:[%s204 + $0x48] sm:$0xff] %v11085
        %11102 = vst [vmem:[%s204 + $0x50] sm:$0xff] %v11086
        %11103 = vst [vmem:[%s204 + $0x58] sm:$0xff] %v11087
        %11104 = vst [vmem:[%s204 + $0x60] sm:$0xff] %v11088
        %11105 = vst [vmem:[%s204 + $0x68] sm:$0xff] %v11089
        %11106 = vst [vmem:[%s204 + $0x70] sm:$0xff] %v11090
        %11107 = vst [vmem:[%s204 + $0x78] sm:$0xff] %v11091
        %s11108 = sand.u32 %s129, 1
        %s11109 = scalar_lea.sflag [#allocation4], %s11108
        %s11110 = sand.u32 %s129, 1
        %s11111 = smul.addr %s11110, 128
        %s11112 = scalar_lea.vmem [#allocation3], %s11111
        // Predicated region
        $region41: #{_lambda_.1} parent=35 // pred_check
          %p11113 = pneg %p139
        $region42: #{_lambda_.1} parent=35 // pred_check_branch
          %11115 = sbr.rel (%p11113) target = $region44
        $region43: #{_lambda_.1} parent=35 // pred_region
          %s11116 = smul.u32 8, %s23
          %s11118 = ssub.s32 2048, 2048
          %11119 = vsyncadd %s11109, %s11118
          %s11120 = smul.addr %s11116, 2
          %s11121 = smul.addr %s22, 32
          %s11122 = sadd.s32 %s11120, %s11121
          %s11123 = smul.addr %s11122, 128
          %s11124 = scalar_lea.hbm %s4, %s11123
          %s11125 = sshll.u32 %s11112, 4
          %s11126 = int_to_ptr.vmem [resolvable:$true] %s11125
          %11131 = dma.vmem_to_hbm [thread:$0]  %s11126, 2048, %s11124, %s11109, 128, 128, 8
        $region44: #{_lambda_.1} parent=35 // pred_fallthru
          _
      $region36: #{_lambda_.1} parent=5 // pred_fallthru
        _
      %p11132 = scmp.le.s32.totalorder 2, %s13
      // Predicated region
      $region45: #{_lambda_.1} parent=5 // pred_check
        %p11133 = pneg %p11132
      $region46: #{_lambda_.1} parent=5 // pred_check_branch
        %11135 = sbr.rel (%p11133) target = $region48
      $region47: #{_lambda_.1} parent=5 // pred_region
        %s11136 = ssub.s32 %s13, 2
        // Predicated region
        $region49: #{_lambda_.1} parent=47 // pred_check
          %p11137 = pneg %p145
        $region50: #{_lambda_.1} parent=47 // pred_check_branch
          %11139 = sbr.rel (%p11137) target = $region52
        $region51: #{_lambda_.1} parent=47 // pred_region
          %s11140 = sand.u32 %s130, 1
          %s11141 = scalar_lea.sflag [#allocation4], %s11140
          %s11142 = sand.u32 %s130, 1
          %s11143 = smul.addr %s11142, 128
          %s11144 = scalar_lea.vmem [#allocation3], %s11143
          %11145 = dma.done %s11141, 2048
        $region52: #{_lambda_.1} parent=47 // pred_fallthru
          _
      $region48: #{_lambda_.1} parent=5 // pred_fallthru
        _
    $region6: #{_lambda_.1} parent=1 // loop_footer
      %s17 = sadd.s32 1, %s13
    $region7: #{_lambda_.1} parent=1 // loop_footer_branch
      %12 = sbr.rel target = $region3
    $region8: #{_lambda_.1} parent=1 // loop_exit
      _
    %11146 = vsyncpa [#allocation4], 1
    %s11147 = scalar_lea.sflag [#allocation4], 1
    %11148 = vsyncpa %s11147, 1

</llo_original>
